<compile_context>
chip_gen: v6e
topology: v6e:2x2x1
jax: 0.10.0
libtpu: 0.0.40
codegen_flags: <defaults>
</compile_context>

<pallas_src>
import functools
import math

import numpy as np
import jax
import jax.numpy as jnp
from jax.experimental import pallas as pl
from jax.experimental.pallas import tpu as pltpu

D_MODEL = 32
N_HEADS = 4
D_K = D_MODEL // N_HEADS
D_FF = 64
N_LAYERS = 2
EPS = 1e-16          # matches LayerNorm(features, eps=1e-16)
_NEG = -1e9
_SLAB_LANES = 128    # single lane-tile-wide weight slab

_VMEM = pl.BlockSpec(memory_space=pltpu.MemorySpace.VMEM)


# ------------------------------ Slab layout -----------------------------------
def _round8(n):
    return -(-n // 8) * 8


def _build_layout(B, St, Ss):
    """Static (row_offset, nrows, ncols) bookkeeping for the packed weight slab."""
    layout = {}
    row = 0

    def add(name, nrows, ncols):
        nonlocal row
        layout[name] = (row, nrows, ncols)
        row += _round8(nrows)          # 8-row alignment for clean sublane slices

    for l in range(N_LAYERS):
        p = f"l{l}_"
        add(p + "ln_g", 3, D_MODEL)
        add(p + "ln_b", 3, D_MODEL)
        add(p + "sa_wqkv", D_MODEL, 3 * D_MODEL)
        add(p + "sa_bqkv", 1, 3 * D_MODEL)
        add(p + "sa_wo", D_MODEL, D_MODEL)
        add(p + "sa_bo", 1, D_MODEL)
        add(p + "ca_wq", D_MODEL, D_MODEL)
        add(p + "ca_bq", 1, D_MODEL)
        add(p + "ca_wkv", D_MODEL, 2 * D_MODEL)
        add(p + "ca_bkv", 1, 2 * D_MODEL)
        add(p + "ca_wo", D_MODEL, D_MODEL)
        add(p + "ca_bo", 1, D_MODEL)
        add(p + "ff_w1", D_MODEL, D_FF)
        add(p + "ff_b1", 1, D_FF)
        add(p + "ff_w2", D_FF, D_MODEL)
        add(p + "ff_b2", 1, D_MODEL)
    add("fin_g", 1, D_MODEL)
    add("fin_b", 1, D_MODEL)
    add("mask", B * St, St + Ss)       # additive attention biases live here too
    return layout, row


# --------------------------- Fused decoder kernel ------------------------------
def _decoder_kernel(x_ref, mem_ref, w_ref, o_ref, *, layout):
    B, St, D = x_ref.shape
    Ss = mem_ref.shape[1]

    def W(name):
        r0, nr, nc = layout[name]
        return w_ref[pl.ds(r0, nr), pl.ds(0, nc)]

    # Activations as lane-dense (rows, D_MODEL) 2-D slabs (leading-dim reshape is free).
    x = x_ref[...].reshape(B * St, D)
    mem2d = mem_ref[...].reshape(B * Ss, D)

    # Pre-computed additive mask biases (0 keep / -1e9 masked), packed in the slab.
    mb = W("mask")                                    # (B*St, St+Ss) f32
    tgt_bias = mb[:, 0:St].reshape(B, St, St)
    src_bias = mb[:, St:St + Ss].reshape(B, St, Ss)

    inv_d = 1.0 / D
    inv_nm1 = 1.0 / (D - 1)

    def layer_norm(v, g, b):
        # PyTorch LayerNorm of the reference: unbiased (N-1) std, eps on std.
        mean = jnp.sum(v, axis=-1, keepdims=True) * inv_d
        diff = v - mean
        var = jnp.sum(diff * diff, axis=-1, keepdims=True) * inv_nm1
        inv_std = 1.0 / (jnp.sqrt(var) + EPS)         # one reciprocal per row
        return g * (diff * inv_std) + b

    def attention(q2d, k2d, v2d, bias, Sq, Sk, wo, bo):
        # Heads are static lane slices; head merge is folded into W_O (no concat).
        # 1/sqrt(D_K) was folded into the Q projection at pack time.
        q = q2d.reshape(B, Sq, D)
        k = k2d.reshape(B, Sk, D)
        v = v2d.reshape(B, Sk, D)
        out = bo                                       # (1, D) broadcasts up
        for h in range(N_HEADS):
            lo = h * D_K
            qh = q[:, :, lo:lo + D_K]
            kh = k[:, :, lo:lo + D_K]
            vh = v[:, :, lo:lo + D_K]
            s = jnp.einsum("bqd,bkd->bqk", qh, kh,
                           preferred_element_type=jnp.float32) + bias
            s = s - jnp.max(s, axis=-1, keepdims=True)
            p = jnp.exp(s)
            p = p * (1.0 / jnp.sum(p, axis=-1, keepdims=True))
            oh = jnp.einsum("bqk,bkd->bqd", p, vh,
                            preferred_element_type=jnp.float32)
            out = out + jnp.dot(oh.reshape(B * Sq, D_K), wo[lo:lo + D_K, :],
                                preferred_element_type=jnp.float32)
        return out

    for l in range(N_LAYERS):          # static unroll (N_LAYERS = 2)
        pfx = f"l{l}_"
        g_all = W(pfx + "ln_g")        # (3, D)
        b_all = W(pfx + "ln_b")        # (3, D)

        # ---- sublayer 0: pre-norm self-attention + residual ------------------
        y = layer_norm(x, g_all[0:1], b_all[0:1])
        qkv = jnp.dot(y, W(pfx + "sa_wqkv"),
                      preferred_element_type=jnp.float32) + W(pfx + "sa_bqkv")
        x = x + attention(qkv[:, 0:D], qkv[:, D:2 * D], qkv[:, 2 * D:3 * D],
                          tgt_bias, St, St, W(pfx + "sa_wo"), W(pfx + "sa_bo"))

        # ---- sublayer 1: pre-norm source attention + residual ----------------
        y = layer_norm(x, g_all[1:2], b_all[1:2])
        q = jnp.dot(y, W(pfx + "ca_wq"),
                    preferred_element_type=jnp.float32) + W(pfx + "ca_bq")
        kv = jnp.dot(mem2d, W(pfx + "ca_wkv"),
                     preferred_element_type=jnp.float32) + W(pfx + "ca_bkv")
        x = x + attention(q, kv[:, 0:D], kv[:, D:2 * D],
                          src_bias, St, Ss, W(pfx + "ca_wo"), W(pfx + "ca_bo"))

        # ---- sublayer 2: pre-norm feed-forward + residual ---------------------
        y = layer_norm(x, g_all[2:3], b_all[2:3])
        h1 = jnp.maximum(jnp.dot(y, W(pfx + "ff_w1"),
                                 preferred_element_type=jnp.float32)
                         + W(pfx + "ff_b1"), 0.0)
        x = x + jnp.dot(h1, W(pfx + "ff_w2"),
                        preferred_element_type=jnp.float32) + W(pfx + "ff_b2")

    # final LayerNorm; single store of the full (B*St, D) result.
    x = layer_norm(x, W("fin_g"), W("fin_b"))
    o_ref[...] = x


# -------------------- One-time host-side packing (NOT per-call) ----------------
def prepare(params, src_mask, tgt_mask):
    """Pack all weights + additive mask biases into one f32 VMEM slab. Run once."""
    B, St, _ = tgt_mask.shape
    Ss = src_mask.shape[-1]
    layout, total_rows = _build_layout(B, St, Ss)
    slab = np.zeros((total_rows, _SLAB_LANES), np.float32)

    def put(name, arr):
        arr = np.asarray(arr, np.float32)
        r0, nr, nc = layout[name]
        assert arr.shape == (nr, nc), (name, arr.shape, (nr, nc))
        slab[r0:r0 + nr, 0:nc] = arr

    t = lambda w: np.asarray(w, np.float32).T          # [out,in] -> [in,out]
    scale = 1.0 / math.sqrt(D_K)                       # folded into Q projection

    for l, p in enumerate(params["layers"]):
        pfx = f"l{l}_"
        put(pfx + "ln_g", np.stack([np.asarray(p["ln0_g"]),
                                    np.asarray(p["ln1_g"]),
                                    np.asarray(p["ln2_g"])]))
        put(pfx + "ln_b", np.stack([np.asarray(p["ln0_b"]),
                                    np.asarray(p["ln1_b"]),
                                    np.asarray(p["ln2_b"])]))
        sa = p["self_attn"]
        put(pfx + "sa_wqkv", np.concatenate(
            [t(sa["wq"]) * scale, t(sa["wk"]), t(sa["wv"])], axis=1))
        put(pfx + "sa_bqkv", np.concatenate(
            [np.asarray(sa["bq"]) * scale, np.asarray(sa["bk"]),
             np.asarray(sa["bv"])])[None, :])
        put(pfx + "sa_wo", t(sa["wo"]))
        put(pfx + "sa_bo", np.asarray(sa["bo"])[None, :])
        ca = p["src_attn"]
        put(pfx + "ca_wq", t(ca["wq"]) * scale)
        put(pfx + "ca_bq", (np.asarray(ca["bq"]) * scale)[None, :])
        put(pfx + "ca_wkv", np.concatenate([t(ca["wk"]), t(ca["wv"])], axis=1))
        put(pfx + "ca_bkv", np.concatenate(
            [np.asarray(ca["bk"]), np.asarray(ca["bv"])])[None, :])
        put(pfx + "ca_wo", t(ca["wo"]))
        put(pfx + "ca_bo", np.asarray(ca["bo"])[None, :])
        put(pfx + "ff_w1", t(p["ff_w1"]))
        put(pfx + "ff_b1", np.asarray(p["ff_b1"])[None, :])
        put(pfx + "ff_w2", t(p["ff_w2"]))
        put(pfx + "ff_b2", np.asarray(p["ff_b2"])[None, :])
    put("fin_g", np.asarray(params["norm_g"])[None, :])
    put("fin_b", np.asarray(params["norm_b"])[None, :])

    # Additive mask biases (0 keep, -1e9 masked), src broadcast to queries here.
    tgt_bias = (np.asarray(tgt_mask, np.float32) - 1.0) * (-_NEG) * (-1.0)
    tgt_bias = (np.asarray(tgt_mask, np.float32) - 1.0) * 1e9
    src_bias = np.broadcast_to(
        (np.asarray(src_mask, np.float32) - 1.0) * 1e9, (B, St, Ss))
    put("mask", np.concatenate([tgt_bias, src_bias],
                               axis=-1).reshape(B * St, St + Ss))

    return jnp.asarray(slab), layout


def make_decoder(layout, B, St, Ss):
    kernel = functools.partial(_decoder_kernel, layout=layout)

    @jax.jit
    def fwd(x, memory, w_slab):
        out = pl.pallas_call(
            kernel,
            out_shape=jax.ShapeDtypeStruct((B * St, D_MODEL), jnp.float32),
            in_specs=[_VMEM, _VMEM, _VMEM],
            out_specs=_VMEM,
        )(x, memory, w_slab)
        return out.reshape(B, St, D_MODEL)

    return fwd


# ------------------------------- Param init ------------------------------------
def _init_attn(key):
    ks = jax.random.split(key, 4)
    p = {}
    for name, k in zip(("q", "k", "v", "o"), ks):
        p[f"w{name}"] = 0.02 * jax.random.normal(k, (D_MODEL, D_MODEL), jnp.float32)
        p[f"b{name}"] = jnp.zeros((D_MODEL,), jnp.float32)
    return p


def init_params(key):
    layers = []
    for _ in range(N_LAYERS):
        key, k_self, k_src, k_w1, k_w2 = jax.random.split(key, 5)
        layers.append({
            "self_attn": _init_attn(k_self),
            "src_attn": _init_attn(k_src),
            "ff_w1": 0.02 * jax.random.normal(k_w1, (D_FF, D_MODEL), jnp.float32),
            "ff_b1": jnp.zeros((D_FF,), jnp.float32),
            "ff_w2": 0.02 * jax.random.normal(k_w2, (D_MODEL, D_FF), jnp.float32),
            "ff_b2": jnp.zeros((D_MODEL,), jnp.float32),
            "ln0_g": jnp.ones((D_MODEL,), jnp.float32),
            "ln0_b": jnp.zeros((D_MODEL,), jnp.float32),
            "ln1_g": jnp.ones((D_MODEL,), jnp.float32),
            "ln1_b": jnp.zeros((D_MODEL,), jnp.float32),
            "ln2_g": jnp.ones((D_MODEL,), jnp.float32),
            "ln2_b": jnp.zeros((D_MODEL,), jnp.float32),
        })
    return {
        "layers": layers,
        "norm_g": jnp.ones((D_MODEL,), jnp.float32),
        "norm_b": jnp.zeros((D_MODEL,), jnp.float32),
    }


# --------------------------- Pure-JAX reference ---------------------------------
def _ref_layer_norm(v, g, b):
    mean = jnp.mean(v, -1, keepdims=True)
    std = jnp.sqrt(jnp.sum((v - mean) ** 2, -1, keepdims=True) / (v.shape[-1] - 1))
    return g * (v - mean) / (std + EPS) + b


def _ref_linear(v, w, b):
    return v @ w.T + b


def _ref_attn(p, x_q, x_kv, mask):
    B, Sq, D = x_q.shape
    Sk = x_kv.shape[1]
    q = _ref_linear(x_q, p["wq"], p["bq"]).reshape(B, Sq, N_HEADS, D_K).transpose(0, 2, 1, 3)
    k = _ref_linear(x_kv, p["wk"], p["bk"]).reshape(B, Sk, N_HEADS, D_K).transpose(0, 2, 1, 3)
    v = _ref_linear(x_kv, p["wv"], p["bv"]).reshape(B, Sk, N_HEADS, D_K).transpose(0, 2, 1, 3)
    s = jnp.einsum("bhqd,bhkd->bhqk", q, k) / math.sqrt(D_K)
    s = jnp.where(mask[:, None] == 0, _NEG, s)
    pr = jax.nn.softmax(s, axis=-1)
    o = jnp.einsum("bhqk,bhkd->bhqd", pr, v).transpose(0, 2, 1, 3).reshape(B, Sq, D)
    return _ref_linear(o, p["wo"], p["bo"])


def reference(params, x, memory, src_mask, tgt_mask):
    for p in params["layers"]:
        y = _ref_layer_norm(x, p["ln0_g"], p["ln0_b"])
        x = x + _ref_attn(p["self_attn"], y, y, tgt_mask)
        y = _ref_layer_norm(x, p["ln1_g"], p["ln1_b"])
        x = x + _ref_attn(p["src_attn"], y, memory, src_mask)
        y = _ref_layer_norm(x, p["ln2_g"], p["ln2_b"])
        h = jnp.maximum(_ref_linear(y, p["ff_w1"], p["ff_b1"]), 0.0)
        x = x + _ref_linear(h, p["ff_w2"], p["ff_b2"])
    return _ref_layer_norm(x, params["norm_g"], params["norm_b"])


# ---------------------------------- Main ----------------------------------------
if __name__ == "__main__":
    key = jax.random.PRNGKey(0)
    k_p, k_x, k_m = jax.random.split(key, 3)

    B, S_TGT, S_SRC = 2, 8, 8
    params = init_params(k_p)
    x = jax.random.normal(k_x, (B, S_TGT, D_MODEL), jnp.float32)
    memory = jax.random.normal(k_m, (B, S_SRC, D_MODEL), jnp.float32)

    src_mask = jnp.ones((B, 1, S_SRC), jnp.int32)                      # [B,1,Ss]
    tgt_mask = jnp.broadcast_to(                                       # [B,St,St]
        jnp.tril(jnp.ones((S_TGT, S_TGT), jnp.int32))[None], (B, S_TGT, S_TGT))

    # One-time packing (weights + mask biases) — NOT in the per-call path.
    w_slab, layout = prepare(params, src_mask, tgt_mask)
    decoder = make_decoder(layout, B, S_TGT, S_SRC)

    out = decoder(x, memory, w_slab)
    jax.block_until_ready(out)
    assert out.shape == (B, S_TGT, D_MODEL)

    ref = reference(params, x, memory, src_mask, tgt_mask)
    assert float(jnp.max(jnp.abs(out - ref))) < 5e-2

    print("KERNEL_OK")
</pallas_src>

<mosaic_0001>
module attributes {stable_mosaic.version = 11 : i64} {
  func.func @_decoder_kernel(%arg0: memref<2x8x32xf32, #tpu.memory_space<vmem>>, %arg1: memref<2x8x32xf32, #tpu.memory_space<vmem>>, %arg2: memref<688x128xf32, #tpu.memory_space<vmem>>, %arg3: memref<16x32xf32, #tpu.memory_space<vmem>>) attributes {dimension_semantics = [], scalar_prefetch = 0 : i64, scratch_operands = 0 : i64, tpu.core_type = #tpu.core_type<tc>} {
    %c0 = arith.constant 0 : index
    %c0_0 = arith.constant 0 : index
    %c0_1 = arith.constant 0 : index
    %0 = vector.load %arg0[%c0, %c0_0, %c0_1] : memref<2x8x32xf32, #tpu.memory_space<vmem>>, vector<2x8x32xf32>
    %1 = vector.shape_cast %0 : vector<2x8x32xf32> to vector<16x32xf32>
    %c0_2 = arith.constant 0 : index
    %c0_3 = arith.constant 0 : index
    %c0_4 = arith.constant 0 : index
    %2 = vector.load %arg1[%c0_2, %c0_3, %c0_4] : memref<2x8x32xf32, #tpu.memory_space<vmem>>, vector<2x8x32xf32>
    %3 = vector.shape_cast %2 : vector<2x8x32xf32> to vector<16x32xf32>
    %c672 = arith.constant 672 : index
    %c0_5 = arith.constant 0 : index
    %4 = vector.load %arg2[%c672, %c0_5] : memref<688x128xf32, #tpu.memory_space<vmem>>, vector<16x16xf32>
    %5 = vector.extract_strided_slice %4 {offsets = [0, 0], sizes = [16, 8], strides = [1, 1]} : vector<16x16xf32> to vector<16x8xf32>
    %6 = vector.shape_cast %5 : vector<16x8xf32> to vector<2x8x8xf32>
    %7 = vector.extract_strided_slice %4 {offsets = [0, 8], sizes = [16, 8], strides = [1, 1]} : vector<16x16xf32> to vector<16x8xf32>
    %8 = vector.shape_cast %7 : vector<16x8xf32> to vector<2x8x8xf32>
    %c0_6 = arith.constant 0 : index
    %c0_7 = arith.constant 0 : index
    %9 = vector.load %arg2[%c0_6, %c0_7] : memref<688x128xf32, #tpu.memory_space<vmem>>, vector<3x32xf32>
    %c8 = arith.constant 8 : index
    %c0_8 = arith.constant 0 : index
    %10 = vector.load %arg2[%c8, %c0_8] : memref<688x128xf32, #tpu.memory_space<vmem>>, vector<3x32xf32>
    %11 = vector.extract_strided_slice %9 {offsets = [0, 0], sizes = [1, 32], strides = [1, 1]} : vector<3x32xf32> to vector<1x32xf32>
    %12 = vector.extract_strided_slice %10 {offsets = [0, 0], sizes = [1, 32], strides = [1, 1]} : vector<3x32xf32> to vector<1x32xf32>
    %cst = arith.constant dense<0.000000e+00> : vector<16xf32>
    %13 = vector.multi_reduction <add>, %1, %cst [1] : vector<16x32xf32> to vector<16xf32>
    %14 = vector.shape_cast %13 : vector<16xf32> to vector<16x1xf32>
    %cst_9 = arith.constant 3.125000e-02 : f32
    %15 = vector.broadcast %cst_9 : f32 to vector<16x1xf32>
    %16 = arith.mulf %14, %15 : vector<16x1xf32>
    %17 = vector.broadcast %16 : vector<16x1xf32> to vector<16x32xf32>
    %18 = arith.subf %1, %17 : vector<16x32xf32>
    %19 = arith.mulf %18, %18 : vector<16x32xf32>
    %cst_10 = arith.constant dense<0.000000e+00> : vector<16xf32>
    %20 = vector.multi_reduction <add>, %19, %cst_10 [1] : vector<16x32xf32> to vector<16xf32>
    %21 = vector.shape_cast %20 : vector<16xf32> to vector<16x1xf32>
    %cst_11 = arith.constant 0.0322580636 : f32
    %22 = vector.broadcast %cst_11 : f32 to vector<16x1xf32>
    %23 = arith.mulf %21, %22 : vector<16x1xf32>
    %24 = math.sqrt %23 : vector<16x1xf32>
    %cst_12 = arith.constant 1.000000e-16 : f32
    %25 = vector.broadcast %cst_12 : f32 to vector<16x1xf32>
    %26 = arith.addf %24, %25 : vector<16x1xf32>
    %cst_13 = arith.constant 1.000000e+00 : f32
    %27 = vector.broadcast %cst_13 : f32 to vector<16x1xf32>
    %28 = arith.divf %27, %26 : vector<16x1xf32>
    %29 = vector.broadcast %28 : vector<16x1xf32> to vector<16x32xf32>
    %30 = arith.mulf %18, %29 : vector<16x32xf32>
    %31 = vector.broadcast %11 : vector<1x32xf32> to vector<16x32xf32>
    %32 = arith.mulf %31, %30 : vector<16x32xf32>
    %33 = vector.broadcast %12 : vector<1x32xf32> to vector<16x32xf32>
    %34 = arith.addf %32, %33 : vector<16x32xf32>
    %c16 = arith.constant 16 : index
    %c0_14 = arith.constant 0 : index
    %35 = vector.load %arg2[%c16, %c0_14] : memref<688x128xf32, #tpu.memory_space<vmem>>, vector<32x96xf32>
    %cst_15 = arith.constant dense<0.000000e+00> : vector<16x96xf32>
    %36 = tpu.matmul %34, %35, %cst_15 {dimension_numbers = #tpu.dot_dimension_numbers<[1], [0], [0], [1], [0, 0, 1, 1], [], []>} : vector<16x32xf32>, vector<32x96xf32>, vector<16x96xf32> -> vector<16x96xf32>
    %c48 = arith.constant 48 : index
    %c0_16 = arith.constant 0 : index
    %37 = vector.load %arg2[%c48, %c0_16] : memref<688x128xf32, #tpu.memory_space<vmem>>, vector<1x96xf32>
    %38 = vector.broadcast %37 : vector<1x96xf32> to vector<16x96xf32>
    %39 = arith.addf %36, %38 : vector<16x96xf32>
    %40 = vector.extract_strided_slice %39 {offsets = [0, 0], sizes = [16, 32], strides = [1, 1]} : vector<16x96xf32> to vector<16x32xf32>
    %41 = vector.extract_strided_slice %39 {offsets = [0, 32], sizes = [16, 32], strides = [1, 1]} : vector<16x96xf32> to vector<16x32xf32>
    %42 = vector.extract_strided_slice %39 {offsets = [0, 64], sizes = [16, 32], strides = [1, 1]} : vector<16x96xf32> to vector<16x32xf32>
    %c56 = arith.constant 56 : index
    %c0_17 = arith.constant 0 : index
    %43 = vector.load %arg2[%c56, %c0_17] : memref<688x128xf32, #tpu.memory_space<vmem>>, vector<32x32xf32>
    %c88 = arith.constant 88 : index
    %c0_18 = arith.constant 0 : index
    %44 = vector.load %arg2[%c88, %c0_18] : memref<688x128xf32, #tpu.memory_space<vmem>>, vector<1x32xf32>
    %45 = vector.shape_cast %40 : vector<16x32xf32> to vector<2x8x32xf32>
    %46 = vector.shape_cast %41 : vector<16x32xf32> to vector<2x8x32xf32>
    %47 = vector.shape_cast %42 : vector<16x32xf32> to vector<2x8x32xf32>
    %48 = vector.extract_strided_slice %45 {offsets = [0, 0, 0], sizes = [2, 8, 8], strides = [1, 1, 1]} : vector<2x8x32xf32> to vector<2x8x8xf32>
    %49 = vector.extract_strided_slice %46 {offsets = [0, 0, 0], sizes = [2, 8, 8], strides = [1, 1, 1]} : vector<2x8x32xf32> to vector<2x8x8xf32>
    %50 = vector.extract_strided_slice %47 {offsets = [0, 0, 0], sizes = [2, 8, 8], strides = [1, 1, 1]} : vector<2x8x32xf32> to vector<2x8x8xf32>
    "tpu.trace_start"() <{level = 10 : i32, message = "bqd,bkd->bqk"}> : () -> ()
    %cst_19 = arith.constant dense<0.000000e+00> : vector<2x8x8xf32>
    %51 = tpu.matmul %48, %49, %cst_19 {dimension_numbers = #tpu.dot_dimension_numbers<[2], [2], [1], [1], [0, 0, 0, 1, 1, 1], [0], [0]>} : vector<2x8x8xf32>, vector<2x8x8xf32>, vector<2x8x8xf32> -> vector<2x8x8xf32>
    "tpu.trace_stop"() : () -> ()
    %52 = arith.addf %51, %6 : vector<2x8x8xf32>
    %cst_20 = arith.constant dense<0xFF800000> : vector<2x8xf32>
    %53 = vector.multi_reduction <maximumf>, %52, %cst_20 [2] : vector<2x8x8xf32> to vector<2x8xf32>
    %54 = vector.shape_cast %53 : vector<2x8xf32> to vector<2x8x1xf32>
    %55 = vector.broadcast %54 : vector<2x8x1xf32> to vector<2x8x8xf32>
    %56 = arith.subf %52, %55 : vector<2x8x8xf32>
    %57 = math.exp %56 : vector<2x8x8xf32>
    %cst_21 = arith.constant dense<0.000000e+00> : vector<2x8xf32>
    %58 = vector.multi_reduction <add>, %57, %cst_21 [2] : vector<2x8x8xf32> to vector<2x8xf32>
    %59 = vector.shape_cast %58 : vector<2x8xf32> to vector<2x8x1xf32>
    %cst_22 = arith.constant 1.000000e+00 : f32
    %60 = vector.broadcast %cst_22 : f32 to vector<2x8x1xf32>
    %61 = arith.divf %60, %59 : vector<2x8x1xf32>
    %62 = vector.broadcast %61 : vector<2x8x1xf32> to vector<2x8x8xf32>
    %63 = arith.mulf %57, %62 : vector<2x8x8xf32>
    "tpu.trace_start"() <{level = 10 : i32, message = "bqk,bkd->bqd"}> : () -> ()
    %cst_23 = arith.constant dense<0.000000e+00> : vector<2x8x8xf32>
    %64 = tpu.matmul %63, %50, %cst_23 {dimension_numbers = #tpu.dot_dimension_numbers<[2], [1], [1], [2], [0, 0, 0, 1, 1, 2], [0], [0]>} : vector<2x8x8xf32>, vector<2x8x8xf32>, vector<2x8x8xf32> -> vector<2x8x8xf32>
    "tpu.trace_stop"() : () -> ()
    %65 = vector.shape_cast %64 : vector<2x8x8xf32> to vector<16x8xf32>
    %66 = vector.extract_strided_slice %43 {offsets = [0, 0], sizes = [8, 32], strides = [1, 1]} : vector<32x32xf32> to vector<8x32xf32>
    %cst_24 = arith.constant dense<0.000000e+00> : vector<16x32xf32>
    %67 = tpu.matmul %65, %66, %cst_24 {dimension_numbers = #tpu.dot_dimension_numbers<[1], [0], [0], [1], [0, 0, 1, 1], [], []>} : vector<16x8xf32>, vector<8x32xf32>, vector<16x32xf32> -> vector<16x32xf32>
    %68 = vector.broadcast %44 : vector<1x32xf32> to vector<16x32xf32>
    %69 = arith.addf %68, %67 : vector<16x32xf32>
    %70 = vector.extract_strided_slice %45 {offsets = [0, 0, 8], sizes = [2, 8, 8], strides = [1, 1, 1]} : vector<2x8x32xf32> to vector<2x8x8xf32>
    %71 = vector.extract_strided_slice %46 {offsets = [0, 0, 8], sizes = [2, 8, 8], strides = [1, 1, 1]} : vector<2x8x32xf32> to vector<2x8x8xf32>
    %72 = vector.extract_strided_slice %47 {offsets = [0, 0, 8], sizes = [2, 8, 8], strides = [1, 1, 1]} : vector<2x8x32xf32> to vector<2x8x8xf32>
    "tpu.trace_start"() <{level = 10 : i32, message = "bqd,bkd->bqk"}> : () -> ()
    %cst_25 = arith.constant dense<0.000000e+00> : vector<2x8x8xf32>
    %73 = tpu.matmul %70, %71, %cst_25 {dimension_numbers = #tpu.dot_dimension_numbers<[2], [2], [1], [1], [0, 0, 0, 1, 1, 1], [0], [0]>} : vector<2x8x8xf32>, vector<2x8x8xf32>, vector<2x8x8xf32> -> vector<2x8x8xf32>
    "tpu.trace_stop"() : () -> ()
    %74 = arith.addf %73, %6 : vector<2x8x8xf32>
    %cst_26 = arith.constant dense<0xFF800000> : vector<2x8xf32>
    %75 = vector.multi_reduction <maximumf>, %74, %cst_26 [2] : vector<2x8x8xf32> to vector<2x8xf32>
    %76 = vector.shape_cast %75 : vector<2x8xf32> to vector<2x8x1xf32>
    %77 = vector.broadcast %76 : vector<2x8x1xf32> to vector<2x8x8xf32>
    %78 = arith.subf %74, %77 : vector<2x8x8xf32>
    %79 = math.exp %78 : vector<2x8x8xf32>
    %cst_27 = arith.constant dense<0.000000e+00> : vector<2x8xf32>
    %80 = vector.multi_reduction <add>, %79, %cst_27 [2] : vector<2x8x8xf32> to vector<2x8xf32>
    %81 = vector.shape_cast %80 : vector<2x8xf32> to vector<2x8x1xf32>
    %cst_28 = arith.constant 1.000000e+00 : f32
    %82 = vector.broadcast %cst_28 : f32 to vector<2x8x1xf32>
    %83 = arith.divf %82, %81 : vector<2x8x1xf32>
    %84 = vector.broadcast %83 : vector<2x8x1xf32> to vector<2x8x8xf32>
    %85 = arith.mulf %79, %84 : vector<2x8x8xf32>
    "tpu.trace_start"() <{level = 10 : i32, message = "bqk,bkd->bqd"}> : () -> ()
    %cst_29 = arith.constant dense<0.000000e+00> : vector<2x8x8xf32>
    %86 = tpu.matmul %85, %72, %cst_29 {dimension_numbers = #tpu.dot_dimension_numbers<[2], [1], [1], [2], [0, 0, 0, 1, 1, 2], [0], [0]>} : vector<2x8x8xf32>, vector<2x8x8xf32>, vector<2x8x8xf32> -> vector<2x8x8xf32>
    "tpu.trace_stop"() : () -> ()
    %87 = vector.shape_cast %86 : vector<2x8x8xf32> to vector<16x8xf32>
    %88 = vector.extract_strided_slice %43 {offsets = [8, 0], sizes = [8, 32], strides = [1, 1]} : vector<32x32xf32> to vector<8x32xf32>
    %cst_30 = arith.constant dense<0.000000e+00> : vector<16x32xf32>
    %89 = tpu.matmul %87, %88, %cst_30 {dimension_numbers = #tpu.dot_dimension_numbers<[1], [0], [0], [1], [0, 0, 1, 1], [], []>} : vector<16x8xf32>, vector<8x32xf32>, vector<16x32xf32> -> vector<16x32xf32>
    %90 = arith.addf %69, %89 : vector<16x32xf32>
    %91 = vector.extract_strided_slice %45 {offsets = [0, 0, 16], sizes = [2, 8, 8], strides = [1, 1, 1]} : vector<2x8x32xf32> to vector<2x8x8xf32>
    %92 = vector.extract_strided_slice %46 {offsets = [0, 0, 16], sizes = [2, 8, 8], strides = [1, 1, 1]} : vector<2x8x32xf32> to vector<2x8x8xf32>
    %93 = vector.extract_strided_slice %47 {offsets = [0, 0, 16], sizes = [2, 8, 8], strides = [1, 1, 1]} : vector<2x8x32xf32> to vector<2x8x8xf32>
    "tpu.trace_start"() <{level = 10 : i32, message = "bqd,bkd->bqk"}> : () -> ()
    %cst_31 = arith.constant dense<0.000000e+00> : vector<2x8x8xf32>
    %94 = tpu.matmul %91, %92, %cst_31 {dimension_numbers = #tpu.dot_dimension_numbers<[2], [2], [1], [1], [0, 0, 0, 1, 1, 1], [0], [0]>} : vector<2x8x8xf32>, vector<2x8x8xf32>, vector<2x8x8xf32> -> vector<2x8x8xf32>
    "tpu.trace_stop"() : () -> ()
    %95 = arith.addf %94, %6 : vector<2x8x8xf32>
    %cst_32 = arith.constant dense<0xFF800000> : vector<2x8xf32>
    %96 = vector.multi_reduction <maximumf>, %95, %cst_32 [2] : vector<2x8x8xf32> to vector<2x8xf32>
    %97 = vector.shape_cast %96 : vector<2x8xf32> to vector<2x8x1xf32>
    %98 = vector.broadcast %97 : vector<2x8x1xf32> to vector<2x8x8xf32>
    %99 = arith.subf %95, %98 : vector<2x8x8xf32>
    %100 = math.exp %99 : vector<2x8x8xf32>
    %cst_33 = arith.constant dense<0.000000e+00> : vector<2x8xf32>
    %101 = vector.multi_reduction <add>, %100, %cst_33 [2] : vector<2x8x8xf32> to vector<2x8xf32>
    %102 = vector.shape_cast %101 : vector<2x8xf32> to vector<2x8x1xf32>
    %cst_34 = arith.constant 1.000000e+00 : f32
    %103 = vector.broadcast %cst_34 : f32 to vector<2x8x1xf32>
    %104 = arith.divf %103, %102 : vector<2x8x1xf32>
    %105 = vector.broadcast %104 : vector<2x8x1xf32> to vector<2x8x8xf32>
    %106 = arith.mulf %100, %105 : vector<2x8x8xf32>
    "tpu.trace_start"() <{level = 10 : i32, message = "bqk,bkd->bqd"}> : () -> ()
    %cst_35 = arith.constant dense<0.000000e+00> : vector<2x8x8xf32>
    %107 = tpu.matmul %106, %93, %cst_35 {dimension_numbers = #tpu.dot_dimension_numbers<[2], [1], [1], [2], [0, 0, 0, 1, 1, 2], [0], [0]>} : vector<2x8x8xf32>, vector<2x8x8xf32>, vector<2x8x8xf32> -> vector<2x8x8xf32>
    "tpu.trace_stop"() : () -> ()
    %108 = vector.shape_cast %107 : vector<2x8x8xf32> to vector<16x8xf32>
    %109 = vector.extract_strided_slice %43 {offsets = [16, 0], sizes = [8, 32], strides = [1, 1]} : vector<32x32xf32> to vector<8x32xf32>
    %cst_36 = arith.constant dense<0.000000e+00> : vector<16x32xf32>
    %110 = tpu.matmul %108, %109, %cst_36 {dimension_numbers = #tpu.dot_dimension_numbers<[1], [0], [0], [1], [0, 0, 1, 1], [], []>} : vector<16x8xf32>, vector<8x32xf32>, vector<16x32xf32> -> vector<16x32xf32>
    %111 = arith.addf %90, %110 : vector<16x32xf32>
    %112 = vector.extract_strided_slice %45 {offsets = [0, 0, 24], sizes = [2, 8, 8], strides = [1, 1, 1]} : vector<2x8x32xf32> to vector<2x8x8xf32>
    %113 = vector.extract_strided_slice %46 {offsets = [0, 0, 24], sizes = [2, 8, 8], strides = [1, 1, 1]} : vector<2x8x32xf32> to vector<2x8x8xf32>
    %114 = vector.extract_strided_slice %47 {offsets = [0, 0, 24], sizes = [2, 8, 8], strides = [1, 1, 1]} : vector<2x8x32xf32> to vector<2x8x8xf32>
    "tpu.trace_start"() <{level = 10 : i32, message = "bqd,bkd->bqk"}> : () -> ()
    %cst_37 = arith.constant dense<0.000000e+00> : vector<2x8x8xf32>
    %115 = tpu.matmul %112, %113, %cst_37 {dimension_numbers = #tpu.dot_dimension_numbers<[2], [2], [1], [1], [0, 0, 0, 1, 1, 1], [0], [0]>} : vector<2x8x8xf32>, vector<2x8x8xf32>, vector<2x8x8xf32> -> vector<2x8x8xf32>
    "tpu.trace_stop"() : () -> ()
    %116 = arith.addf %115, %6 : vector<2x8x8xf32>
    %cst_38 = arith.constant dense<0xFF800000> : vector<2x8xf32>
    %117 = vector.multi_reduction <maximumf>, %116, %cst_38 [2] : vector<2x8x8xf32> to vector<2x8xf32>
    %118 = vector.shape_cast %117 : vector<2x8xf32> to vector<2x8x1xf32>
    %119 = vector.broadcast %118 : vector<2x8x1xf32> to vector<2x8x8xf32>
    %120 = arith.subf %116, %119 : vector<2x8x8xf32>
    %121 = math.exp %120 : vector<2x8x8xf32>
    %cst_39 = arith.constant dense<0.000000e+00> : vector<2x8xf32>
    %122 = vector.multi_reduction <add>, %121, %cst_39 [2] : vector<2x8x8xf32> to vector<2x8xf32>
    %123 = vector.shape_cast %122 : vector<2x8xf32> to vector<2x8x1xf32>
    %cst_40 = arith.constant 1.000000e+00 : f32
    %124 = vector.broadcast %cst_40 : f32 to vector<2x8x1xf32>
    %125 = arith.divf %124, %123 : vector<2x8x1xf32>
    %126 = vector.broadcast %125 : vector<2x8x1xf32> to vector<2x8x8xf32>
    %127 = arith.mulf %121, %126 : vector<2x8x8xf32>
    "tpu.trace_start"() <{level = 10 : i32, message = "bqk,bkd->bqd"}> : () -> ()
    %cst_41 = arith.constant dense<0.000000e+00> : vector<2x8x8xf32>
    %128 = tpu.matmul %127, %114, %cst_41 {dimension_numbers = #tpu.dot_dimension_numbers<[2], [1], [1], [2], [0, 0, 0, 1, 1, 2], [0], [0]>} : vector<2x8x8xf32>, vector<2x8x8xf32>, vector<2x8x8xf32> -> vector<2x8x8xf32>
    "tpu.trace_stop"() : () -> ()
    %129 = vector.shape_cast %128 : vector<2x8x8xf32> to vector<16x8xf32>
    %130 = vector.extract_strided_slice %43 {offsets = [24, 0], sizes = [8, 32], strides = [1, 1]} : vector<32x32xf32> to vector<8x32xf32>
    %cst_42 = arith.constant dense<0.000000e+00> : vector<16x32xf32>
    %131 = tpu.matmul %129, %130, %cst_42 {dimension_numbers = #tpu.dot_dimension_numbers<[1], [0], [0], [1], [0, 0, 1, 1], [], []>} : vector<16x8xf32>, vector<8x32xf32>, vector<16x32xf32> -> vector<16x32xf32>
    %132 = arith.addf %111, %131 : vector<16x32xf32>
    %133 = arith.addf %1, %132 : vector<16x32xf32>
    %134 = vector.extract_strided_slice %9 {offsets = [1, 0], sizes = [1, 32], strides = [1, 1]} : vector<3x32xf32> to vector<1x32xf32>
    %135 = vector.extract_strided_slice %10 {offsets = [1, 0], sizes = [1, 32], strides = [1, 1]} : vector<3x32xf32> to vector<1x32xf32>
    %cst_43 = arith.constant dense<0.000000e+00> : vector<16xf32>
    %136 = vector.multi_reduction <add>, %133, %cst_43 [1] : vector<16x32xf32> to vector<16xf32>
    %137 = vector.shape_cast %136 : vector<16xf32> to vector<16x1xf32>
    %cst_44 = arith.constant 3.125000e-02 : f32
    %138 = vector.broadcast %cst_44 : f32 to vector<16x1xf32>
    %139 = arith.mulf %137, %138 : vector<16x1xf32>
    %140 = vector.broadcast %139 : vector<16x1xf32> to vector<16x32xf32>
    %141 = arith.subf %133, %140 : vector<16x32xf32>
    %142 = arith.mulf %141, %141 : vector<16x32xf32>
    %cst_45 = arith.constant dense<0.000000e+00> : vector<16xf32>
    %143 = vector.multi_reduction <add>, %142, %cst_45 [1] : vector<16x32xf32> to vector<16xf32>
    %144 = vector.shape_cast %143 : vector<16xf32> to vector<16x1xf32>
    %cst_46 = arith.constant 0.0322580636 : f32
    %145 = vector.broadcast %cst_46 : f32 to vector<16x1xf32>
    %146 = arith.mulf %144, %145 : vector<16x1xf32>
    %147 = math.sqrt %146 : vector<16x1xf32>
    %cst_47 = arith.constant 1.000000e-16 : f32
    %148 = vector.broadcast %cst_47 : f32 to vector<16x1xf32>
    %149 = arith.addf %147, %148 : vector<16x1xf32>
    %cst_48 = arith.constant 1.000000e+00 : f32
    %150 = vector.broadcast %cst_48 : f32 to vector<16x1xf32>
    %151 = arith.divf %150, %149 : vector<16x1xf32>
    %152 = vector.broadcast %151 : vector<16x1xf32> to vector<16x32xf32>
    %153 = arith.mulf %141, %152 : vector<16x32xf32>
    %154 = vector.broadcast %134 : vector<1x32xf32> to vector<16x32xf32>
    %155 = arith.mulf %154, %153 : vector<16x32xf32>
    %156 = vector.broadcast %135 : vector<1x32xf32> to vector<16x32xf32>
    %157 = arith.addf %155, %156 : vector<16x32xf32>
    %c96 = arith.constant 96 : index
    %c0_49 = arith.constant 0 : index
    %158 = vector.load %arg2[%c96, %c0_49] : memref<688x128xf32, #tpu.memory_space<vmem>>, vector<32x32xf32>
    %cst_50 = arith.constant dense<0.000000e+00> : vector<16x32xf32>
    %159 = tpu.matmul %157, %158, %cst_50 {dimension_numbers = #tpu.dot_dimension_numbers<[1], [0], [0], [1], [0, 0, 1, 1], [], []>} : vector<16x32xf32>, vector<32x32xf32>, vector<16x32xf32> -> vector<16x32xf32>
    %c128 = arith.constant 128 : index
    %c0_51 = arith.constant 0 : index
    %160 = vector.load %arg2[%c128, %c0_51] : memref<688x128xf32, #tpu.memory_space<vmem>>, vector<1x32xf32>
    %161 = vector.broadcast %160 : vector<1x32xf32> to vector<16x32xf32>
    %162 = arith.addf %159, %161 : vector<16x32xf32>
    %c136 = arith.constant 136 : index
    %c0_52 = arith.constant 0 : index
    %163 = vector.load %arg2[%c136, %c0_52] : memref<688x128xf32, #tpu.memory_space<vmem>>, vector<32x64xf32>
    %cst_53 = arith.constant dense<0.000000e+00> : vector<16x64xf32>
    %164 = tpu.matmul %3, %163, %cst_53 {dimension_numbers = #tpu.dot_dimension_numbers<[1], [0], [0], [1], [0, 0, 1, 1], [], []>} : vector<16x32xf32>, vector<32x64xf32>, vector<16x64xf32> -> vector<16x64xf32>
    %c168 = arith.constant 168 : index
    %c0_54 = arith.constant 0 : index
    %165 = vector.load %arg2[%c168, %c0_54] : memref<688x128xf32, #tpu.memory_space<vmem>>, vector<1x64xf32>
    %166 = vector.broadcast %165 : vector<1x64xf32> to vector<16x64xf32>
    %167 = arith.addf %164, %166 : vector<16x64xf32>
    %168 = vector.extract_strided_slice %167 {offsets = [0, 0], sizes = [16, 32], strides = [1, 1]} : vector<16x64xf32> to vector<16x32xf32>
    %169 = vector.extract_strided_slice %167 {offsets = [0, 32], sizes = [16, 32], strides = [1, 1]} : vector<16x64xf32> to vector<16x32xf32>
    %c176 = arith.constant 176 : index
    %c0_55 = arith.constant 0 : index
    %170 = vector.load %arg2[%c176, %c0_55] : memref<688x128xf32, #tpu.memory_space<vmem>>, vector<32x32xf32>
    %c208 = arith.constant 208 : index
    %c0_56 = arith.constant 0 : index
    %171 = vector.load %arg2[%c208, %c0_56] : memref<688x128xf32, #tpu.memory_space<vmem>>, vector<1x32xf32>
    %172 = vector.shape_cast %162 : vector<16x32xf32> to vector<2x8x32xf32>
    %173 = vector.shape_cast %168 : vector<16x32xf32> to vector<2x8x32xf32>
    %174 = vector.shape_cast %169 : vector<16x32xf32> to vector<2x8x32xf32>
    %175 = vector.extract_strided_slice %172 {offsets = [0, 0, 0], sizes = [2, 8, 8], strides = [1, 1, 1]} : vector<2x8x32xf32> to vector<2x8x8xf32>
    %176 = vector.extract_strided_slice %173 {offsets = [0, 0, 0], sizes = [2, 8, 8], strides = [1, 1, 1]} : vector<2x8x32xf32> to vector<2x8x8xf32>
    %177 = vector.extract_strided_slice %174 {offsets = [0, 0, 0], sizes = [2, 8, 8], strides = [1, 1, 1]} : vector<2x8x32xf32> to vector<2x8x8xf32>
    "tpu.trace_start"() <{level = 10 : i32, message = "bqd,bkd->bqk"}> : () -> ()
    %cst_57 = arith.constant dense<0.000000e+00> : vector<2x8x8xf32>
    %178 = tpu.matmul %175, %176, %cst_57 {dimension_numbers = #tpu.dot_dimension_numbers<[2], [2], [1], [1], [0, 0, 0, 1, 1, 1], [0], [0]>} : vector<2x8x8xf32>, vector<2x8x8xf32>, vector<2x8x8xf32> -> vector<2x8x8xf32>
    "tpu.trace_stop"() : () -> ()
    %179 = arith.addf %178, %8 : vector<2x8x8xf32>
    %cst_58 = arith.constant dense<0xFF800000> : vector<2x8xf32>
    %180 = vector.multi_reduction <maximumf>, %179, %cst_58 [2] : vector<2x8x8xf32> to vector<2x8xf32>
    %181 = vector.shape_cast %180 : vector<2x8xf32> to vector<2x8x1xf32>
    %182 = vector.broadcast %181 : vector<2x8x1xf32> to vector<2x8x8xf32>
    %183 = arith.subf %179, %182 : vector<2x8x8xf32>
    %184 = math.exp %183 : vector<2x8x8xf32>
    %cst_59 = arith.constant dense<0.000000e+00> : vector<2x8xf32>
    %185 = vector.multi_reduction <add>, %184, %cst_59 [2] : vector<2x8x8xf32> to vector<2x8xf32>
    %186 = vector.shape_cast %185 : vector<2x8xf32> to vector<2x8x1xf32>
    %cst_60 = arith.constant 1.000000e+00 : f32
    %187 = vector.broadcast %cst_60 : f32 to vector<2x8x1xf32>
    %188 = arith.divf %187, %186 : vector<2x8x1xf32>
    %189 = vector.broadcast %188 : vector<2x8x1xf32> to vector<2x8x8xf32>
    %190 = arith.mulf %184, %189 : vector<2x8x8xf32>
    "tpu.trace_start"() <{level = 10 : i32, message = "bqk,bkd->bqd"}> : () -> ()
    %cst_61 = arith.constant dense<0.000000e+00> : vector<2x8x8xf32>
    %191 = tpu.matmul %190, %177, %cst_61 {dimension_numbers = #tpu.dot_dimension_numbers<[2], [1], [1], [2], [0, 0, 0, 1, 1, 2], [0], [0]>} : vector<2x8x8xf32>, vector<2x8x8xf32>, vector<2x8x8xf32> -> vector<2x8x8xf32>
    "tpu.trace_stop"() : () -> ()
    %192 = vector.shape_cast %191 : vector<2x8x8xf32> to vector<16x8xf32>
    %193 = vector.extract_strided_slice %170 {offsets = [0, 0], sizes = [8, 32], strides = [1, 1]} : vector<32x32xf32> to vector<8x32xf32>
    %cst_62 = arith.constant dense<0.000000e+00> : vector<16x32xf32>
    %194 = tpu.matmul %192, %193, %cst_62 {dimension_numbers = #tpu.dot_dimension_numbers<[1], [0], [0], [1], [0, 0, 1, 1], [], []>} : vector<16x8xf32>, vector<8x32xf32>, vector<16x32xf32> -> vector<16x32xf32>
    %195 = vector.broadcast %171 : vector<1x32xf32> to vector<16x32xf32>
    %196 = arith.addf %195, %194 : vector<16x32xf32>
    %197 = vector.extract_strided_slice %172 {offsets = [0, 0, 8], sizes = [2, 8, 8], strides = [1, 1, 1]} : vector<2x8x32xf32> to vector<2x8x8xf32>
    %198 = vector.extract_strided_slice %173 {offsets = [0, 0, 8], sizes = [2, 8, 8], strides = [1, 1, 1]} : vector<2x8x32xf32> to vector<2x8x8xf32>
    %199 = vector.extract_strided_slice %174 {offsets = [0, 0, 8], sizes = [2, 8, 8], strides = [1, 1, 1]} : vector<2x8x32xf32> to vector<2x8x8xf32>
    "tpu.trace_start"() <{level = 10 : i32, message = "bqd,bkd->bqk"}> : () -> ()
    %cst_63 = arith.constant dense<0.000000e+00> : vector<2x8x8xf32>
    %200 = tpu.matmul %197, %198, %cst_63 {dimension_numbers = #tpu.dot_dimension_numbers<[2], [2], [1], [1], [0, 0, 0, 1, 1, 1], [0], [0]>} : vector<2x8x8xf32>, vector<2x8x8xf32>, vector<2x8x8xf32> -> vector<2x8x8xf32>
    "tpu.trace_stop"() : () -> ()
    %201 = arith.addf %200, %8 : vector<2x8x8xf32>
    %cst_64 = arith.constant dense<0xFF800000> : vector<2x8xf32>
    %202 = vector.multi_reduction <maximumf>, %201, %cst_64 [2] : vector<2x8x8xf32> to vector<2x8xf32>
    %203 = vector.shape_cast %202 : vector<2x8xf32> to vector<2x8x1xf32>
    %204 = vector.broadcast %203 : vector<2x8x1xf32> to vector<2x8x8xf32>
    %205 = arith.subf %201, %204 : vector<2x8x8xf32>
    %206 = math.exp %205 : vector<2x8x8xf32>
    %cst_65 = arith.constant dense<0.000000e+00> : vector<2x8xf32>
    %207 = vector.multi_reduction <add>, %206, %cst_65 [2] : vector<2x8x8xf32> to vector<2x8xf32>
    %208 = vector.shape_cast %207 : vector<2x8xf32> to vector<2x8x1xf32>
    %cst_66 = arith.constant 1.000000e+00 : f32
    %209 = vector.broadcast %cst_66 : f32 to vector<2x8x1xf32>
    %210 = arith.divf %209, %208 : vector<2x8x1xf32>
    %211 = vector.broadcast %210 : vector<2x8x1xf32> to vector<2x8x8xf32>
    %212 = arith.mulf %206, %211 : vector<2x8x8xf32>
    "tpu.trace_start"() <{level = 10 : i32, message = "bqk,bkd->bqd"}> : () -> ()
    %cst_67 = arith.constant dense<0.000000e+00> : vector<2x8x8xf32>
    %213 = tpu.matmul %212, %199, %cst_67 {dimension_numbers = #tpu.dot_dimension_numbers<[2], [1], [1], [2], [0, 0, 0, 1, 1, 2], [0], [0]>} : vector<2x8x8xf32>, vector<2x8x8xf32>, vector<2x8x8xf32> -> vector<2x8x8xf32>
    "tpu.trace_stop"() : () -> ()
    %214 = vector.shape_cast %213 : vector<2x8x8xf32> to vector<16x8xf32>
    %215 = vector.extract_strided_slice %170 {offsets = [8, 0], sizes = [8, 32], strides = [1, 1]} : vector<32x32xf32> to vector<8x32xf32>
    %cst_68 = arith.constant dense<0.000000e+00> : vector<16x32xf32>
    %216 = tpu.matmul %214, %215, %cst_68 {dimension_numbers = #tpu.dot_dimension_numbers<[1], [0], [0], [1], [0, 0, 1, 1], [], []>} : vector<16x8xf32>, vector<8x32xf32>, vector<16x32xf32> -> vector<16x32xf32>
    %217 = arith.addf %196, %216 : vector<16x32xf32>
    %218 = vector.extract_strided_slice %172 {offsets = [0, 0, 16], sizes = [2, 8, 8], strides = [1, 1, 1]} : vector<2x8x32xf32> to vector<2x8x8xf32>
    %219 = vector.extract_strided_slice %173 {offsets = [0, 0, 16], sizes = [2, 8, 8], strides = [1, 1, 1]} : vector<2x8x32xf32> to vector<2x8x8xf32>
    %220 = vector.extract_strided_slice %174 {offsets = [0, 0, 16], sizes = [2, 8, 8], strides = [1, 1, 1]} : vector<2x8x32xf32> to vector<2x8x8xf32>
    "tpu.trace_start"() <{level = 10 : i32, message = "bqd,bkd->bqk"}> : () -> ()
    %cst_69 = arith.constant dense<0.000000e+00> : vector<2x8x8xf32>
    %221 = tpu.matmul %218, %219, %cst_69 {dimension_numbers = #tpu.dot_dimension_numbers<[2], [2], [1], [1], [0, 0, 0, 1, 1, 1], [0], [0]>} : vector<2x8x8xf32>, vector<2x8x8xf32>, vector<2x8x8xf32> -> vector<2x8x8xf32>
    "tpu.trace_stop"() : () -> ()
    %222 = arith.addf %221, %8 : vector<2x8x8xf32>
    %cst_70 = arith.constant dense<0xFF800000> : vector<2x8xf32>
    %223 = vector.multi_reduction <maximumf>, %222, %cst_70 [2] : vector<2x8x8xf32> to vector<2x8xf32>
    %224 = vector.shape_cast %223 : vector<2x8xf32> to vector<2x8x1xf32>
    %225 = vector.broadcast %224 : vector<2x8x1xf32> to vector<2x8x8xf32>
    %226 = arith.subf %222, %225 : vector<2x8x8xf32>
    %227 = math.exp %226 : vector<2x8x8xf32>
    %cst_71 = arith.constant dense<0.000000e+00> : vector<2x8xf32>
    %228 = vector.multi_reduction <add>, %227, %cst_71 [2] : vector<2x8x8xf32> to vector<2x8xf32>
    %229 = vector.shape_cast %228 : vector<2x8xf32> to vector<2x8x1xf32>
    %cst_72 = arith.constant 1.000000e+00 : f32
    %230 = vector.broadcast %cst_72 : f32 to vector<2x8x1xf32>
    %231 = arith.divf %230, %229 : vector<2x8x1xf32>
    %232 = vector.broadcast %231 : vector<2x8x1xf32> to vector<2x8x8xf32>
    %233 = arith.mulf %227, %232 : vector<2x8x8xf32>
    "tpu.trace_start"() <{level = 10 : i32, message = "bqk,bkd->bqd"}> : () -> ()
    %cst_73 = arith.constant dense<0.000000e+00> : vector<2x8x8xf32>
    %234 = tpu.matmul %233, %220, %cst_73 {dimension_numbers = #tpu.dot_dimension_numbers<[2], [1], [1], [2], [0, 0, 0, 1, 1, 2], [0], [0]>} : vector<2x8x8xf32>, vector<2x8x8xf32>, vector<2x8x8xf32> -> vector<2x8x8xf32>
    "tpu.trace_stop"() : () -> ()
    %235 = vector.shape_cast %234 : vector<2x8x8xf32> to vector<16x8xf32>
    %236 = vector.extract_strided_slice %170 {offsets = [16, 0], sizes = [8, 32], strides = [1, 1]} : vector<32x32xf32> to vector<8x32xf32>
    %cst_74 = arith.constant dense<0.000000e+00> : vector<16x32xf32>
    %237 = tpu.matmul %235, %236, %cst_74 {dimension_numbers = #tpu.dot_dimension_numbers<[1], [0], [0], [1], [0, 0, 1, 1], [], []>} : vector<16x8xf32>, vector<8x32xf32>, vector<16x32xf32> -> vector<16x32xf32>
    %238 = arith.addf %217, %237 : vector<16x32xf32>
    %239 = vector.extract_strided_slice %172 {offsets = [0, 0, 24], sizes = [2, 8, 8], strides = [1, 1, 1]} : vector<2x8x32xf32> to vector<2x8x8xf32>
    %240 = vector.extract_strided_slice %173 {offsets = [0, 0, 24], sizes = [2, 8, 8], strides = [1, 1, 1]} : vector<2x8x32xf32> to vector<2x8x8xf32>
    %241 = vector.extract_strided_slice %174 {offsets = [0, 0, 24], sizes = [2, 8, 8], strides = [1, 1, 1]} : vector<2x8x32xf32> to vector<2x8x8xf32>
    "tpu.trace_start"() <{level = 10 : i32, message = "bqd,bkd->bqk"}> : () -> ()
    %cst_75 = arith.constant dense<0.000000e+00> : vector<2x8x8xf32>
    %242 = tpu.matmul %239, %240, %cst_75 {dimension_numbers = #tpu.dot_dimension_numbers<[2], [2], [1], [1], [0, 0, 0, 1, 1, 1], [0], [0]>} : vector<2x8x8xf32>, vector<2x8x8xf32>, vector<2x8x8xf32> -> vector<2x8x8xf32>
    "tpu.trace_stop"() : () -> ()
    %243 = arith.addf %242, %8 : vector<2x8x8xf32>
    %cst_76 = arith.constant dense<0xFF800000> : vector<2x8xf32>
    %244 = vector.multi_reduction <maximumf>, %243, %cst_76 [2] : vector<2x8x8xf32> to vector<2x8xf32>
    %245 = vector.shape_cast %244 : vector<2x8xf32> to vector<2x8x1xf32>
    %246 = vector.broadcast %245 : vector<2x8x1xf32> to vector<2x8x8xf32>
    %247 = arith.subf %243, %246 : vector<2x8x8xf32>
    %248 = math.exp %247 : vector<2x8x8xf32>
    %cst_77 = arith.constant dense<0.000000e+00> : vector<2x8xf32>
    %249 = vector.multi_reduction <add>, %248, %cst_77 [2] : vector<2x8x8xf32> to vector<2x8xf32>
    %250 = vector.shape_cast %249 : vector<2x8xf32> to vector<2x8x1xf32>
    %cst_78 = arith.constant 1.000000e+00 : f32
    %251 = vector.broadcast %cst_78 : f32 to vector<2x8x1xf32>
    %252 = arith.divf %251, %250 : vector<2x8x1xf32>
    %253 = vector.broadcast %252 : vector<2x8x1xf32> to vector<2x8x8xf32>
    %254 = arith.mulf %248, %253 : vector<2x8x8xf32>
    "tpu.trace_start"() <{level = 10 : i32, message = "bqk,bkd->bqd"}> : () -> ()
    %cst_79 = arith.constant dense<0.000000e+00> : vector<2x8x8xf32>
    %255 = tpu.matmul %254, %241, %cst_79 {dimension_numbers = #tpu.dot_dimension_numbers<[2], [1], [1], [2], [0, 0, 0, 1, 1, 2], [0], [0]>} : vector<2x8x8xf32>, vector<2x8x8xf32>, vector<2x8x8xf32> -> vector<2x8x8xf32>
    "tpu.trace_stop"() : () -> ()
    %256 = vector.shape_cast %255 : vector<2x8x8xf32> to vector<16x8xf32>
    %257 = vector.extract_strided_slice %170 {offsets = [24, 0], sizes = [8, 32], strides = [1, 1]} : vector<32x32xf32> to vector<8x32xf32>
    %cst_80 = arith.constant dense<0.000000e+00> : vector<16x32xf32>
    %258 = tpu.matmul %256, %257, %cst_80 {dimension_numbers = #tpu.dot_dimension_numbers<[1], [0], [0], [1], [0, 0, 1, 1], [], []>} : vector<16x8xf32>, vector<8x32xf32>, vector<16x32xf32> -> vector<16x32xf32>
    %259 = arith.addf %238, %258 : vector<16x32xf32>
    %260 = arith.addf %133, %259 : vector<16x32xf32>
    %261 = vector.extract_strided_slice %9 {offsets = [2, 0], sizes = [1, 32], strides = [1, 1]} : vector<3x32xf32> to vector<1x32xf32>
    %262 = vector.extract_strided_slice %10 {offsets = [2, 0], sizes = [1, 32], strides = [1, 1]} : vector<3x32xf32> to vector<1x32xf32>
    %cst_81 = arith.constant dense<0.000000e+00> : vector<16xf32>
    %263 = vector.multi_reduction <add>, %260, %cst_81 [1] : vector<16x32xf32> to vector<16xf32>
    %264 = vector.shape_cast %263 : vector<16xf32> to vector<16x1xf32>
    %cst_82 = arith.constant 3.125000e-02 : f32
    %265 = vector.broadcast %cst_82 : f32 to vector<16x1xf32>
    %266 = arith.mulf %264, %265 : vector<16x1xf32>
    %267 = vector.broadcast %266 : vector<16x1xf32> to vector<16x32xf32>
    %268 = arith.subf %260, %267 : vector<16x32xf32>
    %269 = arith.mulf %268, %268 : vector<16x32xf32>
    %cst_83 = arith.constant dense<0.000000e+00> : vector<16xf32>
    %270 = vector.multi_reduction <add>, %269, %cst_83 [1] : vector<16x32xf32> to vector<16xf32>
    %271 = vector.shape_cast %270 : vector<16xf32> to vector<16x1xf32>
    %cst_84 = arith.constant 0.0322580636 : f32
    %272 = vector.broadcast %cst_84 : f32 to vector<16x1xf32>
    %273 = arith.mulf %271, %272 : vector<16x1xf32>
    %274 = math.sqrt %273 : vector<16x1xf32>
    %cst_85 = arith.constant 1.000000e-16 : f32
    %275 = vector.broadcast %cst_85 : f32 to vector<16x1xf32>
    %276 = arith.addf %274, %275 : vector<16x1xf32>
    %cst_86 = arith.constant 1.000000e+00 : f32
    %277 = vector.broadcast %cst_86 : f32 to vector<16x1xf32>
    %278 = arith.divf %277, %276 : vector<16x1xf32>
    %279 = vector.broadcast %278 : vector<16x1xf32> to vector<16x32xf32>
    %280 = arith.mulf %268, %279 : vector<16x32xf32>
    %281 = vector.broadcast %261 : vector<1x32xf32> to vector<16x32xf32>
    %282 = arith.mulf %281, %280 : vector<16x32xf32>
    %283 = vector.broadcast %262 : vector<1x32xf32> to vector<16x32xf32>
    %284 = arith.addf %282, %283 : vector<16x32xf32>
    %c216 = arith.constant 216 : index
    %c0_87 = arith.constant 0 : index
    %285 = vector.load %arg2[%c216, %c0_87] : memref<688x128xf32, #tpu.memory_space<vmem>>, vector<32x64xf32>
    %cst_88 = arith.constant dense<0.000000e+00> : vector<16x64xf32>
    %286 = tpu.matmul %284, %285, %cst_88 {dimension_numbers = #tpu.dot_dimension_numbers<[1], [0], [0], [1], [0, 0, 1, 1], [], []>} : vector<16x32xf32>, vector<32x64xf32>, vector<16x64xf32> -> vector<16x64xf32>
    %c248 = arith.constant 248 : index
    %c0_89 = arith.constant 0 : index
    %287 = vector.load %arg2[%c248, %c0_89] : memref<688x128xf32, #tpu.memory_space<vmem>>, vector<1x64xf32>
    %288 = vector.broadcast %287 : vector<1x64xf32> to vector<16x64xf32>
    %289 = arith.addf %286, %288 : vector<16x64xf32>
    %cst_90 = arith.constant 0.000000e+00 : f32
    %290 = vector.broadcast %cst_90 : f32 to vector<16x64xf32>
    %291 = arith.maximumf %289, %290 : vector<16x64xf32>
    %c256 = arith.constant 256 : index
    %c0_91 = arith.constant 0 : index
    %292 = vector.load %arg2[%c256, %c0_91] : memref<688x128xf32, #tpu.memory_space<vmem>>, vector<64x32xf32>
    %cst_92 = arith.constant dense<0.000000e+00> : vector<16x32xf32>
    %293 = tpu.matmul %291, %292, %cst_92 {dimension_numbers = #tpu.dot_dimension_numbers<[1], [0], [0], [1], [0, 0, 1, 1], [], []>} : vector<16x64xf32>, vector<64x32xf32>, vector<16x32xf32> -> vector<16x32xf32>
    %294 = arith.addf %260, %293 : vector<16x32xf32>
    %c320 = arith.constant 320 : index
    %c0_93 = arith.constant 0 : index
    %295 = vector.load %arg2[%c320, %c0_93] : memref<688x128xf32, #tpu.memory_space<vmem>>, vector<1x32xf32>
    %296 = vector.broadcast %295 : vector<1x32xf32> to vector<16x32xf32>
    %297 = arith.addf %294, %296 : vector<16x32xf32>
    %c328 = arith.constant 328 : index
    %c0_94 = arith.constant 0 : index
    %298 = vector.load %arg2[%c328, %c0_94] : memref<688x128xf32, #tpu.memory_space<vmem>>, vector<3x32xf32>
    %c336 = arith.constant 336 : index
    %c0_95 = arith.constant 0 : index
    %299 = vector.load %arg2[%c336, %c0_95] : memref<688x128xf32, #tpu.memory_space<vmem>>, vector<3x32xf32>
    %300 = vector.extract_strided_slice %298 {offsets = [0, 0], sizes = [1, 32], strides = [1, 1]} : vector<3x32xf32> to vector<1x32xf32>
    %301 = vector.extract_strided_slice %299 {offsets = [0, 0], sizes = [1, 32], strides = [1, 1]} : vector<3x32xf32> to vector<1x32xf32>
    %cst_96 = arith.constant dense<0.000000e+00> : vector<16xf32>
    %302 = vector.multi_reduction <add>, %297, %cst_96 [1] : vector<16x32xf32> to vector<16xf32>
    %303 = vector.shape_cast %302 : vector<16xf32> to vector<16x1xf32>
    %cst_97 = arith.constant 3.125000e-02 : f32
    %304 = vector.broadcast %cst_97 : f32 to vector<16x1xf32>
    %305 = arith.mulf %303, %304 : vector<16x1xf32>
    %306 = vector.broadcast %305 : vector<16x1xf32> to vector<16x32xf32>
    %307 = arith.subf %297, %306 : vector<16x32xf32>
    %308 = arith.mulf %307, %307 : vector<16x32xf32>
    %cst_98 = arith.constant dense<0.000000e+00> : vector<16xf32>
    %309 = vector.multi_reduction <add>, %308, %cst_98 [1] : vector<16x32xf32> to vector<16xf32>
    %310 = vector.shape_cast %309 : vector<16xf32> to vector<16x1xf32>
    %cst_99 = arith.constant 0.0322580636 : f32
    %311 = vector.broadcast %cst_99 : f32 to vector<16x1xf32>
    %312 = arith.mulf %310, %311 : vector<16x1xf32>
    %313 = math.sqrt %312 : vector<16x1xf32>
    %cst_100 = arith.constant 1.000000e-16 : f32
    %314 = vector.broadcast %cst_100 : f32 to vector<16x1xf32>
    %315 = arith.addf %313, %314 : vector<16x1xf32>
    %cst_101 = arith.constant 1.000000e+00 : f32
    %316 = vector.broadcast %cst_101 : f32 to vector<16x1xf32>
    %317 = arith.divf %316, %315 : vector<16x1xf32>
    %318 = vector.broadcast %317 : vector<16x1xf32> to vector<16x32xf32>
    %319 = arith.mulf %307, %318 : vector<16x32xf32>
    %320 = vector.broadcast %300 : vector<1x32xf32> to vector<16x32xf32>
    %321 = arith.mulf %320, %319 : vector<16x32xf32>
    %322 = vector.broadcast %301 : vector<1x32xf32> to vector<16x32xf32>
    %323 = arith.addf %321, %322 : vector<16x32xf32>
    %c344 = arith.constant 344 : index
    %c0_102 = arith.constant 0 : index
    %324 = vector.load %arg2[%c344, %c0_102] : memref<688x128xf32, #tpu.memory_space<vmem>>, vector<32x96xf32>
    %cst_103 = arith.constant dense<0.000000e+00> : vector<16x96xf32>
    %325 = tpu.matmul %323, %324, %cst_103 {dimension_numbers = #tpu.dot_dimension_numbers<[1], [0], [0], [1], [0, 0, 1, 1], [], []>} : vector<16x32xf32>, vector<32x96xf32>, vector<16x96xf32> -> vector<16x96xf32>
    %c376 = arith.constant 376 : index
    %c0_104 = arith.constant 0 : index
    %326 = vector.load %arg2[%c376, %c0_104] : memref<688x128xf32, #tpu.memory_space<vmem>>, vector<1x96xf32>
    %327 = vector.broadcast %326 : vector<1x96xf32> to vector<16x96xf32>
    %328 = arith.addf %325, %327 : vector<16x96xf32>
    %329 = vector.extract_strided_slice %328 {offsets = [0, 0], sizes = [16, 32], strides = [1, 1]} : vector<16x96xf32> to vector<16x32xf32>
    %330 = vector.extract_strided_slice %328 {offsets = [0, 32], sizes = [16, 32], strides = [1, 1]} : vector<16x96xf32> to vector<16x32xf32>
    %331 = vector.extract_strided_slice %328 {offsets = [0, 64], sizes = [16, 32], strides = [1, 1]} : vector<16x96xf32> to vector<16x32xf32>
    %c384 = arith.constant 384 : index
    %c0_105 = arith.constant 0 : index
    %332 = vector.load %arg2[%c384, %c0_105] : memref<688x128xf32, #tpu.memory_space<vmem>>, vector<32x32xf32>
    %c416 = arith.constant 416 : index
    %c0_106 = arith.constant 0 : index
    %333 = vector.load %arg2[%c416, %c0_106] : memref<688x128xf32, #tpu.memory_space<vmem>>, vector<1x32xf32>
    %334 = vector.shape_cast %329 : vector<16x32xf32> to vector<2x8x32xf32>
    %335 = vector.shape_cast %330 : vector<16x32xf32> to vector<2x8x32xf32>
    %336 = vector.shape_cast %331 : vector<16x32xf32> to vector<2x8x32xf32>
    %337 = vector.extract_strided_slice %334 {offsets = [0, 0, 0], sizes = [2, 8, 8], strides = [1, 1, 1]} : vector<2x8x32xf32> to vector<2x8x8xf32>
    %338 = vector.extract_strided_slice %335 {offsets = [0, 0, 0], sizes = [2, 8, 8], strides = [1, 1, 1]} : vector<2x8x32xf32> to vector<2x8x8xf32>
    %339 = vector.extract_strided_slice %336 {offsets = [0, 0, 0], sizes = [2, 8, 8], strides = [1, 1, 1]} : vector<2x8x32xf32> to vector<2x8x8xf32>
    "tpu.trace_start"() <{level = 10 : i32, message = "bqd,bkd->bqk"}> : () -> ()
    %cst_107 = arith.constant dense<0.000000e+00> : vector<2x8x8xf32>
    %340 = tpu.matmul %337, %338, %cst_107 {dimension_numbers = #tpu.dot_dimension_numbers<[2], [2], [1], [1], [0, 0, 0, 1, 1, 1], [0], [0]>} : vector<2x8x8xf32>, vector<2x8x8xf32>, vector<2x8x8xf32> -> vector<2x8x8xf32>
    "tpu.trace_stop"() : () -> ()
    %341 = arith.addf %340, %6 : vector<2x8x8xf32>
    %cst_108 = arith.constant dense<0xFF800000> : vector<2x8xf32>
    %342 = vector.multi_reduction <maximumf>, %341, %cst_108 [2] : vector<2x8x8xf32> to vector<2x8xf32>
    %343 = vector.shape_cast %342 : vector<2x8xf32> to vector<2x8x1xf32>
    %344 = vector.broadcast %343 : vector<2x8x1xf32> to vector<2x8x8xf32>
    %345 = arith.subf %341, %344 : vector<2x8x8xf32>
    %346 = math.exp %345 : vector<2x8x8xf32>
    %cst_109 = arith.constant dense<0.000000e+00> : vector<2x8xf32>
    %347 = vector.multi_reduction <add>, %346, %cst_109 [2] : vector<2x8x8xf32> to vector<2x8xf32>
    %348 = vector.shape_cast %347 : vector<2x8xf32> to vector<2x8x1xf32>
    %cst_110 = arith.constant 1.000000e+00 : f32
    %349 = vector.broadcast %cst_110 : f32 to vector<2x8x1xf32>
    %350 = arith.divf %349, %348 : vector<2x8x1xf32>
    %351 = vector.broadcast %350 : vector<2x8x1xf32> to vector<2x8x8xf32>
    %352 = arith.mulf %346, %351 : vector<2x8x8xf32>
    "tpu.trace_start"() <{level = 10 : i32, message = "bqk,bkd->bqd"}> : () -> ()
    %cst_111 = arith.constant dense<0.000000e+00> : vector<2x8x8xf32>
    %353 = tpu.matmul %352, %339, %cst_111 {dimension_numbers = #tpu.dot_dimension_numbers<[2], [1], [1], [2], [0, 0, 0, 1, 1, 2], [0], [0]>} : vector<2x8x8xf32>, vector<2x8x8xf32>, vector<2x8x8xf32> -> vector<2x8x8xf32>
    "tpu.trace_stop"() : () -> ()
    %354 = vector.shape_cast %353 : vector<2x8x8xf32> to vector<16x8xf32>
    %355 = vector.extract_strided_slice %332 {offsets = [0, 0], sizes = [8, 32], strides = [1, 1]} : vector<32x32xf32> to vector<8x32xf32>
    %cst_112 = arith.constant dense<0.000000e+00> : vector<16x32xf32>
    %356 = tpu.matmul %354, %355, %cst_112 {dimension_numbers = #tpu.dot_dimension_numbers<[1], [0], [0], [1], [0, 0, 1, 1], [], []>} : vector<16x8xf32>, vector<8x32xf32>, vector<16x32xf32> -> vector<16x32xf32>
    %357 = vector.broadcast %333 : vector<1x32xf32> to vector<16x32xf32>
    %358 = arith.addf %357, %356 : vector<16x32xf32>
    %359 = vector.extract_strided_slice %334 {offsets = [0, 0, 8], sizes = [2, 8, 8], strides = [1, 1, 1]} : vector<2x8x32xf32> to vector<2x8x8xf32>
    %360 = vector.extract_strided_slice %335 {offsets = [0, 0, 8], sizes = [2, 8, 8], strides = [1, 1, 1]} : vector<2x8x32xf32> to vector<2x8x8xf32>
    %361 = vector.extract_strided_slice %336 {offsets = [0, 0, 8], sizes = [2, 8, 8], strides = [1, 1, 1]} : vector<2x8x32xf32> to vector<2x8x8xf32>
    "tpu.trace_start"() <{level = 10 : i32, message = "bqd,bkd->bqk"}> : () -> ()
    %cst_113 = arith.constant dense<0.000000e+00> : vector<2x8x8xf32>
    %362 = tpu.matmul %359, %360, %cst_113 {dimension_numbers = #tpu.dot_dimension_numbers<[2], [2], [1], [1], [0, 0, 0, 1, 1, 1], [0], [0]>} : vector<2x8x8xf32>, vector<2x8x8xf32>, vector<2x8x8xf32> -> vector<2x8x8xf32>
    "tpu.trace_stop"() : () -> ()
    %363 = arith.addf %362, %6 : vector<2x8x8xf32>
    %cst_114 = arith.constant dense<0xFF800000> : vector<2x8xf32>
    %364 = vector.multi_reduction <maximumf>, %363, %cst_114 [2] : vector<2x8x8xf32> to vector<2x8xf32>
    %365 = vector.shape_cast %364 : vector<2x8xf32> to vector<2x8x1xf32>
    %366 = vector.broadcast %365 : vector<2x8x1xf32> to vector<2x8x8xf32>
    %367 = arith.subf %363, %366 : vector<2x8x8xf32>
    %368 = math.exp %367 : vector<2x8x8xf32>
    %cst_115 = arith.constant dense<0.000000e+00> : vector<2x8xf32>
    %369 = vector.multi_reduction <add>, %368, %cst_115 [2] : vector<2x8x8xf32> to vector<2x8xf32>
    %370 = vector.shape_cast %369 : vector<2x8xf32> to vector<2x8x1xf32>
    %cst_116 = arith.constant 1.000000e+00 : f32
    %371 = vector.broadcast %cst_116 : f32 to vector<2x8x1xf32>
    %372 = arith.divf %371, %370 : vector<2x8x1xf32>
    %373 = vector.broadcast %372 : vector<2x8x1xf32> to vector<2x8x8xf32>
    %374 = arith.mulf %368, %373 : vector<2x8x8xf32>
    "tpu.trace_start"() <{level = 10 : i32, message = "bqk,bkd->bqd"}> : () -> ()
    %cst_117 = arith.constant dense<0.000000e+00> : vector<2x8x8xf32>
    %375 = tpu.matmul %374, %361, %cst_117 {dimension_numbers = #tpu.dot_dimension_numbers<[2], [1], [1], [2], [0, 0, 0, 1, 1, 2], [0], [0]>} : vector<2x8x8xf32>, vector<2x8x8xf32>, vector<2x8x8xf32> -> vector<2x8x8xf32>
    "tpu.trace_stop"() : () -> ()
    %376 = vector.shape_cast %375 : vector<2x8x8xf32> to vector<16x8xf32>
    %377 = vector.extract_strided_slice %332 {offsets = [8, 0], sizes = [8, 32], strides = [1, 1]} : vector<32x32xf32> to vector<8x32xf32>
    %cst_118 = arith.constant dense<0.000000e+00> : vector<16x32xf32>
    %378 = tpu.matmul %376, %377, %cst_118 {dimension_numbers = #tpu.dot_dimension_numbers<[1], [0], [0], [1], [0, 0, 1, 1], [], []>} : vector<16x8xf32>, vector<8x32xf32>, vector<16x32xf32> -> vector<16x32xf32>
    %379 = arith.addf %358, %378 : vector<16x32xf32>
    %380 = vector.extract_strided_slice %334 {offsets = [0, 0, 16], sizes = [2, 8, 8], strides = [1, 1, 1]} : vector<2x8x32xf32> to vector<2x8x8xf32>
    %381 = vector.extract_strided_slice %335 {offsets = [0, 0, 16], sizes = [2, 8, 8], strides = [1, 1, 1]} : vector<2x8x32xf32> to vector<2x8x8xf32>
    %382 = vector.extract_strided_slice %336 {offsets = [0, 0, 16], sizes = [2, 8, 8], strides = [1, 1, 1]} : vector<2x8x32xf32> to vector<2x8x8xf32>
    "tpu.trace_start"() <{level = 10 : i32, message = "bqd,bkd->bqk"}> : () -> ()
    %cst_119 = arith.constant dense<0.000000e+00> : vector<2x8x8xf32>
    %383 = tpu.matmul %380, %381, %cst_119 {dimension_numbers = #tpu.dot_dimension_numbers<[2], [2], [1], [1], [0, 0, 0, 1, 1, 1], [0], [0]>} : vector<2x8x8xf32>, vector<2x8x8xf32>, vector<2x8x8xf32> -> vector<2x8x8xf32>
    "tpu.trace_stop"() : () -> ()
    %384 = arith.addf %383, %6 : vector<2x8x8xf32>
    %cst_120 = arith.constant dense<0xFF800000> : vector<2x8xf32>
    %385 = vector.multi_reduction <maximumf>, %384, %cst_120 [2] : vector<2x8x8xf32> to vector<2x8xf32>
    %386 = vector.shape_cast %385 : vector<2x8xf32> to vector<2x8x1xf32>
    %387 = vector.broadcast %386 : vector<2x8x1xf32> to vector<2x8x8xf32>
    %388 = arith.subf %384, %387 : vector<2x8x8xf32>
    %389 = math.exp %388 : vector<2x8x8xf32>
    %cst_121 = arith.constant dense<0.000000e+00> : vector<2x8xf32>
    %390 = vector.multi_reduction <add>, %389, %cst_121 [2] : vector<2x8x8xf32> to vector<2x8xf32>
    %391 = vector.shape_cast %390 : vector<2x8xf32> to vector<2x8x1xf32>
    %cst_122 = arith.constant 1.000000e+00 : f32
    %392 = vector.broadcast %cst_122 : f32 to vector<2x8x1xf32>
    %393 = arith.divf %392, %391 : vector<2x8x1xf32>
    %394 = vector.broadcast %393 : vector<2x8x1xf32> to vector<2x8x8xf32>
    %395 = arith.mulf %389, %394 : vector<2x8x8xf32>
    "tpu.trace_start"() <{level = 10 : i32, message = "bqk,bkd->bqd"}> : () -> ()
    %cst_123 = arith.constant dense<0.000000e+00> : vector<2x8x8xf32>
    %396 = tpu.matmul %395, %382, %cst_123 {dimension_numbers = #tpu.dot_dimension_numbers<[2], [1], [1], [2], [0, 0, 0, 1, 1, 2], [0], [0]>} : vector<2x8x8xf32>, vector<2x8x8xf32>, vector<2x8x8xf32> -> vector<2x8x8xf32>
    "tpu.trace_stop"() : () -> ()
    %397 = vector.shape_cast %396 : vector<2x8x8xf32> to vector<16x8xf32>
    %398 = vector.extract_strided_slice %332 {offsets = [16, 0], sizes = [8, 32], strides = [1, 1]} : vector<32x32xf32> to vector<8x32xf32>
    %cst_124 = arith.constant dense<0.000000e+00> : vector<16x32xf32>
    %399 = tpu.matmul %397, %398, %cst_124 {dimension_numbers = #tpu.dot_dimension_numbers<[1], [0], [0], [1], [0, 0, 1, 1], [], []>} : vector<16x8xf32>, vector<8x32xf32>, vector<16x32xf32> -> vector<16x32xf32>
    %400 = arith.addf %379, %399 : vector<16x32xf32>
    %401 = vector.extract_strided_slice %334 {offsets = [0, 0, 24], sizes = [2, 8, 8], strides = [1, 1, 1]} : vector<2x8x32xf32> to vector<2x8x8xf32>
    %402 = vector.extract_strided_slice %335 {offsets = [0, 0, 24], sizes = [2, 8, 8], strides = [1, 1, 1]} : vector<2x8x32xf32> to vector<2x8x8xf32>
    %403 = vector.extract_strided_slice %336 {offsets = [0, 0, 24], sizes = [2, 8, 8], strides = [1, 1, 1]} : vector<2x8x32xf32> to vector<2x8x8xf32>
    "tpu.trace_start"() <{level = 10 : i32, message = "bqd,bkd->bqk"}> : () -> ()
    %cst_125 = arith.constant dense<0.000000e+00> : vector<2x8x8xf32>
    %404 = tpu.matmul %401, %402, %cst_125 {dimension_numbers = #tpu.dot_dimension_numbers<[2], [2], [1], [1], [0, 0, 0, 1, 1, 1], [0], [0]>} : vector<2x8x8xf32>, vector<2x8x8xf32>, vector<2x8x8xf32> -> vector<2x8x8xf32>
    "tpu.trace_stop"() : () -> ()
    %405 = arith.addf %404, %6 : vector<2x8x8xf32>
    %cst_126 = arith.constant dense<0xFF800000> : vector<2x8xf32>
    %406 = vector.multi_reduction <maximumf>, %405, %cst_126 [2] : vector<2x8x8xf32> to vector<2x8xf32>
    %407 = vector.shape_cast %406 : vector<2x8xf32> to vector<2x8x1xf32>
    %408 = vector.broadcast %407 : vector<2x8x1xf32> to vector<2x8x8xf32>
    %409 = arith.subf %405, %408 : vector<2x8x8xf32>
    %410 = math.exp %409 : vector<2x8x8xf32>
    %cst_127 = arith.constant dense<0.000000e+00> : vector<2x8xf32>
    %411 = vector.multi_reduction <add>, %410, %cst_127 [2] : vector<2x8x8xf32> to vector<2x8xf32>
    %412 = vector.shape_cast %411 : vector<2x8xf32> to vector<2x8x1xf32>
    %cst_128 = arith.constant 1.000000e+00 : f32
    %413 = vector.broadcast %cst_128 : f32 to vector<2x8x1xf32>
    %414 = arith.divf %413, %412 : vector<2x8x1xf32>
    %415 = vector.broadcast %414 : vector<2x8x1xf32> to vector<2x8x8xf32>
    %416 = arith.mulf %410, %415 : vector<2x8x8xf32>
    "tpu.trace_start"() <{level = 10 : i32, message = "bqk,bkd->bqd"}> : () -> ()
    %cst_129 = arith.constant dense<0.000000e+00> : vector<2x8x8xf32>
    %417 = tpu.matmul %416, %403, %cst_129 {dimension_numbers = #tpu.dot_dimension_numbers<[2], [1], [1], [2], [0, 0, 0, 1, 1, 2], [0], [0]>} : vector<2x8x8xf32>, vector<2x8x8xf32>, vector<2x8x8xf32> -> vector<2x8x8xf32>
    "tpu.trace_stop"() : () -> ()
    %418 = vector.shape_cast %417 : vector<2x8x8xf32> to vector<16x8xf32>
    %419 = vector.extract_strided_slice %332 {offsets = [24, 0], sizes = [8, 32], strides = [1, 1]} : vector<32x32xf32> to vector<8x32xf32>
    %cst_130 = arith.constant dense<0.000000e+00> : vector<16x32xf32>
    %420 = tpu.matmul %418, %419, %cst_130 {dimension_numbers = #tpu.dot_dimension_numbers<[1], [0], [0], [1], [0, 0, 1, 1], [], []>} : vector<16x8xf32>, vector<8x32xf32>, vector<16x32xf32> -> vector<16x32xf32>
    %421 = arith.addf %400, %420 : vector<16x32xf32>
    %422 = arith.addf %297, %421 : vector<16x32xf32>
    %423 = vector.extract_strided_slice %298 {offsets = [1, 0], sizes = [1, 32], strides = [1, 1]} : vector<3x32xf32> to vector<1x32xf32>
    %424 = vector.extract_strided_slice %299 {offsets = [1, 0], sizes = [1, 32], strides = [1, 1]} : vector<3x32xf32> to vector<1x32xf32>
    %cst_131 = arith.constant dense<0.000000e+00> : vector<16xf32>
    %425 = vector.multi_reduction <add>, %422, %cst_131 [1] : vector<16x32xf32> to vector<16xf32>
    %426 = vector.shape_cast %425 : vector<16xf32> to vector<16x1xf32>
    %cst_132 = arith.constant 3.125000e-02 : f32
    %427 = vector.broadcast %cst_132 : f32 to vector<16x1xf32>
    %428 = arith.mulf %426, %427 : vector<16x1xf32>
    %429 = vector.broadcast %428 : vector<16x1xf32> to vector<16x32xf32>
    %430 = arith.subf %422, %429 : vector<16x32xf32>
    %431 = arith.mulf %430, %430 : vector<16x32xf32>
    %cst_133 = arith.constant dense<0.000000e+00> : vector<16xf32>
    %432 = vector.multi_reduction <add>, %431, %cst_133 [1] : vector<16x32xf32> to vector<16xf32>
    %433 = vector.shape_cast %432 : vector<16xf32> to vector<16x1xf32>
    %cst_134 = arith.constant 0.0322580636 : f32
    %434 = vector.broadcast %cst_134 : f32 to vector<16x1xf32>
    %435 = arith.mulf %433, %434 : vector<16x1xf32>
    %436 = math.sqrt %435 : vector<16x1xf32>
    %cst_135 = arith.constant 1.000000e-16 : f32
    %437 = vector.broadcast %cst_135 : f32 to vector<16x1xf32>
    %438 = arith.addf %436, %437 : vector<16x1xf32>
    %cst_136 = arith.constant 1.000000e+00 : f32
    %439 = vector.broadcast %cst_136 : f32 to vector<16x1xf32>
    %440 = arith.divf %439, %438 : vector<16x1xf32>
    %441 = vector.broadcast %440 : vector<16x1xf32> to vector<16x32xf32>
    %442 = arith.mulf %430, %441 : vector<16x32xf32>
    %443 = vector.broadcast %423 : vector<1x32xf32> to vector<16x32xf32>
    %444 = arith.mulf %443, %442 : vector<16x32xf32>
    %445 = vector.broadcast %424 : vector<1x32xf32> to vector<16x32xf32>
    %446 = arith.addf %444, %445 : vector<16x32xf32>
    %c424 = arith.constant 424 : index
    %c0_137 = arith.constant 0 : index
    %447 = vector.load %arg2[%c424, %c0_137] : memref<688x128xf32, #tpu.memory_space<vmem>>, vector<32x32xf32>
    %cst_138 = arith.constant dense<0.000000e+00> : vector<16x32xf32>
    %448 = tpu.matmul %446, %447, %cst_138 {dimension_numbers = #tpu.dot_dimension_numbers<[1], [0], [0], [1], [0, 0, 1, 1], [], []>} : vector<16x32xf32>, vector<32x32xf32>, vector<16x32xf32> -> vector<16x32xf32>
    %c456 = arith.constant 456 : index
    %c0_139 = arith.constant 0 : index
    %449 = vector.load %arg2[%c456, %c0_139] : memref<688x128xf32, #tpu.memory_space<vmem>>, vector<1x32xf32>
    %450 = vector.broadcast %449 : vector<1x32xf32> to vector<16x32xf32>
    %451 = arith.addf %448, %450 : vector<16x32xf32>
    %c464 = arith.constant 464 : index
    %c0_140 = arith.constant 0 : index
    %452 = vector.load %arg2[%c464, %c0_140] : memref<688x128xf32, #tpu.memory_space<vmem>>, vector<32x64xf32>
    %cst_141 = arith.constant dense<0.000000e+00> : vector<16x64xf32>
    %453 = tpu.matmul %3, %452, %cst_141 {dimension_numbers = #tpu.dot_dimension_numbers<[1], [0], [0], [1], [0, 0, 1, 1], [], []>} : vector<16x32xf32>, vector<32x64xf32>, vector<16x64xf32> -> vector<16x64xf32>
    %c496 = arith.constant 496 : index
    %c0_142 = arith.constant 0 : index
    %454 = vector.load %arg2[%c496, %c0_142] : memref<688x128xf32, #tpu.memory_space<vmem>>, vector<1x64xf32>
    %455 = vector.broadcast %454 : vector<1x64xf32> to vector<16x64xf32>
    %456 = arith.addf %453, %455 : vector<16x64xf32>
    %457 = vector.extract_strided_slice %456 {offsets = [0, 0], sizes = [16, 32], strides = [1, 1]} : vector<16x64xf32> to vector<16x32xf32>
    %458 = vector.extract_strided_slice %456 {offsets = [0, 32], sizes = [16, 32], strides = [1, 1]} : vector<16x64xf32> to vector<16x32xf32>
    %c504 = arith.constant 504 : index
    %c0_143 = arith.constant 0 : index
    %459 = vector.load %arg2[%c504, %c0_143] : memref<688x128xf32, #tpu.memory_space<vmem>>, vector<32x32xf32>
    %c536 = arith.constant 536 : index
    %c0_144 = arith.constant 0 : index
    %460 = vector.load %arg2[%c536, %c0_144] : memref<688x128xf32, #tpu.memory_space<vmem>>, vector<1x32xf32>
    %461 = vector.shape_cast %451 : vector<16x32xf32> to vector<2x8x32xf32>
    %462 = vector.shape_cast %457 : vector<16x32xf32> to vector<2x8x32xf32>
    %463 = vector.shape_cast %458 : vector<16x32xf32> to vector<2x8x32xf32>
    %464 = vector.extract_strided_slice %461 {offsets = [0, 0, 0], sizes = [2, 8, 8], strides = [1, 1, 1]} : vector<2x8x32xf32> to vector<2x8x8xf32>
    %465 = vector.extract_strided_slice %462 {offsets = [0, 0, 0], sizes = [2, 8, 8], strides = [1, 1, 1]} : vector<2x8x32xf32> to vector<2x8x8xf32>
    %466 = vector.extract_strided_slice %463 {offsets = [0, 0, 0], sizes = [2, 8, 8], strides = [1, 1, 1]} : vector<2x8x32xf32> to vector<2x8x8xf32>
    "tpu.trace_start"() <{level = 10 : i32, message = "bqd,bkd->bqk"}> : () -> ()
    %cst_145 = arith.constant dense<0.000000e+00> : vector<2x8x8xf32>
    %467 = tpu.matmul %464, %465, %cst_145 {dimension_numbers = #tpu.dot_dimension_numbers<[2], [2], [1], [1], [0, 0, 0, 1, 1, 1], [0], [0]>} : vector<2x8x8xf32>, vector<2x8x8xf32>, vector<2x8x8xf32> -> vector<2x8x8xf32>
    "tpu.trace_stop"() : () -> ()
    %468 = arith.addf %467, %8 : vector<2x8x8xf32>
    %cst_146 = arith.constant dense<0xFF800000> : vector<2x8xf32>
    %469 = vector.multi_reduction <maximumf>, %468, %cst_146 [2] : vector<2x8x8xf32> to vector<2x8xf32>
    %470 = vector.shape_cast %469 : vector<2x8xf32> to vector<2x8x1xf32>
    %471 = vector.broadcast %470 : vector<2x8x1xf32> to vector<2x8x8xf32>
    %472 = arith.subf %468, %471 : vector<2x8x8xf32>
    %473 = math.exp %472 : vector<2x8x8xf32>
    %cst_147 = arith.constant dense<0.000000e+00> : vector<2x8xf32>
    %474 = vector.multi_reduction <add>, %473, %cst_147 [2] : vector<2x8x8xf32> to vector<2x8xf32>
    %475 = vector.shape_cast %474 : vector<2x8xf32> to vector<2x8x1xf32>
    %cst_148 = arith.constant 1.000000e+00 : f32
    %476 = vector.broadcast %cst_148 : f32 to vector<2x8x1xf32>
    %477 = arith.divf %476, %475 : vector<2x8x1xf32>
    %478 = vector.broadcast %477 : vector<2x8x1xf32> to vector<2x8x8xf32>
    %479 = arith.mulf %473, %478 : vector<2x8x8xf32>
    "tpu.trace_start"() <{level = 10 : i32, message = "bqk,bkd->bqd"}> : () -> ()
    %cst_149 = arith.constant dense<0.000000e+00> : vector<2x8x8xf32>
    %480 = tpu.matmul %479, %466, %cst_149 {dimension_numbers = #tpu.dot_dimension_numbers<[2], [1], [1], [2], [0, 0, 0, 1, 1, 2], [0], [0]>} : vector<2x8x8xf32>, vector<2x8x8xf32>, vector<2x8x8xf32> -> vector<2x8x8xf32>
    "tpu.trace_stop"() : () -> ()
    %481 = vector.shape_cast %480 : vector<2x8x8xf32> to vector<16x8xf32>
    %482 = vector.extract_strided_slice %459 {offsets = [0, 0], sizes = [8, 32], strides = [1, 1]} : vector<32x32xf32> to vector<8x32xf32>
    %cst_150 = arith.constant dense<0.000000e+00> : vector<16x32xf32>
    %483 = tpu.matmul %481, %482, %cst_150 {dimension_numbers = #tpu.dot_dimension_numbers<[1], [0], [0], [1], [0, 0, 1, 1], [], []>} : vector<16x8xf32>, vector<8x32xf32>, vector<16x32xf32> -> vector<16x32xf32>
    %484 = vector.broadcast %460 : vector<1x32xf32> to vector<16x32xf32>
    %485 = arith.addf %484, %483 : vector<16x32xf32>
    %486 = vector.extract_strided_slice %461 {offsets = [0, 0, 8], sizes = [2, 8, 8], strides = [1, 1, 1]} : vector<2x8x32xf32> to vector<2x8x8xf32>
    %487 = vector.extract_strided_slice %462 {offsets = [0, 0, 8], sizes = [2, 8, 8], strides = [1, 1, 1]} : vector<2x8x32xf32> to vector<2x8x8xf32>
    %488 = vector.extract_strided_slice %463 {offsets = [0, 0, 8], sizes = [2, 8, 8], strides = [1, 1, 1]} : vector<2x8x32xf32> to vector<2x8x8xf32>
    "tpu.trace_start"() <{level = 10 : i32, message = "bqd,bkd->bqk"}> : () -> ()
    %cst_151 = arith.constant dense<0.000000e+00> : vector<2x8x8xf32>
    %489 = tpu.matmul %486, %487, %cst_151 {dimension_numbers = #tpu.dot_dimension_numbers<[2], [2], [1], [1], [0, 0, 0, 1, 1, 1], [0], [0]>} : vector<2x8x8xf32>, vector<2x8x8xf32>, vector<2x8x8xf32> -> vector<2x8x8xf32>
    "tpu.trace_stop"() : () -> ()
    %490 = arith.addf %489, %8 : vector<2x8x8xf32>
    %cst_152 = arith.constant dense<0xFF800000> : vector<2x8xf32>
    %491 = vector.multi_reduction <maximumf>, %490, %cst_152 [2] : vector<2x8x8xf32> to vector<2x8xf32>
    %492 = vector.shape_cast %491 : vector<2x8xf32> to vector<2x8x1xf32>
    %493 = vector.broadcast %492 : vector<2x8x1xf32> to vector<2x8x8xf32>
    %494 = arith.subf %490, %493 : vector<2x8x8xf32>
    %495 = math.exp %494 : vector<2x8x8xf32>
    %cst_153 = arith.constant dense<0.000000e+00> : vector<2x8xf32>
    %496 = vector.multi_reduction <add>, %495, %cst_153 [2] : vector<2x8x8xf32> to vector<2x8xf32>
    %497 = vector.shape_cast %496 : vector<2x8xf32> to vector<2x8x1xf32>
    %cst_154 = arith.constant 1.000000e+00 : f32
    %498 = vector.broadcast %cst_154 : f32 to vector<2x8x1xf32>
    %499 = arith.divf %498, %497 : vector<2x8x1xf32>
    %500 = vector.broadcast %499 : vector<2x8x1xf32> to vector<2x8x8xf32>
    %501 = arith.mulf %495, %500 : vector<2x8x8xf32>
    "tpu.trace_start"() <{level = 10 : i32, message = "bqk,bkd->bqd"}> : () -> ()
    %cst_155 = arith.constant dense<0.000000e+00> : vector<2x8x8xf32>
    %502 = tpu.matmul %501, %488, %cst_155 {dimension_numbers = #tpu.dot_dimension_numbers<[2], [1], [1], [2], [0, 0, 0, 1, 1, 2], [0], [0]>} : vector<2x8x8xf32>, vector<2x8x8xf32>, vector<2x8x8xf32> -> vector<2x8x8xf32>
    "tpu.trace_stop"() : () -> ()
    %503 = vector.shape_cast %502 : vector<2x8x8xf32> to vector<16x8xf32>
    %504 = vector.extract_strided_slice %459 {offsets = [8, 0], sizes = [8, 32], strides = [1, 1]} : vector<32x32xf32> to vector<8x32xf32>
    %cst_156 = arith.constant dense<0.000000e+00> : vector<16x32xf32>
    %505 = tpu.matmul %503, %504, %cst_156 {dimension_numbers = #tpu.dot_dimension_numbers<[1], [0], [0], [1], [0, 0, 1, 1], [], []>} : vector<16x8xf32>, vector<8x32xf32>, vector<16x32xf32> -> vector<16x32xf32>
    %506 = arith.addf %485, %505 : vector<16x32xf32>
    %507 = vector.extract_strided_slice %461 {offsets = [0, 0, 16], sizes = [2, 8, 8], strides = [1, 1, 1]} : vector<2x8x32xf32> to vector<2x8x8xf32>
    %508 = vector.extract_strided_slice %462 {offsets = [0, 0, 16], sizes = [2, 8, 8], strides = [1, 1, 1]} : vector<2x8x32xf32> to vector<2x8x8xf32>
    %509 = vector.extract_strided_slice %463 {offsets = [0, 0, 16], sizes = [2, 8, 8], strides = [1, 1, 1]} : vector<2x8x32xf32> to vector<2x8x8xf32>
    "tpu.trace_start"() <{level = 10 : i32, message = "bqd,bkd->bqk"}> : () -> ()
    %cst_157 = arith.constant dense<0.000000e+00> : vector<2x8x8xf32>
    %510 = tpu.matmul %507, %508, %cst_157 {dimension_numbers = #tpu.dot_dimension_numbers<[2], [2], [1], [1], [0, 0, 0, 1, 1, 1], [0], [0]>} : vector<2x8x8xf32>, vector<2x8x8xf32>, vector<2x8x8xf32> -> vector<2x8x8xf32>
    "tpu.trace_stop"() : () -> ()
    %511 = arith.addf %510, %8 : vector<2x8x8xf32>
    %cst_158 = arith.constant dense<0xFF800000> : vector<2x8xf32>
    %512 = vector.multi_reduction <maximumf>, %511, %cst_158 [2] : vector<2x8x8xf32> to vector<2x8xf32>
    %513 = vector.shape_cast %512 : vector<2x8xf32> to vector<2x8x1xf32>
    %514 = vector.broadcast %513 : vector<2x8x1xf32> to vector<2x8x8xf32>
    %515 = arith.subf %511, %514 : vector<2x8x8xf32>
    %516 = math.exp %515 : vector<2x8x8xf32>
    %cst_159 = arith.constant dense<0.000000e+00> : vector<2x8xf32>
    %517 = vector.multi_reduction <add>, %516, %cst_159 [2] : vector<2x8x8xf32> to vector<2x8xf32>
    %518 = vector.shape_cast %517 : vector<2x8xf32> to vector<2x8x1xf32>
    %cst_160 = arith.constant 1.000000e+00 : f32
    %519 = vector.broadcast %cst_160 : f32 to vector<2x8x1xf32>
    %520 = arith.divf %519, %518 : vector<2x8x1xf32>
    %521 = vector.broadcast %520 : vector<2x8x1xf32> to vector<2x8x8xf32>
    %522 = arith.mulf %516, %521 : vector<2x8x8xf32>
    "tpu.trace_start"() <{level = 10 : i32, message = "bqk,bkd->bqd"}> : () -> ()
    %cst_161 = arith.constant dense<0.000000e+00> : vector<2x8x8xf32>
    %523 = tpu.matmul %522, %509, %cst_161 {dimension_numbers = #tpu.dot_dimension_numbers<[2], [1], [1], [2], [0, 0, 0, 1, 1, 2], [0], [0]>} : vector<2x8x8xf32>, vector<2x8x8xf32>, vector<2x8x8xf32> -> vector<2x8x8xf32>
    "tpu.trace_stop"() : () -> ()
    %524 = vector.shape_cast %523 : vector<2x8x8xf32> to vector<16x8xf32>
    %525 = vector.extract_strided_slice %459 {offsets = [16, 0], sizes = [8, 32], strides = [1, 1]} : vector<32x32xf32> to vector<8x32xf32>
    %cst_162 = arith.constant dense<0.000000e+00> : vector<16x32xf32>
    %526 = tpu.matmul %524, %525, %cst_162 {dimension_numbers = #tpu.dot_dimension_numbers<[1], [0], [0], [1], [0, 0, 1, 1], [], []>} : vector<16x8xf32>, vector<8x32xf32>, vector<16x32xf32> -> vector<16x32xf32>
    %527 = arith.addf %506, %526 : vector<16x32xf32>
    %528 = vector.extract_strided_slice %461 {offsets = [0, 0, 24], sizes = [2, 8, 8], strides = [1, 1, 1]} : vector<2x8x32xf32> to vector<2x8x8xf32>
    %529 = vector.extract_strided_slice %462 {offsets = [0, 0, 24], sizes = [2, 8, 8], strides = [1, 1, 1]} : vector<2x8x32xf32> to vector<2x8x8xf32>
    %530 = vector.extract_strided_slice %463 {offsets = [0, 0, 24], sizes = [2, 8, 8], strides = [1, 1, 1]} : vector<2x8x32xf32> to vector<2x8x8xf32>
    "tpu.trace_start"() <{level = 10 : i32, message = "bqd,bkd->bqk"}> : () -> ()
    %cst_163 = arith.constant dense<0.000000e+00> : vector<2x8x8xf32>
    %531 = tpu.matmul %528, %529, %cst_163 {dimension_numbers = #tpu.dot_dimension_numbers<[2], [2], [1], [1], [0, 0, 0, 1, 1, 1], [0], [0]>} : vector<2x8x8xf32>, vector<2x8x8xf32>, vector<2x8x8xf32> -> vector<2x8x8xf32>
    "tpu.trace_stop"() : () -> ()
    %532 = arith.addf %531, %8 : vector<2x8x8xf32>
    %cst_164 = arith.constant dense<0xFF800000> : vector<2x8xf32>
    %533 = vector.multi_reduction <maximumf>, %532, %cst_164 [2] : vector<2x8x8xf32> to vector<2x8xf32>
    %534 = vector.shape_cast %533 : vector<2x8xf32> to vector<2x8x1xf32>
    %535 = vector.broadcast %534 : vector<2x8x1xf32> to vector<2x8x8xf32>
    %536 = arith.subf %532, %535 : vector<2x8x8xf32>
    %537 = math.exp %536 : vector<2x8x8xf32>
    %cst_165 = arith.constant dense<0.000000e+00> : vector<2x8xf32>
    %538 = vector.multi_reduction <add>, %537, %cst_165 [2] : vector<2x8x8xf32> to vector<2x8xf32>
    %539 = vector.shape_cast %538 : vector<2x8xf32> to vector<2x8x1xf32>
    %cst_166 = arith.constant 1.000000e+00 : f32
    %540 = vector.broadcast %cst_166 : f32 to vector<2x8x1xf32>
    %541 = arith.divf %540, %539 : vector<2x8x1xf32>
    %542 = vector.broadcast %541 : vector<2x8x1xf32> to vector<2x8x8xf32>
    %543 = arith.mulf %537, %542 : vector<2x8x8xf32>
    "tpu.trace_start"() <{level = 10 : i32, message = "bqk,bkd->bqd"}> : () -> ()
    %cst_167 = arith.constant dense<0.000000e+00> : vector<2x8x8xf32>
    %544 = tpu.matmul %543, %530, %cst_167 {dimension_numbers = #tpu.dot_dimension_numbers<[2], [1], [1], [2], [0, 0, 0, 1, 1, 2], [0], [0]>} : vector<2x8x8xf32>, vector<2x8x8xf32>, vector<2x8x8xf32> -> vector<2x8x8xf32>
    "tpu.trace_stop"() : () -> ()
    %545 = vector.shape_cast %544 : vector<2x8x8xf32> to vector<16x8xf32>
    %546 = vector.extract_strided_slice %459 {offsets = [24, 0], sizes = [8, 32], strides = [1, 1]} : vector<32x32xf32> to vector<8x32xf32>
    %cst_168 = arith.constant dense<0.000000e+00> : vector<16x32xf32>
    %547 = tpu.matmul %545, %546, %cst_168 {dimension_numbers = #tpu.dot_dimension_numbers<[1], [0], [0], [1], [0, 0, 1, 1], [], []>} : vector<16x8xf32>, vector<8x32xf32>, vector<16x32xf32> -> vector<16x32xf32>
    %548 = arith.addf %527, %547 : vector<16x32xf32>
    %549 = arith.addf %422, %548 : vector<16x32xf32>
    %550 = vector.extract_strided_slice %298 {offsets = [2, 0], sizes = [1, 32], strides = [1, 1]} : vector<3x32xf32> to vector<1x32xf32>
    %551 = vector.extract_strided_slice %299 {offsets = [2, 0], sizes = [1, 32], strides = [1, 1]} : vector<3x32xf32> to vector<1x32xf32>
    %cst_169 = arith.constant dense<0.000000e+00> : vector<16xf32>
    %552 = vector.multi_reduction <add>, %549, %cst_169 [1] : vector<16x32xf32> to vector<16xf32>
    %553 = vector.shape_cast %552 : vector<16xf32> to vector<16x1xf32>
    %cst_170 = arith.constant 3.125000e-02 : f32
    %554 = vector.broadcast %cst_170 : f32 to vector<16x1xf32>
    %555 = arith.mulf %553, %554 : vector<16x1xf32>
    %556 = vector.broadcast %555 : vector<16x1xf32> to vector<16x32xf32>
    %557 = arith.subf %549, %556 : vector<16x32xf32>
    %558 = arith.mulf %557, %557 : vector<16x32xf32>
    %cst_171 = arith.constant dense<0.000000e+00> : vector<16xf32>
    %559 = vector.multi_reduction <add>, %558, %cst_171 [1] : vector<16x32xf32> to vector<16xf32>
    %560 = vector.shape_cast %559 : vector<16xf32> to vector<16x1xf32>
    %cst_172 = arith.constant 0.0322580636 : f32
    %561 = vector.broadcast %cst_172 : f32 to vector<16x1xf32>
    %562 = arith.mulf %560, %561 : vector<16x1xf32>
    %563 = math.sqrt %562 : vector<16x1xf32>
    %cst_173 = arith.constant 1.000000e-16 : f32
    %564 = vector.broadcast %cst_173 : f32 to vector<16x1xf32>
    %565 = arith.addf %563, %564 : vector<16x1xf32>
    %cst_174 = arith.constant 1.000000e+00 : f32
    %566 = vector.broadcast %cst_174 : f32 to vector<16x1xf32>
    %567 = arith.divf %566, %565 : vector<16x1xf32>
    %568 = vector.broadcast %567 : vector<16x1xf32> to vector<16x32xf32>
    %569 = arith.mulf %557, %568 : vector<16x32xf32>
    %570 = vector.broadcast %550 : vector<1x32xf32> to vector<16x32xf32>
    %571 = arith.mulf %570, %569 : vector<16x32xf32>
    %572 = vector.broadcast %551 : vector<1x32xf32> to vector<16x32xf32>
    %573 = arith.addf %571, %572 : vector<16x32xf32>
    %c544 = arith.constant 544 : index
    %c0_175 = arith.constant 0 : index
    %574 = vector.load %arg2[%c544, %c0_175] : memref<688x128xf32, #tpu.memory_space<vmem>>, vector<32x64xf32>
    %cst_176 = arith.constant dense<0.000000e+00> : vector<16x64xf32>
    %575 = tpu.matmul %573, %574, %cst_176 {dimension_numbers = #tpu.dot_dimension_numbers<[1], [0], [0], [1], [0, 0, 1, 1], [], []>} : vector<16x32xf32>, vector<32x64xf32>, vector<16x64xf32> -> vector<16x64xf32>
    %c576 = arith.constant 576 : index
    %c0_177 = arith.constant 0 : index
    %576 = vector.load %arg2[%c576, %c0_177] : memref<688x128xf32, #tpu.memory_space<vmem>>, vector<1x64xf32>
    %577 = vector.broadcast %576 : vector<1x64xf32> to vector<16x64xf32>
    %578 = arith.addf %575, %577 : vector<16x64xf32>
    %cst_178 = arith.constant 0.000000e+00 : f32
    %579 = vector.broadcast %cst_178 : f32 to vector<16x64xf32>
    %580 = arith.maximumf %578, %579 : vector<16x64xf32>
    %c584 = arith.constant 584 : index
    %c0_179 = arith.constant 0 : index
    %581 = vector.load %arg2[%c584, %c0_179] : memref<688x128xf32, #tpu.memory_space<vmem>>, vector<64x32xf32>
    %cst_180 = arith.constant dense<0.000000e+00> : vector<16x32xf32>
    %582 = tpu.matmul %580, %581, %cst_180 {dimension_numbers = #tpu.dot_dimension_numbers<[1], [0], [0], [1], [0, 0, 1, 1], [], []>} : vector<16x64xf32>, vector<64x32xf32>, vector<16x32xf32> -> vector<16x32xf32>
    %583 = arith.addf %549, %582 : vector<16x32xf32>
    %c648 = arith.constant 648 : index
    %c0_181 = arith.constant 0 : index
    %584 = vector.load %arg2[%c648, %c0_181] : memref<688x128xf32, #tpu.memory_space<vmem>>, vector<1x32xf32>
    %585 = vector.broadcast %584 : vector<1x32xf32> to vector<16x32xf32>
    %586 = arith.addf %583, %585 : vector<16x32xf32>
    %c656 = arith.constant 656 : index
    %c0_182 = arith.constant 0 : index
    %587 = vector.load %arg2[%c656, %c0_182] : memref<688x128xf32, #tpu.memory_space<vmem>>, vector<1x32xf32>
    %c664 = arith.constant 664 : index
    %c0_183 = arith.constant 0 : index
    %588 = vector.load %arg2[%c664, %c0_183] : memref<688x128xf32, #tpu.memory_space<vmem>>, vector<1x32xf32>
    %cst_184 = arith.constant dense<0.000000e+00> : vector<16xf32>
    %589 = vector.multi_reduction <add>, %586, %cst_184 [1] : vector<16x32xf32> to vector<16xf32>
    %590 = vector.shape_cast %589 : vector<16xf32> to vector<16x1xf32>
    %cst_185 = arith.constant 3.125000e-02 : f32
    %591 = vector.broadcast %cst_185 : f32 to vector<16x1xf32>
    %592 = arith.mulf %590, %591 : vector<16x1xf32>
    %593 = vector.broadcast %592 : vector<16x1xf32> to vector<16x32xf32>
    %594 = arith.subf %586, %593 : vector<16x32xf32>
    %595 = arith.mulf %594, %594 : vector<16x32xf32>
    %cst_186 = arith.constant dense<0.000000e+00> : vector<16xf32>
    %596 = vector.multi_reduction <add>, %595, %cst_186 [1] : vector<16x32xf32> to vector<16xf32>
    %597 = vector.shape_cast %596 : vector<16xf32> to vector<16x1xf32>
    %cst_187 = arith.constant 0.0322580636 : f32
    %598 = vector.broadcast %cst_187 : f32 to vector<16x1xf32>
    %599 = arith.mulf %597, %598 : vector<16x1xf32>
    %600 = math.sqrt %599 : vector<16x1xf32>
    %cst_188 = arith.constant 1.000000e-16 : f32
    %601 = vector.broadcast %cst_188 : f32 to vector<16x1xf32>
    %602 = arith.addf %600, %601 : vector<16x1xf32>
    %cst_189 = arith.constant 1.000000e+00 : f32
    %603 = vector.broadcast %cst_189 : f32 to vector<16x1xf32>
    %604 = arith.divf %603, %602 : vector<16x1xf32>
    %605 = vector.broadcast %604 : vector<16x1xf32> to vector<16x32xf32>
    %606 = arith.mulf %594, %605 : vector<16x32xf32>
    %607 = vector.broadcast %587 : vector<1x32xf32> to vector<16x32xf32>
    %608 = arith.mulf %607, %606 : vector<16x32xf32>
    %609 = vector.broadcast %588 : vector<1x32xf32> to vector<16x32xf32>
    %610 = arith.addf %608, %609 : vector<16x32xf32>
    %c0_190 = arith.constant 0 : index
    %c0_191 = arith.constant 0 : index
    %611 = vector.load %arg3[%c0_190, %c0_191] : memref<16x32xf32, #tpu.memory_space<vmem>>, vector<16x32xf32>
    tpu.vector_store %arg3[%c0_190, %c0_191], %610 {strides = array<i32>} : memref<16x32xf32, #tpu.memory_space<vmem>>, vector<16x32xf32>,
    return
  }
}

</mosaic_0001>

<llo_original>
// kernel: fwd.1
$region0: #{fwd.1}
  #allocation0 [shape = 'u32[]', space=smem, size = 0x4, offset = 0x4, fixed_abs, tag = 'smem constant byte address 0x4 - core index']
  #allocation1 [shape = 'u32[144,128]{1,0:T(1,128)}', space=vmem, size = 0x12000, scoped, tag = 'internal scratch']
  %s0 = inlined_call_operand.hbm [shape: f32[2,8,32], index: 0, kind: input, shape index: {}]
  %s1 = inlined_call_operand.hbm [shape: f32[2,8,32], index: 1, kind: input, shape index: {}]
  %s2 = inlined_call_operand.hbm [shape: f32[688,128], index: 2, kind: input, shape index: {}]
  %s3 = inlined_call_operand.hbm [shape: f32[16,32], index: 3, kind: output, shape index: {}]
  %s4 = sld [smem:[#allocation0]]
  $region34: #{fwd.1} parent=0
    _
  %s6 = ssub.s32 1, %s4
  %s7 = scalar_select 0, %s6, %s4
  $region1: #{fwd.1} parent=0
    #allocation2 [shape = 'u8[8192]{0}', space=vmem, size = 0x2000, scoped, tag = 'input window, operand 0, single buffered']
    #allocation3 [shape = 's32[1]{0}', space=sflag, size = 0x4, scoped, tag = 'scoped memory for fwd.1']
    #allocation4 [shape = 's32[1]{0}', space=sflag, size = 0x4, scoped, tag = 'scoped memory for fwd.1']
    #allocation5 [shape = 'u8[8192]{0}', space=vmem, size = 0x2000, scoped, tag = 'input window, operand 1, single buffered']
    #allocation6 [shape = 's32[1]{0}', space=sflag, size = 0x4, scoped, tag = 'scoped memory for fwd.1']
    #allocation7 [shape = 'u8[352256]{0}', space=vmem, size = 0x56000, scoped, tag = 'input window, operand 2, single buffered']
    #allocation8 [shape = 'u8[8192]{0}', space=vmem, size = 0x2000, scoped, tag = 'output window, operand 0, single buffered']
    %8 = vsyncpa [#allocation3], 0
    %9 = vsyncpa [#allocation6], 0
    %10 = vsyncpa [#allocation4], 0
    // Predicated region
    $region2: #{fwd.1} parent=1 // pred_check
      _
    $region3: #{fwd.1} parent=1 // pred_check_branch
      %12 = sbr.rel (0) target = $region5
    $region4: #{fwd.1} parent=1 // pred_region
      %s14 = ssub.s32 256, 256
      %15 = vsyncadd [#allocation3], %s14
      %s16 = sshll.u32 [#allocation2], 4
      %s17 = int_to_ptr.vmem [resolvable:$true] %s16
      %22 = dma.hbm_to_vmem [thread:$0]  %s0, 256, %s17, [#allocation3], 128, 128, 8
    $region5: #{fwd.1} parent=1 // pred_fallthru
      _
    // Predicated region
    $region6: #{fwd.1} parent=1 // pred_check
      _
    $region7: #{fwd.1} parent=1 // pred_check_branch
      %24 = sbr.rel (0) target = $region9
    $region8: #{fwd.1} parent=1 // pred_region
      %s26 = ssub.s32 256, 256
      %27 = vsyncadd [#allocation6], %s26
      %s28 = sshll.u32 [#allocation5], 4
      %s29 = int_to_ptr.vmem [resolvable:$true] %s28
      %34 = dma.hbm_to_vmem [thread:$0]  %s1, 256, %s29, [#allocation6], 128, 128, 8
    $region9: #{fwd.1} parent=1 // pred_fallthru
      _
    // Predicated region
    $region10: #{fwd.1} parent=1 // pred_check
      _
    $region11: #{fwd.1} parent=1 // pred_check_branch
      %36 = sbr.rel (0) target = $region13
    $region12: #{fwd.1} parent=1 // pred_region
      %s38 = ssub.s32 11008, 11008
      %39 = vsyncadd [#allocation6], %s38
      %s40 = sshll.u32 [#allocation7], 4
      %s41 = int_to_ptr.vmem [resolvable:$true] %s40
      %46 = dma.hbm_to_vmem [thread:$0]  %s2, 11008, %s41, [#allocation6], 128, 128, 8
    $region13: #{fwd.1} parent=1 // pred_fallthru
      _
    // Predicated region
    $region14: #{fwd.1} parent=1 // pred_check
      _
    $region15: #{fwd.1} parent=1 // pred_check_branch
      %48 = sbr.rel (0) target = $region17
    $region16: #{fwd.1} parent=1 // pred_region
      %49 = dma.done [#allocation3], 256
    $region17: #{fwd.1} parent=1 // pred_fallthru
      _
    // Predicated region
    $region18: #{fwd.1} parent=1 // pred_check
      _
    $region19: #{fwd.1} parent=1 // pred_check_branch
      %51 = sbr.rel (0) target = $region21
    $region20: #{fwd.1} parent=1 // pred_region
      %52 = dma.done [#allocation6], 256
    $region21: #{fwd.1} parent=1 // pred_fallthru
      _
    // Predicated region
    $region22: #{fwd.1} parent=1 // pred_check
      _
    $region23: #{fwd.1} parent=1 // pred_check_branch
      %54 = sbr.rel (0) target = $region25
    $region24: #{fwd.1} parent=1 // pred_region
      %55 = dma.done [#allocation6], 11008
    $region25: #{fwd.1} parent=1 // pred_fallthru
      _
    %v56 = vld [vmem:[#allocation2] sm:$0xff]
    %v57 = vld [vmem:[#allocation2 + $0x8] sm:$0xff]
    %v58 = vld [vmem:[#allocation5] sm:$0xff]
    %v59 = vld [vmem:[#allocation5 + $0x8] sm:$0xff]
    %v60 = vld [vmem:[#allocation7 + $0x2a0] sm:$0xff]
    %v61 = vld [vmem:[#allocation7 + $0x2a8] sm:$0xff]
    %v62 = vld [vmem:[#allocation7] sm:$0x7]
    %v63 = vld [vmem:[#allocation7 + $0x8] sm:$0x7]
    %vm64 = vcmask 261120
    %v65 = vsel %vm64, %v56, 0.0
    %66 = vadd.xlane.f32.xlu0 %v65
    %v67 = vpop.xlane.xlu0 %66
    %v68 = vsel %vm64, %v57, 0.0
    %69 = vadd.xlane.f32.xlu0 %v68
    %v70 = vpop.xlane.xlu0 %69
    %v71 = vmul.f32 %v67, 0.03125
    %v72 = vmul.f32 %v70, 0.03125
    %v73 = vsub.f32 %v56, %v71
    %v74 = vsub.f32 %v57, %v72
    %v75 = vmul.f32 %v73, %v73
    %v76 = vmul.f32 %v74, %v74
    %v77 = vsel %vm64, %v75, 0.0
    %78 = vadd.xlane.f32.xlu0 %v77
    %v79 = vpop.xlane.xlu0 %78
    %v80 = vsel %vm64, %v76, 0.0
    %81 = vadd.xlane.f32.xlu0 %v80
    %v82 = vpop.xlane.xlu0 %81
    %v83 = vmul.f32 %v79, 0.032258064
    %v84 = vmul.f32 %v82, 0.032258064
    %v85 = vrsqrt.pop %v83
    %v86 = vmul.f32 %v83, %v85
    %vm87 = vcmp.eq.f32.partialorder %v83, inf
    %v88 = vsel %vm87, %v83, %v86
    %vm89 = vcmp.eq.f32.partialorder %v83, 0.0
    %v90 = vand.u32 %v83, 2147483648
    %v91 = vsel %vm89, %v90, %v88
    %v92 = vrsqrt.pop %v84
    %v93 = vmul.f32 %v84, %v92
    %vm94 = vcmp.eq.f32.partialorder %v84, inf
    %v95 = vsel %vm94, %v84, %v93
    %vm96 = vcmp.eq.f32.partialorder %v84, 0.0
    %v97 = vand.u32 %v84, 2147483648
    %v98 = vsel %vm96, %v97, %v95
    %v99 = vadd.f32 %v91, 1e-16
    %v100 = vadd.f32 %v98, 1e-16
    %v101 = vrcp.pop %v99
    %v102 = vmul.f32 1.0, %v101
    %v103 = vrcp.pop %v100
    %v104 = vmul.f32 1.0, %v103
    %v105 = vmul.f32 %v73, %v102
    %v106 = vmul.f32 %v74, %v104
    %v107 = vlaneseq
    %v108 = vshrl.u32 %v107, 7
    %v109 = vsub.s32 0, %v108
    %v110 = vrot.slane %v62, %v109
    %v111 = vmul.f32 %v110, %v105
    %v112 = vmul.f32 %v110, %v106
    %v113 = vlaneseq
    %v114 = vshrl.u32 %v113, 7
    %v115 = vsub.s32 0, %v114
    %v116 = vrot.slane %v63, %v115
    %v117 = vadd.f32 %v111, %v116
    %v118 = vadd.f32 %v112, %v116
    %v119 = vld [vmem:[#allocation7 + $0x10] sm:$0xff]
    %v120 = vld [vmem:[#allocation7 + $0x18] sm:$0xff]
    %v121 = vld [vmem:[#allocation7 + $0x20] sm:$0xff]
    %v122 = vld [vmem:[#allocation7 + $0x28] sm:$0xff]
    %v123 = vld [vmem:[#allocation7 + $0x30] sm:$0x1]
    %v124 = vlaneseq
    %v125 = vshrl.u32 %v124, 7
    %v126 = vsub.s32 0, %v125
    %v127 = vrot.slane %v123, %v126
    %v129 = vsel %vm64, %v117, 0
    %v132 = vsel %vm64, %v118, 0
    %134 = vmatprep.subr.mxu0 0.0
    %135 = vmatpush1.msra.mxu0 0.0
    %136 = vmatprep.subr.mxu0 0.0
    %137 = vmatpush1.msra.mxu0 0.0
    %138 = vmatprep.subr.mxu0 0.0
    %139 = vmatpush1.msra.mxu0 0.0
    %140 = vmatprep.subr.mxu0 0.0
    %141 = vmatpush1.msra.mxu0 0.0
    %142 = vmatprep.subr.mxu0 0.0
    %143 = vmatpush1.msra.mxu0 0.0
    %144 = vmatprep.subr.mxu0 0.0
    %145 = vmatpush1.msra.mxu0 0.0
    %146 = vmatprep.subr.mxu0 0.0
    %147 = vmatpush1.msra.mxu0 0.0
    %148 = vmatprep.subr.mxu0 0.0
    %149 = vmatpush1.msra.mxu0 0.0
    %150 = vmatprep.subr.mxu0 0.0
    %151 = vmatpush1.msra.mxu0 0.0
    %152 = vmatprep.subr.mxu0 0.0
    %153 = vmatpush1.msra.mxu0 0.0
    %154 = vmatprep.subr.mxu0 0.0
    %155 = vmatpush1.msra.mxu0 0.0
    %156 = vmatprep.subr.mxu0 0.0
    %157 = vmatpush1.msra.mxu0 0.0
    %158 = vmatprep.subr.mxu0 0.0
    %159 = vmatpush1.msra.mxu0 %v122
    %160 = vmatprep.subr.mxu0 0.0
    %161 = vmatpush1.msra.mxu0 %v121
    %162 = vmatprep.subr.mxu0 0.0
    %163 = vmatpush1.msra.mxu0 %v120
    %164 = vmatprep.subr.mxu0 0.0
    %165 = vmatpush1.msra.mxu0 %v119
    %166 = vmatprep.subr.mxu0 0.0
    %167 = vmatpush2.msra.mxu0 0.0
    %168 = vmatprep.subr.mxu0 0.0
    %169 = vmatpush2.msra.mxu0 0.0
    %170 = vmatprep.subr.mxu0 0.0
    %171 = vmatpush2.msra.mxu0 0.0
    %172 = vmatprep.subr.mxu0 0.0
    %173 = vmatpush2.msra.mxu0 0.0
    %174 = vmatprep.subr.mxu0 0.0
    %175 = vmatpush2.msra.mxu0 0.0
    %176 = vmatprep.subr.mxu0 0.0
    %177 = vmatpush2.msra.mxu0 0.0
    %178 = vmatprep.subr.mxu0 0.0
    %179 = vmatpush2.msra.mxu0 0.0
    %180 = vmatprep.subr.mxu0 0.0
    %181 = vmatpush2.msra.mxu0 0.0
    %182 = vmatprep.subr.mxu0 0.0
    %183 = vmatpush2.msra.mxu0 0.0
    %184 = vmatprep.subr.mxu0 0.0
    %185 = vmatpush2.msra.mxu0 0.0
    %186 = vmatprep.subr.mxu0 0.0
    %187 = vmatpush2.msra.mxu0 0.0
    %188 = vmatprep.subr.mxu0 0.0
    %189 = vmatpush2.msra.mxu0 0.0
    %190 = vmatprep.subr.mxu0 0.0
    %191 = vmatpush2.msra.mxu0 0.0
    %192 = vmatprep.subr.mxu0 0.0
    %193 = vmatpush2.msra.mxu0 0.0
    %194 = vmatprep.subr.mxu0 0.0
    %195 = vmatpush2.msra.mxu0 0.0
    %196 = vmatprep.subr.mxu0 0.0
    %197 = vmatpush2.msra.mxu0 0.0
    %198 = vmatprep.mubr.f32.mxu0 0.0
    %199 = vmatmul.mubr.f32.gmra.mxu0 %v129
    %v200 = vpop.f32.mrf.mxu0
    %v201 = vadd.f32 %v127, %v200
    %v202 = vpop.f32.mrf.mxu0
    %203 = vmatprep.mubr.f32.mxu0 0.0
    %204 = vmatmul.mubr.f32.gmra.mxu0 %v132
    %v205 = vpop.f32.mrf.mxu0
    %v206 = vadd.f32 %v127, %v205
    %v207 = vpop.f32.mrf.mxu0
    %208 = vdwg.mxu0
    %v209 = vld [vmem:[#allocation7 + $0x38] sm:$0xff]
    %v210 = vld [vmem:[#allocation7 + $0x40] sm:$0xff]
    %v211 = vld [vmem:[#allocation7 + $0x48] sm:$0xff]
    %v212 = vld [vmem:[#allocation7 + $0x50] sm:$0xff]
    %v213 = vld [vmem:[#allocation7 + $0x58] sm:$0x1]
    %215 = vrot.lane.b32.xlu0 %v201, 96
    %v216 = vpop.permute.xlu0 %215
    %vm217 = vcmask 64512
    %v218 = vsel %vm217, %v201, 0
    %v220 = vsel %vm217, %v216, 0
    %222 = vmatprep.subr.mxu0 0.0
    %223 = vmatpush1.xpose.msra.mxu0 0.0
    %224 = vmatprep.subr.mxu0 0.0
    %225 = vmatpush1.xpose.msra.mxu0 0.0
    %226 = vmatprep.subr.mxu0 0.0
    %227 = vmatpush1.xpose.msra.mxu0 0.0
    %228 = vmatprep.subr.mxu0 0.0
    %229 = vmatpush1.xpose.msra.mxu0 0.0
    %230 = vmatprep.subr.mxu0 0.0
    %231 = vmatpush1.xpose.msra.mxu0 0.0
    %232 = vmatprep.subr.mxu0 0.0
    %233 = vmatpush1.xpose.msra.mxu0 0.0
    %234 = vmatprep.subr.mxu0 0.0
    %235 = vmatpush1.xpose.msra.mxu0 0.0
    %236 = vmatprep.subr.mxu0 0.0
    %237 = vmatpush1.xpose.msra.mxu0 0.0
    %238 = vmatprep.subr.mxu0 0.0
    %239 = vmatpush1.xpose.msra.mxu0 0.0
    %240 = vmatprep.subr.mxu0 0.0
    %241 = vmatpush1.xpose.msra.mxu0 0.0
    %242 = vmatprep.subr.mxu0 0.0
    %243 = vmatpush1.xpose.msra.mxu0 0.0
    %244 = vmatprep.subr.mxu0 0.0
    %245 = vmatpush1.xpose.msra.mxu0 0.0
    %246 = vmatprep.subr.mxu0 0.0
    %247 = vmatpush1.xpose.msra.mxu0 0.0
    %248 = vmatprep.subr.mxu0 0.0
    %249 = vmatpush1.xpose.msra.mxu0 0.0
    %250 = vmatprep.subr.mxu0 0.0
    %251 = vmatpush1.xpose.msra.mxu0 0.0
    %252 = vmatprep.subr.mxu0 0.0
    %253 = vmatpush1.xpose.msra.mxu0 %v220
    %254 = vmatprep.subr.mxu0 0.0
    %255 = vmatpush2.xpose.msra.mxu0 0.0
    %256 = vmatprep.subr.mxu0 0.0
    %257 = vmatpush2.xpose.msra.mxu0 0.0
    %258 = vmatprep.subr.mxu0 0.0
    %259 = vmatpush2.xpose.msra.mxu0 0.0
    %260 = vmatprep.subr.mxu0 0.0
    %261 = vmatpush2.xpose.msra.mxu0 0.0
    %262 = vmatprep.subr.mxu0 0.0
    %263 = vmatpush2.xpose.msra.mxu0 0.0
    %264 = vmatprep.subr.mxu0 0.0
    %265 = vmatpush2.xpose.msra.mxu0 0.0
    %266 = vmatprep.subr.mxu0 0.0
    %267 = vmatpush2.xpose.msra.mxu0 0.0
    %268 = vmatprep.subr.mxu0 0.0
    %269 = vmatpush2.xpose.msra.mxu0 0.0
    %270 = vmatprep.subr.mxu0 0.0
    %271 = vmatpush2.xpose.msra.mxu0 0.0
    %272 = vmatprep.subr.mxu0 0.0
    %273 = vmatpush2.xpose.msra.mxu0 0.0
    %274 = vmatprep.subr.mxu0 0.0
    %275 = vmatpush2.xpose.msra.mxu0 0.0
    %276 = vmatprep.subr.mxu0 0.0
    %277 = vmatpush2.xpose.msra.mxu0 0.0
    %278 = vmatprep.subr.mxu0 0.0
    %279 = vmatpush2.xpose.msra.mxu0 0.0
    %280 = vmatprep.subr.mxu0 0.0
    %281 = vmatpush2.xpose.msra.mxu0 0.0
    %282 = vmatprep.subr.mxu0 0.0
    %283 = vmatpush2.xpose.msra.mxu0 0.0
    %284 = vmatprep.subr.mxu0 0.0
    %285 = vmatpush2.xpose.msra.mxu0 0.0
    %286 = vmatprep.mubr.f32.mxu0 0.0
    %287 = vmatmul.mubr.f32.gmra.mxu0 %v218
    %v288 = vpop.f32.mrf.mxu0
    %v289 = vadd.f32 %v60, %v288
    %v290 = vpop.f32.mrf.mxu0
    %291 = vdwg.mxu0
    %293 = vrot.lane.b32.xlu0 %v206, 96
    %v294 = vpop.permute.xlu0 %293
    %v295 = vsel %vm217, %v206, 0
    %v297 = vsel %vm217, %v294, 0
    %299 = vmatprep.subr.mxu0 0.0
    %300 = vmatpush1.xpose.msra.mxu0 0.0
    %301 = vmatprep.subr.mxu0 0.0
    %302 = vmatpush1.xpose.msra.mxu0 0.0
    %303 = vmatprep.subr.mxu0 0.0
    %304 = vmatpush1.xpose.msra.mxu0 0.0
    %305 = vmatprep.subr.mxu0 0.0
    %306 = vmatpush1.xpose.msra.mxu0 0.0
    %307 = vmatprep.subr.mxu0 0.0
    %308 = vmatpush1.xpose.msra.mxu0 0.0
    %309 = vmatprep.subr.mxu0 0.0
    %310 = vmatpush1.xpose.msra.mxu0 0.0
    %311 = vmatprep.subr.mxu0 0.0
    %312 = vmatpush1.xpose.msra.mxu0 0.0
    %313 = vmatprep.subr.mxu0 0.0
    %314 = vmatpush1.xpose.msra.mxu0 0.0
    %315 = vmatprep.subr.mxu0 0.0
    %316 = vmatpush1.xpose.msra.mxu0 0.0
    %317 = vmatprep.subr.mxu0 0.0
    %318 = vmatpush1.xpose.msra.mxu0 0.0
    %319 = vmatprep.subr.mxu0 0.0
    %320 = vmatpush1.xpose.msra.mxu0 0.0
    %321 = vmatprep.subr.mxu0 0.0
    %322 = vmatpush1.xpose.msra.mxu0 0.0
    %323 = vmatprep.subr.mxu0 0.0
    %324 = vmatpush1.xpose.msra.mxu0 0.0
    %325 = vmatprep.subr.mxu0 0.0
    %326 = vmatpush1.xpose.msra.mxu0 0.0
    %327 = vmatprep.subr.mxu0 0.0
    %328 = vmatpush1.xpose.msra.mxu0 0.0
    %329 = vmatprep.subr.mxu0 0.0
    %330 = vmatpush1.xpose.msra.mxu0 %v297
    %331 = vmatprep.subr.mxu0 0.0
    %332 = vmatpush2.xpose.msra.mxu0 0.0
    %333 = vmatprep.subr.mxu0 0.0
    %334 = vmatpush2.xpose.msra.mxu0 0.0
    %335 = vmatprep.subr.mxu0 0.0
    %336 = vmatpush2.xpose.msra.mxu0 0.0
    %337 = vmatprep.subr.mxu0 0.0
    %338 = vmatpush2.xpose.msra.mxu0 0.0
    %339 = vmatprep.subr.mxu0 0.0
    %340 = vmatpush2.xpose.msra.mxu0 0.0
    %341 = vmatprep.subr.mxu0 0.0
    %342 = vmatpush2.xpose.msra.mxu0 0.0
    %343 = vmatprep.subr.mxu0 0.0
    %344 = vmatpush2.xpose.msra.mxu0 0.0
    %345 = vmatprep.subr.mxu0 0.0
    %346 = vmatpush2.xpose.msra.mxu0 0.0
    %347 = vmatprep.subr.mxu0 0.0
    %348 = vmatpush2.xpose.msra.mxu0 0.0
    %349 = vmatprep.subr.mxu0 0.0
    %350 = vmatpush2.xpose.msra.mxu0 0.0
    %351 = vmatprep.subr.mxu0 0.0
    %352 = vmatpush2.xpose.msra.mxu0 0.0
    %353 = vmatprep.subr.mxu0 0.0
    %354 = vmatpush2.xpose.msra.mxu0 0.0
    %355 = vmatprep.subr.mxu0 0.0
    %356 = vmatpush2.xpose.msra.mxu0 0.0
    %357 = vmatprep.subr.mxu0 0.0
    %358 = vmatpush2.xpose.msra.mxu0 0.0
    %359 = vmatprep.subr.mxu0 0.0
    %360 = vmatpush2.xpose.msra.mxu0 0.0
    %361 = vmatprep.subr.mxu0 0.0
    %362 = vmatpush2.xpose.msra.mxu0 0.0
    %363 = vmatprep.mubr.f32.mxu0 0.0
    %364 = vmatmul.mubr.f32.gmra.mxu0 %v295
    %v365 = vpop.f32.mrf.mxu0
    %v366 = vadd.f32 %v61, %v365
    %v367 = vpop.f32.mrf.mxu0
    %368 = vdwg.mxu0
    %v369 = vsel %vm217, %v289, -inf
    %370 = vmax.xlane.f32.xlu0 %v369
    %v371 = vpop.xlane.xlu0 %370
    %v372 = vsel %vm217, %v366, -inf
    %373 = vmax.xlane.f32.xlu0 %v372
    %v374 = vpop.xlane.xlu0 %373
    %v375 = vsub.f32 %v289, %v371
    %v376 = vsub.f32 %v366, %v374
    %v377 = vmul.f32 %v375, 1.442695
    %v378 = vpow.pop %v377
    %v379 = vmul.f32 %v376, 1.442695
    %v380 = vpow.pop %v379
    %v381 = vsel %vm217, %v378, 0.0
    %382 = vadd.xlane.f32.xlu0 %v381
    %v383 = vpop.xlane.xlu0 %382
    %v384 = vsel %vm217, %v380, 0.0
    %385 = vadd.xlane.f32.xlu0 %v384
    %v386 = vpop.xlane.xlu0 %385
    %v387 = vrcp.pop %v383
    %v388 = vmul.f32 1.0, %v387
    %v389 = vrcp.pop %v386
    %v390 = vmul.f32 1.0, %v389
    %v391 = vmul.f32 %v378, %v388
    %v392 = vmul.f32 %v380, %v390
    %393 = vrot.lane.b32.xlu0 %v201, 64
    %v394 = vpop.permute.xlu0 %393
    %v397 = vsel %vm217, %v391, 0
    %399 = vmatprep.subr.mxu0 0.0
    %400 = vmatpush1.msra.mxu0 0.0
    %401 = vmatprep.subr.mxu0 0.0
    %402 = vmatpush1.msra.mxu0 0.0
    %403 = vmatprep.subr.mxu0 0.0
    %404 = vmatpush1.msra.mxu0 0.0
    %405 = vmatprep.subr.mxu0 0.0
    %406 = vmatpush1.msra.mxu0 0.0
    %407 = vmatprep.subr.mxu0 0.0
    %408 = vmatpush1.msra.mxu0 0.0
    %409 = vmatprep.subr.mxu0 0.0
    %410 = vmatpush1.msra.mxu0 0.0
    %411 = vmatprep.subr.mxu0 0.0
    %412 = vmatpush1.msra.mxu0 0.0
    %413 = vmatprep.subr.mxu0 0.0
    %414 = vmatpush1.msra.mxu0 0.0
    %415 = vmatprep.subr.mxu0 0.0
    %416 = vmatpush1.msra.mxu0 0.0
    %417 = vmatprep.subr.mxu0 0.0
    %418 = vmatpush1.msra.mxu0 0.0
    %419 = vmatprep.subr.mxu0 0.0
    %420 = vmatpush1.msra.mxu0 0.0
    %421 = vmatprep.subr.mxu0 0.0
    %422 = vmatpush1.msra.mxu0 0.0
    %423 = vmatprep.subr.mxu0 0.0
    %424 = vmatpush1.msra.mxu0 0.0
    %425 = vmatprep.subr.mxu0 0.0
    %426 = vmatpush1.msra.mxu0 0.0
    %427 = vmatprep.subr.mxu0 0.0
    %428 = vmatpush1.msra.mxu0 0.0
    %429 = vmatprep.subr.mxu0 0.0
    %430 = vmatpush1.msra.mxu0 %v394
    %431 = vmatprep.subr.mxu0 0.0
    %432 = vmatpush2.msra.mxu0 0.0
    %433 = vmatprep.subr.mxu0 0.0
    %434 = vmatpush2.msra.mxu0 0.0
    %435 = vmatprep.subr.mxu0 0.0
    %436 = vmatpush2.msra.mxu0 0.0
    %437 = vmatprep.subr.mxu0 0.0
    %438 = vmatpush2.msra.mxu0 0.0
    %439 = vmatprep.subr.mxu0 0.0
    %440 = vmatpush2.msra.mxu0 0.0
    %441 = vmatprep.subr.mxu0 0.0
    %442 = vmatpush2.msra.mxu0 0.0
    %443 = vmatprep.subr.mxu0 0.0
    %444 = vmatpush2.msra.mxu0 0.0
    %445 = vmatprep.subr.mxu0 0.0
    %446 = vmatpush2.msra.mxu0 0.0
    %447 = vmatprep.subr.mxu0 0.0
    %448 = vmatpush2.msra.mxu0 0.0
    %449 = vmatprep.subr.mxu0 0.0
    %450 = vmatpush2.msra.mxu0 0.0
    %451 = vmatprep.subr.mxu0 0.0
    %452 = vmatpush2.msra.mxu0 0.0
    %453 = vmatprep.subr.mxu0 0.0
    %454 = vmatpush2.msra.mxu0 0.0
    %455 = vmatprep.subr.mxu0 0.0
    %456 = vmatpush2.msra.mxu0 0.0
    %457 = vmatprep.subr.mxu0 0.0
    %458 = vmatpush2.msra.mxu0 0.0
    %459 = vmatprep.subr.mxu0 0.0
    %460 = vmatpush2.msra.mxu0 0.0
    %461 = vmatprep.subr.mxu0 0.0
    %462 = vmatpush2.msra.mxu0 0.0
    %463 = vmatprep.mubr.f32.mxu0 0.0
    %464 = vmatmul.mubr.f32.gmra.mxu0 %v397
    %v465 = vpop.f32.mrf.mxu0
    %v466 = vadd.f32 0.0, %v465
    %v467 = vpop.f32.mrf.mxu0
    %468 = vdwg.mxu0
    %469 = vrot.lane.b32.xlu0 %v206, 64
    %v470 = vpop.permute.xlu0 %469
    %v473 = vsel %vm217, %v392, 0
    %475 = vmatprep.subr.mxu0 0.0
    %476 = vmatpush1.msra.mxu0 0.0
    %477 = vmatprep.subr.mxu0 0.0
    %478 = vmatpush1.msra.mxu0 0.0
    %479 = vmatprep.subr.mxu0 0.0
    %480 = vmatpush1.msra.mxu0 0.0
    %481 = vmatprep.subr.mxu0 0.0
    %482 = vmatpush1.msra.mxu0 0.0
    %483 = vmatprep.subr.mxu0 0.0
    %484 = vmatpush1.msra.mxu0 0.0
    %485 = vmatprep.subr.mxu0 0.0
    %486 = vmatpush1.msra.mxu0 0.0
    %487 = vmatprep.subr.mxu0 0.0
    %488 = vmatpush1.msra.mxu0 0.0
    %489 = vmatprep.subr.mxu0 0.0
    %490 = vmatpush1.msra.mxu0 0.0
    %491 = vmatprep.subr.mxu0 0.0
    %492 = vmatpush1.msra.mxu0 0.0
    %493 = vmatprep.subr.mxu0 0.0
    %494 = vmatpush1.msra.mxu0 0.0
    %495 = vmatprep.subr.mxu0 0.0
    %496 = vmatpush1.msra.mxu0 0.0
    %497 = vmatprep.subr.mxu0 0.0
    %498 = vmatpush1.msra.mxu0 0.0
    %499 = vmatprep.subr.mxu0 0.0
    %500 = vmatpush1.msra.mxu0 0.0
    %501 = vmatprep.subr.mxu0 0.0
    %502 = vmatpush1.msra.mxu0 0.0
    %503 = vmatprep.subr.mxu0 0.0
    %504 = vmatpush1.msra.mxu0 0.0
    %505 = vmatprep.subr.mxu0 0.0
    %506 = vmatpush1.msra.mxu0 %v470
    %507 = vmatprep.subr.mxu0 0.0
    %508 = vmatpush2.msra.mxu0 0.0
    %509 = vmatprep.subr.mxu0 0.0
    %510 = vmatpush2.msra.mxu0 0.0
    %511 = vmatprep.subr.mxu0 0.0
    %512 = vmatpush2.msra.mxu0 0.0
    %513 = vmatprep.subr.mxu0 0.0
    %514 = vmatpush2.msra.mxu0 0.0
    %515 = vmatprep.subr.mxu0 0.0
    %516 = vmatpush2.msra.mxu0 0.0
    %517 = vmatprep.subr.mxu0 0.0
    %518 = vmatpush2.msra.mxu0 0.0
    %519 = vmatprep.subr.mxu0 0.0
    %520 = vmatpush2.msra.mxu0 0.0
    %521 = vmatprep.subr.mxu0 0.0
    %522 = vmatpush2.msra.mxu0 0.0
    %523 = vmatprep.subr.mxu0 0.0
    %524 = vmatpush2.msra.mxu0 0.0
    %525 = vmatprep.subr.mxu0 0.0
    %526 = vmatpush2.msra.mxu0 0.0
    %527 = vmatprep.subr.mxu0 0.0
    %528 = vmatpush2.msra.mxu0 0.0
    %529 = vmatprep.subr.mxu0 0.0
    %530 = vmatpush2.msra.mxu0 0.0
    %531 = vmatprep.subr.mxu0 0.0
    %532 = vmatpush2.msra.mxu0 0.0
    %533 = vmatprep.subr.mxu0 0.0
    %534 = vmatpush2.msra.mxu0 0.0
    %535 = vmatprep.subr.mxu0 0.0
    %536 = vmatpush2.msra.mxu0 0.0
    %537 = vmatprep.subr.mxu0 0.0
    %538 = vmatpush2.msra.mxu0 0.0
    %539 = vmatprep.mubr.f32.mxu0 0.0
    %540 = vmatmul.mubr.f32.gmra.mxu0 %v473
    %v541 = vpop.f32.mrf.mxu0
    %v542 = vadd.f32 0.0, %v541
    %v543 = vpop.f32.mrf.mxu0
    %544 = vdwg.mxu0
    %v546 = vsel %vm217, %v466, 0
    %v549 = vsel %vm217, %v542, 0
    %551 = vmatprep.subr.mxu0 0.0
    %552 = vmatpush1.msra.mxu0 0.0
    %553 = vmatprep.subr.mxu0 0.0
    %554 = vmatpush1.msra.mxu0 0.0
    %555 = vmatprep.subr.mxu0 0.0
    %556 = vmatpush1.msra.mxu0 0.0
    %557 = vmatprep.subr.mxu0 0.0
    %558 = vmatpush1.msra.mxu0 0.0
    %559 = vmatprep.subr.mxu0 0.0
    %560 = vmatpush1.msra.mxu0 0.0
    %561 = vmatprep.subr.mxu0 0.0
    %562 = vmatpush1.msra.mxu0 0.0
    %563 = vmatprep.subr.mxu0 0.0
    %564 = vmatpush1.msra.mxu0 0.0
    %565 = vmatprep.subr.mxu0 0.0
    %566 = vmatpush1.msra.mxu0 0.0
    %567 = vmatprep.subr.mxu0 0.0
    %568 = vmatpush1.msra.mxu0 0.0
    %569 = vmatprep.subr.mxu0 0.0
    %570 = vmatpush1.msra.mxu0 0.0
    %571 = vmatprep.subr.mxu0 0.0
    %572 = vmatpush1.msra.mxu0 0.0
    %573 = vmatprep.subr.mxu0 0.0
    %574 = vmatpush1.msra.mxu0 0.0
    %575 = vmatprep.subr.mxu0 0.0
    %576 = vmatpush1.msra.mxu0 0.0
    %577 = vmatprep.subr.mxu0 0.0
    %578 = vmatpush1.msra.mxu0 0.0
    %579 = vmatprep.subr.mxu0 0.0
    %580 = vmatpush1.msra.mxu0 0.0
    %581 = vmatprep.subr.mxu0 0.0
    %582 = vmatpush1.msra.mxu0 %v209
    %583 = vmatprep.subr.mxu0 0.0
    %584 = vmatpush2.msra.mxu0 0.0
    %585 = vmatprep.subr.mxu0 0.0
    %586 = vmatpush2.msra.mxu0 0.0
    %587 = vmatprep.subr.mxu0 0.0
    %588 = vmatpush2.msra.mxu0 0.0
    %589 = vmatprep.subr.mxu0 0.0
    %590 = vmatpush2.msra.mxu0 0.0
    %591 = vmatprep.subr.mxu0 0.0
    %592 = vmatpush2.msra.mxu0 0.0
    %593 = vmatprep.subr.mxu0 0.0
    %594 = vmatpush2.msra.mxu0 0.0
    %595 = vmatprep.subr.mxu0 0.0
    %596 = vmatpush2.msra.mxu0 0.0
    %597 = vmatprep.subr.mxu0 0.0
    %598 = vmatpush2.msra.mxu0 0.0
    %599 = vmatprep.subr.mxu0 0.0
    %600 = vmatpush2.msra.mxu0 0.0
    %601 = vmatprep.subr.mxu0 0.0
    %602 = vmatpush2.msra.mxu0 0.0
    %603 = vmatprep.subr.mxu0 0.0
    %604 = vmatpush2.msra.mxu0 0.0
    %605 = vmatprep.subr.mxu0 0.0
    %606 = vmatpush2.msra.mxu0 0.0
    %607 = vmatprep.subr.mxu0 0.0
    %608 = vmatpush2.msra.mxu0 0.0
    %609 = vmatprep.subr.mxu0 0.0
    %610 = vmatpush2.msra.mxu0 0.0
    %611 = vmatprep.subr.mxu0 0.0
    %612 = vmatpush2.msra.mxu0 0.0
    %613 = vmatprep.subr.mxu0 0.0
    %614 = vmatpush2.msra.mxu0 0.0
    %615 = vmatprep.mubr.f32.mxu0 0.0
    %616 = vmatmul.mubr.f32.gmra.mxu0 %v546
    %v617 = vpop.f32.mrf.mxu0
    %v618 = vadd.f32 0.0, %v617
    %v619 = vpop.f32.mrf.mxu0
    %620 = vmatprep.mubr.f32.mxu0 0.0
    %621 = vmatmul.mubr.f32.gmra.mxu0 %v549
    %v622 = vpop.f32.mrf.mxu0
    %v623 = vadd.f32 0.0, %v622
    %v624 = vpop.f32.mrf.mxu0
    %625 = vdwg.mxu0
    %v626 = vlaneseq
    %v627 = vshrl.u32 %v626, 7
    %v628 = vsub.s32 0, %v627
    %v629 = vrot.slane %v213, %v628
    %v630 = vadd.f32 %v629, %v618
    %v631 = vadd.f32 %v629, %v623
    %632 = vrot.lane.b32.xlu0 %v201, 120
    %v633 = vpop.permute.xlu0 %632
    %634 = vrot.lane.b32.xlu0 %v201, 88
    %v635 = vpop.permute.xlu0 %634
    %v636 = vsel %vm217, %v633, 0
    %v638 = vsel %vm217, %v635, 0
    %640 = vmatprep.subr.mxu0 0.0
    %641 = vmatpush1.xpose.msra.mxu0 0.0
    %642 = vmatprep.subr.mxu0 0.0
    %643 = vmatpush1.xpose.msra.mxu0 0.0
    %644 = vmatprep.subr.mxu0 0.0
    %645 = vmatpush1.xpose.msra.mxu0 0.0
    %646 = vmatprep.subr.mxu0 0.0
    %647 = vmatpush1.xpose.msra.mxu0 0.0
    %648 = vmatprep.subr.mxu0 0.0
    %649 = vmatpush1.xpose.msra.mxu0 0.0
    %650 = vmatprep.subr.mxu0 0.0
    %651 = vmatpush1.xpose.msra.mxu0 0.0
    %652 = vmatprep.subr.mxu0 0.0
    %653 = vmatpush1.xpose.msra.mxu0 0.0
    %654 = vmatprep.subr.mxu0 0.0
    %655 = vmatpush1.xpose.msra.mxu0 0.0
    %656 = vmatprep.subr.mxu0 0.0
    %657 = vmatpush1.xpose.msra.mxu0 0.0
    %658 = vmatprep.subr.mxu0 0.0
    %659 = vmatpush1.xpose.msra.mxu0 0.0
    %660 = vmatprep.subr.mxu0 0.0
    %661 = vmatpush1.xpose.msra.mxu0 0.0
    %662 = vmatprep.subr.mxu0 0.0
    %663 = vmatpush1.xpose.msra.mxu0 0.0
    %664 = vmatprep.subr.mxu0 0.0
    %665 = vmatpush1.xpose.msra.mxu0 0.0
    %666 = vmatprep.subr.mxu0 0.0
    %667 = vmatpush1.xpose.msra.mxu0 0.0
    %668 = vmatprep.subr.mxu0 0.0
    %669 = vmatpush1.xpose.msra.mxu0 0.0
    %670 = vmatprep.subr.mxu0 0.0
    %671 = vmatpush1.xpose.msra.mxu0 %v638
    %672 = vmatprep.subr.mxu0 0.0
    %673 = vmatpush2.xpose.msra.mxu0 0.0
    %674 = vmatprep.subr.mxu0 0.0
    %675 = vmatpush2.xpose.msra.mxu0 0.0
    %676 = vmatprep.subr.mxu0 0.0
    %677 = vmatpush2.xpose.msra.mxu0 0.0
    %678 = vmatprep.subr.mxu0 0.0
    %679 = vmatpush2.xpose.msra.mxu0 0.0
    %680 = vmatprep.subr.mxu0 0.0
    %681 = vmatpush2.xpose.msra.mxu0 0.0
    %682 = vmatprep.subr.mxu0 0.0
    %683 = vmatpush2.xpose.msra.mxu0 0.0
    %684 = vmatprep.subr.mxu0 0.0
    %685 = vmatpush2.xpose.msra.mxu0 0.0
    %686 = vmatprep.subr.mxu0 0.0
    %687 = vmatpush2.xpose.msra.mxu0 0.0
    %688 = vmatprep.subr.mxu0 0.0
    %689 = vmatpush2.xpose.msra.mxu0 0.0
    %690 = vmatprep.subr.mxu0 0.0
    %691 = vmatpush2.xpose.msra.mxu0 0.0
    %692 = vmatprep.subr.mxu0 0.0
    %693 = vmatpush2.xpose.msra.mxu0 0.0
    %694 = vmatprep.subr.mxu0 0.0
    %695 = vmatpush2.xpose.msra.mxu0 0.0
    %696 = vmatprep.subr.mxu0 0.0
    %697 = vmatpush2.xpose.msra.mxu0 0.0
    %698 = vmatprep.subr.mxu0 0.0
    %699 = vmatpush2.xpose.msra.mxu0 0.0
    %700 = vmatprep.subr.mxu0 0.0
    %701 = vmatpush2.xpose.msra.mxu0 0.0
    %702 = vmatprep.subr.mxu0 0.0
    %703 = vmatpush2.xpose.msra.mxu0 0.0
    %704 = vmatprep.mubr.f32.mxu0 0.0
    %705 = vmatmul.mubr.f32.gmra.mxu0 %v636
    %v706 = vpop.f32.mrf.mxu0
    %v707 = vadd.f32 %v60, %v706
    %v708 = vpop.f32.mrf.mxu0
    %709 = vdwg.mxu0
    %710 = vrot.lane.b32.xlu0 %v206, 120
    %v711 = vpop.permute.xlu0 %710
    %712 = vrot.lane.b32.xlu0 %v206, 88
    %v713 = vpop.permute.xlu0 %712
    %v714 = vsel %vm217, %v711, 0
    %v716 = vsel %vm217, %v713, 0
    %718 = vmatprep.subr.mxu0 0.0
    %719 = vmatpush1.xpose.msra.mxu0 0.0
    %720 = vmatprep.subr.mxu0 0.0
    %721 = vmatpush1.xpose.msra.mxu0 0.0
    %722 = vmatprep.subr.mxu0 0.0
    %723 = vmatpush1.xpose.msra.mxu0 0.0
    %724 = vmatprep.subr.mxu0 0.0
    %725 = vmatpush1.xpose.msra.mxu0 0.0
    %726 = vmatprep.subr.mxu0 0.0
    %727 = vmatpush1.xpose.msra.mxu0 0.0
    %728 = vmatprep.subr.mxu0 0.0
    %729 = vmatpush1.xpose.msra.mxu0 0.0
    %730 = vmatprep.subr.mxu0 0.0
    %731 = vmatpush1.xpose.msra.mxu0 0.0
    %732 = vmatprep.subr.mxu0 0.0
    %733 = vmatpush1.xpose.msra.mxu0 0.0
    %734 = vmatprep.subr.mxu0 0.0
    %735 = vmatpush1.xpose.msra.mxu0 0.0
    %736 = vmatprep.subr.mxu0 0.0
    %737 = vmatpush1.xpose.msra.mxu0 0.0
    %738 = vmatprep.subr.mxu0 0.0
    %739 = vmatpush1.xpose.msra.mxu0 0.0
    %740 = vmatprep.subr.mxu0 0.0
    %741 = vmatpush1.xpose.msra.mxu0 0.0
    %742 = vmatprep.subr.mxu0 0.0
    %743 = vmatpush1.xpose.msra.mxu0 0.0
    %744 = vmatprep.subr.mxu0 0.0
    %745 = vmatpush1.xpose.msra.mxu0 0.0
    %746 = vmatprep.subr.mxu0 0.0
    %747 = vmatpush1.xpose.msra.mxu0 0.0
    %748 = vmatprep.subr.mxu0 0.0
    %749 = vmatpush1.xpose.msra.mxu0 %v716
    %750 = vmatprep.subr.mxu0 0.0
    %751 = vmatpush2.xpose.msra.mxu0 0.0
    %752 = vmatprep.subr.mxu0 0.0
    %753 = vmatpush2.xpose.msra.mxu0 0.0
    %754 = vmatprep.subr.mxu0 0.0
    %755 = vmatpush2.xpose.msra.mxu0 0.0
    %756 = vmatprep.subr.mxu0 0.0
    %757 = vmatpush2.xpose.msra.mxu0 0.0
    %758 = vmatprep.subr.mxu0 0.0
    %759 = vmatpush2.xpose.msra.mxu0 0.0
    %760 = vmatprep.subr.mxu0 0.0
    %761 = vmatpush2.xpose.msra.mxu0 0.0
    %762 = vmatprep.subr.mxu0 0.0
    %763 = vmatpush2.xpose.msra.mxu0 0.0
    %764 = vmatprep.subr.mxu0 0.0
    %765 = vmatpush2.xpose.msra.mxu0 0.0
    %766 = vmatprep.subr.mxu0 0.0
    %767 = vmatpush2.xpose.msra.mxu0 0.0
    %768 = vmatprep.subr.mxu0 0.0
    %769 = vmatpush2.xpose.msra.mxu0 0.0
    %770 = vmatprep.subr.mxu0 0.0
    %771 = vmatpush2.xpose.msra.mxu0 0.0
    %772 = vmatprep.subr.mxu0 0.0
    %773 = vmatpush2.xpose.msra.mxu0 0.0
    %774 = vmatprep.subr.mxu0 0.0
    %775 = vmatpush2.xpose.msra.mxu0 0.0
    %776 = vmatprep.subr.mxu0 0.0
    %777 = vmatpush2.xpose.msra.mxu0 0.0
    %778 = vmatprep.subr.mxu0 0.0
    %779 = vmatpush2.xpose.msra.mxu0 0.0
    %780 = vmatprep.subr.mxu0 0.0
    %781 = vmatpush2.xpose.msra.mxu0 0.0
    %782 = vmatprep.mubr.f32.mxu0 0.0
    %783 = vmatmul.mubr.f32.gmra.mxu0 %v714
    %v784 = vpop.f32.mrf.mxu0
    %v785 = vadd.f32 %v61, %v784
    %v786 = vpop.f32.mrf.mxu0
    %787 = vdwg.mxu0
    %v788 = vsel %vm217, %v707, -inf
    %789 = vmax.xlane.f32.xlu0 %v788
    %v790 = vpop.xlane.xlu0 %789
    %v791 = vsel %vm217, %v785, -inf
    %792 = vmax.xlane.f32.xlu0 %v791
    %v793 = vpop.xlane.xlu0 %792
    %v794 = vsub.f32 %v707, %v790
    %v795 = vsub.f32 %v785, %v793
    %v796 = vmul.f32 %v794, 1.442695
    %v797 = vpow.pop %v796
    %v798 = vmul.f32 %v795, 1.442695
    %v799 = vpow.pop %v798
    %v800 = vsel %vm217, %v797, 0.0
    %801 = vadd.xlane.f32.xlu0 %v800
    %v802 = vpop.xlane.xlu0 %801
    %v803 = vsel %vm217, %v799, 0.0
    %804 = vadd.xlane.f32.xlu0 %v803
    %v805 = vpop.xlane.xlu0 %804
    %v806 = vrcp.pop %v802
    %v807 = vmul.f32 1.0, %v806
    %v808 = vrcp.pop %v805
    %v809 = vmul.f32 1.0, %v808
    %v810 = vmul.f32 %v797, %v807
    %v811 = vmul.f32 %v799, %v809
    %812 = vrot.lane.b32.xlu0 %v201, 56
    %v813 = vpop.permute.xlu0 %812
    %v816 = vsel %vm217, %v810, 0
    %818 = vmatprep.subr.mxu0 0.0
    %819 = vmatpush1.msra.mxu0 0.0
    %820 = vmatprep.subr.mxu0 0.0
    %821 = vmatpush1.msra.mxu0 0.0
    %822 = vmatprep.subr.mxu0 0.0
    %823 = vmatpush1.msra.mxu0 0.0
    %824 = vmatprep.subr.mxu0 0.0
    %825 = vmatpush1.msra.mxu0 0.0
    %826 = vmatprep.subr.mxu0 0.0
    %827 = vmatpush1.msra.mxu0 0.0
    %828 = vmatprep.subr.mxu0 0.0
    %829 = vmatpush1.msra.mxu0 0.0
    %830 = vmatprep.subr.mxu0 0.0
    %831 = vmatpush1.msra.mxu0 0.0
    %832 = vmatprep.subr.mxu0 0.0
    %833 = vmatpush1.msra.mxu0 0.0
    %834 = vmatprep.subr.mxu0 0.0
    %835 = vmatpush1.msra.mxu0 0.0
    %836 = vmatprep.subr.mxu0 0.0
    %837 = vmatpush1.msra.mxu0 0.0
    %838 = vmatprep.subr.mxu0 0.0
    %839 = vmatpush1.msra.mxu0 0.0
    %840 = vmatprep.subr.mxu0 0.0
    %841 = vmatpush1.msra.mxu0 0.0
    %842 = vmatprep.subr.mxu0 0.0
    %843 = vmatpush1.msra.mxu0 0.0
    %844 = vmatprep.subr.mxu0 0.0
    %845 = vmatpush1.msra.mxu0 0.0
    %846 = vmatprep.subr.mxu0 0.0
    %847 = vmatpush1.msra.mxu0 0.0
    %848 = vmatprep.subr.mxu0 0.0
    %849 = vmatpush1.msra.mxu0 %v813
    %850 = vmatprep.subr.mxu0 0.0
    %851 = vmatpush2.msra.mxu0 0.0
    %852 = vmatprep.subr.mxu0 0.0
    %853 = vmatpush2.msra.mxu0 0.0
    %854 = vmatprep.subr.mxu0 0.0
    %855 = vmatpush2.msra.mxu0 0.0
    %856 = vmatprep.subr.mxu0 0.0
    %857 = vmatpush2.msra.mxu0 0.0
    %858 = vmatprep.subr.mxu0 0.0
    %859 = vmatpush2.msra.mxu0 0.0
    %860 = vmatprep.subr.mxu0 0.0
    %861 = vmatpush2.msra.mxu0 0.0
    %862 = vmatprep.subr.mxu0 0.0
    %863 = vmatpush2.msra.mxu0 0.0
    %864 = vmatprep.subr.mxu0 0.0
    %865 = vmatpush2.msra.mxu0 0.0
    %866 = vmatprep.subr.mxu0 0.0
    %867 = vmatpush2.msra.mxu0 0.0
    %868 = vmatprep.subr.mxu0 0.0
    %869 = vmatpush2.msra.mxu0 0.0
    %870 = vmatprep.subr.mxu0 0.0
    %871 = vmatpush2.msra.mxu0 0.0
    %872 = vmatprep.subr.mxu0 0.0
    %873 = vmatpush2.msra.mxu0 0.0
    %874 = vmatprep.subr.mxu0 0.0
    %875 = vmatpush2.msra.mxu0 0.0
    %876 = vmatprep.subr.mxu0 0.0
    %877 = vmatpush2.msra.mxu0 0.0
    %878 = vmatprep.subr.mxu0 0.0
    %879 = vmatpush2.msra.mxu0 0.0
    %880 = vmatprep.subr.mxu0 0.0
    %881 = vmatpush2.msra.mxu0 0.0
    %882 = vmatprep.mubr.f32.mxu0 0.0
    %883 = vmatmul.mubr.f32.gmra.mxu0 %v816
    %v884 = vpop.f32.mrf.mxu0
    %v885 = vadd.f32 0.0, %v884
    %v886 = vpop.f32.mrf.mxu0
    %887 = vdwg.mxu0
    %888 = vrot.lane.b32.xlu0 %v206, 56
    %v889 = vpop.permute.xlu0 %888
    %v892 = vsel %vm217, %v811, 0
    %894 = vmatprep.subr.mxu0 0.0
    %895 = vmatpush1.msra.mxu0 0.0
    %896 = vmatprep.subr.mxu0 0.0
    %897 = vmatpush1.msra.mxu0 0.0
    %898 = vmatprep.subr.mxu0 0.0
    %899 = vmatpush1.msra.mxu0 0.0
    %900 = vmatprep.subr.mxu0 0.0
    %901 = vmatpush1.msra.mxu0 0.0
    %902 = vmatprep.subr.mxu0 0.0
    %903 = vmatpush1.msra.mxu0 0.0
    %904 = vmatprep.subr.mxu0 0.0
    %905 = vmatpush1.msra.mxu0 0.0
    %906 = vmatprep.subr.mxu0 0.0
    %907 = vmatpush1.msra.mxu0 0.0
    %908 = vmatprep.subr.mxu0 0.0
    %909 = vmatpush1.msra.mxu0 0.0
    %910 = vmatprep.subr.mxu0 0.0
    %911 = vmatpush1.msra.mxu0 0.0
    %912 = vmatprep.subr.mxu0 0.0
    %913 = vmatpush1.msra.mxu0 0.0
    %914 = vmatprep.subr.mxu0 0.0
    %915 = vmatpush1.msra.mxu0 0.0
    %916 = vmatprep.subr.mxu0 0.0
    %917 = vmatpush1.msra.mxu0 0.0
    %918 = vmatprep.subr.mxu0 0.0
    %919 = vmatpush1.msra.mxu0 0.0
    %920 = vmatprep.subr.mxu0 0.0
    %921 = vmatpush1.msra.mxu0 0.0
    %922 = vmatprep.subr.mxu0 0.0
    %923 = vmatpush1.msra.mxu0 0.0
    %924 = vmatprep.subr.mxu0 0.0
    %925 = vmatpush1.msra.mxu0 %v889
    %926 = vmatprep.subr.mxu0 0.0
    %927 = vmatpush2.msra.mxu0 0.0
    %928 = vmatprep.subr.mxu0 0.0
    %929 = vmatpush2.msra.mxu0 0.0
    %930 = vmatprep.subr.mxu0 0.0
    %931 = vmatpush2.msra.mxu0 0.0
    %932 = vmatprep.subr.mxu0 0.0
    %933 = vmatpush2.msra.mxu0 0.0
    %934 = vmatprep.subr.mxu0 0.0
    %935 = vmatpush2.msra.mxu0 0.0
    %936 = vmatprep.subr.mxu0 0.0
    %937 = vmatpush2.msra.mxu0 0.0
    %938 = vmatprep.subr.mxu0 0.0
    %939 = vmatpush2.msra.mxu0 0.0
    %940 = vmatprep.subr.mxu0 0.0
    %941 = vmatpush2.msra.mxu0 0.0
    %942 = vmatprep.subr.mxu0 0.0
    %943 = vmatpush2.msra.mxu0 0.0
    %944 = vmatprep.subr.mxu0 0.0
    %945 = vmatpush2.msra.mxu0 0.0
    %946 = vmatprep.subr.mxu0 0.0
    %947 = vmatpush2.msra.mxu0 0.0
    %948 = vmatprep.subr.mxu0 0.0
    %949 = vmatpush2.msra.mxu0 0.0
    %950 = vmatprep.subr.mxu0 0.0
    %951 = vmatpush2.msra.mxu0 0.0
    %952 = vmatprep.subr.mxu0 0.0
    %953 = vmatpush2.msra.mxu0 0.0
    %954 = vmatprep.subr.mxu0 0.0
    %955 = vmatpush2.msra.mxu0 0.0
    %956 = vmatprep.subr.mxu0 0.0
    %957 = vmatpush2.msra.mxu0 0.0
    %958 = vmatprep.mubr.f32.mxu0 0.0
    %959 = vmatmul.mubr.f32.gmra.mxu0 %v892
    %v960 = vpop.f32.mrf.mxu0
    %v961 = vadd.f32 0.0, %v960
    %v962 = vpop.f32.mrf.mxu0
    %963 = vdwg.mxu0
    %v965 = vsel %vm217, %v885, 0
    %v968 = vsel %vm217, %v961, 0
    %970 = vmatprep.subr.mxu0 0.0
    %971 = vmatpush1.msra.mxu0 0.0
    %972 = vmatprep.subr.mxu0 0.0
    %973 = vmatpush1.msra.mxu0 0.0
    %974 = vmatprep.subr.mxu0 0.0
    %975 = vmatpush1.msra.mxu0 0.0
    %976 = vmatprep.subr.mxu0 0.0
    %977 = vmatpush1.msra.mxu0 0.0
    %978 = vmatprep.subr.mxu0 0.0
    %979 = vmatpush1.msra.mxu0 0.0
    %980 = vmatprep.subr.mxu0 0.0
    %981 = vmatpush1.msra.mxu0 0.0
    %982 = vmatprep.subr.mxu0 0.0
    %983 = vmatpush1.msra.mxu0 0.0
    %984 = vmatprep.subr.mxu0 0.0
    %985 = vmatpush1.msra.mxu0 0.0
    %986 = vmatprep.subr.mxu0 0.0
    %987 = vmatpush1.msra.mxu0 0.0
    %988 = vmatprep.subr.mxu0 0.0
    %989 = vmatpush1.msra.mxu0 0.0
    %990 = vmatprep.subr.mxu0 0.0
    %991 = vmatpush1.msra.mxu0 0.0
    %992 = vmatprep.subr.mxu0 0.0
    %993 = vmatpush1.msra.mxu0 0.0
    %994 = vmatprep.subr.mxu0 0.0
    %995 = vmatpush1.msra.mxu0 0.0
    %996 = vmatprep.subr.mxu0 0.0
    %997 = vmatpush1.msra.mxu0 0.0
    %998 = vmatprep.subr.mxu0 0.0
    %999 = vmatpush1.msra.mxu0 0.0
    %1000 = vmatprep.subr.mxu0 0.0
    %1001 = vmatpush1.msra.mxu0 %v210
    %1002 = vmatprep.subr.mxu0 0.0
    %1003 = vmatpush2.msra.mxu0 0.0
    %1004 = vmatprep.subr.mxu0 0.0
    %1005 = vmatpush2.msra.mxu0 0.0
    %1006 = vmatprep.subr.mxu0 0.0
    %1007 = vmatpush2.msra.mxu0 0.0
    %1008 = vmatprep.subr.mxu0 0.0
    %1009 = vmatpush2.msra.mxu0 0.0
    %1010 = vmatprep.subr.mxu0 0.0
    %1011 = vmatpush2.msra.mxu0 0.0
    %1012 = vmatprep.subr.mxu0 0.0
    %1013 = vmatpush2.msra.mxu0 0.0
    %1014 = vmatprep.subr.mxu0 0.0
    %1015 = vmatpush2.msra.mxu0 0.0
    %1016 = vmatprep.subr.mxu0 0.0
    %1017 = vmatpush2.msra.mxu0 0.0
    %1018 = vmatprep.subr.mxu0 0.0
    %1019 = vmatpush2.msra.mxu0 0.0
    %1020 = vmatprep.subr.mxu0 0.0
    %1021 = vmatpush2.msra.mxu0 0.0
    %1022 = vmatprep.subr.mxu0 0.0
    %1023 = vmatpush2.msra.mxu0 0.0
    %1024 = vmatprep.subr.mxu0 0.0
    %1025 = vmatpush2.msra.mxu0 0.0
    %1026 = vmatprep.subr.mxu0 0.0
    %1027 = vmatpush2.msra.mxu0 0.0
    %1028 = vmatprep.subr.mxu0 0.0
    %1029 = vmatpush2.msra.mxu0 0.0
    %1030 = vmatprep.subr.mxu0 0.0
    %1031 = vmatpush2.msra.mxu0 0.0
    %1032 = vmatprep.subr.mxu0 0.0
    %1033 = vmatpush2.msra.mxu0 0.0
    %1034 = vmatprep.mubr.f32.mxu0 0.0
    %1035 = vmatmul.mubr.f32.gmra.mxu0 %v965
    %v1036 = vpop.f32.mrf.mxu0
    %v1037 = vadd.f32 0.0, %v1036
    %v1038 = vpop.f32.mrf.mxu0
    %1039 = vmatprep.mubr.f32.mxu0 0.0
    %1040 = vmatmul.mubr.f32.gmra.mxu0 %v968
    %v1041 = vpop.f32.mrf.mxu0
    %v1042 = vadd.f32 0.0, %v1041
    %v1043 = vpop.f32.mrf.mxu0
    %1044 = vdwg.mxu0
    %v1045 = vadd.f32 %v630, %v1037
    %v1046 = vadd.f32 %v631, %v1042
    %1047 = vrot.lane.b32.xlu0 %v201, 112
    %v1048 = vpop.permute.xlu0 %1047
    %1049 = vrot.lane.b32.xlu0 %v201, 80
    %v1050 = vpop.permute.xlu0 %1049
    %v1051 = vsel %vm217, %v1048, 0
    %v1053 = vsel %vm217, %v1050, 0
    %1055 = vmatprep.subr.mxu0 0.0
    %1056 = vmatpush1.xpose.msra.mxu0 0.0
    %1057 = vmatprep.subr.mxu0 0.0
    %1058 = vmatpush1.xpose.msra.mxu0 0.0
    %1059 = vmatprep.subr.mxu0 0.0
    %1060 = vmatpush1.xpose.msra.mxu0 0.0
    %1061 = vmatprep.subr.mxu0 0.0
    %1062 = vmatpush1.xpose.msra.mxu0 0.0
    %1063 = vmatprep.subr.mxu0 0.0
    %1064 = vmatpush1.xpose.msra.mxu0 0.0
    %1065 = vmatprep.subr.mxu0 0.0
    %1066 = vmatpush1.xpose.msra.mxu0 0.0
    %1067 = vmatprep.subr.mxu0 0.0
    %1068 = vmatpush1.xpose.msra.mxu0 0.0
    %1069 = vmatprep.subr.mxu0 0.0
    %1070 = vmatpush1.xpose.msra.mxu0 0.0
    %1071 = vmatprep.subr.mxu0 0.0
    %1072 = vmatpush1.xpose.msra.mxu0 0.0
    %1073 = vmatprep.subr.mxu0 0.0
    %1074 = vmatpush1.xpose.msra.mxu0 0.0
    %1075 = vmatprep.subr.mxu0 0.0
    %1076 = vmatpush1.xpose.msra.mxu0 0.0
    %1077 = vmatprep.subr.mxu0 0.0
    %1078 = vmatpush1.xpose.msra.mxu0 0.0
    %1079 = vmatprep.subr.mxu0 0.0
    %1080 = vmatpush1.xpose.msra.mxu0 0.0
    %1081 = vmatprep.subr.mxu0 0.0
    %1082 = vmatpush1.xpose.msra.mxu0 0.0
    %1083 = vmatprep.subr.mxu0 0.0
    %1084 = vmatpush1.xpose.msra.mxu0 0.0
    %1085 = vmatprep.subr.mxu0 0.0
    %1086 = vmatpush1.xpose.msra.mxu0 %v1053
    %1087 = vmatprep.subr.mxu0 0.0
    %1088 = vmatpush2.xpose.msra.mxu0 0.0
    %1089 = vmatprep.subr.mxu0 0.0
    %1090 = vmatpush2.xpose.msra.mxu0 0.0
    %1091 = vmatprep.subr.mxu0 0.0
    %1092 = vmatpush2.xpose.msra.mxu0 0.0
    %1093 = vmatprep.subr.mxu0 0.0
    %1094 = vmatpush2.xpose.msra.mxu0 0.0
    %1095 = vmatprep.subr.mxu0 0.0
    %1096 = vmatpush2.xpose.msra.mxu0 0.0
    %1097 = vmatprep.subr.mxu0 0.0
    %1098 = vmatpush2.xpose.msra.mxu0 0.0
    %1099 = vmatprep.subr.mxu0 0.0
    %1100 = vmatpush2.xpose.msra.mxu0 0.0
    %1101 = vmatprep.subr.mxu0 0.0
    %1102 = vmatpush2.xpose.msra.mxu0 0.0
    %1103 = vmatprep.subr.mxu0 0.0
    %1104 = vmatpush2.xpose.msra.mxu0 0.0
    %1105 = vmatprep.subr.mxu0 0.0
    %1106 = vmatpush2.xpose.msra.mxu0 0.0
    %1107 = vmatprep.subr.mxu0 0.0
    %1108 = vmatpush2.xpose.msra.mxu0 0.0
    %1109 = vmatprep.subr.mxu0 0.0
    %1110 = vmatpush2.xpose.msra.mxu0 0.0
    %1111 = vmatprep.subr.mxu0 0.0
    %1112 = vmatpush2.xpose.msra.mxu0 0.0
    %1113 = vmatprep.subr.mxu0 0.0
    %1114 = vmatpush2.xpose.msra.mxu0 0.0
    %1115 = vmatprep.subr.mxu0 0.0
    %1116 = vmatpush2.xpose.msra.mxu0 0.0
    %1117 = vmatprep.subr.mxu0 0.0
    %1118 = vmatpush2.xpose.msra.mxu0 0.0
    %1119 = vmatprep.mubr.f32.mxu0 0.0
    %1120 = vmatmul.mubr.f32.gmra.mxu0 %v1051
    %v1121 = vpop.f32.mrf.mxu0
    %v1122 = vadd.f32 %v60, %v1121
    %v1123 = vpop.f32.mrf.mxu0
    %1124 = vdwg.mxu0
    %1125 = vrot.lane.b32.xlu0 %v206, 112
    %v1126 = vpop.permute.xlu0 %1125
    %1127 = vrot.lane.b32.xlu0 %v206, 80
    %v1128 = vpop.permute.xlu0 %1127
    %v1129 = vsel %vm217, %v1126, 0
    %v1131 = vsel %vm217, %v1128, 0
    %1133 = vmatprep.subr.mxu0 0.0
    %1134 = vmatpush1.xpose.msra.mxu0 0.0
    %1135 = vmatprep.subr.mxu0 0.0
    %1136 = vmatpush1.xpose.msra.mxu0 0.0
    %1137 = vmatprep.subr.mxu0 0.0
    %1138 = vmatpush1.xpose.msra.mxu0 0.0
    %1139 = vmatprep.subr.mxu0 0.0
    %1140 = vmatpush1.xpose.msra.mxu0 0.0
    %1141 = vmatprep.subr.mxu0 0.0
    %1142 = vmatpush1.xpose.msra.mxu0 0.0
    %1143 = vmatprep.subr.mxu0 0.0
    %1144 = vmatpush1.xpose.msra.mxu0 0.0
    %1145 = vmatprep.subr.mxu0 0.0
    %1146 = vmatpush1.xpose.msra.mxu0 0.0
    %1147 = vmatprep.subr.mxu0 0.0
    %1148 = vmatpush1.xpose.msra.mxu0 0.0
    %1149 = vmatprep.subr.mxu0 0.0
    %1150 = vmatpush1.xpose.msra.mxu0 0.0
    %1151 = vmatprep.subr.mxu0 0.0
    %1152 = vmatpush1.xpose.msra.mxu0 0.0
    %1153 = vmatprep.subr.mxu0 0.0
    %1154 = vmatpush1.xpose.msra.mxu0 0.0
    %1155 = vmatprep.subr.mxu0 0.0
    %1156 = vmatpush1.xpose.msra.mxu0 0.0
    %1157 = vmatprep.subr.mxu0 0.0
    %1158 = vmatpush1.xpose.msra.mxu0 0.0
    %1159 = vmatprep.subr.mxu0 0.0
    %1160 = vmatpush1.xpose.msra.mxu0 0.0
    %1161 = vmatprep.subr.mxu0 0.0
    %1162 = vmatpush1.xpose.msra.mxu0 0.0
    %1163 = vmatprep.subr.mxu0 0.0
    %1164 = vmatpush1.xpose.msra.mxu0 %v1131
    %1165 = vmatprep.subr.mxu0 0.0
    %1166 = vmatpush2.xpose.msra.mxu0 0.0
    %1167 = vmatprep.subr.mxu0 0.0
    %1168 = vmatpush2.xpose.msra.mxu0 0.0
    %1169 = vmatprep.subr.mxu0 0.0
    %1170 = vmatpush2.xpose.msra.mxu0 0.0
    %1171 = vmatprep.subr.mxu0 0.0
    %1172 = vmatpush2.xpose.msra.mxu0 0.0
    %1173 = vmatprep.subr.mxu0 0.0
    %1174 = vmatpush2.xpose.msra.mxu0 0.0
    %1175 = vmatprep.subr.mxu0 0.0
    %1176 = vmatpush2.xpose.msra.mxu0 0.0
    %1177 = vmatprep.subr.mxu0 0.0
    %1178 = vmatpush2.xpose.msra.mxu0 0.0
    %1179 = vmatprep.subr.mxu0 0.0
    %1180 = vmatpush2.xpose.msra.mxu0 0.0
    %1181 = vmatprep.subr.mxu0 0.0
    %1182 = vmatpush2.xpose.msra.mxu0 0.0
    %1183 = vmatprep.subr.mxu0 0.0
    %1184 = vmatpush2.xpose.msra.mxu0 0.0
    %1185 = vmatprep.subr.mxu0 0.0
    %1186 = vmatpush2.xpose.msra.mxu0 0.0
    %1187 = vmatprep.subr.mxu0 0.0
    %1188 = vmatpush2.xpose.msra.mxu0 0.0
    %1189 = vmatprep.subr.mxu0 0.0
    %1190 = vmatpush2.xpose.msra.mxu0 0.0
    %1191 = vmatprep.subr.mxu0 0.0
    %1192 = vmatpush2.xpose.msra.mxu0 0.0
    %1193 = vmatprep.subr.mxu0 0.0
    %1194 = vmatpush2.xpose.msra.mxu0 0.0
    %1195 = vmatprep.subr.mxu0 0.0
    %1196 = vmatpush2.xpose.msra.mxu0 0.0
    %1197 = vmatprep.mubr.f32.mxu0 0.0
    %1198 = vmatmul.mubr.f32.gmra.mxu0 %v1129
    %v1199 = vpop.f32.mrf.mxu0
    %v1200 = vadd.f32 %v61, %v1199
    %v1201 = vpop.f32.mrf.mxu0
    %1202 = vdwg.mxu0
    %v1203 = vsel %vm217, %v1122, -inf
    %1204 = vmax.xlane.f32.xlu0 %v1203
    %v1205 = vpop.xlane.xlu0 %1204
    %v1206 = vsel %vm217, %v1200, -inf
    %1207 = vmax.xlane.f32.xlu0 %v1206
    %v1208 = vpop.xlane.xlu0 %1207
    %v1209 = vsub.f32 %v1122, %v1205
    %v1210 = vsub.f32 %v1200, %v1208
    %v1211 = vmul.f32 %v1209, 1.442695
    %v1212 = vpow.pop %v1211
    %v1213 = vmul.f32 %v1210, 1.442695
    %v1214 = vpow.pop %v1213
    %v1215 = vsel %vm217, %v1212, 0.0
    %1216 = vadd.xlane.f32.xlu0 %v1215
    %v1217 = vpop.xlane.xlu0 %1216
    %v1218 = vsel %vm217, %v1214, 0.0
    %1219 = vadd.xlane.f32.xlu0 %v1218
    %v1220 = vpop.xlane.xlu0 %1219
    %v1221 = vrcp.pop %v1217
    %v1222 = vmul.f32 1.0, %v1221
    %v1223 = vrcp.pop %v1220
    %v1224 = vmul.f32 1.0, %v1223
    %v1225 = vmul.f32 %v1212, %v1222
    %v1226 = vmul.f32 %v1214, %v1224
    %1227 = vrot.lane.b32.xlu0 %v201, 48
    %v1228 = vpop.permute.xlu0 %1227
    %v1231 = vsel %vm217, %v1225, 0
    %1233 = vmatprep.subr.mxu0 0.0
    %1234 = vmatpush1.msra.mxu0 0.0
    %1235 = vmatprep.subr.mxu0 0.0
    %1236 = vmatpush1.msra.mxu0 0.0
    %1237 = vmatprep.subr.mxu0 0.0
    %1238 = vmatpush1.msra.mxu0 0.0
    %1239 = vmatprep.subr.mxu0 0.0
    %1240 = vmatpush1.msra.mxu0 0.0
    %1241 = vmatprep.subr.mxu0 0.0
    %1242 = vmatpush1.msra.mxu0 0.0
    %1243 = vmatprep.subr.mxu0 0.0
    %1244 = vmatpush1.msra.mxu0 0.0
    %1245 = vmatprep.subr.mxu0 0.0
    %1246 = vmatpush1.msra.mxu0 0.0
    %1247 = vmatprep.subr.mxu0 0.0
    %1248 = vmatpush1.msra.mxu0 0.0
    %1249 = vmatprep.subr.mxu0 0.0
    %1250 = vmatpush1.msra.mxu0 0.0
    %1251 = vmatprep.subr.mxu0 0.0
    %1252 = vmatpush1.msra.mxu0 0.0
    %1253 = vmatprep.subr.mxu0 0.0
    %1254 = vmatpush1.msra.mxu0 0.0
    %1255 = vmatprep.subr.mxu0 0.0
    %1256 = vmatpush1.msra.mxu0 0.0
    %1257 = vmatprep.subr.mxu0 0.0
    %1258 = vmatpush1.msra.mxu0 0.0
    %1259 = vmatprep.subr.mxu0 0.0
    %1260 = vmatpush1.msra.mxu0 0.0
    %1261 = vmatprep.subr.mxu0 0.0
    %1262 = vmatpush1.msra.mxu0 0.0
    %1263 = vmatprep.subr.mxu0 0.0
    %1264 = vmatpush1.msra.mxu0 %v1228
    %1265 = vmatprep.subr.mxu0 0.0
    %1266 = vmatpush2.msra.mxu0 0.0
    %1267 = vmatprep.subr.mxu0 0.0
    %1268 = vmatpush2.msra.mxu0 0.0
    %1269 = vmatprep.subr.mxu0 0.0
    %1270 = vmatpush2.msra.mxu0 0.0
    %1271 = vmatprep.subr.mxu0 0.0
    %1272 = vmatpush2.msra.mxu0 0.0
    %1273 = vmatprep.subr.mxu0 0.0
    %1274 = vmatpush2.msra.mxu0 0.0
    %1275 = vmatprep.subr.mxu0 0.0
    %1276 = vmatpush2.msra.mxu0 0.0
    %1277 = vmatprep.subr.mxu0 0.0
    %1278 = vmatpush2.msra.mxu0 0.0
    %1279 = vmatprep.subr.mxu0 0.0
    %1280 = vmatpush2.msra.mxu0 0.0
    %1281 = vmatprep.subr.mxu0 0.0
    %1282 = vmatpush2.msra.mxu0 0.0
    %1283 = vmatprep.subr.mxu0 0.0
    %1284 = vmatpush2.msra.mxu0 0.0
    %1285 = vmatprep.subr.mxu0 0.0
    %1286 = vmatpush2.msra.mxu0 0.0
    %1287 = vmatprep.subr.mxu0 0.0
    %1288 = vmatpush2.msra.mxu0 0.0
    %1289 = vmatprep.subr.mxu0 0.0
    %1290 = vmatpush2.msra.mxu0 0.0
    %1291 = vmatprep.subr.mxu0 0.0
    %1292 = vmatpush2.msra.mxu0 0.0
    %1293 = vmatprep.subr.mxu0 0.0
    %1294 = vmatpush2.msra.mxu0 0.0
    %1295 = vmatprep.subr.mxu0 0.0
    %1296 = vmatpush2.msra.mxu0 0.0
    %1297 = vmatprep.mubr.f32.mxu0 0.0
    %1298 = vmatmul.mubr.f32.gmra.mxu0 %v1231
    %v1299 = vpop.f32.mrf.mxu0
    %v1300 = vadd.f32 0.0, %v1299
    %v1301 = vpop.f32.mrf.mxu0
    %1302 = vdwg.mxu0
    %1303 = vrot.lane.b32.xlu0 %v206, 48
    %v1304 = vpop.permute.xlu0 %1303
    %v1307 = vsel %vm217, %v1226, 0
    %1309 = vmatprep.subr.mxu0 0.0
    %1310 = vmatpush1.msra.mxu0 0.0
    %1311 = vmatprep.subr.mxu0 0.0
    %1312 = vmatpush1.msra.mxu0 0.0
    %1313 = vmatprep.subr.mxu0 0.0
    %1314 = vmatpush1.msra.mxu0 0.0
    %1315 = vmatprep.subr.mxu0 0.0
    %1316 = vmatpush1.msra.mxu0 0.0
    %1317 = vmatprep.subr.mxu0 0.0
    %1318 = vmatpush1.msra.mxu0 0.0
    %1319 = vmatprep.subr.mxu0 0.0
    %1320 = vmatpush1.msra.mxu0 0.0
    %1321 = vmatprep.subr.mxu0 0.0
    %1322 = vmatpush1.msra.mxu0 0.0
    %1323 = vmatprep.subr.mxu0 0.0
    %1324 = vmatpush1.msra.mxu0 0.0
    %1325 = vmatprep.subr.mxu0 0.0
    %1326 = vmatpush1.msra.mxu0 0.0
    %1327 = vmatprep.subr.mxu0 0.0
    %1328 = vmatpush1.msra.mxu0 0.0
    %1329 = vmatprep.subr.mxu0 0.0
    %1330 = vmatpush1.msra.mxu0 0.0
    %1331 = vmatprep.subr.mxu0 0.0
    %1332 = vmatpush1.msra.mxu0 0.0
    %1333 = vmatprep.subr.mxu0 0.0
    %1334 = vmatpush1.msra.mxu0 0.0
    %1335 = vmatprep.subr.mxu0 0.0
    %1336 = vmatpush1.msra.mxu0 0.0
    %1337 = vmatprep.subr.mxu0 0.0
    %1338 = vmatpush1.msra.mxu0 0.0
    %1339 = vmatprep.subr.mxu0 0.0
    %1340 = vmatpush1.msra.mxu0 %v1304
    %1341 = vmatprep.subr.mxu0 0.0
    %1342 = vmatpush2.msra.mxu0 0.0
    %1343 = vmatprep.subr.mxu0 0.0
    %1344 = vmatpush2.msra.mxu0 0.0
    %1345 = vmatprep.subr.mxu0 0.0
    %1346 = vmatpush2.msra.mxu0 0.0
    %1347 = vmatprep.subr.mxu0 0.0
    %1348 = vmatpush2.msra.mxu0 0.0
    %1349 = vmatprep.subr.mxu0 0.0
    %1350 = vmatpush2.msra.mxu0 0.0
    %1351 = vmatprep.subr.mxu0 0.0
    %1352 = vmatpush2.msra.mxu0 0.0
    %1353 = vmatprep.subr.mxu0 0.0
    %1354 = vmatpush2.msra.mxu0 0.0
    %1355 = vmatprep.subr.mxu0 0.0
    %1356 = vmatpush2.msra.mxu0 0.0
    %1357 = vmatprep.subr.mxu0 0.0
    %1358 = vmatpush2.msra.mxu0 0.0
    %1359 = vmatprep.subr.mxu0 0.0
    %1360 = vmatpush2.msra.mxu0 0.0
    %1361 = vmatprep.subr.mxu0 0.0
    %1362 = vmatpush2.msra.mxu0 0.0
    %1363 = vmatprep.subr.mxu0 0.0
    %1364 = vmatpush2.msra.mxu0 0.0
    %1365 = vmatprep.subr.mxu0 0.0
    %1366 = vmatpush2.msra.mxu0 0.0
    %1367 = vmatprep.subr.mxu0 0.0
    %1368 = vmatpush2.msra.mxu0 0.0
    %1369 = vmatprep.subr.mxu0 0.0
    %1370 = vmatpush2.msra.mxu0 0.0
    %1371 = vmatprep.subr.mxu0 0.0
    %1372 = vmatpush2.msra.mxu0 0.0
    %1373 = vmatprep.mubr.f32.mxu0 0.0
    %1374 = vmatmul.mubr.f32.gmra.mxu0 %v1307
    %v1375 = vpop.f32.mrf.mxu0
    %v1376 = vadd.f32 0.0, %v1375
    %v1377 = vpop.f32.mrf.mxu0
    %1378 = vdwg.mxu0
    %v1380 = vsel %vm217, %v1300, 0
    %v1383 = vsel %vm217, %v1376, 0
    %1385 = vmatprep.subr.mxu0 0.0
    %1386 = vmatpush1.msra.mxu0 0.0
    %1387 = vmatprep.subr.mxu0 0.0
    %1388 = vmatpush1.msra.mxu0 0.0
    %1389 = vmatprep.subr.mxu0 0.0
    %1390 = vmatpush1.msra.mxu0 0.0
    %1391 = vmatprep.subr.mxu0 0.0
    %1392 = vmatpush1.msra.mxu0 0.0
    %1393 = vmatprep.subr.mxu0 0.0
    %1394 = vmatpush1.msra.mxu0 0.0
    %1395 = vmatprep.subr.mxu0 0.0
    %1396 = vmatpush1.msra.mxu0 0.0
    %1397 = vmatprep.subr.mxu0 0.0
    %1398 = vmatpush1.msra.mxu0 0.0
    %1399 = vmatprep.subr.mxu0 0.0
    %1400 = vmatpush1.msra.mxu0 0.0
    %1401 = vmatprep.subr.mxu0 0.0
    %1402 = vmatpush1.msra.mxu0 0.0
    %1403 = vmatprep.subr.mxu0 0.0
    %1404 = vmatpush1.msra.mxu0 0.0
    %1405 = vmatprep.subr.mxu0 0.0
    %1406 = vmatpush1.msra.mxu0 0.0
    %1407 = vmatprep.subr.mxu0 0.0
    %1408 = vmatpush1.msra.mxu0 0.0
    %1409 = vmatprep.subr.mxu0 0.0
    %1410 = vmatpush1.msra.mxu0 0.0
    %1411 = vmatprep.subr.mxu0 0.0
    %1412 = vmatpush1.msra.mxu0 0.0
    %1413 = vmatprep.subr.mxu0 0.0
    %1414 = vmatpush1.msra.mxu0 0.0
    %1415 = vmatprep.subr.mxu0 0.0
    %1416 = vmatpush1.msra.mxu0 %v211
    %1417 = vmatprep.subr.mxu0 0.0
    %1418 = vmatpush2.msra.mxu0 0.0
    %1419 = vmatprep.subr.mxu0 0.0
    %1420 = vmatpush2.msra.mxu0 0.0
    %1421 = vmatprep.subr.mxu0 0.0
    %1422 = vmatpush2.msra.mxu0 0.0
    %1423 = vmatprep.subr.mxu0 0.0
    %1424 = vmatpush2.msra.mxu0 0.0
    %1425 = vmatprep.subr.mxu0 0.0
    %1426 = vmatpush2.msra.mxu0 0.0
    %1427 = vmatprep.subr.mxu0 0.0
    %1428 = vmatpush2.msra.mxu0 0.0
    %1429 = vmatprep.subr.mxu0 0.0
    %1430 = vmatpush2.msra.mxu0 0.0
    %1431 = vmatprep.subr.mxu0 0.0
    %1432 = vmatpush2.msra.mxu0 0.0
    %1433 = vmatprep.subr.mxu0 0.0
    %1434 = vmatpush2.msra.mxu0 0.0
    %1435 = vmatprep.subr.mxu0 0.0
    %1436 = vmatpush2.msra.mxu0 0.0
    %1437 = vmatprep.subr.mxu0 0.0
    %1438 = vmatpush2.msra.mxu0 0.0
    %1439 = vmatprep.subr.mxu0 0.0
    %1440 = vmatpush2.msra.mxu0 0.0
    %1441 = vmatprep.subr.mxu0 0.0
    %1442 = vmatpush2.msra.mxu0 0.0
    %1443 = vmatprep.subr.mxu0 0.0
    %1444 = vmatpush2.msra.mxu0 0.0
    %1445 = vmatprep.subr.mxu0 0.0
    %1446 = vmatpush2.msra.mxu0 0.0
    %1447 = vmatprep.subr.mxu0 0.0
    %1448 = vmatpush2.msra.mxu0 0.0
    %1449 = vmatprep.mubr.f32.mxu0 0.0
    %1450 = vmatmul.mubr.f32.gmra.mxu0 %v1380
    %v1451 = vpop.f32.mrf.mxu0
    %v1452 = vadd.f32 0.0, %v1451
    %v1453 = vpop.f32.mrf.mxu0
    %1454 = vmatprep.mubr.f32.mxu0 0.0
    %1455 = vmatmul.mubr.f32.gmra.mxu0 %v1383
    %v1456 = vpop.f32.mrf.mxu0
    %v1457 = vadd.f32 0.0, %v1456
    %v1458 = vpop.f32.mrf.mxu0
    %1459 = vdwg.mxu0
    %v1460 = vadd.f32 %v1045, %v1452
    %v1461 = vadd.f32 %v1046, %v1457
    %1462 = vrot.lane.b32.xlu0 %v201, 104
    %v1463 = vpop.permute.xlu0 %1462
    %1464 = vrot.lane.b32.xlu0 %v201, 72
    %v1465 = vpop.permute.xlu0 %1464
    %v1466 = vsel %vm217, %v1463, 0
    %v1468 = vsel %vm217, %v1465, 0
    %1470 = vmatprep.subr.mxu0 0.0
    %1471 = vmatpush1.xpose.msra.mxu0 0.0
    %1472 = vmatprep.subr.mxu0 0.0
    %1473 = vmatpush1.xpose.msra.mxu0 0.0
    %1474 = vmatprep.subr.mxu0 0.0
    %1475 = vmatpush1.xpose.msra.mxu0 0.0
    %1476 = vmatprep.subr.mxu0 0.0
    %1477 = vmatpush1.xpose.msra.mxu0 0.0
    %1478 = vmatprep.subr.mxu0 0.0
    %1479 = vmatpush1.xpose.msra.mxu0 0.0
    %1480 = vmatprep.subr.mxu0 0.0
    %1481 = vmatpush1.xpose.msra.mxu0 0.0
    %1482 = vmatprep.subr.mxu0 0.0
    %1483 = vmatpush1.xpose.msra.mxu0 0.0
    %1484 = vmatprep.subr.mxu0 0.0
    %1485 = vmatpush1.xpose.msra.mxu0 0.0
    %1486 = vmatprep.subr.mxu0 0.0
    %1487 = vmatpush1.xpose.msra.mxu0 0.0
    %1488 = vmatprep.subr.mxu0 0.0
    %1489 = vmatpush1.xpose.msra.mxu0 0.0
    %1490 = vmatprep.subr.mxu0 0.0
    %1491 = vmatpush1.xpose.msra.mxu0 0.0
    %1492 = vmatprep.subr.mxu0 0.0
    %1493 = vmatpush1.xpose.msra.mxu0 0.0
    %1494 = vmatprep.subr.mxu0 0.0
    %1495 = vmatpush1.xpose.msra.mxu0 0.0
    %1496 = vmatprep.subr.mxu0 0.0
    %1497 = vmatpush1.xpose.msra.mxu0 0.0
    %1498 = vmatprep.subr.mxu0 0.0
    %1499 = vmatpush1.xpose.msra.mxu0 0.0
    %1500 = vmatprep.subr.mxu0 0.0
    %1501 = vmatpush1.xpose.msra.mxu0 %v1468
    %1502 = vmatprep.subr.mxu0 0.0
    %1503 = vmatpush2.xpose.msra.mxu0 0.0
    %1504 = vmatprep.subr.mxu0 0.0
    %1505 = vmatpush2.xpose.msra.mxu0 0.0
    %1506 = vmatprep.subr.mxu0 0.0
    %1507 = vmatpush2.xpose.msra.mxu0 0.0
    %1508 = vmatprep.subr.mxu0 0.0
    %1509 = vmatpush2.xpose.msra.mxu0 0.0
    %1510 = vmatprep.subr.mxu0 0.0
    %1511 = vmatpush2.xpose.msra.mxu0 0.0
    %1512 = vmatprep.subr.mxu0 0.0
    %1513 = vmatpush2.xpose.msra.mxu0 0.0
    %1514 = vmatprep.subr.mxu0 0.0
    %1515 = vmatpush2.xpose.msra.mxu0 0.0
    %1516 = vmatprep.subr.mxu0 0.0
    %1517 = vmatpush2.xpose.msra.mxu0 0.0
    %1518 = vmatprep.subr.mxu0 0.0
    %1519 = vmatpush2.xpose.msra.mxu0 0.0
    %1520 = vmatprep.subr.mxu0 0.0
    %1521 = vmatpush2.xpose.msra.mxu0 0.0
    %1522 = vmatprep.subr.mxu0 0.0
    %1523 = vmatpush2.xpose.msra.mxu0 0.0
    %1524 = vmatprep.subr.mxu0 0.0
    %1525 = vmatpush2.xpose.msra.mxu0 0.0
    %1526 = vmatprep.subr.mxu0 0.0
    %1527 = vmatpush2.xpose.msra.mxu0 0.0
    %1528 = vmatprep.subr.mxu0 0.0
    %1529 = vmatpush2.xpose.msra.mxu0 0.0
    %1530 = vmatprep.subr.mxu0 0.0
    %1531 = vmatpush2.xpose.msra.mxu0 0.0
    %1532 = vmatprep.subr.mxu0 0.0
    %1533 = vmatpush2.xpose.msra.mxu0 0.0
    %1534 = vmatprep.mubr.f32.mxu0 0.0
    %1535 = vmatmul.mubr.f32.gmra.mxu0 %v1466
    %v1536 = vpop.f32.mrf.mxu0
    %v1537 = vadd.f32 %v60, %v1536
    %v1538 = vpop.f32.mrf.mxu0
    %1539 = vdwg.mxu0
    %1540 = vrot.lane.b32.xlu0 %v206, 104
    %v1541 = vpop.permute.xlu0 %1540
    %1542 = vrot.lane.b32.xlu0 %v206, 72
    %v1543 = vpop.permute.xlu0 %1542
    %v1544 = vsel %vm217, %v1541, 0
    %v1546 = vsel %vm217, %v1543, 0
    %1548 = vmatprep.subr.mxu0 0.0
    %1549 = vmatpush1.xpose.msra.mxu0 0.0
    %1550 = vmatprep.subr.mxu0 0.0
    %1551 = vmatpush1.xpose.msra.mxu0 0.0
    %1552 = vmatprep.subr.mxu0 0.0
    %1553 = vmatpush1.xpose.msra.mxu0 0.0
    %1554 = vmatprep.subr.mxu0 0.0
    %1555 = vmatpush1.xpose.msra.mxu0 0.0
    %1556 = vmatprep.subr.mxu0 0.0
    %1557 = vmatpush1.xpose.msra.mxu0 0.0
    %1558 = vmatprep.subr.mxu0 0.0
    %1559 = vmatpush1.xpose.msra.mxu0 0.0
    %1560 = vmatprep.subr.mxu0 0.0
    %1561 = vmatpush1.xpose.msra.mxu0 0.0
    %1562 = vmatprep.subr.mxu0 0.0
    %1563 = vmatpush1.xpose.msra.mxu0 0.0
    %1564 = vmatprep.subr.mxu0 0.0
    %1565 = vmatpush1.xpose.msra.mxu0 0.0
    %1566 = vmatprep.subr.mxu0 0.0
    %1567 = vmatpush1.xpose.msra.mxu0 0.0
    %1568 = vmatprep.subr.mxu0 0.0
    %1569 = vmatpush1.xpose.msra.mxu0 0.0
    %1570 = vmatprep.subr.mxu0 0.0
    %1571 = vmatpush1.xpose.msra.mxu0 0.0
    %1572 = vmatprep.subr.mxu0 0.0
    %1573 = vmatpush1.xpose.msra.mxu0 0.0
    %1574 = vmatprep.subr.mxu0 0.0
    %1575 = vmatpush1.xpose.msra.mxu0 0.0
    %1576 = vmatprep.subr.mxu0 0.0
    %1577 = vmatpush1.xpose.msra.mxu0 0.0
    %1578 = vmatprep.subr.mxu0 0.0
    %1579 = vmatpush1.xpose.msra.mxu0 %v1546
    %1580 = vmatprep.subr.mxu0 0.0
    %1581 = vmatpush2.xpose.msra.mxu0 0.0
    %1582 = vmatprep.subr.mxu0 0.0
    %1583 = vmatpush2.xpose.msra.mxu0 0.0
    %1584 = vmatprep.subr.mxu0 0.0
    %1585 = vmatpush2.xpose.msra.mxu0 0.0
    %1586 = vmatprep.subr.mxu0 0.0
    %1587 = vmatpush2.xpose.msra.mxu0 0.0
    %1588 = vmatprep.subr.mxu0 0.0
    %1589 = vmatpush2.xpose.msra.mxu0 0.0
    %1590 = vmatprep.subr.mxu0 0.0
    %1591 = vmatpush2.xpose.msra.mxu0 0.0
    %1592 = vmatprep.subr.mxu0 0.0
    %1593 = vmatpush2.xpose.msra.mxu0 0.0
    %1594 = vmatprep.subr.mxu0 0.0
    %1595 = vmatpush2.xpose.msra.mxu0 0.0
    %1596 = vmatprep.subr.mxu0 0.0
    %1597 = vmatpush2.xpose.msra.mxu0 0.0
    %1598 = vmatprep.subr.mxu0 0.0
    %1599 = vmatpush2.xpose.msra.mxu0 0.0
    %1600 = vmatprep.subr.mxu0 0.0
    %1601 = vmatpush2.xpose.msra.mxu0 0.0
    %1602 = vmatprep.subr.mxu0 0.0
    %1603 = vmatpush2.xpose.msra.mxu0 0.0
    %1604 = vmatprep.subr.mxu0 0.0
    %1605 = vmatpush2.xpose.msra.mxu0 0.0
    %1606 = vmatprep.subr.mxu0 0.0
    %1607 = vmatpush2.xpose.msra.mxu0 0.0
    %1608 = vmatprep.subr.mxu0 0.0
    %1609 = vmatpush2.xpose.msra.mxu0 0.0
    %1610 = vmatprep.subr.mxu0 0.0
    %1611 = vmatpush2.xpose.msra.mxu0 0.0
    %1612 = vmatprep.mubr.f32.mxu0 0.0
    %1613 = vmatmul.mubr.f32.gmra.mxu0 %v1544
    %v1614 = vpop.f32.mrf.mxu0
    %v1615 = vadd.f32 %v61, %v1614
    %v1616 = vpop.f32.mrf.mxu0
    %1617 = vdwg.mxu0
    %v1618 = vsel %vm217, %v1537, -inf
    %1619 = vmax.xlane.f32.xlu0 %v1618
    %v1620 = vpop.xlane.xlu0 %1619
    %v1621 = vsel %vm217, %v1615, -inf
    %1622 = vmax.xlane.f32.xlu0 %v1621
    %v1623 = vpop.xlane.xlu0 %1622
    %v1624 = vsub.f32 %v1537, %v1620
    %v1625 = vsub.f32 %v1615, %v1623
    %v1626 = vmul.f32 %v1624, 1.442695
    %v1627 = vpow.pop %v1626
    %v1628 = vmul.f32 %v1625, 1.442695
    %v1629 = vpow.pop %v1628
    %v1630 = vsel %vm217, %v1627, 0.0
    %1631 = vadd.xlane.f32.xlu0 %v1630
    %v1632 = vpop.xlane.xlu0 %1631
    %v1633 = vsel %vm217, %v1629, 0.0
    %1634 = vadd.xlane.f32.xlu0 %v1633
    %v1635 = vpop.xlane.xlu0 %1634
    %v1636 = vrcp.pop %v1632
    %v1637 = vmul.f32 1.0, %v1636
    %v1638 = vrcp.pop %v1635
    %v1639 = vmul.f32 1.0, %v1638
    %v1640 = vmul.f32 %v1627, %v1637
    %v1641 = vmul.f32 %v1629, %v1639
    %1642 = vrot.lane.b32.xlu0 %v201, 40
    %v1643 = vpop.permute.xlu0 %1642
    %v1646 = vsel %vm217, %v1640, 0
    %1648 = vmatprep.subr.mxu0 0.0
    %1649 = vmatpush1.msra.mxu0 0.0
    %1650 = vmatprep.subr.mxu0 0.0
    %1651 = vmatpush1.msra.mxu0 0.0
    %1652 = vmatprep.subr.mxu0 0.0
    %1653 = vmatpush1.msra.mxu0 0.0
    %1654 = vmatprep.subr.mxu0 0.0
    %1655 = vmatpush1.msra.mxu0 0.0
    %1656 = vmatprep.subr.mxu0 0.0
    %1657 = vmatpush1.msra.mxu0 0.0
    %1658 = vmatprep.subr.mxu0 0.0
    %1659 = vmatpush1.msra.mxu0 0.0
    %1660 = vmatprep.subr.mxu0 0.0
    %1661 = vmatpush1.msra.mxu0 0.0
    %1662 = vmatprep.subr.mxu0 0.0
    %1663 = vmatpush1.msra.mxu0 0.0
    %1664 = vmatprep.subr.mxu0 0.0
    %1665 = vmatpush1.msra.mxu0 0.0
    %1666 = vmatprep.subr.mxu0 0.0
    %1667 = vmatpush1.msra.mxu0 0.0
    %1668 = vmatprep.subr.mxu0 0.0
    %1669 = vmatpush1.msra.mxu0 0.0
    %1670 = vmatprep.subr.mxu0 0.0
    %1671 = vmatpush1.msra.mxu0 0.0
    %1672 = vmatprep.subr.mxu0 0.0
    %1673 = vmatpush1.msra.mxu0 0.0
    %1674 = vmatprep.subr.mxu0 0.0
    %1675 = vmatpush1.msra.mxu0 0.0
    %1676 = vmatprep.subr.mxu0 0.0
    %1677 = vmatpush1.msra.mxu0 0.0
    %1678 = vmatprep.subr.mxu0 0.0
    %1679 = vmatpush1.msra.mxu0 %v1643
    %1680 = vmatprep.subr.mxu0 0.0
    %1681 = vmatpush2.msra.mxu0 0.0
    %1682 = vmatprep.subr.mxu0 0.0
    %1683 = vmatpush2.msra.mxu0 0.0
    %1684 = vmatprep.subr.mxu0 0.0
    %1685 = vmatpush2.msra.mxu0 0.0
    %1686 = vmatprep.subr.mxu0 0.0
    %1687 = vmatpush2.msra.mxu0 0.0
    %1688 = vmatprep.subr.mxu0 0.0
    %1689 = vmatpush2.msra.mxu0 0.0
    %1690 = vmatprep.subr.mxu0 0.0
    %1691 = vmatpush2.msra.mxu0 0.0
    %1692 = vmatprep.subr.mxu0 0.0
    %1693 = vmatpush2.msra.mxu0 0.0
    %1694 = vmatprep.subr.mxu0 0.0
    %1695 = vmatpush2.msra.mxu0 0.0
    %1696 = vmatprep.subr.mxu0 0.0
    %1697 = vmatpush2.msra.mxu0 0.0
    %1698 = vmatprep.subr.mxu0 0.0
    %1699 = vmatpush2.msra.mxu0 0.0
    %1700 = vmatprep.subr.mxu0 0.0
    %1701 = vmatpush2.msra.mxu0 0.0
    %1702 = vmatprep.subr.mxu0 0.0
    %1703 = vmatpush2.msra.mxu0 0.0
    %1704 = vmatprep.subr.mxu0 0.0
    %1705 = vmatpush2.msra.mxu0 0.0
    %1706 = vmatprep.subr.mxu0 0.0
    %1707 = vmatpush2.msra.mxu0 0.0
    %1708 = vmatprep.subr.mxu0 0.0
    %1709 = vmatpush2.msra.mxu0 0.0
    %1710 = vmatprep.subr.mxu0 0.0
    %1711 = vmatpush2.msra.mxu0 0.0
    %1712 = vmatprep.mubr.f32.mxu0 0.0
    %1713 = vmatmul.mubr.f32.gmra.mxu0 %v1646
    %v1714 = vpop.f32.mrf.mxu0
    %v1715 = vadd.f32 0.0, %v1714
    %v1716 = vpop.f32.mrf.mxu0
    %1717 = vdwg.mxu0
    %1718 = vrot.lane.b32.xlu0 %v206, 40
    %v1719 = vpop.permute.xlu0 %1718
    %v1722 = vsel %vm217, %v1641, 0
    %1724 = vmatprep.subr.mxu0 0.0
    %1725 = vmatpush1.msra.mxu0 0.0
    %1726 = vmatprep.subr.mxu0 0.0
    %1727 = vmatpush1.msra.mxu0 0.0
    %1728 = vmatprep.subr.mxu0 0.0
    %1729 = vmatpush1.msra.mxu0 0.0
    %1730 = vmatprep.subr.mxu0 0.0
    %1731 = vmatpush1.msra.mxu0 0.0
    %1732 = vmatprep.subr.mxu0 0.0
    %1733 = vmatpush1.msra.mxu0 0.0
    %1734 = vmatprep.subr.mxu0 0.0
    %1735 = vmatpush1.msra.mxu0 0.0
    %1736 = vmatprep.subr.mxu0 0.0
    %1737 = vmatpush1.msra.mxu0 0.0
    %1738 = vmatprep.subr.mxu0 0.0
    %1739 = vmatpush1.msra.mxu0 0.0
    %1740 = vmatprep.subr.mxu0 0.0
    %1741 = vmatpush1.msra.mxu0 0.0
    %1742 = vmatprep.subr.mxu0 0.0
    %1743 = vmatpush1.msra.mxu0 0.0
    %1744 = vmatprep.subr.mxu0 0.0
    %1745 = vmatpush1.msra.mxu0 0.0
    %1746 = vmatprep.subr.mxu0 0.0
    %1747 = vmatpush1.msra.mxu0 0.0
    %1748 = vmatprep.subr.mxu0 0.0
    %1749 = vmatpush1.msra.mxu0 0.0
    %1750 = vmatprep.subr.mxu0 0.0
    %1751 = vmatpush1.msra.mxu0 0.0
    %1752 = vmatprep.subr.mxu0 0.0
    %1753 = vmatpush1.msra.mxu0 0.0
    %1754 = vmatprep.subr.mxu0 0.0
    %1755 = vmatpush1.msra.mxu0 %v1719
    %1756 = vmatprep.subr.mxu0 0.0
    %1757 = vmatpush2.msra.mxu0 0.0
    %1758 = vmatprep.subr.mxu0 0.0
    %1759 = vmatpush2.msra.mxu0 0.0
    %1760 = vmatprep.subr.mxu0 0.0
    %1761 = vmatpush2.msra.mxu0 0.0
    %1762 = vmatprep.subr.mxu0 0.0
    %1763 = vmatpush2.msra.mxu0 0.0
    %1764 = vmatprep.subr.mxu0 0.0
    %1765 = vmatpush2.msra.mxu0 0.0
    %1766 = vmatprep.subr.mxu0 0.0
    %1767 = vmatpush2.msra.mxu0 0.0
    %1768 = vmatprep.subr.mxu0 0.0
    %1769 = vmatpush2.msra.mxu0 0.0
    %1770 = vmatprep.subr.mxu0 0.0
    %1771 = vmatpush2.msra.mxu0 0.0
    %1772 = vmatprep.subr.mxu0 0.0
    %1773 = vmatpush2.msra.mxu0 0.0
    %1774 = vmatprep.subr.mxu0 0.0
    %1775 = vmatpush2.msra.mxu0 0.0
    %1776 = vmatprep.subr.mxu0 0.0
    %1777 = vmatpush2.msra.mxu0 0.0
    %1778 = vmatprep.subr.mxu0 0.0
    %1779 = vmatpush2.msra.mxu0 0.0
    %1780 = vmatprep.subr.mxu0 0.0
    %1781 = vmatpush2.msra.mxu0 0.0
    %1782 = vmatprep.subr.mxu0 0.0
    %1783 = vmatpush2.msra.mxu0 0.0
    %1784 = vmatprep.subr.mxu0 0.0
    %1785 = vmatpush2.msra.mxu0 0.0
    %1786 = vmatprep.subr.mxu0 0.0
    %1787 = vmatpush2.msra.mxu0 0.0
    %1788 = vmatprep.mubr.f32.mxu0 0.0
    %1789 = vmatmul.mubr.f32.gmra.mxu0 %v1722
    %v1790 = vpop.f32.mrf.mxu0
    %v1791 = vadd.f32 0.0, %v1790
    %v1792 = vpop.f32.mrf.mxu0
    %1793 = vdwg.mxu0
    %v1795 = vsel %vm217, %v1715, 0
    %v1798 = vsel %vm217, %v1791, 0
    %1800 = vmatprep.subr.mxu0 0.0
    %1801 = vmatpush1.msra.mxu0 0.0
    %1802 = vmatprep.subr.mxu0 0.0
    %1803 = vmatpush1.msra.mxu0 0.0
    %1804 = vmatprep.subr.mxu0 0.0
    %1805 = vmatpush1.msra.mxu0 0.0
    %1806 = vmatprep.subr.mxu0 0.0
    %1807 = vmatpush1.msra.mxu0 0.0
    %1808 = vmatprep.subr.mxu0 0.0
    %1809 = vmatpush1.msra.mxu0 0.0
    %1810 = vmatprep.subr.mxu0 0.0
    %1811 = vmatpush1.msra.mxu0 0.0
    %1812 = vmatprep.subr.mxu0 0.0
    %1813 = vmatpush1.msra.mxu0 0.0
    %1814 = vmatprep.subr.mxu0 0.0
    %1815 = vmatpush1.msra.mxu0 0.0
    %1816 = vmatprep.subr.mxu0 0.0
    %1817 = vmatpush1.msra.mxu0 0.0
    %1818 = vmatprep.subr.mxu0 0.0
    %1819 = vmatpush1.msra.mxu0 0.0
    %1820 = vmatprep.subr.mxu0 0.0
    %1821 = vmatpush1.msra.mxu0 0.0
    %1822 = vmatprep.subr.mxu0 0.0
    %1823 = vmatpush1.msra.mxu0 0.0
    %1824 = vmatprep.subr.mxu0 0.0
    %1825 = vmatpush1.msra.mxu0 0.0
    %1826 = vmatprep.subr.mxu0 0.0
    %1827 = vmatpush1.msra.mxu0 0.0
    %1828 = vmatprep.subr.mxu0 0.0
    %1829 = vmatpush1.msra.mxu0 0.0
    %1830 = vmatprep.subr.mxu0 0.0
    %1831 = vmatpush1.msra.mxu0 %v212
    %1832 = vmatprep.subr.mxu0 0.0
    %1833 = vmatpush2.msra.mxu0 0.0
    %1834 = vmatprep.subr.mxu0 0.0
    %1835 = vmatpush2.msra.mxu0 0.0
    %1836 = vmatprep.subr.mxu0 0.0
    %1837 = vmatpush2.msra.mxu0 0.0
    %1838 = vmatprep.subr.mxu0 0.0
    %1839 = vmatpush2.msra.mxu0 0.0
    %1840 = vmatprep.subr.mxu0 0.0
    %1841 = vmatpush2.msra.mxu0 0.0
    %1842 = vmatprep.subr.mxu0 0.0
    %1843 = vmatpush2.msra.mxu0 0.0
    %1844 = vmatprep.subr.mxu0 0.0
    %1845 = vmatpush2.msra.mxu0 0.0
    %1846 = vmatprep.subr.mxu0 0.0
    %1847 = vmatpush2.msra.mxu0 0.0
    %1848 = vmatprep.subr.mxu0 0.0
    %1849 = vmatpush2.msra.mxu0 0.0
    %1850 = vmatprep.subr.mxu0 0.0
    %1851 = vmatpush2.msra.mxu0 0.0
    %1852 = vmatprep.subr.mxu0 0.0
    %1853 = vmatpush2.msra.mxu0 0.0
    %1854 = vmatprep.subr.mxu0 0.0
    %1855 = vmatpush2.msra.mxu0 0.0
    %1856 = vmatprep.subr.mxu0 0.0
    %1857 = vmatpush2.msra.mxu0 0.0
    %1858 = vmatprep.subr.mxu0 0.0
    %1859 = vmatpush2.msra.mxu0 0.0
    %1860 = vmatprep.subr.mxu0 0.0
    %1861 = vmatpush2.msra.mxu0 0.0
    %1862 = vmatprep.subr.mxu0 0.0
    %1863 = vmatpush2.msra.mxu0 0.0
    %1864 = vmatprep.mubr.f32.mxu0 0.0
    %1865 = vmatmul.mubr.f32.gmra.mxu0 %v1795
    %v1866 = vpop.f32.mrf.mxu0
    %v1867 = vadd.f32 0.0, %v1866
    %v1868 = vpop.f32.mrf.mxu0
    %1869 = vmatprep.mubr.f32.mxu0 0.0
    %1870 = vmatmul.mubr.f32.gmra.mxu0 %v1798
    %v1871 = vpop.f32.mrf.mxu0
    %v1872 = vadd.f32 0.0, %v1871
    %v1873 = vpop.f32.mrf.mxu0
    %1874 = vdwg.mxu0
    %v1875 = vadd.f32 %v1460, %v1867
    %v1876 = vadd.f32 %v1461, %v1872
    %v1877 = vadd.f32 %v56, %v1875
    %v1878 = vadd.f32 %v57, %v1876
    %v1879 = vsel %vm64, %v1877, 0.0
    %1880 = vadd.xlane.f32.xlu0 %v1879
    %v1881 = vpop.xlane.xlu0 %1880
    %v1882 = vsel %vm64, %v1878, 0.0
    %1883 = vadd.xlane.f32.xlu0 %v1882
    %v1884 = vpop.xlane.xlu0 %1883
    %v1885 = vmul.f32 %v1881, 0.03125
    %v1886 = vmul.f32 %v1884, 0.03125
    %v1887 = vsub.f32 %v1877, %v1885
    %v1888 = vsub.f32 %v1878, %v1886
    %v1889 = vmul.f32 %v1887, %v1887
    %v1890 = vmul.f32 %v1888, %v1888
    %v1891 = vsel %vm64, %v1889, 0.0
    %1892 = vadd.xlane.f32.xlu0 %v1891
    %v1893 = vpop.xlane.xlu0 %1892
    %v1894 = vsel %vm64, %v1890, 0.0
    %1895 = vadd.xlane.f32.xlu0 %v1894
    %v1896 = vpop.xlane.xlu0 %1895
    %v1897 = vmul.f32 %v1893, 0.032258064
    %v1898 = vmul.f32 %v1896, 0.032258064
    %v1899 = vrsqrt.pop %v1897
    %v1900 = vmul.f32 %v1897, %v1899
    %vm1901 = vcmp.eq.f32.partialorder %v1897, inf
    %v1902 = vsel %vm1901, %v1897, %v1900
    %vm1903 = vcmp.eq.f32.partialorder %v1897, 0.0
    %v1904 = vand.u32 %v1897, 2147483648
    %v1905 = vsel %vm1903, %v1904, %v1902
    %v1906 = vrsqrt.pop %v1898
    %v1907 = vmul.f32 %v1898, %v1906
    %vm1908 = vcmp.eq.f32.partialorder %v1898, inf
    %v1909 = vsel %vm1908, %v1898, %v1907
    %vm1910 = vcmp.eq.f32.partialorder %v1898, 0.0
    %v1911 = vand.u32 %v1898, 2147483648
    %v1912 = vsel %vm1910, %v1911, %v1909
    %v1913 = vadd.f32 %v1905, 1e-16
    %v1914 = vadd.f32 %v1912, 1e-16
    %v1915 = vrcp.pop %v1913
    %v1916 = vmul.f32 1.0, %v1915
    %v1917 = vrcp.pop %v1914
    %v1918 = vmul.f32 1.0, %v1917
    %v1919 = vmul.f32 %v1887, %v1916
    %v1920 = vmul.f32 %v1888, %v1918
    %v1921 = vlaneseq
    %v1922 = vshrl.u32 %v1921, 7
    %v1923 = vsub.s32 1, %v1922
    %v1924 = vrot.slane %v62, %v1923
    %v1925 = vmul.f32 %v1924, %v1919
    %v1926 = vmul.f32 %v1924, %v1920
    %v1927 = vlaneseq
    %v1928 = vshrl.u32 %v1927, 7
    %v1929 = vsub.s32 1, %v1928
    %v1930 = vrot.slane %v63, %v1929
    %v1931 = vadd.f32 %v1925, %v1930
    %v1932 = vadd.f32 %v1926, %v1930
    %v1933 = vld [vmem:[#allocation7 + $0x60] sm:$0xff]
    %v1934 = vld [vmem:[#allocation7 + $0x68] sm:$0xff]
    %v1935 = vld [vmem:[#allocation7 + $0x70] sm:$0xff]
    %v1936 = vld [vmem:[#allocation7 + $0x78] sm:$0xff]
    %v1937 = vld [vmem:[#allocation7 + $0x80] sm:$0x1]
    %v1938 = vlaneseq
    %v1939 = vshrl.u32 %v1938, 7
    %v1940 = vsub.s32 0, %v1939
    %v1941 = vrot.slane %v1937, %v1940
    %v1943 = vsel %vm64, %v1931, 0
    %v1946 = vsel %vm64, %v1932, 0
    %1948 = vmatprep.subr.mxu0 0.0
    %1949 = vmatpush1.msra.mxu0 0.0
    %1950 = vmatprep.subr.mxu0 0.0
    %1951 = vmatpush1.msra.mxu0 0.0
    %1952 = vmatprep.subr.mxu0 0.0
    %1953 = vmatpush1.msra.mxu0 0.0
    %1954 = vmatprep.subr.mxu0 0.0
    %1955 = vmatpush1.msra.mxu0 0.0
    %1956 = vmatprep.subr.mxu0 0.0
    %1957 = vmatpush1.msra.mxu0 0.0
    %1958 = vmatprep.subr.mxu0 0.0
    %1959 = vmatpush1.msra.mxu0 0.0
    %1960 = vmatprep.subr.mxu0 0.0
    %1961 = vmatpush1.msra.mxu0 0.0
    %1962 = vmatprep.subr.mxu0 0.0
    %1963 = vmatpush1.msra.mxu0 0.0
    %1964 = vmatprep.subr.mxu0 0.0
    %1965 = vmatpush1.msra.mxu0 0.0
    %1966 = vmatprep.subr.mxu0 0.0
    %1967 = vmatpush1.msra.mxu0 0.0
    %1968 = vmatprep.subr.mxu0 0.0
    %1969 = vmatpush1.msra.mxu0 0.0
    %1970 = vmatprep.subr.mxu0 0.0
    %1971 = vmatpush1.msra.mxu0 0.0
    %1972 = vmatprep.subr.mxu0 0.0
    %1973 = vmatpush1.msra.mxu0 %v1936
    %1974 = vmatprep.subr.mxu0 0.0
    %1975 = vmatpush1.msra.mxu0 %v1935
    %1976 = vmatprep.subr.mxu0 0.0
    %1977 = vmatpush1.msra.mxu0 %v1934
    %1978 = vmatprep.subr.mxu0 0.0
    %1979 = vmatpush1.msra.mxu0 %v1933
    %1980 = vmatprep.subr.mxu0 0.0
    %1981 = vmatpush2.msra.mxu0 0.0
    %1982 = vmatprep.subr.mxu0 0.0
    %1983 = vmatpush2.msra.mxu0 0.0
    %1984 = vmatprep.subr.mxu0 0.0
    %1985 = vmatpush2.msra.mxu0 0.0
    %1986 = vmatprep.subr.mxu0 0.0
    %1987 = vmatpush2.msra.mxu0 0.0
    %1988 = vmatprep.subr.mxu0 0.0
    %1989 = vmatpush2.msra.mxu0 0.0
    %1990 = vmatprep.subr.mxu0 0.0
    %1991 = vmatpush2.msra.mxu0 0.0
    %1992 = vmatprep.subr.mxu0 0.0
    %1993 = vmatpush2.msra.mxu0 0.0
    %1994 = vmatprep.subr.mxu0 0.0
    %1995 = vmatpush2.msra.mxu0 0.0
    %1996 = vmatprep.subr.mxu0 0.0
    %1997 = vmatpush2.msra.mxu0 0.0
    %1998 = vmatprep.subr.mxu0 0.0
    %1999 = vmatpush2.msra.mxu0 0.0
    %2000 = vmatprep.subr.mxu0 0.0
    %2001 = vmatpush2.msra.mxu0 0.0
    %2002 = vmatprep.subr.mxu0 0.0
    %2003 = vmatpush2.msra.mxu0 0.0
    %2004 = vmatprep.subr.mxu0 0.0
    %2005 = vmatpush2.msra.mxu0 0.0
    %2006 = vmatprep.subr.mxu0 0.0
    %2007 = vmatpush2.msra.mxu0 0.0
    %2008 = vmatprep.subr.mxu0 0.0
    %2009 = vmatpush2.msra.mxu0 0.0
    %2010 = vmatprep.subr.mxu0 0.0
    %2011 = vmatpush2.msra.mxu0 0.0
    %2012 = vmatprep.mubr.f32.mxu0 0.0
    %2013 = vmatmul.mubr.f32.gmra.mxu0 %v1943
    %v2014 = vpop.f32.mrf.mxu0
    %v2015 = vadd.f32 %v1941, %v2014
    %v2016 = vpop.f32.mrf.mxu0
    %2017 = vmatprep.mubr.f32.mxu0 0.0
    %2018 = vmatmul.mubr.f32.gmra.mxu0 %v1946
    %v2019 = vpop.f32.mrf.mxu0
    %v2020 = vadd.f32 %v1941, %v2019
    %v2021 = vpop.f32.mrf.mxu0
    %2022 = vdwg.mxu0
    %v2023 = vld [vmem:[#allocation7 + $0x88] sm:$0xff]
    %v2024 = vld [vmem:[#allocation7 + $0x90] sm:$0xff]
    %v2025 = vld [vmem:[#allocation7 + $0x98] sm:$0xff]
    %v2026 = vld [vmem:[#allocation7 + $0xa0] sm:$0xff]
    %v2027 = vld [vmem:[#allocation7 + $0xa8] sm:$0x1]
    %v2028 = vlaneseq
    %v2029 = vshrl.u32 %v2028, 7
    %v2030 = vsub.s32 0, %v2029
    %v2031 = vrot.slane %v2027, %v2030
    %v2033 = vsel %vm64, %v58, 0
    %v2036 = vsel %vm64, %v59, 0
    %2038 = vmatprep.subr.mxu0 0.0
    %2039 = vmatpush1.msra.mxu0 0.0
    %2040 = vmatprep.subr.mxu0 0.0
    %2041 = vmatpush1.msra.mxu0 0.0
    %2042 = vmatprep.subr.mxu0 0.0
    %2043 = vmatpush1.msra.mxu0 0.0
    %2044 = vmatprep.subr.mxu0 0.0
    %2045 = vmatpush1.msra.mxu0 0.0
    %2046 = vmatprep.subr.mxu0 0.0
    %2047 = vmatpush1.msra.mxu0 0.0
    %2048 = vmatprep.subr.mxu0 0.0
    %2049 = vmatpush1.msra.mxu0 0.0
    %2050 = vmatprep.subr.mxu0 0.0
    %2051 = vmatpush1.msra.mxu0 0.0
    %2052 = vmatprep.subr.mxu0 0.0
    %2053 = vmatpush1.msra.mxu0 0.0
    %2054 = vmatprep.subr.mxu0 0.0
    %2055 = vmatpush1.msra.mxu0 0.0
    %2056 = vmatprep.subr.mxu0 0.0
    %2057 = vmatpush1.msra.mxu0 0.0
    %2058 = vmatprep.subr.mxu0 0.0
    %2059 = vmatpush1.msra.mxu0 0.0
    %2060 = vmatprep.subr.mxu0 0.0
    %2061 = vmatpush1.msra.mxu0 0.0
    %2062 = vmatprep.subr.mxu0 0.0
    %2063 = vmatpush1.msra.mxu0 %v2026
    %2064 = vmatprep.subr.mxu0 0.0
    %2065 = vmatpush1.msra.mxu0 %v2025
    %2066 = vmatprep.subr.mxu0 0.0
    %2067 = vmatpush1.msra.mxu0 %v2024
    %2068 = vmatprep.subr.mxu0 0.0
    %2069 = vmatpush1.msra.mxu0 %v2023
    %2070 = vmatprep.subr.mxu0 0.0
    %2071 = vmatpush2.msra.mxu0 0.0
    %2072 = vmatprep.subr.mxu0 0.0
    %2073 = vmatpush2.msra.mxu0 0.0
    %2074 = vmatprep.subr.mxu0 0.0
    %2075 = vmatpush2.msra.mxu0 0.0
    %2076 = vmatprep.subr.mxu0 0.0
    %2077 = vmatpush2.msra.mxu0 0.0
    %2078 = vmatprep.subr.mxu0 0.0
    %2079 = vmatpush2.msra.mxu0 0.0
    %2080 = vmatprep.subr.mxu0 0.0
    %2081 = vmatpush2.msra.mxu0 0.0
    %2082 = vmatprep.subr.mxu0 0.0
    %2083 = vmatpush2.msra.mxu0 0.0
    %2084 = vmatprep.subr.mxu0 0.0
    %2085 = vmatpush2.msra.mxu0 0.0
    %2086 = vmatprep.subr.mxu0 0.0
    %2087 = vmatpush2.msra.mxu0 0.0
    %2088 = vmatprep.subr.mxu0 0.0
    %2089 = vmatpush2.msra.mxu0 0.0
    %2090 = vmatprep.subr.mxu0 0.0
    %2091 = vmatpush2.msra.mxu0 0.0
    %2092 = vmatprep.subr.mxu0 0.0
    %2093 = vmatpush2.msra.mxu0 0.0
    %2094 = vmatprep.subr.mxu0 0.0
    %2095 = vmatpush2.msra.mxu0 0.0
    %2096 = vmatprep.subr.mxu0 0.0
    %2097 = vmatpush2.msra.mxu0 0.0
    %2098 = vmatprep.subr.mxu0 0.0
    %2099 = vmatpush2.msra.mxu0 0.0
    %2100 = vmatprep.subr.mxu0 0.0
    %2101 = vmatpush2.msra.mxu0 0.0
    %2102 = vmatprep.mubr.f32.mxu0 0.0
    %2103 = vmatmul.mubr.f32.gmra.mxu0 %v2033
    %v2104 = vpop.f32.mrf.mxu0
    %v2105 = vadd.f32 %v2031, %v2104
    %v2106 = vpop.f32.mrf.mxu0
    %2107 = vmatprep.mubr.f32.mxu0 0.0
    %2108 = vmatmul.mubr.f32.gmra.mxu0 %v2036
    %v2109 = vpop.f32.mrf.mxu0
    %v2110 = vadd.f32 %v2031, %v2109
    %v2111 = vpop.f32.mrf.mxu0
    %2112 = vdwg.mxu0
    %v2113 = vld [vmem:[#allocation7 + $0xb0] sm:$0xff]
    %v2114 = vld [vmem:[#allocation7 + $0xb8] sm:$0xff]
    %v2115 = vld [vmem:[#allocation7 + $0xc0] sm:$0xff]
    %v2116 = vld [vmem:[#allocation7 + $0xc8] sm:$0xff]
    %v2117 = vld [vmem:[#allocation7 + $0xd0] sm:$0x1]
    %2119 = vrot.lane.b32.xlu0 %v60, 120
    %v2120 = vpop.permute.xlu0 %2119
    %v2123 = vsel %vm217, %v2015, 0
    %v2126 = vsel %vm217, %v2105, 0
    %2128 = vmatprep.subr.mxu0 0.0
    %2129 = vmatpush1.xpose.msra.mxu0 0.0
    %2130 = vmatprep.subr.mxu0 0.0
    %2131 = vmatpush1.xpose.msra.mxu0 0.0
    %2132 = vmatprep.subr.mxu0 0.0
    %2133 = vmatpush1.xpose.msra.mxu0 0.0
    %2134 = vmatprep.subr.mxu0 0.0
    %2135 = vmatpush1.xpose.msra.mxu0 0.0
    %2136 = vmatprep.subr.mxu0 0.0
    %2137 = vmatpush1.xpose.msra.mxu0 0.0
    %2138 = vmatprep.subr.mxu0 0.0
    %2139 = vmatpush1.xpose.msra.mxu0 0.0
    %2140 = vmatprep.subr.mxu0 0.0
    %2141 = vmatpush1.xpose.msra.mxu0 0.0
    %2142 = vmatprep.subr.mxu0 0.0
    %2143 = vmatpush1.xpose.msra.mxu0 0.0
    %2144 = vmatprep.subr.mxu0 0.0
    %2145 = vmatpush1.xpose.msra.mxu0 0.0
    %2146 = vmatprep.subr.mxu0 0.0
    %2147 = vmatpush1.xpose.msra.mxu0 0.0
    %2148 = vmatprep.subr.mxu0 0.0
    %2149 = vmatpush1.xpose.msra.mxu0 0.0
    %2150 = vmatprep.subr.mxu0 0.0
    %2151 = vmatpush1.xpose.msra.mxu0 0.0
    %2152 = vmatprep.subr.mxu0 0.0
    %2153 = vmatpush1.xpose.msra.mxu0 0.0
    %2154 = vmatprep.subr.mxu0 0.0
    %2155 = vmatpush1.xpose.msra.mxu0 0.0
    %2156 = vmatprep.subr.mxu0 0.0
    %2157 = vmatpush1.xpose.msra.mxu0 0.0
    %2158 = vmatprep.subr.mxu0 0.0
    %2159 = vmatpush1.xpose.msra.mxu0 %v2126
    %2160 = vmatprep.subr.mxu0 0.0
    %2161 = vmatpush2.xpose.msra.mxu0 0.0
    %2162 = vmatprep.subr.mxu0 0.0
    %2163 = vmatpush2.xpose.msra.mxu0 0.0
    %2164 = vmatprep.subr.mxu0 0.0
    %2165 = vmatpush2.xpose.msra.mxu0 0.0
    %2166 = vmatprep.subr.mxu0 0.0
    %2167 = vmatpush2.xpose.msra.mxu0 0.0
    %2168 = vmatprep.subr.mxu0 0.0
    %2169 = vmatpush2.xpose.msra.mxu0 0.0
    %2170 = vmatprep.subr.mxu0 0.0
    %2171 = vmatpush2.xpose.msra.mxu0 0.0
    %2172 = vmatprep.subr.mxu0 0.0
    %2173 = vmatpush2.xpose.msra.mxu0 0.0
    %2174 = vmatprep.subr.mxu0 0.0
    %2175 = vmatpush2.xpose.msra.mxu0 0.0
    %2176 = vmatprep.subr.mxu0 0.0
    %2177 = vmatpush2.xpose.msra.mxu0 0.0
    %2178 = vmatprep.subr.mxu0 0.0
    %2179 = vmatpush2.xpose.msra.mxu0 0.0
    %2180 = vmatprep.subr.mxu0 0.0
    %2181 = vmatpush2.xpose.msra.mxu0 0.0
    %2182 = vmatprep.subr.mxu0 0.0
    %2183 = vmatpush2.xpose.msra.mxu0 0.0
    %2184 = vmatprep.subr.mxu0 0.0
    %2185 = vmatpush2.xpose.msra.mxu0 0.0
    %2186 = vmatprep.subr.mxu0 0.0
    %2187 = vmatpush2.xpose.msra.mxu0 0.0
    %2188 = vmatprep.subr.mxu0 0.0
    %2189 = vmatpush2.xpose.msra.mxu0 0.0
    %2190 = vmatprep.subr.mxu0 0.0
    %2191 = vmatpush2.xpose.msra.mxu0 0.0
    %2192 = vmatprep.mubr.f32.mxu0 0.0
    %2193 = vmatmul.mubr.f32.gmra.mxu0 %v2123
    %v2194 = vpop.f32.mrf.mxu0
    %v2195 = vadd.f32 %v2120, %v2194
    %v2196 = vpop.f32.mrf.mxu0
    %2197 = vdwg.mxu0
    %2199 = vrot.lane.b32.xlu0 %v61, 120
    %v2200 = vpop.permute.xlu0 %2199
    %v2203 = vsel %vm217, %v2020, 0
    %v2206 = vsel %vm217, %v2110, 0
    %2208 = vmatprep.subr.mxu0 0.0
    %2209 = vmatpush1.xpose.msra.mxu0 0.0
    %2210 = vmatprep.subr.mxu0 0.0
    %2211 = vmatpush1.xpose.msra.mxu0 0.0
    %2212 = vmatprep.subr.mxu0 0.0
    %2213 = vmatpush1.xpose.msra.mxu0 0.0
    %2214 = vmatprep.subr.mxu0 0.0
    %2215 = vmatpush1.xpose.msra.mxu0 0.0
    %2216 = vmatprep.subr.mxu0 0.0
    %2217 = vmatpush1.xpose.msra.mxu0 0.0
    %2218 = vmatprep.subr.mxu0 0.0
    %2219 = vmatpush1.xpose.msra.mxu0 0.0
    %2220 = vmatprep.subr.mxu0 0.0
    %2221 = vmatpush1.xpose.msra.mxu0 0.0
    %2222 = vmatprep.subr.mxu0 0.0
    %2223 = vmatpush1.xpose.msra.mxu0 0.0
    %2224 = vmatprep.subr.mxu0 0.0
    %2225 = vmatpush1.xpose.msra.mxu0 0.0
    %2226 = vmatprep.subr.mxu0 0.0
    %2227 = vmatpush1.xpose.msra.mxu0 0.0
    %2228 = vmatprep.subr.mxu0 0.0
    %2229 = vmatpush1.xpose.msra.mxu0 0.0
    %2230 = vmatprep.subr.mxu0 0.0
    %2231 = vmatpush1.xpose.msra.mxu0 0.0
    %2232 = vmatprep.subr.mxu0 0.0
    %2233 = vmatpush1.xpose.msra.mxu0 0.0
    %2234 = vmatprep.subr.mxu0 0.0
    %2235 = vmatpush1.xpose.msra.mxu0 0.0
    %2236 = vmatprep.subr.mxu0 0.0
    %2237 = vmatpush1.xpose.msra.mxu0 0.0
    %2238 = vmatprep.subr.mxu0 0.0
    %2239 = vmatpush1.xpose.msra.mxu0 %v2206
    %2240 = vmatprep.subr.mxu0 0.0
    %2241 = vmatpush2.xpose.msra.mxu0 0.0
    %2242 = vmatprep.subr.mxu0 0.0
    %2243 = vmatpush2.xpose.msra.mxu0 0.0
    %2244 = vmatprep.subr.mxu0 0.0
    %2245 = vmatpush2.xpose.msra.mxu0 0.0
    %2246 = vmatprep.subr.mxu0 0.0
    %2247 = vmatpush2.xpose.msra.mxu0 0.0
    %2248 = vmatprep.subr.mxu0 0.0
    %2249 = vmatpush2.xpose.msra.mxu0 0.0
    %2250 = vmatprep.subr.mxu0 0.0
    %2251 = vmatpush2.xpose.msra.mxu0 0.0
    %2252 = vmatprep.subr.mxu0 0.0
    %2253 = vmatpush2.xpose.msra.mxu0 0.0
    %2254 = vmatprep.subr.mxu0 0.0
    %2255 = vmatpush2.xpose.msra.mxu0 0.0
    %2256 = vmatprep.subr.mxu0 0.0
    %2257 = vmatpush2.xpose.msra.mxu0 0.0
    %2258 = vmatprep.subr.mxu0 0.0
    %2259 = vmatpush2.xpose.msra.mxu0 0.0
    %2260 = vmatprep.subr.mxu0 0.0
    %2261 = vmatpush2.xpose.msra.mxu0 0.0
    %2262 = vmatprep.subr.mxu0 0.0
    %2263 = vmatpush2.xpose.msra.mxu0 0.0
    %2264 = vmatprep.subr.mxu0 0.0
    %2265 = vmatpush2.xpose.msra.mxu0 0.0
    %2266 = vmatprep.subr.mxu0 0.0
    %2267 = vmatpush2.xpose.msra.mxu0 0.0
    %2268 = vmatprep.subr.mxu0 0.0
    %2269 = vmatpush2.xpose.msra.mxu0 0.0
    %2270 = vmatprep.subr.mxu0 0.0
    %2271 = vmatpush2.xpose.msra.mxu0 0.0
    %2272 = vmatprep.mubr.f32.mxu0 0.0
    %2273 = vmatmul.mubr.f32.gmra.mxu0 %v2203
    %v2274 = vpop.f32.mrf.mxu0
    %v2275 = vadd.f32 %v2200, %v2274
    %v2276 = vpop.f32.mrf.mxu0
    %2277 = vdwg.mxu0
    %v2278 = vsel %vm217, %v2195, -inf
    %2279 = vmax.xlane.f32.xlu0 %v2278
    %v2280 = vpop.xlane.xlu0 %2279
    %v2281 = vsel %vm217, %v2275, -inf
    %2282 = vmax.xlane.f32.xlu0 %v2281
    %v2283 = vpop.xlane.xlu0 %2282
    %v2284 = vsub.f32 %v2195, %v2280
    %v2285 = vsub.f32 %v2275, %v2283
    %v2286 = vmul.f32 %v2284, 1.442695
    %v2287 = vpow.pop %v2286
    %v2288 = vmul.f32 %v2285, 1.442695
    %v2289 = vpow.pop %v2288
    %v2290 = vsel %vm217, %v2287, 0.0
    %2291 = vadd.xlane.f32.xlu0 %v2290
    %v2292 = vpop.xlane.xlu0 %2291
    %v2293 = vsel %vm217, %v2289, 0.0
    %2294 = vadd.xlane.f32.xlu0 %v2293
    %v2295 = vpop.xlane.xlu0 %2294
    %v2296 = vrcp.pop %v2292
    %v2297 = vmul.f32 1.0, %v2296
    %v2298 = vrcp.pop %v2295
    %v2299 = vmul.f32 1.0, %v2298
    %v2300 = vmul.f32 %v2287, %v2297
    %v2301 = vmul.f32 %v2289, %v2299
    %2302 = vrot.lane.b32.xlu0 %v2105, 96
    %v2303 = vpop.permute.xlu0 %2302
    %v2306 = vsel %vm217, %v2300, 0
    %2308 = vmatprep.subr.mxu0 0.0
    %2309 = vmatpush1.msra.mxu0 0.0
    %2310 = vmatprep.subr.mxu0 0.0
    %2311 = vmatpush1.msra.mxu0 0.0
    %2312 = vmatprep.subr.mxu0 0.0
    %2313 = vmatpush1.msra.mxu0 0.0
    %2314 = vmatprep.subr.mxu0 0.0
    %2315 = vmatpush1.msra.mxu0 0.0
    %2316 = vmatprep.subr.mxu0 0.0
    %2317 = vmatpush1.msra.mxu0 0.0
    %2318 = vmatprep.subr.mxu0 0.0
    %2319 = vmatpush1.msra.mxu0 0.0
    %2320 = vmatprep.subr.mxu0 0.0
    %2321 = vmatpush1.msra.mxu0 0.0
    %2322 = vmatprep.subr.mxu0 0.0
    %2323 = vmatpush1.msra.mxu0 0.0
    %2324 = vmatprep.subr.mxu0 0.0
    %2325 = vmatpush1.msra.mxu0 0.0
    %2326 = vmatprep.subr.mxu0 0.0
    %2327 = vmatpush1.msra.mxu0 0.0
    %2328 = vmatprep.subr.mxu0 0.0
    %2329 = vmatpush1.msra.mxu0 0.0
    %2330 = vmatprep.subr.mxu0 0.0
    %2331 = vmatpush1.msra.mxu0 0.0
    %2332 = vmatprep.subr.mxu0 0.0
    %2333 = vmatpush1.msra.mxu0 0.0
    %2334 = vmatprep.subr.mxu0 0.0
    %2335 = vmatpush1.msra.mxu0 0.0
    %2336 = vmatprep.subr.mxu0 0.0
    %2337 = vmatpush1.msra.mxu0 0.0
    %2338 = vmatprep.subr.mxu0 0.0
    %2339 = vmatpush1.msra.mxu0 %v2303
    %2340 = vmatprep.subr.mxu0 0.0
    %2341 = vmatpush2.msra.mxu0 0.0
    %2342 = vmatprep.subr.mxu0 0.0
    %2343 = vmatpush2.msra.mxu0 0.0
    %2344 = vmatprep.subr.mxu0 0.0
    %2345 = vmatpush2.msra.mxu0 0.0
    %2346 = vmatprep.subr.mxu0 0.0
    %2347 = vmatpush2.msra.mxu0 0.0
    %2348 = vmatprep.subr.mxu0 0.0
    %2349 = vmatpush2.msra.mxu0 0.0
    %2350 = vmatprep.subr.mxu0 0.0
    %2351 = vmatpush2.msra.mxu0 0.0
    %2352 = vmatprep.subr.mxu0 0.0
    %2353 = vmatpush2.msra.mxu0 0.0
    %2354 = vmatprep.subr.mxu0 0.0
    %2355 = vmatpush2.msra.mxu0 0.0
    %2356 = vmatprep.subr.mxu0 0.0
    %2357 = vmatpush2.msra.mxu0 0.0
    %2358 = vmatprep.subr.mxu0 0.0
    %2359 = vmatpush2.msra.mxu0 0.0
    %2360 = vmatprep.subr.mxu0 0.0
    %2361 = vmatpush2.msra.mxu0 0.0
    %2362 = vmatprep.subr.mxu0 0.0
    %2363 = vmatpush2.msra.mxu0 0.0
    %2364 = vmatprep.subr.mxu0 0.0
    %2365 = vmatpush2.msra.mxu0 0.0
    %2366 = vmatprep.subr.mxu0 0.0
    %2367 = vmatpush2.msra.mxu0 0.0
    %2368 = vmatprep.subr.mxu0 0.0
    %2369 = vmatpush2.msra.mxu0 0.0
    %2370 = vmatprep.subr.mxu0 0.0
    %2371 = vmatpush2.msra.mxu0 0.0
    %2372 = vmatprep.mubr.f32.mxu0 0.0
    %2373 = vmatmul.mubr.f32.gmra.mxu0 %v2306
    %v2374 = vpop.f32.mrf.mxu0
    %v2375 = vadd.f32 0.0, %v2374
    %v2376 = vpop.f32.mrf.mxu0
    %2377 = vdwg.mxu0
    %2378 = vrot.lane.b32.xlu0 %v2110, 96
    %v2379 = vpop.permute.xlu0 %2378
    %v2382 = vsel %vm217, %v2301, 0
    %2384 = vmatprep.subr.mxu0 0.0
    %2385 = vmatpush1.msra.mxu0 0.0
    %2386 = vmatprep.subr.mxu0 0.0
    %2387 = vmatpush1.msra.mxu0 0.0
    %2388 = vmatprep.subr.mxu0 0.0
    %2389 = vmatpush1.msra.mxu0 0.0
    %2390 = vmatprep.subr.mxu0 0.0
    %2391 = vmatpush1.msra.mxu0 0.0
    %2392 = vmatprep.subr.mxu0 0.0
    %2393 = vmatpush1.msra.mxu0 0.0
    %2394 = vmatprep.subr.mxu0 0.0
    %2395 = vmatpush1.msra.mxu0 0.0
    %2396 = vmatprep.subr.mxu0 0.0
    %2397 = vmatpush1.msra.mxu0 0.0
    %2398 = vmatprep.subr.mxu0 0.0
    %2399 = vmatpush1.msra.mxu0 0.0
    %2400 = vmatprep.subr.mxu0 0.0
    %2401 = vmatpush1.msra.mxu0 0.0
    %2402 = vmatprep.subr.mxu0 0.0
    %2403 = vmatpush1.msra.mxu0 0.0
    %2404 = vmatprep.subr.mxu0 0.0
    %2405 = vmatpush1.msra.mxu0 0.0
    %2406 = vmatprep.subr.mxu0 0.0
    %2407 = vmatpush1.msra.mxu0 0.0
    %2408 = vmatprep.subr.mxu0 0.0
    %2409 = vmatpush1.msra.mxu0 0.0
    %2410 = vmatprep.subr.mxu0 0.0
    %2411 = vmatpush1.msra.mxu0 0.0
    %2412 = vmatprep.subr.mxu0 0.0
    %2413 = vmatpush1.msra.mxu0 0.0
    %2414 = vmatprep.subr.mxu0 0.0
    %2415 = vmatpush1.msra.mxu0 %v2379
    %2416 = vmatprep.subr.mxu0 0.0
    %2417 = vmatpush2.msra.mxu0 0.0
    %2418 = vmatprep.subr.mxu0 0.0
    %2419 = vmatpush2.msra.mxu0 0.0
    %2420 = vmatprep.subr.mxu0 0.0
    %2421 = vmatpush2.msra.mxu0 0.0
    %2422 = vmatprep.subr.mxu0 0.0
    %2423 = vmatpush2.msra.mxu0 0.0
    %2424 = vmatprep.subr.mxu0 0.0
    %2425 = vmatpush2.msra.mxu0 0.0
    %2426 = vmatprep.subr.mxu0 0.0
    %2427 = vmatpush2.msra.mxu0 0.0
    %2428 = vmatprep.subr.mxu0 0.0
    %2429 = vmatpush2.msra.mxu0 0.0
    %2430 = vmatprep.subr.mxu0 0.0
    %2431 = vmatpush2.msra.mxu0 0.0
    %2432 = vmatprep.subr.mxu0 0.0
    %2433 = vmatpush2.msra.mxu0 0.0
    %2434 = vmatprep.subr.mxu0 0.0
    %2435 = vmatpush2.msra.mxu0 0.0
    %2436 = vmatprep.subr.mxu0 0.0
    %2437 = vmatpush2.msra.mxu0 0.0
    %2438 = vmatprep.subr.mxu0 0.0
    %2439 = vmatpush2.msra.mxu0 0.0
    %2440 = vmatprep.subr.mxu0 0.0
    %2441 = vmatpush2.msra.mxu0 0.0
    %2442 = vmatprep.subr.mxu0 0.0
    %2443 = vmatpush2.msra.mxu0 0.0
    %2444 = vmatprep.subr.mxu0 0.0
    %2445 = vmatpush2.msra.mxu0 0.0
    %2446 = vmatprep.subr.mxu0 0.0
    %2447 = vmatpush2.msra.mxu0 0.0
    %2448 = vmatprep.mubr.f32.mxu0 0.0
    %2449 = vmatmul.mubr.f32.gmra.mxu0 %v2382
    %v2450 = vpop.f32.mrf.mxu0
    %v2451 = vadd.f32 0.0, %v2450
    %v2452 = vpop.f32.mrf.mxu0
    %2453 = vdwg.mxu0
    %v2455 = vsel %vm217, %v2375, 0
    %v2458 = vsel %vm217, %v2451, 0
    %2460 = vmatprep.subr.mxu0 0.0
    %2461 = vmatpush1.msra.mxu0 0.0
    %2462 = vmatprep.subr.mxu0 0.0
    %2463 = vmatpush1.msra.mxu0 0.0
    %2464 = vmatprep.subr.mxu0 0.0
    %2465 = vmatpush1.msra.mxu0 0.0
    %2466 = vmatprep.subr.mxu0 0.0
    %2467 = vmatpush1.msra.mxu0 0.0
    %2468 = vmatprep.subr.mxu0 0.0
    %2469 = vmatpush1.msra.mxu0 0.0
    %2470 = vmatprep.subr.mxu0 0.0
    %2471 = vmatpush1.msra.mxu0 0.0
    %2472 = vmatprep.subr.mxu0 0.0
    %2473 = vmatpush1.msra.mxu0 0.0
    %2474 = vmatprep.subr.mxu0 0.0
    %2475 = vmatpush1.msra.mxu0 0.0
    %2476 = vmatprep.subr.mxu0 0.0
    %2477 = vmatpush1.msra.mxu0 0.0
    %2478 = vmatprep.subr.mxu0 0.0
    %2479 = vmatpush1.msra.mxu0 0.0
    %2480 = vmatprep.subr.mxu0 0.0
    %2481 = vmatpush1.msra.mxu0 0.0
    %2482 = vmatprep.subr.mxu0 0.0
    %2483 = vmatpush1.msra.mxu0 0.0
    %2484 = vmatprep.subr.mxu0 0.0
    %2485 = vmatpush1.msra.mxu0 0.0
    %2486 = vmatprep.subr.mxu0 0.0
    %2487 = vmatpush1.msra.mxu0 0.0
    %2488 = vmatprep.subr.mxu0 0.0
    %2489 = vmatpush1.msra.mxu0 0.0
    %2490 = vmatprep.subr.mxu0 0.0
    %2491 = vmatpush1.msra.mxu0 %v2113
    %2492 = vmatprep.subr.mxu0 0.0
    %2493 = vmatpush2.msra.mxu0 0.0
    %2494 = vmatprep.subr.mxu0 0.0
    %2495 = vmatpush2.msra.mxu0 0.0
    %2496 = vmatprep.subr.mxu0 0.0
    %2497 = vmatpush2.msra.mxu0 0.0
    %2498 = vmatprep.subr.mxu0 0.0
    %2499 = vmatpush2.msra.mxu0 0.0
    %2500 = vmatprep.subr.mxu0 0.0
    %2501 = vmatpush2.msra.mxu0 0.0
    %2502 = vmatprep.subr.mxu0 0.0
    %2503 = vmatpush2.msra.mxu0 0.0
    %2504 = vmatprep.subr.mxu0 0.0
    %2505 = vmatpush2.msra.mxu0 0.0
    %2506 = vmatprep.subr.mxu0 0.0
    %2507 = vmatpush2.msra.mxu0 0.0
    %2508 = vmatprep.subr.mxu0 0.0
    %2509 = vmatpush2.msra.mxu0 0.0
    %2510 = vmatprep.subr.mxu0 0.0
    %2511 = vmatpush2.msra.mxu0 0.0
    %2512 = vmatprep.subr.mxu0 0.0
    %2513 = vmatpush2.msra.mxu0 0.0
    %2514 = vmatprep.subr.mxu0 0.0
    %2515 = vmatpush2.msra.mxu0 0.0
    %2516 = vmatprep.subr.mxu0 0.0
    %2517 = vmatpush2.msra.mxu0 0.0
    %2518 = vmatprep.subr.mxu0 0.0
    %2519 = vmatpush2.msra.mxu0 0.0
    %2520 = vmatprep.subr.mxu0 0.0
    %2521 = vmatpush2.msra.mxu0 0.0
    %2522 = vmatprep.subr.mxu0 0.0
    %2523 = vmatpush2.msra.mxu0 0.0
    %2524 = vmatprep.mubr.f32.mxu0 0.0
    %2525 = vmatmul.mubr.f32.gmra.mxu0 %v2455
    %v2526 = vpop.f32.mrf.mxu0
    %v2527 = vadd.f32 0.0, %v2526
    %v2528 = vpop.f32.mrf.mxu0
    %2529 = vmatprep.mubr.f32.mxu0 0.0
    %2530 = vmatmul.mubr.f32.gmra.mxu0 %v2458
    %v2531 = vpop.f32.mrf.mxu0
    %v2532 = vadd.f32 0.0, %v2531
    %v2533 = vpop.f32.mrf.mxu0
    %2534 = vdwg.mxu0
    %v2535 = vlaneseq
    %v2536 = vshrl.u32 %v2535, 7
    %v2537 = vsub.s32 0, %v2536
    %v2538 = vrot.slane %v2117, %v2537
    %v2539 = vadd.f32 %v2538, %v2527
    %v2540 = vadd.f32 %v2538, %v2532
    %2541 = vrot.lane.b32.xlu0 %v2015, 120
    %v2542 = vpop.permute.xlu0 %2541
    %2543 = vrot.lane.b32.xlu0 %v2105, 120
    %v2544 = vpop.permute.xlu0 %2543
    %v2545 = vsel %vm217, %v2542, 0
    %v2547 = vsel %vm217, %v2544, 0
    %2549 = vmatprep.subr.mxu0 0.0
    %2550 = vmatpush1.xpose.msra.mxu0 0.0
    %2551 = vmatprep.subr.mxu0 0.0
    %2552 = vmatpush1.xpose.msra.mxu0 0.0
    %2553 = vmatprep.subr.mxu0 0.0
    %2554 = vmatpush1.xpose.msra.mxu0 0.0
    %2555 = vmatprep.subr.mxu0 0.0
    %2556 = vmatpush1.xpose.msra.mxu0 0.0
    %2557 = vmatprep.subr.mxu0 0.0
    %2558 = vmatpush1.xpose.msra.mxu0 0.0
    %2559 = vmatprep.subr.mxu0 0.0
    %2560 = vmatpush1.xpose.msra.mxu0 0.0
    %2561 = vmatprep.subr.mxu0 0.0
    %2562 = vmatpush1.xpose.msra.mxu0 0.0
    %2563 = vmatprep.subr.mxu0 0.0
    %2564 = vmatpush1.xpose.msra.mxu0 0.0
    %2565 = vmatprep.subr.mxu0 0.0
    %2566 = vmatpush1.xpose.msra.mxu0 0.0
    %2567 = vmatprep.subr.mxu0 0.0
    %2568 = vmatpush1.xpose.msra.mxu0 0.0
    %2569 = vmatprep.subr.mxu0 0.0
    %2570 = vmatpush1.xpose.msra.mxu0 0.0
    %2571 = vmatprep.subr.mxu0 0.0
    %2572 = vmatpush1.xpose.msra.mxu0 0.0
    %2573 = vmatprep.subr.mxu0 0.0
    %2574 = vmatpush1.xpose.msra.mxu0 0.0
    %2575 = vmatprep.subr.mxu0 0.0
    %2576 = vmatpush1.xpose.msra.mxu0 0.0
    %2577 = vmatprep.subr.mxu0 0.0
    %2578 = vmatpush1.xpose.msra.mxu0 0.0
    %2579 = vmatprep.subr.mxu0 0.0
    %2580 = vmatpush1.xpose.msra.mxu0 %v2547
    %2581 = vmatprep.subr.mxu0 0.0
    %2582 = vmatpush2.xpose.msra.mxu0 0.0
    %2583 = vmatprep.subr.mxu0 0.0
    %2584 = vmatpush2.xpose.msra.mxu0 0.0
    %2585 = vmatprep.subr.mxu0 0.0
    %2586 = vmatpush2.xpose.msra.mxu0 0.0
    %2587 = vmatprep.subr.mxu0 0.0
    %2588 = vmatpush2.xpose.msra.mxu0 0.0
    %2589 = vmatprep.subr.mxu0 0.0
    %2590 = vmatpush2.xpose.msra.mxu0 0.0
    %2591 = vmatprep.subr.mxu0 0.0
    %2592 = vmatpush2.xpose.msra.mxu0 0.0
    %2593 = vmatprep.subr.mxu0 0.0
    %2594 = vmatpush2.xpose.msra.mxu0 0.0
    %2595 = vmatprep.subr.mxu0 0.0
    %2596 = vmatpush2.xpose.msra.mxu0 0.0
    %2597 = vmatprep.subr.mxu0 0.0
    %2598 = vmatpush2.xpose.msra.mxu0 0.0
    %2599 = vmatprep.subr.mxu0 0.0
    %2600 = vmatpush2.xpose.msra.mxu0 0.0
    %2601 = vmatprep.subr.mxu0 0.0
    %2602 = vmatpush2.xpose.msra.mxu0 0.0
    %2603 = vmatprep.subr.mxu0 0.0
    %2604 = vmatpush2.xpose.msra.mxu0 0.0
    %2605 = vmatprep.subr.mxu0 0.0
    %2606 = vmatpush2.xpose.msra.mxu0 0.0
    %2607 = vmatprep.subr.mxu0 0.0
    %2608 = vmatpush2.xpose.msra.mxu0 0.0
    %2609 = vmatprep.subr.mxu0 0.0
    %2610 = vmatpush2.xpose.msra.mxu0 0.0
    %2611 = vmatprep.subr.mxu0 0.0
    %2612 = vmatpush2.xpose.msra.mxu0 0.0
    %2613 = vmatprep.mubr.f32.mxu0 0.0
    %2614 = vmatmul.mubr.f32.gmra.mxu0 %v2545
    %v2615 = vpop.f32.mrf.mxu0
    %v2616 = vadd.f32 %v2120, %v2615
    %v2617 = vpop.f32.mrf.mxu0
    %2618 = vdwg.mxu0
    %2619 = vrot.lane.b32.xlu0 %v2020, 120
    %v2620 = vpop.permute.xlu0 %2619
    %2621 = vrot.lane.b32.xlu0 %v2110, 120
    %v2622 = vpop.permute.xlu0 %2621
    %v2623 = vsel %vm217, %v2620, 0
    %v2625 = vsel %vm217, %v2622, 0
    %2627 = vmatprep.subr.mxu0 0.0
    %2628 = vmatpush1.xpose.msra.mxu0 0.0
    %2629 = vmatprep.subr.mxu0 0.0
    %2630 = vmatpush1.xpose.msra.mxu0 0.0
    %2631 = vmatprep.subr.mxu0 0.0
    %2632 = vmatpush1.xpose.msra.mxu0 0.0
    %2633 = vmatprep.subr.mxu0 0.0
    %2634 = vmatpush1.xpose.msra.mxu0 0.0
    %2635 = vmatprep.subr.mxu0 0.0
    %2636 = vmatpush1.xpose.msra.mxu0 0.0
    %2637 = vmatprep.subr.mxu0 0.0
    %2638 = vmatpush1.xpose.msra.mxu0 0.0
    %2639 = vmatprep.subr.mxu0 0.0
    %2640 = vmatpush1.xpose.msra.mxu0 0.0
    %2641 = vmatprep.subr.mxu0 0.0
    %2642 = vmatpush1.xpose.msra.mxu0 0.0
    %2643 = vmatprep.subr.mxu0 0.0
    %2644 = vmatpush1.xpose.msra.mxu0 0.0
    %2645 = vmatprep.subr.mxu0 0.0
    %2646 = vmatpush1.xpose.msra.mxu0 0.0
    %2647 = vmatprep.subr.mxu0 0.0
    %2648 = vmatpush1.xpose.msra.mxu0 0.0
    %2649 = vmatprep.subr.mxu0 0.0
    %2650 = vmatpush1.xpose.msra.mxu0 0.0
    %2651 = vmatprep.subr.mxu0 0.0
    %2652 = vmatpush1.xpose.msra.mxu0 0.0
    %2653 = vmatprep.subr.mxu0 0.0
    %2654 = vmatpush1.xpose.msra.mxu0 0.0
    %2655 = vmatprep.subr.mxu0 0.0
    %2656 = vmatpush1.xpose.msra.mxu0 0.0
    %2657 = vmatprep.subr.mxu0 0.0
    %2658 = vmatpush1.xpose.msra.mxu0 %v2625
    %2659 = vmatprep.subr.mxu0 0.0
    %2660 = vmatpush2.xpose.msra.mxu0 0.0
    %2661 = vmatprep.subr.mxu0 0.0
    %2662 = vmatpush2.xpose.msra.mxu0 0.0
    %2663 = vmatprep.subr.mxu0 0.0
    %2664 = vmatpush2.xpose.msra.mxu0 0.0
    %2665 = vmatprep.subr.mxu0 0.0
    %2666 = vmatpush2.xpose.msra.mxu0 0.0
    %2667 = vmatprep.subr.mxu0 0.0
    %2668 = vmatpush2.xpose.msra.mxu0 0.0
    %2669 = vmatprep.subr.mxu0 0.0
    %2670 = vmatpush2.xpose.msra.mxu0 0.0
    %2671 = vmatprep.subr.mxu0 0.0
    %2672 = vmatpush2.xpose.msra.mxu0 0.0
    %2673 = vmatprep.subr.mxu0 0.0
    %2674 = vmatpush2.xpose.msra.mxu0 0.0
    %2675 = vmatprep.subr.mxu0 0.0
    %2676 = vmatpush2.xpose.msra.mxu0 0.0
    %2677 = vmatprep.subr.mxu0 0.0
    %2678 = vmatpush2.xpose.msra.mxu0 0.0
    %2679 = vmatprep.subr.mxu0 0.0
    %2680 = vmatpush2.xpose.msra.mxu0 0.0
    %2681 = vmatprep.subr.mxu0 0.0
    %2682 = vmatpush2.xpose.msra.mxu0 0.0
    %2683 = vmatprep.subr.mxu0 0.0
    %2684 = vmatpush2.xpose.msra.mxu0 0.0
    %2685 = vmatprep.subr.mxu0 0.0
    %2686 = vmatpush2.xpose.msra.mxu0 0.0
    %2687 = vmatprep.subr.mxu0 0.0
    %2688 = vmatpush2.xpose.msra.mxu0 0.0
    %2689 = vmatprep.subr.mxu0 0.0
    %2690 = vmatpush2.xpose.msra.mxu0 0.0
    %2691 = vmatprep.mubr.f32.mxu0 0.0
    %2692 = vmatmul.mubr.f32.gmra.mxu0 %v2623
    %v2693 = vpop.f32.mrf.mxu0
    %v2694 = vadd.f32 %v2200, %v2693
    %v2695 = vpop.f32.mrf.mxu0
    %2696 = vdwg.mxu0
    %v2697 = vsel %vm217, %v2616, -inf
    %2698 = vmax.xlane.f32.xlu0 %v2697
    %v2699 = vpop.xlane.xlu0 %2698
    %v2700 = vsel %vm217, %v2694, -inf
    %2701 = vmax.xlane.f32.xlu0 %v2700
    %v2702 = vpop.xlane.xlu0 %2701
    %v2703 = vsub.f32 %v2616, %v2699
    %v2704 = vsub.f32 %v2694, %v2702
    %v2705 = vmul.f32 %v2703, 1.442695
    %v2706 = vpow.pop %v2705
    %v2707 = vmul.f32 %v2704, 1.442695
    %v2708 = vpow.pop %v2707
    %v2709 = vsel %vm217, %v2706, 0.0
    %2710 = vadd.xlane.f32.xlu0 %v2709
    %v2711 = vpop.xlane.xlu0 %2710
    %v2712 = vsel %vm217, %v2708, 0.0
    %2713 = vadd.xlane.f32.xlu0 %v2712
    %v2714 = vpop.xlane.xlu0 %2713
    %v2715 = vrcp.pop %v2711
    %v2716 = vmul.f32 1.0, %v2715
    %v2717 = vrcp.pop %v2714
    %v2718 = vmul.f32 1.0, %v2717
    %v2719 = vmul.f32 %v2706, %v2716
    %v2720 = vmul.f32 %v2708, %v2718
    %2721 = vrot.lane.b32.xlu0 %v2105, 88
    %v2722 = vpop.permute.xlu0 %2721
    %v2725 = vsel %vm217, %v2719, 0
    %2727 = vmatprep.subr.mxu0 0.0
    %2728 = vmatpush1.msra.mxu0 0.0
    %2729 = vmatprep.subr.mxu0 0.0
    %2730 = vmatpush1.msra.mxu0 0.0
    %2731 = vmatprep.subr.mxu0 0.0
    %2732 = vmatpush1.msra.mxu0 0.0
    %2733 = vmatprep.subr.mxu0 0.0
    %2734 = vmatpush1.msra.mxu0 0.0
    %2735 = vmatprep.subr.mxu0 0.0
    %2736 = vmatpush1.msra.mxu0 0.0
    %2737 = vmatprep.subr.mxu0 0.0
    %2738 = vmatpush1.msra.mxu0 0.0
    %2739 = vmatprep.subr.mxu0 0.0
    %2740 = vmatpush1.msra.mxu0 0.0
    %2741 = vmatprep.subr.mxu0 0.0
    %2742 = vmatpush1.msra.mxu0 0.0
    %2743 = vmatprep.subr.mxu0 0.0
    %2744 = vmatpush1.msra.mxu0 0.0
    %2745 = vmatprep.subr.mxu0 0.0
    %2746 = vmatpush1.msra.mxu0 0.0
    %2747 = vmatprep.subr.mxu0 0.0
    %2748 = vmatpush1.msra.mxu0 0.0
    %2749 = vmatprep.subr.mxu0 0.0
    %2750 = vmatpush1.msra.mxu0 0.0
    %2751 = vmatprep.subr.mxu0 0.0
    %2752 = vmatpush1.msra.mxu0 0.0
    %2753 = vmatprep.subr.mxu0 0.0
    %2754 = vmatpush1.msra.mxu0 0.0
    %2755 = vmatprep.subr.mxu0 0.0
    %2756 = vmatpush1.msra.mxu0 0.0
    %2757 = vmatprep.subr.mxu0 0.0
    %2758 = vmatpush1.msra.mxu0 %v2722
    %2759 = vmatprep.subr.mxu0 0.0
    %2760 = vmatpush2.msra.mxu0 0.0
    %2761 = vmatprep.subr.mxu0 0.0
    %2762 = vmatpush2.msra.mxu0 0.0
    %2763 = vmatprep.subr.mxu0 0.0
    %2764 = vmatpush2.msra.mxu0 0.0
    %2765 = vmatprep.subr.mxu0 0.0
    %2766 = vmatpush2.msra.mxu0 0.0
    %2767 = vmatprep.subr.mxu0 0.0
    %2768 = vmatpush2.msra.mxu0 0.0
    %2769 = vmatprep.subr.mxu0 0.0
    %2770 = vmatpush2.msra.mxu0 0.0
    %2771 = vmatprep.subr.mxu0 0.0
    %2772 = vmatpush2.msra.mxu0 0.0
    %2773 = vmatprep.subr.mxu0 0.0
    %2774 = vmatpush2.msra.mxu0 0.0
    %2775 = vmatprep.subr.mxu0 0.0
    %2776 = vmatpush2.msra.mxu0 0.0
    %2777 = vmatprep.subr.mxu0 0.0
    %2778 = vmatpush2.msra.mxu0 0.0
    %2779 = vmatprep.subr.mxu0 0.0
    %2780 = vmatpush2.msra.mxu0 0.0
    %2781 = vmatprep.subr.mxu0 0.0
    %2782 = vmatpush2.msra.mxu0 0.0
    %2783 = vmatprep.subr.mxu0 0.0
    %2784 = vmatpush2.msra.mxu0 0.0
    %2785 = vmatprep.subr.mxu0 0.0
    %2786 = vmatpush2.msra.mxu0 0.0
    %2787 = vmatprep.subr.mxu0 0.0
    %2788 = vmatpush2.msra.mxu0 0.0
    %2789 = vmatprep.subr.mxu0 0.0
    %2790 = vmatpush2.msra.mxu0 0.0
    %2791 = vmatprep.mubr.f32.mxu0 0.0
    %2792 = vmatmul.mubr.f32.gmra.mxu0 %v2725
    %v2793 = vpop.f32.mrf.mxu0
    %v2794 = vadd.f32 0.0, %v2793
    %v2795 = vpop.f32.mrf.mxu0
    %2796 = vdwg.mxu0
    %2797 = vrot.lane.b32.xlu0 %v2110, 88
    %v2798 = vpop.permute.xlu0 %2797
    %v2801 = vsel %vm217, %v2720, 0
    %2803 = vmatprep.subr.mxu0 0.0
    %2804 = vmatpush1.msra.mxu0 0.0
    %2805 = vmatprep.subr.mxu0 0.0
    %2806 = vmatpush1.msra.mxu0 0.0
    %2807 = vmatprep.subr.mxu0 0.0
    %2808 = vmatpush1.msra.mxu0 0.0
    %2809 = vmatprep.subr.mxu0 0.0
    %2810 = vmatpush1.msra.mxu0 0.0
    %2811 = vmatprep.subr.mxu0 0.0
    %2812 = vmatpush1.msra.mxu0 0.0
    %2813 = vmatprep.subr.mxu0 0.0
    %2814 = vmatpush1.msra.mxu0 0.0
    %2815 = vmatprep.subr.mxu0 0.0
    %2816 = vmatpush1.msra.mxu0 0.0
    %2817 = vmatprep.subr.mxu0 0.0
    %2818 = vmatpush1.msra.mxu0 0.0
    %2819 = vmatprep.subr.mxu0 0.0
    %2820 = vmatpush1.msra.mxu0 0.0
    %2821 = vmatprep.subr.mxu0 0.0
    %2822 = vmatpush1.msra.mxu0 0.0
    %2823 = vmatprep.subr.mxu0 0.0
    %2824 = vmatpush1.msra.mxu0 0.0
    %2825 = vmatprep.subr.mxu0 0.0
    %2826 = vmatpush1.msra.mxu0 0.0
    %2827 = vmatprep.subr.mxu0 0.0
    %2828 = vmatpush1.msra.mxu0 0.0
    %2829 = vmatprep.subr.mxu0 0.0
    %2830 = vmatpush1.msra.mxu0 0.0
    %2831 = vmatprep.subr.mxu0 0.0
    %2832 = vmatpush1.msra.mxu0 0.0
    %2833 = vmatprep.subr.mxu0 0.0
    %2834 = vmatpush1.msra.mxu0 %v2798
    %2835 = vmatprep.subr.mxu0 0.0
    %2836 = vmatpush2.msra.mxu0 0.0
    %2837 = vmatprep.subr.mxu0 0.0
    %2838 = vmatpush2.msra.mxu0 0.0
    %2839 = vmatprep.subr.mxu0 0.0
    %2840 = vmatpush2.msra.mxu0 0.0
    %2841 = vmatprep.subr.mxu0 0.0
    %2842 = vmatpush2.msra.mxu0 0.0
    %2843 = vmatprep.subr.mxu0 0.0
    %2844 = vmatpush2.msra.mxu0 0.0
    %2845 = vmatprep.subr.mxu0 0.0
    %2846 = vmatpush2.msra.mxu0 0.0
    %2847 = vmatprep.subr.mxu0 0.0
    %2848 = vmatpush2.msra.mxu0 0.0
    %2849 = vmatprep.subr.mxu0 0.0
    %2850 = vmatpush2.msra.mxu0 0.0
    %2851 = vmatprep.subr.mxu0 0.0
    %2852 = vmatpush2.msra.mxu0 0.0
    %2853 = vmatprep.subr.mxu0 0.0
    %2854 = vmatpush2.msra.mxu0 0.0
    %2855 = vmatprep.subr.mxu0 0.0
    %2856 = vmatpush2.msra.mxu0 0.0
    %2857 = vmatprep.subr.mxu0 0.0
    %2858 = vmatpush2.msra.mxu0 0.0
    %2859 = vmatprep.subr.mxu0 0.0
    %2860 = vmatpush2.msra.mxu0 0.0
    %2861 = vmatprep.subr.mxu0 0.0
    %2862 = vmatpush2.msra.mxu0 0.0
    %2863 = vmatprep.subr.mxu0 0.0
    %2864 = vmatpush2.msra.mxu0 0.0
    %2865 = vmatprep.subr.mxu0 0.0
    %2866 = vmatpush2.msra.mxu0 0.0
    %2867 = vmatprep.mubr.f32.mxu0 0.0
    %2868 = vmatmul.mubr.f32.gmra.mxu0 %v2801
    %v2869 = vpop.f32.mrf.mxu0
    %v2870 = vadd.f32 0.0, %v2869
    %v2871 = vpop.f32.mrf.mxu0
    %2872 = vdwg.mxu0
    %v2874 = vsel %vm217, %v2794, 0
    %v2877 = vsel %vm217, %v2870, 0
    %2879 = vmatprep.subr.mxu0 0.0
    %2880 = vmatpush1.msra.mxu0 0.0
    %2881 = vmatprep.subr.mxu0 0.0
    %2882 = vmatpush1.msra.mxu0 0.0
    %2883 = vmatprep.subr.mxu0 0.0
    %2884 = vmatpush1.msra.mxu0 0.0
    %2885 = vmatprep.subr.mxu0 0.0
    %2886 = vmatpush1.msra.mxu0 0.0
    %2887 = vmatprep.subr.mxu0 0.0
    %2888 = vmatpush1.msra.mxu0 0.0
    %2889 = vmatprep.subr.mxu0 0.0
    %2890 = vmatpush1.msra.mxu0 0.0
    %2891 = vmatprep.subr.mxu0 0.0
    %2892 = vmatpush1.msra.mxu0 0.0
    %2893 = vmatprep.subr.mxu0 0.0
    %2894 = vmatpush1.msra.mxu0 0.0
    %2895 = vmatprep.subr.mxu0 0.0
    %2896 = vmatpush1.msra.mxu0 0.0
    %2897 = vmatprep.subr.mxu0 0.0
    %2898 = vmatpush1.msra.mxu0 0.0
    %2899 = vmatprep.subr.mxu0 0.0
    %2900 = vmatpush1.msra.mxu0 0.0
    %2901 = vmatprep.subr.mxu0 0.0
    %2902 = vmatpush1.msra.mxu0 0.0
    %2903 = vmatprep.subr.mxu0 0.0
    %2904 = vmatpush1.msra.mxu0 0.0
    %2905 = vmatprep.subr.mxu0 0.0
    %2906 = vmatpush1.msra.mxu0 0.0
    %2907 = vmatprep.subr.mxu0 0.0
    %2908 = vmatpush1.msra.mxu0 0.0
    %2909 = vmatprep.subr.mxu0 0.0
    %2910 = vmatpush1.msra.mxu0 %v2114
    %2911 = vmatprep.subr.mxu0 0.0
    %2912 = vmatpush2.msra.mxu0 0.0
    %2913 = vmatprep.subr.mxu0 0.0
    %2914 = vmatpush2.msra.mxu0 0.0
    %2915 = vmatprep.subr.mxu0 0.0
    %2916 = vmatpush2.msra.mxu0 0.0
    %2917 = vmatprep.subr.mxu0 0.0
    %2918 = vmatpush2.msra.mxu0 0.0
    %2919 = vmatprep.subr.mxu0 0.0
    %2920 = vmatpush2.msra.mxu0 0.0
    %2921 = vmatprep.subr.mxu0 0.0
    %2922 = vmatpush2.msra.mxu0 0.0
    %2923 = vmatprep.subr.mxu0 0.0
    %2924 = vmatpush2.msra.mxu0 0.0
    %2925 = vmatprep.subr.mxu0 0.0
    %2926 = vmatpush2.msra.mxu0 0.0
    %2927 = vmatprep.subr.mxu0 0.0
    %2928 = vmatpush2.msra.mxu0 0.0
    %2929 = vmatprep.subr.mxu0 0.0
    %2930 = vmatpush2.msra.mxu0 0.0
    %2931 = vmatprep.subr.mxu0 0.0
    %2932 = vmatpush2.msra.mxu0 0.0
    %2933 = vmatprep.subr.mxu0 0.0
    %2934 = vmatpush2.msra.mxu0 0.0
    %2935 = vmatprep.subr.mxu0 0.0
    %2936 = vmatpush2.msra.mxu0 0.0
    %2937 = vmatprep.subr.mxu0 0.0
    %2938 = vmatpush2.msra.mxu0 0.0
    %2939 = vmatprep.subr.mxu0 0.0
    %2940 = vmatpush2.msra.mxu0 0.0
    %2941 = vmatprep.subr.mxu0 0.0
    %2942 = vmatpush2.msra.mxu0 0.0
    %2943 = vmatprep.mubr.f32.mxu0 0.0
    %2944 = vmatmul.mubr.f32.gmra.mxu0 %v2874
    %v2945 = vpop.f32.mrf.mxu0
    %v2946 = vadd.f32 0.0, %v2945
    %v2947 = vpop.f32.mrf.mxu0
    %2948 = vmatprep.mubr.f32.mxu0 0.0
    %2949 = vmatmul.mubr.f32.gmra.mxu0 %v2877
    %v2950 = vpop.f32.mrf.mxu0
    %v2951 = vadd.f32 0.0, %v2950
    %v2952 = vpop.f32.mrf.mxu0
    %2953 = vdwg.mxu0
    %v2954 = vadd.f32 %v2539, %v2946
    %v2955 = vadd.f32 %v2540, %v2951
    %2956 = vrot.lane.b32.xlu0 %v2015, 112
    %v2957 = vpop.permute.xlu0 %2956
    %2958 = vrot.lane.b32.xlu0 %v2105, 112
    %v2959 = vpop.permute.xlu0 %2958
    %v2960 = vsel %vm217, %v2957, 0
    %v2962 = vsel %vm217, %v2959, 0
    %2964 = vmatprep.subr.mxu0 0.0
    %2965 = vmatpush1.xpose.msra.mxu0 0.0
    %2966 = vmatprep.subr.mxu0 0.0
    %2967 = vmatpush1.xpose.msra.mxu0 0.0
    %2968 = vmatprep.subr.mxu0 0.0
    %2969 = vmatpush1.xpose.msra.mxu0 0.0
    %2970 = vmatprep.subr.mxu0 0.0
    %2971 = vmatpush1.xpose.msra.mxu0 0.0
    %2972 = vmatprep.subr.mxu0 0.0
    %2973 = vmatpush1.xpose.msra.mxu0 0.0
    %2974 = vmatprep.subr.mxu0 0.0
    %2975 = vmatpush1.xpose.msra.mxu0 0.0
    %2976 = vmatprep.subr.mxu0 0.0
    %2977 = vmatpush1.xpose.msra.mxu0 0.0
    %2978 = vmatprep.subr.mxu0 0.0
    %2979 = vmatpush1.xpose.msra.mxu0 0.0
    %2980 = vmatprep.subr.mxu0 0.0
    %2981 = vmatpush1.xpose.msra.mxu0 0.0
    %2982 = vmatprep.subr.mxu0 0.0
    %2983 = vmatpush1.xpose.msra.mxu0 0.0
    %2984 = vmatprep.subr.mxu0 0.0
    %2985 = vmatpush1.xpose.msra.mxu0 0.0
    %2986 = vmatprep.subr.mxu0 0.0
    %2987 = vmatpush1.xpose.msra.mxu0 0.0
    %2988 = vmatprep.subr.mxu0 0.0
    %2989 = vmatpush1.xpose.msra.mxu0 0.0
    %2990 = vmatprep.subr.mxu0 0.0
    %2991 = vmatpush1.xpose.msra.mxu0 0.0
    %2992 = vmatprep.subr.mxu0 0.0
    %2993 = vmatpush1.xpose.msra.mxu0 0.0
    %2994 = vmatprep.subr.mxu0 0.0
    %2995 = vmatpush1.xpose.msra.mxu0 %v2962
    %2996 = vmatprep.subr.mxu0 0.0
    %2997 = vmatpush2.xpose.msra.mxu0 0.0
    %2998 = vmatprep.subr.mxu0 0.0
    %2999 = vmatpush2.xpose.msra.mxu0 0.0
    %3000 = vmatprep.subr.mxu0 0.0
    %3001 = vmatpush2.xpose.msra.mxu0 0.0
    %3002 = vmatprep.subr.mxu0 0.0
    %3003 = vmatpush2.xpose.msra.mxu0 0.0
    %3004 = vmatprep.subr.mxu0 0.0
    %3005 = vmatpush2.xpose.msra.mxu0 0.0
    %3006 = vmatprep.subr.mxu0 0.0
    %3007 = vmatpush2.xpose.msra.mxu0 0.0
    %3008 = vmatprep.subr.mxu0 0.0
    %3009 = vmatpush2.xpose.msra.mxu0 0.0
    %3010 = vmatprep.subr.mxu0 0.0
    %3011 = vmatpush2.xpose.msra.mxu0 0.0
    %3012 = vmatprep.subr.mxu0 0.0
    %3013 = vmatpush2.xpose.msra.mxu0 0.0
    %3014 = vmatprep.subr.mxu0 0.0
    %3015 = vmatpush2.xpose.msra.mxu0 0.0
    %3016 = vmatprep.subr.mxu0 0.0
    %3017 = vmatpush2.xpose.msra.mxu0 0.0
    %3018 = vmatprep.subr.mxu0 0.0
    %3019 = vmatpush2.xpose.msra.mxu0 0.0
    %3020 = vmatprep.subr.mxu0 0.0
    %3021 = vmatpush2.xpose.msra.mxu0 0.0
    %3022 = vmatprep.subr.mxu0 0.0
    %3023 = vmatpush2.xpose.msra.mxu0 0.0
    %3024 = vmatprep.subr.mxu0 0.0
    %3025 = vmatpush2.xpose.msra.mxu0 0.0
    %3026 = vmatprep.subr.mxu0 0.0
    %3027 = vmatpush2.xpose.msra.mxu0 0.0
    %3028 = vmatprep.mubr.f32.mxu0 0.0
    %3029 = vmatmul.mubr.f32.gmra.mxu0 %v2960
    %v3030 = vpop.f32.mrf.mxu0
    %v3031 = vadd.f32 %v2120, %v3030
    %v3032 = vpop.f32.mrf.mxu0
    %3033 = vdwg.mxu0
    %3034 = vrot.lane.b32.xlu0 %v2020, 112
    %v3035 = vpop.permute.xlu0 %3034
    %3036 = vrot.lane.b32.xlu0 %v2110, 112
    %v3037 = vpop.permute.xlu0 %3036
    %v3038 = vsel %vm217, %v3035, 0
    %v3040 = vsel %vm217, %v3037, 0
    %3042 = vmatprep.subr.mxu0 0.0
    %3043 = vmatpush1.xpose.msra.mxu0 0.0
    %3044 = vmatprep.subr.mxu0 0.0
    %3045 = vmatpush1.xpose.msra.mxu0 0.0
    %3046 = vmatprep.subr.mxu0 0.0
    %3047 = vmatpush1.xpose.msra.mxu0 0.0
    %3048 = vmatprep.subr.mxu0 0.0
    %3049 = vmatpush1.xpose.msra.mxu0 0.0
    %3050 = vmatprep.subr.mxu0 0.0
    %3051 = vmatpush1.xpose.msra.mxu0 0.0
    %3052 = vmatprep.subr.mxu0 0.0
    %3053 = vmatpush1.xpose.msra.mxu0 0.0
    %3054 = vmatprep.subr.mxu0 0.0
    %3055 = vmatpush1.xpose.msra.mxu0 0.0
    %3056 = vmatprep.subr.mxu0 0.0
    %3057 = vmatpush1.xpose.msra.mxu0 0.0
    %3058 = vmatprep.subr.mxu0 0.0
    %3059 = vmatpush1.xpose.msra.mxu0 0.0
    %3060 = vmatprep.subr.mxu0 0.0
    %3061 = vmatpush1.xpose.msra.mxu0 0.0
    %3062 = vmatprep.subr.mxu0 0.0
    %3063 = vmatpush1.xpose.msra.mxu0 0.0
    %3064 = vmatprep.subr.mxu0 0.0
    %3065 = vmatpush1.xpose.msra.mxu0 0.0
    %3066 = vmatprep.subr.mxu0 0.0
    %3067 = vmatpush1.xpose.msra.mxu0 0.0
    %3068 = vmatprep.subr.mxu0 0.0
    %3069 = vmatpush1.xpose.msra.mxu0 0.0
    %3070 = vmatprep.subr.mxu0 0.0
    %3071 = vmatpush1.xpose.msra.mxu0 0.0
    %3072 = vmatprep.subr.mxu0 0.0
    %3073 = vmatpush1.xpose.msra.mxu0 %v3040
    %3074 = vmatprep.subr.mxu0 0.0
    %3075 = vmatpush2.xpose.msra.mxu0 0.0
    %3076 = vmatprep.subr.mxu0 0.0
    %3077 = vmatpush2.xpose.msra.mxu0 0.0
    %3078 = vmatprep.subr.mxu0 0.0
    %3079 = vmatpush2.xpose.msra.mxu0 0.0
    %3080 = vmatprep.subr.mxu0 0.0
    %3081 = vmatpush2.xpose.msra.mxu0 0.0
    %3082 = vmatprep.subr.mxu0 0.0
    %3083 = vmatpush2.xpose.msra.mxu0 0.0
    %3084 = vmatprep.subr.mxu0 0.0
    %3085 = vmatpush2.xpose.msra.mxu0 0.0
    %3086 = vmatprep.subr.mxu0 0.0
    %3087 = vmatpush2.xpose.msra.mxu0 0.0
    %3088 = vmatprep.subr.mxu0 0.0
    %3089 = vmatpush2.xpose.msra.mxu0 0.0
    %3090 = vmatprep.subr.mxu0 0.0
    %3091 = vmatpush2.xpose.msra.mxu0 0.0
    %3092 = vmatprep.subr.mxu0 0.0
    %3093 = vmatpush2.xpose.msra.mxu0 0.0
    %3094 = vmatprep.subr.mxu0 0.0
    %3095 = vmatpush2.xpose.msra.mxu0 0.0
    %3096 = vmatprep.subr.mxu0 0.0
    %3097 = vmatpush2.xpose.msra.mxu0 0.0
    %3098 = vmatprep.subr.mxu0 0.0
    %3099 = vmatpush2.xpose.msra.mxu0 0.0
    %3100 = vmatprep.subr.mxu0 0.0
    %3101 = vmatpush2.xpose.msra.mxu0 0.0
    %3102 = vmatprep.subr.mxu0 0.0
    %3103 = vmatpush2.xpose.msra.mxu0 0.0
    %3104 = vmatprep.subr.mxu0 0.0
    %3105 = vmatpush2.xpose.msra.mxu0 0.0
    %3106 = vmatprep.mubr.f32.mxu0 0.0
    %3107 = vmatmul.mubr.f32.gmra.mxu0 %v3038
    %v3108 = vpop.f32.mrf.mxu0
    %v3109 = vadd.f32 %v2200, %v3108
    %v3110 = vpop.f32.mrf.mxu0
    %3111 = vdwg.mxu0
    %v3112 = vsel %vm217, %v3031, -inf
    %3113 = vmax.xlane.f32.xlu0 %v3112
    %v3114 = vpop.xlane.xlu0 %3113
    %v3115 = vsel %vm217, %v3109, -inf
    %3116 = vmax.xlane.f32.xlu0 %v3115
    %v3117 = vpop.xlane.xlu0 %3116
    %v3118 = vsub.f32 %v3031, %v3114
    %v3119 = vsub.f32 %v3109, %v3117
    %v3120 = vmul.f32 %v3118, 1.442695
    %v3121 = vpow.pop %v3120
    %v3122 = vmul.f32 %v3119, 1.442695
    %v3123 = vpow.pop %v3122
    %v3124 = vsel %vm217, %v3121, 0.0
    %3125 = vadd.xlane.f32.xlu0 %v3124
    %v3126 = vpop.xlane.xlu0 %3125
    %v3127 = vsel %vm217, %v3123, 0.0
    %3128 = vadd.xlane.f32.xlu0 %v3127
    %v3129 = vpop.xlane.xlu0 %3128
    %v3130 = vrcp.pop %v3126
    %v3131 = vmul.f32 1.0, %v3130
    %v3132 = vrcp.pop %v3129
    %v3133 = vmul.f32 1.0, %v3132
    %v3134 = vmul.f32 %v3121, %v3131
    %v3135 = vmul.f32 %v3123, %v3133
    %3136 = vrot.lane.b32.xlu0 %v2105, 80
    %v3137 = vpop.permute.xlu0 %3136
    %v3140 = vsel %vm217, %v3134, 0
    %3142 = vmatprep.subr.mxu0 0.0
    %3143 = vmatpush1.msra.mxu0 0.0
    %3144 = vmatprep.subr.mxu0 0.0
    %3145 = vmatpush1.msra.mxu0 0.0
    %3146 = vmatprep.subr.mxu0 0.0
    %3147 = vmatpush1.msra.mxu0 0.0
    %3148 = vmatprep.subr.mxu0 0.0
    %3149 = vmatpush1.msra.mxu0 0.0
    %3150 = vmatprep.subr.mxu0 0.0
    %3151 = vmatpush1.msra.mxu0 0.0
    %3152 = vmatprep.subr.mxu0 0.0
    %3153 = vmatpush1.msra.mxu0 0.0
    %3154 = vmatprep.subr.mxu0 0.0
    %3155 = vmatpush1.msra.mxu0 0.0
    %3156 = vmatprep.subr.mxu0 0.0
    %3157 = vmatpush1.msra.mxu0 0.0
    %3158 = vmatprep.subr.mxu0 0.0
    %3159 = vmatpush1.msra.mxu0 0.0
    %3160 = vmatprep.subr.mxu0 0.0
    %3161 = vmatpush1.msra.mxu0 0.0
    %3162 = vmatprep.subr.mxu0 0.0
    %3163 = vmatpush1.msra.mxu0 0.0
    %3164 = vmatprep.subr.mxu0 0.0
    %3165 = vmatpush1.msra.mxu0 0.0
    %3166 = vmatprep.subr.mxu0 0.0
    %3167 = vmatpush1.msra.mxu0 0.0
    %3168 = vmatprep.subr.mxu0 0.0
    %3169 = vmatpush1.msra.mxu0 0.0
    %3170 = vmatprep.subr.mxu0 0.0
    %3171 = vmatpush1.msra.mxu0 0.0
    %3172 = vmatprep.subr.mxu0 0.0
    %3173 = vmatpush1.msra.mxu0 %v3137
    %3174 = vmatprep.subr.mxu0 0.0
    %3175 = vmatpush2.msra.mxu0 0.0
    %3176 = vmatprep.subr.mxu0 0.0
    %3177 = vmatpush2.msra.mxu0 0.0
    %3178 = vmatprep.subr.mxu0 0.0
    %3179 = vmatpush2.msra.mxu0 0.0
    %3180 = vmatprep.subr.mxu0 0.0
    %3181 = vmatpush2.msra.mxu0 0.0
    %3182 = vmatprep.subr.mxu0 0.0
    %3183 = vmatpush2.msra.mxu0 0.0
    %3184 = vmatprep.subr.mxu0 0.0
    %3185 = vmatpush2.msra.mxu0 0.0
    %3186 = vmatprep.subr.mxu0 0.0
    %3187 = vmatpush2.msra.mxu0 0.0
    %3188 = vmatprep.subr.mxu0 0.0
    %3189 = vmatpush2.msra.mxu0 0.0
    %3190 = vmatprep.subr.mxu0 0.0
    %3191 = vmatpush2.msra.mxu0 0.0
    %3192 = vmatprep.subr.mxu0 0.0
    %3193 = vmatpush2.msra.mxu0 0.0
    %3194 = vmatprep.subr.mxu0 0.0
    %3195 = vmatpush2.msra.mxu0 0.0
    %3196 = vmatprep.subr.mxu0 0.0
    %3197 = vmatpush2.msra.mxu0 0.0
    %3198 = vmatprep.subr.mxu0 0.0
    %3199 = vmatpush2.msra.mxu0 0.0
    %3200 = vmatprep.subr.mxu0 0.0
    %3201 = vmatpush2.msra.mxu0 0.0
    %3202 = vmatprep.subr.mxu0 0.0
    %3203 = vmatpush2.msra.mxu0 0.0
    %3204 = vmatprep.subr.mxu0 0.0
    %3205 = vmatpush2.msra.mxu0 0.0
    %3206 = vmatprep.mubr.f32.mxu0 0.0
    %3207 = vmatmul.mubr.f32.gmra.mxu0 %v3140
    %v3208 = vpop.f32.mrf.mxu0
    %v3209 = vadd.f32 0.0, %v3208
    %v3210 = vpop.f32.mrf.mxu0
    %3211 = vdwg.mxu0
    %3212 = vrot.lane.b32.xlu0 %v2110, 80
    %v3213 = vpop.permute.xlu0 %3212
    %v3216 = vsel %vm217, %v3135, 0
    %3218 = vmatprep.subr.mxu0 0.0
    %3219 = vmatpush1.msra.mxu0 0.0
    %3220 = vmatprep.subr.mxu0 0.0
    %3221 = vmatpush1.msra.mxu0 0.0
    %3222 = vmatprep.subr.mxu0 0.0
    %3223 = vmatpush1.msra.mxu0 0.0
    %3224 = vmatprep.subr.mxu0 0.0
    %3225 = vmatpush1.msra.mxu0 0.0
    %3226 = vmatprep.subr.mxu0 0.0
    %3227 = vmatpush1.msra.mxu0 0.0
    %3228 = vmatprep.subr.mxu0 0.0
    %3229 = vmatpush1.msra.mxu0 0.0
    %3230 = vmatprep.subr.mxu0 0.0
    %3231 = vmatpush1.msra.mxu0 0.0
    %3232 = vmatprep.subr.mxu0 0.0
    %3233 = vmatpush1.msra.mxu0 0.0
    %3234 = vmatprep.subr.mxu0 0.0
    %3235 = vmatpush1.msra.mxu0 0.0
    %3236 = vmatprep.subr.mxu0 0.0
    %3237 = vmatpush1.msra.mxu0 0.0
    %3238 = vmatprep.subr.mxu0 0.0
    %3239 = vmatpush1.msra.mxu0 0.0
    %3240 = vmatprep.subr.mxu0 0.0
    %3241 = vmatpush1.msra.mxu0 0.0
    %3242 = vmatprep.subr.mxu0 0.0
    %3243 = vmatpush1.msra.mxu0 0.0
    %3244 = vmatprep.subr.mxu0 0.0
    %3245 = vmatpush1.msra.mxu0 0.0
    %3246 = vmatprep.subr.mxu0 0.0
    %3247 = vmatpush1.msra.mxu0 0.0
    %3248 = vmatprep.subr.mxu0 0.0
    %3249 = vmatpush1.msra.mxu0 %v3213
    %3250 = vmatprep.subr.mxu0 0.0
    %3251 = vmatpush2.msra.mxu0 0.0
    %3252 = vmatprep.subr.mxu0 0.0
    %3253 = vmatpush2.msra.mxu0 0.0
    %3254 = vmatprep.subr.mxu0 0.0
    %3255 = vmatpush2.msra.mxu0 0.0
    %3256 = vmatprep.subr.mxu0 0.0
    %3257 = vmatpush2.msra.mxu0 0.0
    %3258 = vmatprep.subr.mxu0 0.0
    %3259 = vmatpush2.msra.mxu0 0.0
    %3260 = vmatprep.subr.mxu0 0.0
    %3261 = vmatpush2.msra.mxu0 0.0
    %3262 = vmatprep.subr.mxu0 0.0
    %3263 = vmatpush2.msra.mxu0 0.0
    %3264 = vmatprep.subr.mxu0 0.0
    %3265 = vmatpush2.msra.mxu0 0.0
    %3266 = vmatprep.subr.mxu0 0.0
    %3267 = vmatpush2.msra.mxu0 0.0
    %3268 = vmatprep.subr.mxu0 0.0
    %3269 = vmatpush2.msra.mxu0 0.0
    %3270 = vmatprep.subr.mxu0 0.0
    %3271 = vmatpush2.msra.mxu0 0.0
    %3272 = vmatprep.subr.mxu0 0.0
    %3273 = vmatpush2.msra.mxu0 0.0
    %3274 = vmatprep.subr.mxu0 0.0
    %3275 = vmatpush2.msra.mxu0 0.0
    %3276 = vmatprep.subr.mxu0 0.0
    %3277 = vmatpush2.msra.mxu0 0.0
    %3278 = vmatprep.subr.mxu0 0.0
    %3279 = vmatpush2.msra.mxu0 0.0
    %3280 = vmatprep.subr.mxu0 0.0
    %3281 = vmatpush2.msra.mxu0 0.0
    %3282 = vmatprep.mubr.f32.mxu0 0.0
    %3283 = vmatmul.mubr.f32.gmra.mxu0 %v3216
    %v3284 = vpop.f32.mrf.mxu0
    %v3285 = vadd.f32 0.0, %v3284
    %v3286 = vpop.f32.mrf.mxu0
    %3287 = vdwg.mxu0
    %v3289 = vsel %vm217, %v3209, 0
    %v3292 = vsel %vm217, %v3285, 0
    %3294 = vmatprep.subr.mxu0 0.0
    %3295 = vmatpush1.msra.mxu0 0.0
    %3296 = vmatprep.subr.mxu0 0.0
    %3297 = vmatpush1.msra.mxu0 0.0
    %3298 = vmatprep.subr.mxu0 0.0
    %3299 = vmatpush1.msra.mxu0 0.0
    %3300 = vmatprep.subr.mxu0 0.0
    %3301 = vmatpush1.msra.mxu0 0.0
    %3302 = vmatprep.subr.mxu0 0.0
    %3303 = vmatpush1.msra.mxu0 0.0
    %3304 = vmatprep.subr.mxu0 0.0
    %3305 = vmatpush1.msra.mxu0 0.0
    %3306 = vmatprep.subr.mxu0 0.0
    %3307 = vmatpush1.msra.mxu0 0.0
    %3308 = vmatprep.subr.mxu0 0.0
    %3309 = vmatpush1.msra.mxu0 0.0
    %3310 = vmatprep.subr.mxu0 0.0
    %3311 = vmatpush1.msra.mxu0 0.0
    %3312 = vmatprep.subr.mxu0 0.0
    %3313 = vmatpush1.msra.mxu0 0.0
    %3314 = vmatprep.subr.mxu0 0.0
    %3315 = vmatpush1.msra.mxu0 0.0
    %3316 = vmatprep.subr.mxu0 0.0
    %3317 = vmatpush1.msra.mxu0 0.0
    %3318 = vmatprep.subr.mxu0 0.0
    %3319 = vmatpush1.msra.mxu0 0.0
    %3320 = vmatprep.subr.mxu0 0.0
    %3321 = vmatpush1.msra.mxu0 0.0
    %3322 = vmatprep.subr.mxu0 0.0
    %3323 = vmatpush1.msra.mxu0 0.0
    %3324 = vmatprep.subr.mxu0 0.0
    %3325 = vmatpush1.msra.mxu0 %v2115
    %3326 = vmatprep.subr.mxu0 0.0
    %3327 = vmatpush2.msra.mxu0 0.0
    %3328 = vmatprep.subr.mxu0 0.0
    %3329 = vmatpush2.msra.mxu0 0.0
    %3330 = vmatprep.subr.mxu0 0.0
    %3331 = vmatpush2.msra.mxu0 0.0
    %3332 = vmatprep.subr.mxu0 0.0
    %3333 = vmatpush2.msra.mxu0 0.0
    %3334 = vmatprep.subr.mxu0 0.0
    %3335 = vmatpush2.msra.mxu0 0.0
    %3336 = vmatprep.subr.mxu0 0.0
    %3337 = vmatpush2.msra.mxu0 0.0
    %3338 = vmatprep.subr.mxu0 0.0
    %3339 = vmatpush2.msra.mxu0 0.0
    %3340 = vmatprep.subr.mxu0 0.0
    %3341 = vmatpush2.msra.mxu0 0.0
    %3342 = vmatprep.subr.mxu0 0.0
    %3343 = vmatpush2.msra.mxu0 0.0
    %3344 = vmatprep.subr.mxu0 0.0
    %3345 = vmatpush2.msra.mxu0 0.0
    %3346 = vmatprep.subr.mxu0 0.0
    %3347 = vmatpush2.msra.mxu0 0.0
    %3348 = vmatprep.subr.mxu0 0.0
    %3349 = vmatpush2.msra.mxu0 0.0
    %3350 = vmatprep.subr.mxu0 0.0
    %3351 = vmatpush2.msra.mxu0 0.0
    %3352 = vmatprep.subr.mxu0 0.0
    %3353 = vmatpush2.msra.mxu0 0.0
    %3354 = vmatprep.subr.mxu0 0.0
    %3355 = vmatpush2.msra.mxu0 0.0
    %3356 = vmatprep.subr.mxu0 0.0
    %3357 = vmatpush2.msra.mxu0 0.0
    %3358 = vmatprep.mubr.f32.mxu0 0.0
    %3359 = vmatmul.mubr.f32.gmra.mxu0 %v3289
    %v3360 = vpop.f32.mrf.mxu0
    %v3361 = vadd.f32 0.0, %v3360
    %v3362 = vpop.f32.mrf.mxu0
    %3363 = vmatprep.mubr.f32.mxu0 0.0
    %3364 = vmatmul.mubr.f32.gmra.mxu0 %v3292
    %v3365 = vpop.f32.mrf.mxu0
    %v3366 = vadd.f32 0.0, %v3365
    %v3367 = vpop.f32.mrf.mxu0
    %3368 = vdwg.mxu0
    %v3369 = vadd.f32 %v2954, %v3361
    %v3370 = vadd.f32 %v2955, %v3366
    %3371 = vrot.lane.b32.xlu0 %v2015, 104
    %v3372 = vpop.permute.xlu0 %3371
    %3373 = vrot.lane.b32.xlu0 %v2105, 104
    %v3374 = vpop.permute.xlu0 %3373
    %v3375 = vsel %vm217, %v3372, 0
    %v3377 = vsel %vm217, %v3374, 0
    %3379 = vmatprep.subr.mxu0 0.0
    %3380 = vmatpush1.xpose.msra.mxu0 0.0
    %3381 = vmatprep.subr.mxu0 0.0
    %3382 = vmatpush1.xpose.msra.mxu0 0.0
    %3383 = vmatprep.subr.mxu0 0.0
    %3384 = vmatpush1.xpose.msra.mxu0 0.0
    %3385 = vmatprep.subr.mxu0 0.0
    %3386 = vmatpush1.xpose.msra.mxu0 0.0
    %3387 = vmatprep.subr.mxu0 0.0
    %3388 = vmatpush1.xpose.msra.mxu0 0.0
    %3389 = vmatprep.subr.mxu0 0.0
    %3390 = vmatpush1.xpose.msra.mxu0 0.0
    %3391 = vmatprep.subr.mxu0 0.0
    %3392 = vmatpush1.xpose.msra.mxu0 0.0
    %3393 = vmatprep.subr.mxu0 0.0
    %3394 = vmatpush1.xpose.msra.mxu0 0.0
    %3395 = vmatprep.subr.mxu0 0.0
    %3396 = vmatpush1.xpose.msra.mxu0 0.0
    %3397 = vmatprep.subr.mxu0 0.0
    %3398 = vmatpush1.xpose.msra.mxu0 0.0
    %3399 = vmatprep.subr.mxu0 0.0
    %3400 = vmatpush1.xpose.msra.mxu0 0.0
    %3401 = vmatprep.subr.mxu0 0.0
    %3402 = vmatpush1.xpose.msra.mxu0 0.0
    %3403 = vmatprep.subr.mxu0 0.0
    %3404 = vmatpush1.xpose.msra.mxu0 0.0
    %3405 = vmatprep.subr.mxu0 0.0
    %3406 = vmatpush1.xpose.msra.mxu0 0.0
    %3407 = vmatprep.subr.mxu0 0.0
    %3408 = vmatpush1.xpose.msra.mxu0 0.0
    %3409 = vmatprep.subr.mxu0 0.0
    %3410 = vmatpush1.xpose.msra.mxu0 %v3377
    %3411 = vmatprep.subr.mxu0 0.0
    %3412 = vmatpush2.xpose.msra.mxu0 0.0
    %3413 = vmatprep.subr.mxu0 0.0
    %3414 = vmatpush2.xpose.msra.mxu0 0.0
    %3415 = vmatprep.subr.mxu0 0.0
    %3416 = vmatpush2.xpose.msra.mxu0 0.0
    %3417 = vmatprep.subr.mxu0 0.0
    %3418 = vmatpush2.xpose.msra.mxu0 0.0
    %3419 = vmatprep.subr.mxu0 0.0
    %3420 = vmatpush2.xpose.msra.mxu0 0.0
    %3421 = vmatprep.subr.mxu0 0.0
    %3422 = vmatpush2.xpose.msra.mxu0 0.0
    %3423 = vmatprep.subr.mxu0 0.0
    %3424 = vmatpush2.xpose.msra.mxu0 0.0
    %3425 = vmatprep.subr.mxu0 0.0
    %3426 = vmatpush2.xpose.msra.mxu0 0.0
    %3427 = vmatprep.subr.mxu0 0.0
    %3428 = vmatpush2.xpose.msra.mxu0 0.0
    %3429 = vmatprep.subr.mxu0 0.0
    %3430 = vmatpush2.xpose.msra.mxu0 0.0
    %3431 = vmatprep.subr.mxu0 0.0
    %3432 = vmatpush2.xpose.msra.mxu0 0.0
    %3433 = vmatprep.subr.mxu0 0.0
    %3434 = vmatpush2.xpose.msra.mxu0 0.0
    %3435 = vmatprep.subr.mxu0 0.0
    %3436 = vmatpush2.xpose.msra.mxu0 0.0
    %3437 = vmatprep.subr.mxu0 0.0
    %3438 = vmatpush2.xpose.msra.mxu0 0.0
    %3439 = vmatprep.subr.mxu0 0.0
    %3440 = vmatpush2.xpose.msra.mxu0 0.0
    %3441 = vmatprep.subr.mxu0 0.0
    %3442 = vmatpush2.xpose.msra.mxu0 0.0
    %3443 = vmatprep.mubr.f32.mxu0 0.0
    %3444 = vmatmul.mubr.f32.gmra.mxu0 %v3375
    %v3445 = vpop.f32.mrf.mxu0
    %v3446 = vadd.f32 %v2120, %v3445
    %v3447 = vpop.f32.mrf.mxu0
    %3448 = vdwg.mxu0
    %3449 = vrot.lane.b32.xlu0 %v2020, 104
    %v3450 = vpop.permute.xlu0 %3449
    %3451 = vrot.lane.b32.xlu0 %v2110, 104
    %v3452 = vpop.permute.xlu0 %3451
    %v3453 = vsel %vm217, %v3450, 0
    %v3455 = vsel %vm217, %v3452, 0
    %3457 = vmatprep.subr.mxu0 0.0
    %3458 = vmatpush1.xpose.msra.mxu0 0.0
    %3459 = vmatprep.subr.mxu0 0.0
    %3460 = vmatpush1.xpose.msra.mxu0 0.0
    %3461 = vmatprep.subr.mxu0 0.0
    %3462 = vmatpush1.xpose.msra.mxu0 0.0
    %3463 = vmatprep.subr.mxu0 0.0
    %3464 = vmatpush1.xpose.msra.mxu0 0.0
    %3465 = vmatprep.subr.mxu0 0.0
    %3466 = vmatpush1.xpose.msra.mxu0 0.0
    %3467 = vmatprep.subr.mxu0 0.0
    %3468 = vmatpush1.xpose.msra.mxu0 0.0
    %3469 = vmatprep.subr.mxu0 0.0
    %3470 = vmatpush1.xpose.msra.mxu0 0.0
    %3471 = vmatprep.subr.mxu0 0.0
    %3472 = vmatpush1.xpose.msra.mxu0 0.0
    %3473 = vmatprep.subr.mxu0 0.0
    %3474 = vmatpush1.xpose.msra.mxu0 0.0
    %3475 = vmatprep.subr.mxu0 0.0
    %3476 = vmatpush1.xpose.msra.mxu0 0.0
    %3477 = vmatprep.subr.mxu0 0.0
    %3478 = vmatpush1.xpose.msra.mxu0 0.0
    %3479 = vmatprep.subr.mxu0 0.0
    %3480 = vmatpush1.xpose.msra.mxu0 0.0
    %3481 = vmatprep.subr.mxu0 0.0
    %3482 = vmatpush1.xpose.msra.mxu0 0.0
    %3483 = vmatprep.subr.mxu0 0.0
    %3484 = vmatpush1.xpose.msra.mxu0 0.0
    %3485 = vmatprep.subr.mxu0 0.0
    %3486 = vmatpush1.xpose.msra.mxu0 0.0
    %3487 = vmatprep.subr.mxu0 0.0
    %3488 = vmatpush1.xpose.msra.mxu0 %v3455
    %3489 = vmatprep.subr.mxu0 0.0
    %3490 = vmatpush2.xpose.msra.mxu0 0.0
    %3491 = vmatprep.subr.mxu0 0.0
    %3492 = vmatpush2.xpose.msra.mxu0 0.0
    %3493 = vmatprep.subr.mxu0 0.0
    %3494 = vmatpush2.xpose.msra.mxu0 0.0
    %3495 = vmatprep.subr.mxu0 0.0
    %3496 = vmatpush2.xpose.msra.mxu0 0.0
    %3497 = vmatprep.subr.mxu0 0.0
    %3498 = vmatpush2.xpose.msra.mxu0 0.0
    %3499 = vmatprep.subr.mxu0 0.0
    %3500 = vmatpush2.xpose.msra.mxu0 0.0
    %3501 = vmatprep.subr.mxu0 0.0
    %3502 = vmatpush2.xpose.msra.mxu0 0.0
    %3503 = vmatprep.subr.mxu0 0.0
    %3504 = vmatpush2.xpose.msra.mxu0 0.0
    %3505 = vmatprep.subr.mxu0 0.0
    %3506 = vmatpush2.xpose.msra.mxu0 0.0
    %3507 = vmatprep.subr.mxu0 0.0
    %3508 = vmatpush2.xpose.msra.mxu0 0.0
    %3509 = vmatprep.subr.mxu0 0.0
    %3510 = vmatpush2.xpose.msra.mxu0 0.0
    %3511 = vmatprep.subr.mxu0 0.0
    %3512 = vmatpush2.xpose.msra.mxu0 0.0
    %3513 = vmatprep.subr.mxu0 0.0
    %3514 = vmatpush2.xpose.msra.mxu0 0.0
    %3515 = vmatprep.subr.mxu0 0.0
    %3516 = vmatpush2.xpose.msra.mxu0 0.0
    %3517 = vmatprep.subr.mxu0 0.0
    %3518 = vmatpush2.xpose.msra.mxu0 0.0
    %3519 = vmatprep.subr.mxu0 0.0
    %3520 = vmatpush2.xpose.msra.mxu0 0.0
    %3521 = vmatprep.mubr.f32.mxu0 0.0
    %3522 = vmatmul.mubr.f32.gmra.mxu0 %v3453
    %v3523 = vpop.f32.mrf.mxu0
    %v3524 = vadd.f32 %v2200, %v3523
    %v3525 = vpop.f32.mrf.mxu0
    %3526 = vdwg.mxu0
    %v3527 = vsel %vm217, %v3446, -inf
    %3528 = vmax.xlane.f32.xlu0 %v3527
    %v3529 = vpop.xlane.xlu0 %3528
    %v3530 = vsel %vm217, %v3524, -inf
    %3531 = vmax.xlane.f32.xlu0 %v3530
    %v3532 = vpop.xlane.xlu0 %3531
    %v3533 = vsub.f32 %v3446, %v3529
    %v3534 = vsub.f32 %v3524, %v3532
    %v3535 = vmul.f32 %v3533, 1.442695
    %v3536 = vpow.pop %v3535
    %v3537 = vmul.f32 %v3534, 1.442695
    %v3538 = vpow.pop %v3537
    %v3539 = vsel %vm217, %v3536, 0.0
    %3540 = vadd.xlane.f32.xlu0 %v3539
    %v3541 = vpop.xlane.xlu0 %3540
    %v3542 = vsel %vm217, %v3538, 0.0
    %3543 = vadd.xlane.f32.xlu0 %v3542
    %v3544 = vpop.xlane.xlu0 %3543
    %v3545 = vrcp.pop %v3541
    %v3546 = vmul.f32 1.0, %v3545
    %v3547 = vrcp.pop %v3544
    %v3548 = vmul.f32 1.0, %v3547
    %v3549 = vmul.f32 %v3536, %v3546
    %v3550 = vmul.f32 %v3538, %v3548
    %3551 = vrot.lane.b32.xlu0 %v2105, 72
    %v3552 = vpop.permute.xlu0 %3551
    %v3555 = vsel %vm217, %v3549, 0
    %3557 = vmatprep.subr.mxu0 0.0
    %3558 = vmatpush1.msra.mxu0 0.0
    %3559 = vmatprep.subr.mxu0 0.0
    %3560 = vmatpush1.msra.mxu0 0.0
    %3561 = vmatprep.subr.mxu0 0.0
    %3562 = vmatpush1.msra.mxu0 0.0
    %3563 = vmatprep.subr.mxu0 0.0
    %3564 = vmatpush1.msra.mxu0 0.0
    %3565 = vmatprep.subr.mxu0 0.0
    %3566 = vmatpush1.msra.mxu0 0.0
    %3567 = vmatprep.subr.mxu0 0.0
    %3568 = vmatpush1.msra.mxu0 0.0
    %3569 = vmatprep.subr.mxu0 0.0
    %3570 = vmatpush1.msra.mxu0 0.0
    %3571 = vmatprep.subr.mxu0 0.0
    %3572 = vmatpush1.msra.mxu0 0.0
    %3573 = vmatprep.subr.mxu0 0.0
    %3574 = vmatpush1.msra.mxu0 0.0
    %3575 = vmatprep.subr.mxu0 0.0
    %3576 = vmatpush1.msra.mxu0 0.0
    %3577 = vmatprep.subr.mxu0 0.0
    %3578 = vmatpush1.msra.mxu0 0.0
    %3579 = vmatprep.subr.mxu0 0.0
    %3580 = vmatpush1.msra.mxu0 0.0
    %3581 = vmatprep.subr.mxu0 0.0
    %3582 = vmatpush1.msra.mxu0 0.0
    %3583 = vmatprep.subr.mxu0 0.0
    %3584 = vmatpush1.msra.mxu0 0.0
    %3585 = vmatprep.subr.mxu0 0.0
    %3586 = vmatpush1.msra.mxu0 0.0
    %3587 = vmatprep.subr.mxu0 0.0
    %3588 = vmatpush1.msra.mxu0 %v3552
    %3589 = vmatprep.subr.mxu0 0.0
    %3590 = vmatpush2.msra.mxu0 0.0
    %3591 = vmatprep.subr.mxu0 0.0
    %3592 = vmatpush2.msra.mxu0 0.0
    %3593 = vmatprep.subr.mxu0 0.0
    %3594 = vmatpush2.msra.mxu0 0.0
    %3595 = vmatprep.subr.mxu0 0.0
    %3596 = vmatpush2.msra.mxu0 0.0
    %3597 = vmatprep.subr.mxu0 0.0
    %3598 = vmatpush2.msra.mxu0 0.0
    %3599 = vmatprep.subr.mxu0 0.0
    %3600 = vmatpush2.msra.mxu0 0.0
    %3601 = vmatprep.subr.mxu0 0.0
    %3602 = vmatpush2.msra.mxu0 0.0
    %3603 = vmatprep.subr.mxu0 0.0
    %3604 = vmatpush2.msra.mxu0 0.0
    %3605 = vmatprep.subr.mxu0 0.0
    %3606 = vmatpush2.msra.mxu0 0.0
    %3607 = vmatprep.subr.mxu0 0.0
    %3608 = vmatpush2.msra.mxu0 0.0
    %3609 = vmatprep.subr.mxu0 0.0
    %3610 = vmatpush2.msra.mxu0 0.0
    %3611 = vmatprep.subr.mxu0 0.0
    %3612 = vmatpush2.msra.mxu0 0.0
    %3613 = vmatprep.subr.mxu0 0.0
    %3614 = vmatpush2.msra.mxu0 0.0
    %3615 = vmatprep.subr.mxu0 0.0
    %3616 = vmatpush2.msra.mxu0 0.0
    %3617 = vmatprep.subr.mxu0 0.0
    %3618 = vmatpush2.msra.mxu0 0.0
    %3619 = vmatprep.subr.mxu0 0.0
    %3620 = vmatpush2.msra.mxu0 0.0
    %3621 = vmatprep.mubr.f32.mxu0 0.0
    %3622 = vmatmul.mubr.f32.gmra.mxu0 %v3555
    %v3623 = vpop.f32.mrf.mxu0
    %v3624 = vadd.f32 0.0, %v3623
    %v3625 = vpop.f32.mrf.mxu0
    %3626 = vdwg.mxu0
    %3627 = vrot.lane.b32.xlu0 %v2110, 72
    %v3628 = vpop.permute.xlu0 %3627
    %v3631 = vsel %vm217, %v3550, 0
    %3633 = vmatprep.subr.mxu0 0.0
    %3634 = vmatpush1.msra.mxu0 0.0
    %3635 = vmatprep.subr.mxu0 0.0
    %3636 = vmatpush1.msra.mxu0 0.0
    %3637 = vmatprep.subr.mxu0 0.0
    %3638 = vmatpush1.msra.mxu0 0.0
    %3639 = vmatprep.subr.mxu0 0.0
    %3640 = vmatpush1.msra.mxu0 0.0
    %3641 = vmatprep.subr.mxu0 0.0
    %3642 = vmatpush1.msra.mxu0 0.0
    %3643 = vmatprep.subr.mxu0 0.0
    %3644 = vmatpush1.msra.mxu0 0.0
    %3645 = vmatprep.subr.mxu0 0.0
    %3646 = vmatpush1.msra.mxu0 0.0
    %3647 = vmatprep.subr.mxu0 0.0
    %3648 = vmatpush1.msra.mxu0 0.0
    %3649 = vmatprep.subr.mxu0 0.0
    %3650 = vmatpush1.msra.mxu0 0.0
    %3651 = vmatprep.subr.mxu0 0.0
    %3652 = vmatpush1.msra.mxu0 0.0
    %3653 = vmatprep.subr.mxu0 0.0
    %3654 = vmatpush1.msra.mxu0 0.0
    %3655 = vmatprep.subr.mxu0 0.0
    %3656 = vmatpush1.msra.mxu0 0.0
    %3657 = vmatprep.subr.mxu0 0.0
    %3658 = vmatpush1.msra.mxu0 0.0
    %3659 = vmatprep.subr.mxu0 0.0
    %3660 = vmatpush1.msra.mxu0 0.0
    %3661 = vmatprep.subr.mxu0 0.0
    %3662 = vmatpush1.msra.mxu0 0.0
    %3663 = vmatprep.subr.mxu0 0.0
    %3664 = vmatpush1.msra.mxu0 %v3628
    %3665 = vmatprep.subr.mxu0 0.0
    %3666 = vmatpush2.msra.mxu0 0.0
    %3667 = vmatprep.subr.mxu0 0.0
    %3668 = vmatpush2.msra.mxu0 0.0
    %3669 = vmatprep.subr.mxu0 0.0
    %3670 = vmatpush2.msra.mxu0 0.0
    %3671 = vmatprep.subr.mxu0 0.0
    %3672 = vmatpush2.msra.mxu0 0.0
    %3673 = vmatprep.subr.mxu0 0.0
    %3674 = vmatpush2.msra.mxu0 0.0
    %3675 = vmatprep.subr.mxu0 0.0
    %3676 = vmatpush2.msra.mxu0 0.0
    %3677 = vmatprep.subr.mxu0 0.0
    %3678 = vmatpush2.msra.mxu0 0.0
    %3679 = vmatprep.subr.mxu0 0.0
    %3680 = vmatpush2.msra.mxu0 0.0
    %3681 = vmatprep.subr.mxu0 0.0
    %3682 = vmatpush2.msra.mxu0 0.0
    %3683 = vmatprep.subr.mxu0 0.0
    %3684 = vmatpush2.msra.mxu0 0.0
    %3685 = vmatprep.subr.mxu0 0.0
    %3686 = vmatpush2.msra.mxu0 0.0
    %3687 = vmatprep.subr.mxu0 0.0
    %3688 = vmatpush2.msra.mxu0 0.0
    %3689 = vmatprep.subr.mxu0 0.0
    %3690 = vmatpush2.msra.mxu0 0.0
    %3691 = vmatprep.subr.mxu0 0.0
    %3692 = vmatpush2.msra.mxu0 0.0
    %3693 = vmatprep.subr.mxu0 0.0
    %3694 = vmatpush2.msra.mxu0 0.0
    %3695 = vmatprep.subr.mxu0 0.0
    %3696 = vmatpush2.msra.mxu0 0.0
    %3697 = vmatprep.mubr.f32.mxu0 0.0
    %3698 = vmatmul.mubr.f32.gmra.mxu0 %v3631
    %v3699 = vpop.f32.mrf.mxu0
    %v3700 = vadd.f32 0.0, %v3699
    %v3701 = vpop.f32.mrf.mxu0
    %3702 = vdwg.mxu0
    %v3704 = vsel %vm217, %v3624, 0
    %v3707 = vsel %vm217, %v3700, 0
    %3709 = vmatprep.subr.mxu0 0.0
    %3710 = vmatpush1.msra.mxu0 0.0
    %3711 = vmatprep.subr.mxu0 0.0
    %3712 = vmatpush1.msra.mxu0 0.0
    %3713 = vmatprep.subr.mxu0 0.0
    %3714 = vmatpush1.msra.mxu0 0.0
    %3715 = vmatprep.subr.mxu0 0.0
    %3716 = vmatpush1.msra.mxu0 0.0
    %3717 = vmatprep.subr.mxu0 0.0
    %3718 = vmatpush1.msra.mxu0 0.0
    %3719 = vmatprep.subr.mxu0 0.0
    %3720 = vmatpush1.msra.mxu0 0.0
    %3721 = vmatprep.subr.mxu0 0.0
    %3722 = vmatpush1.msra.mxu0 0.0
    %3723 = vmatprep.subr.mxu0 0.0
    %3724 = vmatpush1.msra.mxu0 0.0
    %3725 = vmatprep.subr.mxu0 0.0
    %3726 = vmatpush1.msra.mxu0 0.0
    %3727 = vmatprep.subr.mxu0 0.0
    %3728 = vmatpush1.msra.mxu0 0.0
    %3729 = vmatprep.subr.mxu0 0.0
    %3730 = vmatpush1.msra.mxu0 0.0
    %3731 = vmatprep.subr.mxu0 0.0
    %3732 = vmatpush1.msra.mxu0 0.0
    %3733 = vmatprep.subr.mxu0 0.0
    %3734 = vmatpush1.msra.mxu0 0.0
    %3735 = vmatprep.subr.mxu0 0.0
    %3736 = vmatpush1.msra.mxu0 0.0
    %3737 = vmatprep.subr.mxu0 0.0
    %3738 = vmatpush1.msra.mxu0 0.0
    %3739 = vmatprep.subr.mxu0 0.0
    %3740 = vmatpush1.msra.mxu0 %v2116
    %3741 = vmatprep.subr.mxu0 0.0
    %3742 = vmatpush2.msra.mxu0 0.0
    %3743 = vmatprep.subr.mxu0 0.0
    %3744 = vmatpush2.msra.mxu0 0.0
    %3745 = vmatprep.subr.mxu0 0.0
    %3746 = vmatpush2.msra.mxu0 0.0
    %3747 = vmatprep.subr.mxu0 0.0
    %3748 = vmatpush2.msra.mxu0 0.0
    %3749 = vmatprep.subr.mxu0 0.0
    %3750 = vmatpush2.msra.mxu0 0.0
    %3751 = vmatprep.subr.mxu0 0.0
    %3752 = vmatpush2.msra.mxu0 0.0
    %3753 = vmatprep.subr.mxu0 0.0
    %3754 = vmatpush2.msra.mxu0 0.0
    %3755 = vmatprep.subr.mxu0 0.0
    %3756 = vmatpush2.msra.mxu0 0.0
    %3757 = vmatprep.subr.mxu0 0.0
    %3758 = vmatpush2.msra.mxu0 0.0
    %3759 = vmatprep.subr.mxu0 0.0
    %3760 = vmatpush2.msra.mxu0 0.0
    %3761 = vmatprep.subr.mxu0 0.0
    %3762 = vmatpush2.msra.mxu0 0.0
    %3763 = vmatprep.subr.mxu0 0.0
    %3764 = vmatpush2.msra.mxu0 0.0
    %3765 = vmatprep.subr.mxu0 0.0
    %3766 = vmatpush2.msra.mxu0 0.0
    %3767 = vmatprep.subr.mxu0 0.0
    %3768 = vmatpush2.msra.mxu0 0.0
    %3769 = vmatprep.subr.mxu0 0.0
    %3770 = vmatpush2.msra.mxu0 0.0
    %3771 = vmatprep.subr.mxu0 0.0
    %3772 = vmatpush2.msra.mxu0 0.0
    %3773 = vmatprep.mubr.f32.mxu0 0.0
    %3774 = vmatmul.mubr.f32.gmra.mxu0 %v3704
    %v3775 = vpop.f32.mrf.mxu0
    %v3776 = vadd.f32 0.0, %v3775
    %v3777 = vpop.f32.mrf.mxu0
    %3778 = vmatprep.mubr.f32.mxu0 0.0
    %3779 = vmatmul.mubr.f32.gmra.mxu0 %v3707
    %v3780 = vpop.f32.mrf.mxu0
    %v3781 = vadd.f32 0.0, %v3780
    %v3782 = vpop.f32.mrf.mxu0
    %3783 = vdwg.mxu0
    %v3784 = vadd.f32 %v3369, %v3776
    %v3785 = vadd.f32 %v3370, %v3781
    %v3786 = vadd.f32 %v1877, %v3784
    %v3787 = vadd.f32 %v1878, %v3785
    %v3788 = vsel %vm64, %v3786, 0.0
    %3789 = vadd.xlane.f32.xlu0 %v3788
    %v3790 = vpop.xlane.xlu0 %3789
    %v3791 = vsel %vm64, %v3787, 0.0
    %3792 = vadd.xlane.f32.xlu0 %v3791
    %v3793 = vpop.xlane.xlu0 %3792
    %v3794 = vmul.f32 %v3790, 0.03125
    %v3795 = vmul.f32 %v3793, 0.03125
    %v3796 = vsub.f32 %v3786, %v3794
    %v3797 = vsub.f32 %v3787, %v3795
    %v3798 = vmul.f32 %v3796, %v3796
    %v3799 = vmul.f32 %v3797, %v3797
    %v3800 = vsel %vm64, %v3798, 0.0
    %3801 = vadd.xlane.f32.xlu0 %v3800
    %v3802 = vpop.xlane.xlu0 %3801
    %v3803 = vsel %vm64, %v3799, 0.0
    %3804 = vadd.xlane.f32.xlu0 %v3803
    %v3805 = vpop.xlane.xlu0 %3804
    %v3806 = vmul.f32 %v3802, 0.032258064
    %v3807 = vmul.f32 %v3805, 0.032258064
    %v3808 = vrsqrt.pop %v3806
    %v3809 = vmul.f32 %v3806, %v3808
    %vm3810 = vcmp.eq.f32.partialorder %v3806, inf
    %v3811 = vsel %vm3810, %v3806, %v3809
    %vm3812 = vcmp.eq.f32.partialorder %v3806, 0.0
    %v3813 = vand.u32 %v3806, 2147483648
    %v3814 = vsel %vm3812, %v3813, %v3811
    %v3815 = vrsqrt.pop %v3807
    %v3816 = vmul.f32 %v3807, %v3815
    %vm3817 = vcmp.eq.f32.partialorder %v3807, inf
    %v3818 = vsel %vm3817, %v3807, %v3816
    %vm3819 = vcmp.eq.f32.partialorder %v3807, 0.0
    %v3820 = vand.u32 %v3807, 2147483648
    %v3821 = vsel %vm3819, %v3820, %v3818
    %v3822 = vadd.f32 %v3814, 1e-16
    %v3823 = vadd.f32 %v3821, 1e-16
    %v3824 = vrcp.pop %v3822
    %v3825 = vmul.f32 1.0, %v3824
    %v3826 = vrcp.pop %v3823
    %v3827 = vmul.f32 1.0, %v3826
    %v3828 = vmul.f32 %v3796, %v3825
    %v3829 = vmul.f32 %v3797, %v3827
    %v3830 = vlaneseq
    %v3831 = vshrl.u32 %v3830, 7
    %v3832 = vsub.s32 2, %v3831
    %v3833 = vrot.slane %v62, %v3832
    %v3834 = vmul.f32 %v3833, %v3828
    %v3835 = vmul.f32 %v3833, %v3829
    %v3836 = vlaneseq
    %v3837 = vshrl.u32 %v3836, 7
    %v3838 = vsub.s32 2, %v3837
    %v3839 = vrot.slane %v63, %v3838
    %v3840 = vadd.f32 %v3834, %v3839
    %v3841 = vadd.f32 %v3835, %v3839
    %v3842 = vld [vmem:[#allocation7 + $0xd8] sm:$0xff]
    %v3843 = vld [vmem:[#allocation7 + $0xe0] sm:$0xff]
    %v3844 = vld [vmem:[#allocation7 + $0xe8] sm:$0xff]
    %v3845 = vld [vmem:[#allocation7 + $0xf0] sm:$0xff]
    %v3846 = vld [vmem:[#allocation7 + $0xf8] sm:$0x1]
    %v3847 = vlaneseq
    %v3848 = vshrl.u32 %v3847, 7
    %v3849 = vsub.s32 0, %v3848
    %v3850 = vrot.slane %v3846, %v3849
    %v3852 = vsel %vm64, %v3840, 0
    %v3855 = vsel %vm64, %v3841, 0
    %3857 = vmatprep.subr.mxu0 0.0
    %3858 = vmatpush1.msra.mxu0 0.0
    %3859 = vmatprep.subr.mxu0 0.0
    %3860 = vmatpush1.msra.mxu0 0.0
    %3861 = vmatprep.subr.mxu0 0.0
    %3862 = vmatpush1.msra.mxu0 0.0
    %3863 = vmatprep.subr.mxu0 0.0
    %3864 = vmatpush1.msra.mxu0 0.0
    %3865 = vmatprep.subr.mxu0 0.0
    %3866 = vmatpush1.msra.mxu0 0.0
    %3867 = vmatprep.subr.mxu0 0.0
    %3868 = vmatpush1.msra.mxu0 0.0
    %3869 = vmatprep.subr.mxu0 0.0
    %3870 = vmatpush1.msra.mxu0 0.0
    %3871 = vmatprep.subr.mxu0 0.0
    %3872 = vmatpush1.msra.mxu0 0.0
    %3873 = vmatprep.subr.mxu0 0.0
    %3874 = vmatpush1.msra.mxu0 0.0
    %3875 = vmatprep.subr.mxu0 0.0
    %3876 = vmatpush1.msra.mxu0 0.0
    %3877 = vmatprep.subr.mxu0 0.0
    %3878 = vmatpush1.msra.mxu0 0.0
    %3879 = vmatprep.subr.mxu0 0.0
    %3880 = vmatpush1.msra.mxu0 0.0
    %3881 = vmatprep.subr.mxu0 0.0
    %3882 = vmatpush1.msra.mxu0 %v3845
    %3883 = vmatprep.subr.mxu0 0.0
    %3884 = vmatpush1.msra.mxu0 %v3844
    %3885 = vmatprep.subr.mxu0 0.0
    %3886 = vmatpush1.msra.mxu0 %v3843
    %3887 = vmatprep.subr.mxu0 0.0
    %3888 = vmatpush1.msra.mxu0 %v3842
    %3889 = vmatprep.subr.mxu0 0.0
    %3890 = vmatpush2.msra.mxu0 0.0
    %3891 = vmatprep.subr.mxu0 0.0
    %3892 = vmatpush2.msra.mxu0 0.0
    %3893 = vmatprep.subr.mxu0 0.0
    %3894 = vmatpush2.msra.mxu0 0.0
    %3895 = vmatprep.subr.mxu0 0.0
    %3896 = vmatpush2.msra.mxu0 0.0
    %3897 = vmatprep.subr.mxu0 0.0
    %3898 = vmatpush2.msra.mxu0 0.0
    %3899 = vmatprep.subr.mxu0 0.0
    %3900 = vmatpush2.msra.mxu0 0.0
    %3901 = vmatprep.subr.mxu0 0.0
    %3902 = vmatpush2.msra.mxu0 0.0
    %3903 = vmatprep.subr.mxu0 0.0
    %3904 = vmatpush2.msra.mxu0 0.0
    %3905 = vmatprep.subr.mxu0 0.0
    %3906 = vmatpush2.msra.mxu0 0.0
    %3907 = vmatprep.subr.mxu0 0.0
    %3908 = vmatpush2.msra.mxu0 0.0
    %3909 = vmatprep.subr.mxu0 0.0
    %3910 = vmatpush2.msra.mxu0 0.0
    %3911 = vmatprep.subr.mxu0 0.0
    %3912 = vmatpush2.msra.mxu0 0.0
    %3913 = vmatprep.subr.mxu0 0.0
    %3914 = vmatpush2.msra.mxu0 0.0
    %3915 = vmatprep.subr.mxu0 0.0
    %3916 = vmatpush2.msra.mxu0 0.0
    %3917 = vmatprep.subr.mxu0 0.0
    %3918 = vmatpush2.msra.mxu0 0.0
    %3919 = vmatprep.subr.mxu0 0.0
    %3920 = vmatpush2.msra.mxu0 0.0
    %3921 = vmatprep.mubr.f32.mxu0 0.0
    %3922 = vmatmul.mubr.f32.gmra.mxu0 %v3852
    %v3923 = vpop.f32.mrf.mxu0
    %v3924 = vadd.f32 %v3850, %v3923
    %v3925 = vpop.f32.mrf.mxu0
    %3926 = vmatprep.mubr.f32.mxu0 0.0
    %3927 = vmatmul.mubr.f32.gmra.mxu0 %v3855
    %v3928 = vpop.f32.mrf.mxu0
    %v3929 = vadd.f32 %v3850, %v3928
    %v3930 = vpop.f32.mrf.mxu0
    %3931 = vdwg.mxu0
    %v3932 = vmax.f32 %v3924, 0.0
    %v3933 = vmax.f32 %v3929, 0.0
    %v3934 = vld [vmem:[#allocation7 + $0x100] sm:$0xff]
    %v3935 = vld [vmem:[#allocation7 + $0x108] sm:$0xff]
    %v3936 = vld [vmem:[#allocation7 + $0x110] sm:$0xff]
    %v3937 = vld [vmem:[#allocation7 + $0x118] sm:$0xff]
    %v3938 = vld [vmem:[#allocation7 + $0x120] sm:$0xff]
    %v3939 = vld [vmem:[#allocation7 + $0x128] sm:$0xff]
    %v3940 = vld [vmem:[#allocation7 + $0x130] sm:$0xff]
    %v3941 = vld [vmem:[#allocation7 + $0x138] sm:$0xff]
    %vm3942 = vcmask 523264
    %v3944 = vsel %vm3942, %v3932, 0
    %v3947 = vsel %vm3942, %v3933, 0
    %3949 = vmatprep.subr.mxu0 0.0
    %3950 = vmatpush1.msra.mxu0 0.0
    %3951 = vmatprep.subr.mxu0 0.0
    %3952 = vmatpush1.msra.mxu0 0.0
    %3953 = vmatprep.subr.mxu0 0.0
    %3954 = vmatpush1.msra.mxu0 0.0
    %3955 = vmatprep.subr.mxu0 0.0
    %3956 = vmatpush1.msra.mxu0 0.0
    %3957 = vmatprep.subr.mxu0 0.0
    %3958 = vmatpush1.msra.mxu0 0.0
    %3959 = vmatprep.subr.mxu0 0.0
    %3960 = vmatpush1.msra.mxu0 0.0
    %3961 = vmatprep.subr.mxu0 0.0
    %3962 = vmatpush1.msra.mxu0 0.0
    %3963 = vmatprep.subr.mxu0 0.0
    %3964 = vmatpush1.msra.mxu0 0.0
    %3965 = vmatprep.subr.mxu0 0.0
    %3966 = vmatpush1.msra.mxu0 %v3941
    %3967 = vmatprep.subr.mxu0 0.0
    %3968 = vmatpush1.msra.mxu0 %v3940
    %3969 = vmatprep.subr.mxu0 0.0
    %3970 = vmatpush1.msra.mxu0 %v3939
    %3971 = vmatprep.subr.mxu0 0.0
    %3972 = vmatpush1.msra.mxu0 %v3938
    %3973 = vmatprep.subr.mxu0 0.0
    %3974 = vmatpush1.msra.mxu0 %v3937
    %3975 = vmatprep.subr.mxu0 0.0
    %3976 = vmatpush1.msra.mxu0 %v3936
    %3977 = vmatprep.subr.mxu0 0.0
    %3978 = vmatpush1.msra.mxu0 %v3935
    %3979 = vmatprep.subr.mxu0 0.0
    %3980 = vmatpush1.msra.mxu0 %v3934
    %3981 = vmatprep.subr.mxu0 0.0
    %3982 = vmatpush2.msra.mxu0 0.0
    %3983 = vmatprep.subr.mxu0 0.0
    %3984 = vmatpush2.msra.mxu0 0.0
    %3985 = vmatprep.subr.mxu0 0.0
    %3986 = vmatpush2.msra.mxu0 0.0
    %3987 = vmatprep.subr.mxu0 0.0
    %3988 = vmatpush2.msra.mxu0 0.0
    %3989 = vmatprep.subr.mxu0 0.0
    %3990 = vmatpush2.msra.mxu0 0.0
    %3991 = vmatprep.subr.mxu0 0.0
    %3992 = vmatpush2.msra.mxu0 0.0
    %3993 = vmatprep.subr.mxu0 0.0
    %3994 = vmatpush2.msra.mxu0 0.0
    %3995 = vmatprep.subr.mxu0 0.0
    %3996 = vmatpush2.msra.mxu0 0.0
    %3997 = vmatprep.subr.mxu0 0.0
    %3998 = vmatpush2.msra.mxu0 0.0
    %3999 = vmatprep.subr.mxu0 0.0
    %4000 = vmatpush2.msra.mxu0 0.0
    %4001 = vmatprep.subr.mxu0 0.0
    %4002 = vmatpush2.msra.mxu0 0.0
    %4003 = vmatprep.subr.mxu0 0.0
    %4004 = vmatpush2.msra.mxu0 0.0
    %4005 = vmatprep.subr.mxu0 0.0
    %4006 = vmatpush2.msra.mxu0 0.0
    %4007 = vmatprep.subr.mxu0 0.0
    %4008 = vmatpush2.msra.mxu0 0.0
    %4009 = vmatprep.subr.mxu0 0.0
    %4010 = vmatpush2.msra.mxu0 0.0
    %4011 = vmatprep.subr.mxu0 0.0
    %4012 = vmatpush2.msra.mxu0 0.0
    %4013 = vmatprep.mubr.f32.mxu0 0.0
    %4014 = vmatmul.mubr.f32.gmra.mxu0 %v3944
    %v4015 = vpop.f32.mrf.mxu0
    %v4016 = vadd.f32 0.0, %v4015
    %v4017 = vpop.f32.mrf.mxu0
    %4018 = vmatprep.mubr.f32.mxu0 0.0
    %4019 = vmatmul.mubr.f32.gmra.mxu0 %v3947
    %v4020 = vpop.f32.mrf.mxu0
    %v4021 = vadd.f32 0.0, %v4020
    %v4022 = vpop.f32.mrf.mxu0
    %4023 = vdwg.mxu0
    %v4024 = vadd.f32 %v3786, %v4016
    %v4025 = vadd.f32 %v3787, %v4021
    %v4026 = vld [vmem:[#allocation7 + $0x140] sm:$0x1]
    %v4027 = vlaneseq
    %v4028 = vshrl.u32 %v4027, 7
    %v4029 = vsub.s32 0, %v4028
    %v4030 = vrot.slane %v4026, %v4029
    %v4031 = vadd.f32 %v4024, %v4030
    %v4032 = vadd.f32 %v4025, %v4030
    %v4033 = vld [vmem:[#allocation7 + $0x148] sm:$0x7]
    %v4034 = vld [vmem:[#allocation7 + $0x150] sm:$0x7]
    %v4035 = vsel %vm64, %v4031, 0.0
    %4036 = vadd.xlane.f32.xlu0 %v4035
    %v4037 = vpop.xlane.xlu0 %4036
    %v4038 = vsel %vm64, %v4032, 0.0
    %4039 = vadd.xlane.f32.xlu0 %v4038
    %v4040 = vpop.xlane.xlu0 %4039
    %v4041 = vmul.f32 %v4037, 0.03125
    %v4042 = vmul.f32 %v4040, 0.03125
    %v4043 = vsub.f32 %v4031, %v4041
    %v4044 = vsub.f32 %v4032, %v4042
    %v4045 = vmul.f32 %v4043, %v4043
    %v4046 = vmul.f32 %v4044, %v4044
    %v4047 = vsel %vm64, %v4045, 0.0
    %4048 = vadd.xlane.f32.xlu0 %v4047
    %v4049 = vpop.xlane.xlu0 %4048
    %v4050 = vsel %vm64, %v4046, 0.0
    %4051 = vadd.xlane.f32.xlu0 %v4050
    %v4052 = vpop.xlane.xlu0 %4051
    %v4053 = vmul.f32 %v4049, 0.032258064
    %v4054 = vmul.f32 %v4052, 0.032258064
    %v4055 = vrsqrt.pop %v4053
    %v4056 = vmul.f32 %v4053, %v4055
    %vm4057 = vcmp.eq.f32.partialorder %v4053, inf
    %v4058 = vsel %vm4057, %v4053, %v4056
    %vm4059 = vcmp.eq.f32.partialorder %v4053, 0.0
    %v4060 = vand.u32 %v4053, 2147483648
    %v4061 = vsel %vm4059, %v4060, %v4058
    %v4062 = vrsqrt.pop %v4054
    %v4063 = vmul.f32 %v4054, %v4062
    %vm4064 = vcmp.eq.f32.partialorder %v4054, inf
    %v4065 = vsel %vm4064, %v4054, %v4063
    %vm4066 = vcmp.eq.f32.partialorder %v4054, 0.0
    %v4067 = vand.u32 %v4054, 2147483648
    %v4068 = vsel %vm4066, %v4067, %v4065
    %v4069 = vadd.f32 %v4061, 1e-16
    %v4070 = vadd.f32 %v4068, 1e-16
    %v4071 = vrcp.pop %v4069
    %v4072 = vmul.f32 1.0, %v4071
    %v4073 = vrcp.pop %v4070
    %v4074 = vmul.f32 1.0, %v4073
    %v4075 = vmul.f32 %v4043, %v4072
    %v4076 = vmul.f32 %v4044, %v4074
    %v4077 = vlaneseq
    %v4078 = vshrl.u32 %v4077, 7
    %v4079 = vsub.s32 0, %v4078
    %v4080 = vrot.slane %v4033, %v4079
    %v4081 = vmul.f32 %v4080, %v4075
    %v4082 = vmul.f32 %v4080, %v4076
    %v4083 = vlaneseq
    %v4084 = vshrl.u32 %v4083, 7
    %v4085 = vsub.s32 0, %v4084
    %v4086 = vrot.slane %v4034, %v4085
    %v4087 = vadd.f32 %v4081, %v4086
    %v4088 = vadd.f32 %v4082, %v4086
    %v4089 = vld [vmem:[#allocation7 + $0x158] sm:$0xff]
    %v4090 = vld [vmem:[#allocation7 + $0x160] sm:$0xff]
    %v4091 = vld [vmem:[#allocation7 + $0x168] sm:$0xff]
    %v4092 = vld [vmem:[#allocation7 + $0x170] sm:$0xff]
    %v4093 = vld [vmem:[#allocation7 + $0x178] sm:$0x1]
    %v4094 = vlaneseq
    %v4095 = vshrl.u32 %v4094, 7
    %v4096 = vsub.s32 0, %v4095
    %v4097 = vrot.slane %v4093, %v4096
    %v4099 = vsel %vm64, %v4087, 0
    %v4102 = vsel %vm64, %v4088, 0
    %4104 = vmatprep.subr.mxu0 0.0
    %4105 = vmatpush1.msra.mxu0 0.0
    %4106 = vmatprep.subr.mxu0 0.0
    %4107 = vmatpush1.msra.mxu0 0.0
    %4108 = vmatprep.subr.mxu0 0.0
    %4109 = vmatpush1.msra.mxu0 0.0
    %4110 = vmatprep.subr.mxu0 0.0
    %4111 = vmatpush1.msra.mxu0 0.0
    %4112 = vmatprep.subr.mxu0 0.0
    %4113 = vmatpush1.msra.mxu0 0.0
    %4114 = vmatprep.subr.mxu0 0.0
    %4115 = vmatpush1.msra.mxu0 0.0
    %4116 = vmatprep.subr.mxu0 0.0
    %4117 = vmatpush1.msra.mxu0 0.0
    %4118 = vmatprep.subr.mxu0 0.0
    %4119 = vmatpush1.msra.mxu0 0.0
    %4120 = vmatprep.subr.mxu0 0.0
    %4121 = vmatpush1.msra.mxu0 0.0
    %4122 = vmatprep.subr.mxu0 0.0
    %4123 = vmatpush1.msra.mxu0 0.0
    %4124 = vmatprep.subr.mxu0 0.0
    %4125 = vmatpush1.msra.mxu0 0.0
    %4126 = vmatprep.subr.mxu0 0.0
    %4127 = vmatpush1.msra.mxu0 0.0
    %4128 = vmatprep.subr.mxu0 0.0
    %4129 = vmatpush1.msra.mxu0 %v4092
    %4130 = vmatprep.subr.mxu0 0.0
    %4131 = vmatpush1.msra.mxu0 %v4091
    %4132 = vmatprep.subr.mxu0 0.0
    %4133 = vmatpush1.msra.mxu0 %v4090
    %4134 = vmatprep.subr.mxu0 0.0
    %4135 = vmatpush1.msra.mxu0 %v4089
    %4136 = vmatprep.subr.mxu0 0.0
    %4137 = vmatpush2.msra.mxu0 0.0
    %4138 = vmatprep.subr.mxu0 0.0
    %4139 = vmatpush2.msra.mxu0 0.0
    %4140 = vmatprep.subr.mxu0 0.0
    %4141 = vmatpush2.msra.mxu0 0.0
    %4142 = vmatprep.subr.mxu0 0.0
    %4143 = vmatpush2.msra.mxu0 0.0
    %4144 = vmatprep.subr.mxu0 0.0
    %4145 = vmatpush2.msra.mxu0 0.0
    %4146 = vmatprep.subr.mxu0 0.0
    %4147 = vmatpush2.msra.mxu0 0.0
    %4148 = vmatprep.subr.mxu0 0.0
    %4149 = vmatpush2.msra.mxu0 0.0
    %4150 = vmatprep.subr.mxu0 0.0
    %4151 = vmatpush2.msra.mxu0 0.0
    %4152 = vmatprep.subr.mxu0 0.0
    %4153 = vmatpush2.msra.mxu0 0.0
    %4154 = vmatprep.subr.mxu0 0.0
    %4155 = vmatpush2.msra.mxu0 0.0
    %4156 = vmatprep.subr.mxu0 0.0
    %4157 = vmatpush2.msra.mxu0 0.0
    %4158 = vmatprep.subr.mxu0 0.0
    %4159 = vmatpush2.msra.mxu0 0.0
    %4160 = vmatprep.subr.mxu0 0.0
    %4161 = vmatpush2.msra.mxu0 0.0
    %4162 = vmatprep.subr.mxu0 0.0
    %4163 = vmatpush2.msra.mxu0 0.0
    %4164 = vmatprep.subr.mxu0 0.0
    %4165 = vmatpush2.msra.mxu0 0.0
    %4166 = vmatprep.subr.mxu0 0.0
    %4167 = vmatpush2.msra.mxu0 0.0
    %4168 = vmatprep.mubr.f32.mxu0 0.0
    %4169 = vmatmul.mubr.f32.gmra.mxu0 %v4099
    %v4170 = vpop.f32.mrf.mxu0
    %v4171 = vadd.f32 %v4097, %v4170
    %v4172 = vpop.f32.mrf.mxu0
    %4173 = vmatprep.mubr.f32.mxu0 0.0
    %4174 = vmatmul.mubr.f32.gmra.mxu0 %v4102
    %v4175 = vpop.f32.mrf.mxu0
    %v4176 = vadd.f32 %v4097, %v4175
    %v4177 = vpop.f32.mrf.mxu0
    %4178 = vdwg.mxu0
    %v4179 = vld [vmem:[#allocation7 + $0x180] sm:$0xff]
    %v4180 = vld [vmem:[#allocation7 + $0x188] sm:$0xff]
    %v4181 = vld [vmem:[#allocation7 + $0x190] sm:$0xff]
    %v4182 = vld [vmem:[#allocation7 + $0x198] sm:$0xff]
    %v4183 = vld [vmem:[#allocation7 + $0x1a0] sm:$0x1]
    %4185 = vrot.lane.b32.xlu0 %v4171, 96
    %v4186 = vpop.permute.xlu0 %4185
    %v4187 = vsel %vm217, %v4171, 0
    %v4189 = vsel %vm217, %v4186, 0
    %4191 = vmatprep.subr.mxu0 0.0
    %4192 = vmatpush1.xpose.msra.mxu0 0.0
    %4193 = vmatprep.subr.mxu0 0.0
    %4194 = vmatpush1.xpose.msra.mxu0 0.0
    %4195 = vmatprep.subr.mxu0 0.0
    %4196 = vmatpush1.xpose.msra.mxu0 0.0
    %4197 = vmatprep.subr.mxu0 0.0
    %4198 = vmatpush1.xpose.msra.mxu0 0.0
    %4199 = vmatprep.subr.mxu0 0.0
    %4200 = vmatpush1.xpose.msra.mxu0 0.0
    %4201 = vmatprep.subr.mxu0 0.0
    %4202 = vmatpush1.xpose.msra.mxu0 0.0
    %4203 = vmatprep.subr.mxu0 0.0
    %4204 = vmatpush1.xpose.msra.mxu0 0.0
    %4205 = vmatprep.subr.mxu0 0.0
    %4206 = vmatpush1.xpose.msra.mxu0 0.0
    %4207 = vmatprep.subr.mxu0 0.0
    %4208 = vmatpush1.xpose.msra.mxu0 0.0
    %4209 = vmatprep.subr.mxu0 0.0
    %4210 = vmatpush1.xpose.msra.mxu0 0.0
    %4211 = vmatprep.subr.mxu0 0.0
    %4212 = vmatpush1.xpose.msra.mxu0 0.0
    %4213 = vmatprep.subr.mxu0 0.0
    %4214 = vmatpush1.xpose.msra.mxu0 0.0
    %4215 = vmatprep.subr.mxu0 0.0
    %4216 = vmatpush1.xpose.msra.mxu0 0.0
    %4217 = vmatprep.subr.mxu0 0.0
    %4218 = vmatpush1.xpose.msra.mxu0 0.0
    %4219 = vmatprep.subr.mxu0 0.0
    %4220 = vmatpush1.xpose.msra.mxu0 0.0
    %4221 = vmatprep.subr.mxu0 0.0
    %4222 = vmatpush1.xpose.msra.mxu0 %v4189
    %4223 = vmatprep.subr.mxu0 0.0
    %4224 = vmatpush2.xpose.msra.mxu0 0.0
    %4225 = vmatprep.subr.mxu0 0.0
    %4226 = vmatpush2.xpose.msra.mxu0 0.0
    %4227 = vmatprep.subr.mxu0 0.0
    %4228 = vmatpush2.xpose.msra.mxu0 0.0
    %4229 = vmatprep.subr.mxu0 0.0
    %4230 = vmatpush2.xpose.msra.mxu0 0.0
    %4231 = vmatprep.subr.mxu0 0.0
    %4232 = vmatpush2.xpose.msra.mxu0 0.0
    %4233 = vmatprep.subr.mxu0 0.0
    %4234 = vmatpush2.xpose.msra.mxu0 0.0
    %4235 = vmatprep.subr.mxu0 0.0
    %4236 = vmatpush2.xpose.msra.mxu0 0.0
    %4237 = vmatprep.subr.mxu0 0.0
    %4238 = vmatpush2.xpose.msra.mxu0 0.0
    %4239 = vmatprep.subr.mxu0 0.0
    %4240 = vmatpush2.xpose.msra.mxu0 0.0
    %4241 = vmatprep.subr.mxu0 0.0
    %4242 = vmatpush2.xpose.msra.mxu0 0.0
    %4243 = vmatprep.subr.mxu0 0.0
    %4244 = vmatpush2.xpose.msra.mxu0 0.0
    %4245 = vmatprep.subr.mxu0 0.0
    %4246 = vmatpush2.xpose.msra.mxu0 0.0
    %4247 = vmatprep.subr.mxu0 0.0
    %4248 = vmatpush2.xpose.msra.mxu0 0.0
    %4249 = vmatprep.subr.mxu0 0.0
    %4250 = vmatpush2.xpose.msra.mxu0 0.0
    %4251 = vmatprep.subr.mxu0 0.0
    %4252 = vmatpush2.xpose.msra.mxu0 0.0
    %4253 = vmatprep.subr.mxu0 0.0
    %4254 = vmatpush2.xpose.msra.mxu0 0.0
    %4255 = vmatprep.mubr.f32.mxu0 0.0
    %4256 = vmatmul.mubr.f32.gmra.mxu0 %v4187
    %v4257 = vpop.f32.mrf.mxu0
    %v4258 = vadd.f32 %v60, %v4257
    %v4259 = vpop.f32.mrf.mxu0
    %4260 = vdwg.mxu0
    %4262 = vrot.lane.b32.xlu0 %v4176, 96
    %v4263 = vpop.permute.xlu0 %4262
    %v4264 = vsel %vm217, %v4176, 0
    %v4266 = vsel %vm217, %v4263, 0
    %4268 = vmatprep.subr.mxu0 0.0
    %4269 = vmatpush1.xpose.msra.mxu0 0.0
    %4270 = vmatprep.subr.mxu0 0.0
    %4271 = vmatpush1.xpose.msra.mxu0 0.0
    %4272 = vmatprep.subr.mxu0 0.0
    %4273 = vmatpush1.xpose.msra.mxu0 0.0
    %4274 = vmatprep.subr.mxu0 0.0
    %4275 = vmatpush1.xpose.msra.mxu0 0.0
    %4276 = vmatprep.subr.mxu0 0.0
    %4277 = vmatpush1.xpose.msra.mxu0 0.0
    %4278 = vmatprep.subr.mxu0 0.0
    %4279 = vmatpush1.xpose.msra.mxu0 0.0
    %4280 = vmatprep.subr.mxu0 0.0
    %4281 = vmatpush1.xpose.msra.mxu0 0.0
    %4282 = vmatprep.subr.mxu0 0.0
    %4283 = vmatpush1.xpose.msra.mxu0 0.0
    %4284 = vmatprep.subr.mxu0 0.0
    %4285 = vmatpush1.xpose.msra.mxu0 0.0
    %4286 = vmatprep.subr.mxu0 0.0
    %4287 = vmatpush1.xpose.msra.mxu0 0.0
    %4288 = vmatprep.subr.mxu0 0.0
    %4289 = vmatpush1.xpose.msra.mxu0 0.0
    %4290 = vmatprep.subr.mxu0 0.0
    %4291 = vmatpush1.xpose.msra.mxu0 0.0
    %4292 = vmatprep.subr.mxu0 0.0
    %4293 = vmatpush1.xpose.msra.mxu0 0.0
    %4294 = vmatprep.subr.mxu0 0.0
    %4295 = vmatpush1.xpose.msra.mxu0 0.0
    %4296 = vmatprep.subr.mxu0 0.0
    %4297 = vmatpush1.xpose.msra.mxu0 0.0
    %4298 = vmatprep.subr.mxu0 0.0
    %4299 = vmatpush1.xpose.msra.mxu0 %v4266
    %4300 = vmatprep.subr.mxu0 0.0
    %4301 = vmatpush2.xpose.msra.mxu0 0.0
    %4302 = vmatprep.subr.mxu0 0.0
    %4303 = vmatpush2.xpose.msra.mxu0 0.0
    %4304 = vmatprep.subr.mxu0 0.0
    %4305 = vmatpush2.xpose.msra.mxu0 0.0
    %4306 = vmatprep.subr.mxu0 0.0
    %4307 = vmatpush2.xpose.msra.mxu0 0.0
    %4308 = vmatprep.subr.mxu0 0.0
    %4309 = vmatpush2.xpose.msra.mxu0 0.0
    %4310 = vmatprep.subr.mxu0 0.0
    %4311 = vmatpush2.xpose.msra.mxu0 0.0
    %4312 = vmatprep.subr.mxu0 0.0
    %4313 = vmatpush2.xpose.msra.mxu0 0.0
    %4314 = vmatprep.subr.mxu0 0.0
    %4315 = vmatpush2.xpose.msra.mxu0 0.0
    %4316 = vmatprep.subr.mxu0 0.0
    %4317 = vmatpush2.xpose.msra.mxu0 0.0
    %4318 = vmatprep.subr.mxu0 0.0
    %4319 = vmatpush2.xpose.msra.mxu0 0.0
    %4320 = vmatprep.subr.mxu0 0.0
    %4321 = vmatpush2.xpose.msra.mxu0 0.0
    %4322 = vmatprep.subr.mxu0 0.0
    %4323 = vmatpush2.xpose.msra.mxu0 0.0
    %4324 = vmatprep.subr.mxu0 0.0
    %4325 = vmatpush2.xpose.msra.mxu0 0.0
    %4326 = vmatprep.subr.mxu0 0.0
    %4327 = vmatpush2.xpose.msra.mxu0 0.0
    %4328 = vmatprep.subr.mxu0 0.0
    %4329 = vmatpush2.xpose.msra.mxu0 0.0
    %4330 = vmatprep.subr.mxu0 0.0
    %4331 = vmatpush2.xpose.msra.mxu0 0.0
    %4332 = vmatprep.mubr.f32.mxu0 0.0
    %4333 = vmatmul.mubr.f32.gmra.mxu0 %v4264
    %v4334 = vpop.f32.mrf.mxu0
    %v4335 = vadd.f32 %v61, %v4334
    %v4336 = vpop.f32.mrf.mxu0
    %4337 = vdwg.mxu0
    %v4338 = vsel %vm217, %v4258, -inf
    %4339 = vmax.xlane.f32.xlu0 %v4338
    %v4340 = vpop.xlane.xlu0 %4339
    %v4341 = vsel %vm217, %v4335, -inf
    %4342 = vmax.xlane.f32.xlu0 %v4341
    %v4343 = vpop.xlane.xlu0 %4342
    %v4344 = vsub.f32 %v4258, %v4340
    %v4345 = vsub.f32 %v4335, %v4343
    %v4346 = vmul.f32 %v4344, 1.442695
    %v4347 = vpow.pop %v4346
    %v4348 = vmul.f32 %v4345, 1.442695
    %v4349 = vpow.pop %v4348
    %v4350 = vsel %vm217, %v4347, 0.0
    %4351 = vadd.xlane.f32.xlu0 %v4350
    %v4352 = vpop.xlane.xlu0 %4351
    %v4353 = vsel %vm217, %v4349, 0.0
    %4354 = vadd.xlane.f32.xlu0 %v4353
    %v4355 = vpop.xlane.xlu0 %4354
    %v4356 = vrcp.pop %v4352
    %v4357 = vmul.f32 1.0, %v4356
    %v4358 = vrcp.pop %v4355
    %v4359 = vmul.f32 1.0, %v4358
    %v4360 = vmul.f32 %v4347, %v4357
    %v4361 = vmul.f32 %v4349, %v4359
    %4362 = vrot.lane.b32.xlu0 %v4171, 64
    %v4363 = vpop.permute.xlu0 %4362
    %v4366 = vsel %vm217, %v4360, 0
    %4368 = vmatprep.subr.mxu0 0.0
    %4369 = vmatpush1.msra.mxu0 0.0
    %4370 = vmatprep.subr.mxu0 0.0
    %4371 = vmatpush1.msra.mxu0 0.0
    %4372 = vmatprep.subr.mxu0 0.0
    %4373 = vmatpush1.msra.mxu0 0.0
    %4374 = vmatprep.subr.mxu0 0.0
    %4375 = vmatpush1.msra.mxu0 0.0
    %4376 = vmatprep.subr.mxu0 0.0
    %4377 = vmatpush1.msra.mxu0 0.0
    %4378 = vmatprep.subr.mxu0 0.0
    %4379 = vmatpush1.msra.mxu0 0.0
    %4380 = vmatprep.subr.mxu0 0.0
    %4381 = vmatpush1.msra.mxu0 0.0
    %4382 = vmatprep.subr.mxu0 0.0
    %4383 = vmatpush1.msra.mxu0 0.0
    %4384 = vmatprep.subr.mxu0 0.0
    %4385 = vmatpush1.msra.mxu0 0.0
    %4386 = vmatprep.subr.mxu0 0.0
    %4387 = vmatpush1.msra.mxu0 0.0
    %4388 = vmatprep.subr.mxu0 0.0
    %4389 = vmatpush1.msra.mxu0 0.0
    %4390 = vmatprep.subr.mxu0 0.0
    %4391 = vmatpush1.msra.mxu0 0.0
    %4392 = vmatprep.subr.mxu0 0.0
    %4393 = vmatpush1.msra.mxu0 0.0
    %4394 = vmatprep.subr.mxu0 0.0
    %4395 = vmatpush1.msra.mxu0 0.0
    %4396 = vmatprep.subr.mxu0 0.0
    %4397 = vmatpush1.msra.mxu0 0.0
    %4398 = vmatprep.subr.mxu0 0.0
    %4399 = vmatpush1.msra.mxu0 %v4363
    %4400 = vmatprep.subr.mxu0 0.0
    %4401 = vmatpush2.msra.mxu0 0.0
    %4402 = vmatprep.subr.mxu0 0.0
    %4403 = vmatpush2.msra.mxu0 0.0
    %4404 = vmatprep.subr.mxu0 0.0
    %4405 = vmatpush2.msra.mxu0 0.0
    %4406 = vmatprep.subr.mxu0 0.0
    %4407 = vmatpush2.msra.mxu0 0.0
    %4408 = vmatprep.subr.mxu0 0.0
    %4409 = vmatpush2.msra.mxu0 0.0
    %4410 = vmatprep.subr.mxu0 0.0
    %4411 = vmatpush2.msra.mxu0 0.0
    %4412 = vmatprep.subr.mxu0 0.0
    %4413 = vmatpush2.msra.mxu0 0.0
    %4414 = vmatprep.subr.mxu0 0.0
    %4415 = vmatpush2.msra.mxu0 0.0
    %4416 = vmatprep.subr.mxu0 0.0
    %4417 = vmatpush2.msra.mxu0 0.0
    %4418 = vmatprep.subr.mxu0 0.0
    %4419 = vmatpush2.msra.mxu0 0.0
    %4420 = vmatprep.subr.mxu0 0.0
    %4421 = vmatpush2.msra.mxu0 0.0
    %4422 = vmatprep.subr.mxu0 0.0
    %4423 = vmatpush2.msra.mxu0 0.0
    %4424 = vmatprep.subr.mxu0 0.0
    %4425 = vmatpush2.msra.mxu0 0.0
    %4426 = vmatprep.subr.mxu0 0.0
    %4427 = vmatpush2.msra.mxu0 0.0
    %4428 = vmatprep.subr.mxu0 0.0
    %4429 = vmatpush2.msra.mxu0 0.0
    %4430 = vmatprep.subr.mxu0 0.0
    %4431 = vmatpush2.msra.mxu0 0.0
    %4432 = vmatprep.mubr.f32.mxu0 0.0
    %4433 = vmatmul.mubr.f32.gmra.mxu0 %v4366
    %v4434 = vpop.f32.mrf.mxu0
    %v4435 = vadd.f32 0.0, %v4434
    %v4436 = vpop.f32.mrf.mxu0
    %4437 = vdwg.mxu0
    %4438 = vrot.lane.b32.xlu0 %v4176, 64
    %v4439 = vpop.permute.xlu0 %4438
    %v4442 = vsel %vm217, %v4361, 0
    %4444 = vmatprep.subr.mxu0 0.0
    %4445 = vmatpush1.msra.mxu0 0.0
    %4446 = vmatprep.subr.mxu0 0.0
    %4447 = vmatpush1.msra.mxu0 0.0
    %4448 = vmatprep.subr.mxu0 0.0
    %4449 = vmatpush1.msra.mxu0 0.0
    %4450 = vmatprep.subr.mxu0 0.0
    %4451 = vmatpush1.msra.mxu0 0.0
    %4452 = vmatprep.subr.mxu0 0.0
    %4453 = vmatpush1.msra.mxu0 0.0
    %4454 = vmatprep.subr.mxu0 0.0
    %4455 = vmatpush1.msra.mxu0 0.0
    %4456 = vmatprep.subr.mxu0 0.0
    %4457 = vmatpush1.msra.mxu0 0.0
    %4458 = vmatprep.subr.mxu0 0.0
    %4459 = vmatpush1.msra.mxu0 0.0
    %4460 = vmatprep.subr.mxu0 0.0
    %4461 = vmatpush1.msra.mxu0 0.0
    %4462 = vmatprep.subr.mxu0 0.0
    %4463 = vmatpush1.msra.mxu0 0.0
    %4464 = vmatprep.subr.mxu0 0.0
    %4465 = vmatpush1.msra.mxu0 0.0
    %4466 = vmatprep.subr.mxu0 0.0
    %4467 = vmatpush1.msra.mxu0 0.0
    %4468 = vmatprep.subr.mxu0 0.0
    %4469 = vmatpush1.msra.mxu0 0.0
    %4470 = vmatprep.subr.mxu0 0.0
    %4471 = vmatpush1.msra.mxu0 0.0
    %4472 = vmatprep.subr.mxu0 0.0
    %4473 = vmatpush1.msra.mxu0 0.0
    %4474 = vmatprep.subr.mxu0 0.0
    %4475 = vmatpush1.msra.mxu0 %v4439
    %4476 = vmatprep.subr.mxu0 0.0
    %4477 = vmatpush2.msra.mxu0 0.0
    %4478 = vmatprep.subr.mxu0 0.0
    %4479 = vmatpush2.msra.mxu0 0.0
    %4480 = vmatprep.subr.mxu0 0.0
    %4481 = vmatpush2.msra.mxu0 0.0
    %4482 = vmatprep.subr.mxu0 0.0
    %4483 = vmatpush2.msra.mxu0 0.0
    %4484 = vmatprep.subr.mxu0 0.0
    %4485 = vmatpush2.msra.mxu0 0.0
    %4486 = vmatprep.subr.mxu0 0.0
    %4487 = vmatpush2.msra.mxu0 0.0
    %4488 = vmatprep.subr.mxu0 0.0
    %4489 = vmatpush2.msra.mxu0 0.0
    %4490 = vmatprep.subr.mxu0 0.0
    %4491 = vmatpush2.msra.mxu0 0.0
    %4492 = vmatprep.subr.mxu0 0.0
    %4493 = vmatpush2.msra.mxu0 0.0
    %4494 = vmatprep.subr.mxu0 0.0
    %4495 = vmatpush2.msra.mxu0 0.0
    %4496 = vmatprep.subr.mxu0 0.0
    %4497 = vmatpush2.msra.mxu0 0.0
    %4498 = vmatprep.subr.mxu0 0.0
    %4499 = vmatpush2.msra.mxu0 0.0
    %4500 = vmatprep.subr.mxu0 0.0
    %4501 = vmatpush2.msra.mxu0 0.0
    %4502 = vmatprep.subr.mxu0 0.0
    %4503 = vmatpush2.msra.mxu0 0.0
    %4504 = vmatprep.subr.mxu0 0.0
    %4505 = vmatpush2.msra.mxu0 0.0
    %4506 = vmatprep.subr.mxu0 0.0
    %4507 = vmatpush2.msra.mxu0 0.0
    %4508 = vmatprep.mubr.f32.mxu0 0.0
    %4509 = vmatmul.mubr.f32.gmra.mxu0 %v4442
    %v4510 = vpop.f32.mrf.mxu0
    %v4511 = vadd.f32 0.0, %v4510
    %v4512 = vpop.f32.mrf.mxu0
    %4513 = vdwg.mxu0
    %v4515 = vsel %vm217, %v4435, 0
    %v4518 = vsel %vm217, %v4511, 0
    %4520 = vmatprep.subr.mxu0 0.0
    %4521 = vmatpush1.msra.mxu0 0.0
    %4522 = vmatprep.subr.mxu0 0.0
    %4523 = vmatpush1.msra.mxu0 0.0
    %4524 = vmatprep.subr.mxu0 0.0
    %4525 = vmatpush1.msra.mxu0 0.0
    %4526 = vmatprep.subr.mxu0 0.0
    %4527 = vmatpush1.msra.mxu0 0.0
    %4528 = vmatprep.subr.mxu0 0.0
    %4529 = vmatpush1.msra.mxu0 0.0
    %4530 = vmatprep.subr.mxu0 0.0
    %4531 = vmatpush1.msra.mxu0 0.0
    %4532 = vmatprep.subr.mxu0 0.0
    %4533 = vmatpush1.msra.mxu0 0.0
    %4534 = vmatprep.subr.mxu0 0.0
    %4535 = vmatpush1.msra.mxu0 0.0
    %4536 = vmatprep.subr.mxu0 0.0
    %4537 = vmatpush1.msra.mxu0 0.0
    %4538 = vmatprep.subr.mxu0 0.0
    %4539 = vmatpush1.msra.mxu0 0.0
    %4540 = vmatprep.subr.mxu0 0.0
    %4541 = vmatpush1.msra.mxu0 0.0
    %4542 = vmatprep.subr.mxu0 0.0
    %4543 = vmatpush1.msra.mxu0 0.0
    %4544 = vmatprep.subr.mxu0 0.0
    %4545 = vmatpush1.msra.mxu0 0.0
    %4546 = vmatprep.subr.mxu0 0.0
    %4547 = vmatpush1.msra.mxu0 0.0
    %4548 = vmatprep.subr.mxu0 0.0
    %4549 = vmatpush1.msra.mxu0 0.0
    %4550 = vmatprep.subr.mxu0 0.0
    %4551 = vmatpush1.msra.mxu0 %v4179
    %4552 = vmatprep.subr.mxu0 0.0
    %4553 = vmatpush2.msra.mxu0 0.0
    %4554 = vmatprep.subr.mxu0 0.0
    %4555 = vmatpush2.msra.mxu0 0.0
    %4556 = vmatprep.subr.mxu0 0.0
    %4557 = vmatpush2.msra.mxu0 0.0
    %4558 = vmatprep.subr.mxu0 0.0
    %4559 = vmatpush2.msra.mxu0 0.0
    %4560 = vmatprep.subr.mxu0 0.0
    %4561 = vmatpush2.msra.mxu0 0.0
    %4562 = vmatprep.subr.mxu0 0.0
    %4563 = vmatpush2.msra.mxu0 0.0
    %4564 = vmatprep.subr.mxu0 0.0
    %4565 = vmatpush2.msra.mxu0 0.0
    %4566 = vmatprep.subr.mxu0 0.0
    %4567 = vmatpush2.msra.mxu0 0.0
    %4568 = vmatprep.subr.mxu0 0.0
    %4569 = vmatpush2.msra.mxu0 0.0
    %4570 = vmatprep.subr.mxu0 0.0
    %4571 = vmatpush2.msra.mxu0 0.0
    %4572 = vmatprep.subr.mxu0 0.0
    %4573 = vmatpush2.msra.mxu0 0.0
    %4574 = vmatprep.subr.mxu0 0.0
    %4575 = vmatpush2.msra.mxu0 0.0
    %4576 = vmatprep.subr.mxu0 0.0
    %4577 = vmatpush2.msra.mxu0 0.0
    %4578 = vmatprep.subr.mxu0 0.0
    %4579 = vmatpush2.msra.mxu0 0.0
    %4580 = vmatprep.subr.mxu0 0.0
    %4581 = vmatpush2.msra.mxu0 0.0
    %4582 = vmatprep.subr.mxu0 0.0
    %4583 = vmatpush2.msra.mxu0 0.0
    %4584 = vmatprep.mubr.f32.mxu0 0.0
    %4585 = vmatmul.mubr.f32.gmra.mxu0 %v4515
    %v4586 = vpop.f32.mrf.mxu0
    %v4587 = vadd.f32 0.0, %v4586
    %v4588 = vpop.f32.mrf.mxu0
    %4589 = vmatprep.mubr.f32.mxu0 0.0
    %4590 = vmatmul.mubr.f32.gmra.mxu0 %v4518
    %v4591 = vpop.f32.mrf.mxu0
    %v4592 = vadd.f32 0.0, %v4591
    %v4593 = vpop.f32.mrf.mxu0
    %4594 = vdwg.mxu0
    %v4595 = vlaneseq
    %v4596 = vshrl.u32 %v4595, 7
    %v4597 = vsub.s32 0, %v4596
    %v4598 = vrot.slane %v4183, %v4597
    %v4599 = vadd.f32 %v4598, %v4587
    %v4600 = vadd.f32 %v4598, %v4592
    %4601 = vrot.lane.b32.xlu0 %v4171, 120
    %v4602 = vpop.permute.xlu0 %4601
    %4603 = vrot.lane.b32.xlu0 %v4171, 88
    %v4604 = vpop.permute.xlu0 %4603
    %v4605 = vsel %vm217, %v4602, 0
    %v4607 = vsel %vm217, %v4604, 0
    %4609 = vmatprep.subr.mxu0 0.0
    %4610 = vmatpush1.xpose.msra.mxu0 0.0
    %4611 = vmatprep.subr.mxu0 0.0
    %4612 = vmatpush1.xpose.msra.mxu0 0.0
    %4613 = vmatprep.subr.mxu0 0.0
    %4614 = vmatpush1.xpose.msra.mxu0 0.0
    %4615 = vmatprep.subr.mxu0 0.0
    %4616 = vmatpush1.xpose.msra.mxu0 0.0
    %4617 = vmatprep.subr.mxu0 0.0
    %4618 = vmatpush1.xpose.msra.mxu0 0.0
    %4619 = vmatprep.subr.mxu0 0.0
    %4620 = vmatpush1.xpose.msra.mxu0 0.0
    %4621 = vmatprep.subr.mxu0 0.0
    %4622 = vmatpush1.xpose.msra.mxu0 0.0
    %4623 = vmatprep.subr.mxu0 0.0
    %4624 = vmatpush1.xpose.msra.mxu0 0.0
    %4625 = vmatprep.subr.mxu0 0.0
    %4626 = vmatpush1.xpose.msra.mxu0 0.0
    %4627 = vmatprep.subr.mxu0 0.0
    %4628 = vmatpush1.xpose.msra.mxu0 0.0
    %4629 = vmatprep.subr.mxu0 0.0
    %4630 = vmatpush1.xpose.msra.mxu0 0.0
    %4631 = vmatprep.subr.mxu0 0.0
    %4632 = vmatpush1.xpose.msra.mxu0 0.0
    %4633 = vmatprep.subr.mxu0 0.0
    %4634 = vmatpush1.xpose.msra.mxu0 0.0
    %4635 = vmatprep.subr.mxu0 0.0
    %4636 = vmatpush1.xpose.msra.mxu0 0.0
    %4637 = vmatprep.subr.mxu0 0.0
    %4638 = vmatpush1.xpose.msra.mxu0 0.0
    %4639 = vmatprep.subr.mxu0 0.0
    %4640 = vmatpush1.xpose.msra.mxu0 %v4607
    %4641 = vmatprep.subr.mxu0 0.0
    %4642 = vmatpush2.xpose.msra.mxu0 0.0
    %4643 = vmatprep.subr.mxu0 0.0
    %4644 = vmatpush2.xpose.msra.mxu0 0.0
    %4645 = vmatprep.subr.mxu0 0.0
    %4646 = vmatpush2.xpose.msra.mxu0 0.0
    %4647 = vmatprep.subr.mxu0 0.0
    %4648 = vmatpush2.xpose.msra.mxu0 0.0
    %4649 = vmatprep.subr.mxu0 0.0
    %4650 = vmatpush2.xpose.msra.mxu0 0.0
    %4651 = vmatprep.subr.mxu0 0.0
    %4652 = vmatpush2.xpose.msra.mxu0 0.0
    %4653 = vmatprep.subr.mxu0 0.0
    %4654 = vmatpush2.xpose.msra.mxu0 0.0
    %4655 = vmatprep.subr.mxu0 0.0
    %4656 = vmatpush2.xpose.msra.mxu0 0.0
    %4657 = vmatprep.subr.mxu0 0.0
    %4658 = vmatpush2.xpose.msra.mxu0 0.0
    %4659 = vmatprep.subr.mxu0 0.0
    %4660 = vmatpush2.xpose.msra.mxu0 0.0
    %4661 = vmatprep.subr.mxu0 0.0
    %4662 = vmatpush2.xpose.msra.mxu0 0.0
    %4663 = vmatprep.subr.mxu0 0.0
    %4664 = vmatpush2.xpose.msra.mxu0 0.0
    %4665 = vmatprep.subr.mxu0 0.0
    %4666 = vmatpush2.xpose.msra.mxu0 0.0
    %4667 = vmatprep.subr.mxu0 0.0
    %4668 = vmatpush2.xpose.msra.mxu0 0.0
    %4669 = vmatprep.subr.mxu0 0.0
    %4670 = vmatpush2.xpose.msra.mxu0 0.0
    %4671 = vmatprep.subr.mxu0 0.0
    %4672 = vmatpush2.xpose.msra.mxu0 0.0
    %4673 = vmatprep.mubr.f32.mxu0 0.0
    %4674 = vmatmul.mubr.f32.gmra.mxu0 %v4605
    %v4675 = vpop.f32.mrf.mxu0
    %v4676 = vadd.f32 %v60, %v4675
    %v4677 = vpop.f32.mrf.mxu0
    %4678 = vdwg.mxu0
    %4679 = vrot.lane.b32.xlu0 %v4176, 120
    %v4680 = vpop.permute.xlu0 %4679
    %4681 = vrot.lane.b32.xlu0 %v4176, 88
    %v4682 = vpop.permute.xlu0 %4681
    %v4683 = vsel %vm217, %v4680, 0
    %v4685 = vsel %vm217, %v4682, 0
    %4687 = vmatprep.subr.mxu0 0.0
    %4688 = vmatpush1.xpose.msra.mxu0 0.0
    %4689 = vmatprep.subr.mxu0 0.0
    %4690 = vmatpush1.xpose.msra.mxu0 0.0
    %4691 = vmatprep.subr.mxu0 0.0
    %4692 = vmatpush1.xpose.msra.mxu0 0.0
    %4693 = vmatprep.subr.mxu0 0.0
    %4694 = vmatpush1.xpose.msra.mxu0 0.0
    %4695 = vmatprep.subr.mxu0 0.0
    %4696 = vmatpush1.xpose.msra.mxu0 0.0
    %4697 = vmatprep.subr.mxu0 0.0
    %4698 = vmatpush1.xpose.msra.mxu0 0.0
    %4699 = vmatprep.subr.mxu0 0.0
    %4700 = vmatpush1.xpose.msra.mxu0 0.0
    %4701 = vmatprep.subr.mxu0 0.0
    %4702 = vmatpush1.xpose.msra.mxu0 0.0
    %4703 = vmatprep.subr.mxu0 0.0
    %4704 = vmatpush1.xpose.msra.mxu0 0.0
    %4705 = vmatprep.subr.mxu0 0.0
    %4706 = vmatpush1.xpose.msra.mxu0 0.0
    %4707 = vmatprep.subr.mxu0 0.0
    %4708 = vmatpush1.xpose.msra.mxu0 0.0
    %4709 = vmatprep.subr.mxu0 0.0
    %4710 = vmatpush1.xpose.msra.mxu0 0.0
    %4711 = vmatprep.subr.mxu0 0.0
    %4712 = vmatpush1.xpose.msra.mxu0 0.0
    %4713 = vmatprep.subr.mxu0 0.0
    %4714 = vmatpush1.xpose.msra.mxu0 0.0
    %4715 = vmatprep.subr.mxu0 0.0
    %4716 = vmatpush1.xpose.msra.mxu0 0.0
    %4717 = vmatprep.subr.mxu0 0.0
    %4718 = vmatpush1.xpose.msra.mxu0 %v4685
    %4719 = vmatprep.subr.mxu0 0.0
    %4720 = vmatpush2.xpose.msra.mxu0 0.0
    %4721 = vmatprep.subr.mxu0 0.0
    %4722 = vmatpush2.xpose.msra.mxu0 0.0
    %4723 = vmatprep.subr.mxu0 0.0
    %4724 = vmatpush2.xpose.msra.mxu0 0.0
    %4725 = vmatprep.subr.mxu0 0.0
    %4726 = vmatpush2.xpose.msra.mxu0 0.0
    %4727 = vmatprep.subr.mxu0 0.0
    %4728 = vmatpush2.xpose.msra.mxu0 0.0
    %4729 = vmatprep.subr.mxu0 0.0
    %4730 = vmatpush2.xpose.msra.mxu0 0.0
    %4731 = vmatprep.subr.mxu0 0.0
    %4732 = vmatpush2.xpose.msra.mxu0 0.0
    %4733 = vmatprep.subr.mxu0 0.0
    %4734 = vmatpush2.xpose.msra.mxu0 0.0
    %4735 = vmatprep.subr.mxu0 0.0
    %4736 = vmatpush2.xpose.msra.mxu0 0.0
    %4737 = vmatprep.subr.mxu0 0.0
    %4738 = vmatpush2.xpose.msra.mxu0 0.0
    %4739 = vmatprep.subr.mxu0 0.0
    %4740 = vmatpush2.xpose.msra.mxu0 0.0
    %4741 = vmatprep.subr.mxu0 0.0
    %4742 = vmatpush2.xpose.msra.mxu0 0.0
    %4743 = vmatprep.subr.mxu0 0.0
    %4744 = vmatpush2.xpose.msra.mxu0 0.0
    %4745 = vmatprep.subr.mxu0 0.0
    %4746 = vmatpush2.xpose.msra.mxu0 0.0
    %4747 = vmatprep.subr.mxu0 0.0
    %4748 = vmatpush2.xpose.msra.mxu0 0.0
    %4749 = vmatprep.subr.mxu0 0.0
    %4750 = vmatpush2.xpose.msra.mxu0 0.0
    %4751 = vmatprep.mubr.f32.mxu0 0.0
    %4752 = vmatmul.mubr.f32.gmra.mxu0 %v4683
    %v4753 = vpop.f32.mrf.mxu0
    %v4754 = vadd.f32 %v61, %v4753
    %v4755 = vpop.f32.mrf.mxu0
    %4756 = vdwg.mxu0
    %v4757 = vsel %vm217, %v4676, -inf
    %4758 = vmax.xlane.f32.xlu0 %v4757
    %v4759 = vpop.xlane.xlu0 %4758
    %v4760 = vsel %vm217, %v4754, -inf
    %4761 = vmax.xlane.f32.xlu0 %v4760
    %v4762 = vpop.xlane.xlu0 %4761
    %v4763 = vsub.f32 %v4676, %v4759
    %v4764 = vsub.f32 %v4754, %v4762
    %v4765 = vmul.f32 %v4763, 1.442695
    %v4766 = vpow.pop %v4765
    %v4767 = vmul.f32 %v4764, 1.442695
    %v4768 = vpow.pop %v4767
    %v4769 = vsel %vm217, %v4766, 0.0
    %4770 = vadd.xlane.f32.xlu0 %v4769
    %v4771 = vpop.xlane.xlu0 %4770
    %v4772 = vsel %vm217, %v4768, 0.0
    %4773 = vadd.xlane.f32.xlu0 %v4772
    %v4774 = vpop.xlane.xlu0 %4773
    %v4775 = vrcp.pop %v4771
    %v4776 = vmul.f32 1.0, %v4775
    %v4777 = vrcp.pop %v4774
    %v4778 = vmul.f32 1.0, %v4777
    %v4779 = vmul.f32 %v4766, %v4776
    %v4780 = vmul.f32 %v4768, %v4778
    %4781 = vrot.lane.b32.xlu0 %v4171, 56
    %v4782 = vpop.permute.xlu0 %4781
    %v4785 = vsel %vm217, %v4779, 0
    %4787 = vmatprep.subr.mxu0 0.0
    %4788 = vmatpush1.msra.mxu0 0.0
    %4789 = vmatprep.subr.mxu0 0.0
    %4790 = vmatpush1.msra.mxu0 0.0
    %4791 = vmatprep.subr.mxu0 0.0
    %4792 = vmatpush1.msra.mxu0 0.0
    %4793 = vmatprep.subr.mxu0 0.0
    %4794 = vmatpush1.msra.mxu0 0.0
    %4795 = vmatprep.subr.mxu0 0.0
    %4796 = vmatpush1.msra.mxu0 0.0
    %4797 = vmatprep.subr.mxu0 0.0
    %4798 = vmatpush1.msra.mxu0 0.0
    %4799 = vmatprep.subr.mxu0 0.0
    %4800 = vmatpush1.msra.mxu0 0.0
    %4801 = vmatprep.subr.mxu0 0.0
    %4802 = vmatpush1.msra.mxu0 0.0
    %4803 = vmatprep.subr.mxu0 0.0
    %4804 = vmatpush1.msra.mxu0 0.0
    %4805 = vmatprep.subr.mxu0 0.0
    %4806 = vmatpush1.msra.mxu0 0.0
    %4807 = vmatprep.subr.mxu0 0.0
    %4808 = vmatpush1.msra.mxu0 0.0
    %4809 = vmatprep.subr.mxu0 0.0
    %4810 = vmatpush1.msra.mxu0 0.0
    %4811 = vmatprep.subr.mxu0 0.0
    %4812 = vmatpush1.msra.mxu0 0.0
    %4813 = vmatprep.subr.mxu0 0.0
    %4814 = vmatpush1.msra.mxu0 0.0
    %4815 = vmatprep.subr.mxu0 0.0
    %4816 = vmatpush1.msra.mxu0 0.0
    %4817 = vmatprep.subr.mxu0 0.0
    %4818 = vmatpush1.msra.mxu0 %v4782
    %4819 = vmatprep.subr.mxu0 0.0
    %4820 = vmatpush2.msra.mxu0 0.0
    %4821 = vmatprep.subr.mxu0 0.0
    %4822 = vmatpush2.msra.mxu0 0.0
    %4823 = vmatprep.subr.mxu0 0.0
    %4824 = vmatpush2.msra.mxu0 0.0
    %4825 = vmatprep.subr.mxu0 0.0
    %4826 = vmatpush2.msra.mxu0 0.0
    %4827 = vmatprep.subr.mxu0 0.0
    %4828 = vmatpush2.msra.mxu0 0.0
    %4829 = vmatprep.subr.mxu0 0.0
    %4830 = vmatpush2.msra.mxu0 0.0
    %4831 = vmatprep.subr.mxu0 0.0
    %4832 = vmatpush2.msra.mxu0 0.0
    %4833 = vmatprep.subr.mxu0 0.0
    %4834 = vmatpush2.msra.mxu0 0.0
    %4835 = vmatprep.subr.mxu0 0.0
    %4836 = vmatpush2.msra.mxu0 0.0
    %4837 = vmatprep.subr.mxu0 0.0
    %4838 = vmatpush2.msra.mxu0 0.0
    %4839 = vmatprep.subr.mxu0 0.0
    %4840 = vmatpush2.msra.mxu0 0.0
    %4841 = vmatprep.subr.mxu0 0.0
    %4842 = vmatpush2.msra.mxu0 0.0
    %4843 = vmatprep.subr.mxu0 0.0
    %4844 = vmatpush2.msra.mxu0 0.0
    %4845 = vmatprep.subr.mxu0 0.0
    %4846 = vmatpush2.msra.mxu0 0.0
    %4847 = vmatprep.subr.mxu0 0.0
    %4848 = vmatpush2.msra.mxu0 0.0
    %4849 = vmatprep.subr.mxu0 0.0
    %4850 = vmatpush2.msra.mxu0 0.0
    %4851 = vmatprep.mubr.f32.mxu0 0.0
    %4852 = vmatmul.mubr.f32.gmra.mxu0 %v4785
    %v4853 = vpop.f32.mrf.mxu0
    %v4854 = vadd.f32 0.0, %v4853
    %v4855 = vpop.f32.mrf.mxu0
    %4856 = vdwg.mxu0
    %4857 = vrot.lane.b32.xlu0 %v4176, 56
    %v4858 = vpop.permute.xlu0 %4857
    %v4861 = vsel %vm217, %v4780, 0
    %4863 = vmatprep.subr.mxu0 0.0
    %4864 = vmatpush1.msra.mxu0 0.0
    %4865 = vmatprep.subr.mxu0 0.0
    %4866 = vmatpush1.msra.mxu0 0.0
    %4867 = vmatprep.subr.mxu0 0.0
    %4868 = vmatpush1.msra.mxu0 0.0
    %4869 = vmatprep.subr.mxu0 0.0
    %4870 = vmatpush1.msra.mxu0 0.0
    %4871 = vmatprep.subr.mxu0 0.0
    %4872 = vmatpush1.msra.mxu0 0.0
    %4873 = vmatprep.subr.mxu0 0.0
    %4874 = vmatpush1.msra.mxu0 0.0
    %4875 = vmatprep.subr.mxu0 0.0
    %4876 = vmatpush1.msra.mxu0 0.0
    %4877 = vmatprep.subr.mxu0 0.0
    %4878 = vmatpush1.msra.mxu0 0.0
    %4879 = vmatprep.subr.mxu0 0.0
    %4880 = vmatpush1.msra.mxu0 0.0
    %4881 = vmatprep.subr.mxu0 0.0
    %4882 = vmatpush1.msra.mxu0 0.0
    %4883 = vmatprep.subr.mxu0 0.0
    %4884 = vmatpush1.msra.mxu0 0.0
    %4885 = vmatprep.subr.mxu0 0.0
    %4886 = vmatpush1.msra.mxu0 0.0
    %4887 = vmatprep.subr.mxu0 0.0
    %4888 = vmatpush1.msra.mxu0 0.0
    %4889 = vmatprep.subr.mxu0 0.0
    %4890 = vmatpush1.msra.mxu0 0.0
    %4891 = vmatprep.subr.mxu0 0.0
    %4892 = vmatpush1.msra.mxu0 0.0
    %4893 = vmatprep.subr.mxu0 0.0
    %4894 = vmatpush1.msra.mxu0 %v4858
    %4895 = vmatprep.subr.mxu0 0.0
    %4896 = vmatpush2.msra.mxu0 0.0
    %4897 = vmatprep.subr.mxu0 0.0
    %4898 = vmatpush2.msra.mxu0 0.0
    %4899 = vmatprep.subr.mxu0 0.0
    %4900 = vmatpush2.msra.mxu0 0.0
    %4901 = vmatprep.subr.mxu0 0.0
    %4902 = vmatpush2.msra.mxu0 0.0
    %4903 = vmatprep.subr.mxu0 0.0
    %4904 = vmatpush2.msra.mxu0 0.0
    %4905 = vmatprep.subr.mxu0 0.0
    %4906 = vmatpush2.msra.mxu0 0.0
    %4907 = vmatprep.subr.mxu0 0.0
    %4908 = vmatpush2.msra.mxu0 0.0
    %4909 = vmatprep.subr.mxu0 0.0
    %4910 = vmatpush2.msra.mxu0 0.0
    %4911 = vmatprep.subr.mxu0 0.0
    %4912 = vmatpush2.msra.mxu0 0.0
    %4913 = vmatprep.subr.mxu0 0.0
    %4914 = vmatpush2.msra.mxu0 0.0
    %4915 = vmatprep.subr.mxu0 0.0
    %4916 = vmatpush2.msra.mxu0 0.0
    %4917 = vmatprep.subr.mxu0 0.0
    %4918 = vmatpush2.msra.mxu0 0.0
    %4919 = vmatprep.subr.mxu0 0.0
    %4920 = vmatpush2.msra.mxu0 0.0
    %4921 = vmatprep.subr.mxu0 0.0
    %4922 = vmatpush2.msra.mxu0 0.0
    %4923 = vmatprep.subr.mxu0 0.0
    %4924 = vmatpush2.msra.mxu0 0.0
    %4925 = vmatprep.subr.mxu0 0.0
    %4926 = vmatpush2.msra.mxu0 0.0
    %4927 = vmatprep.mubr.f32.mxu0 0.0
    %4928 = vmatmul.mubr.f32.gmra.mxu0 %v4861
    %v4929 = vpop.f32.mrf.mxu0
    %v4930 = vadd.f32 0.0, %v4929
    %v4931 = vpop.f32.mrf.mxu0
    %4932 = vdwg.mxu0
    %v4934 = vsel %vm217, %v4854, 0
    %v4937 = vsel %vm217, %v4930, 0
    %4939 = vmatprep.subr.mxu0 0.0
    %4940 = vmatpush1.msra.mxu0 0.0
    %4941 = vmatprep.subr.mxu0 0.0
    %4942 = vmatpush1.msra.mxu0 0.0
    %4943 = vmatprep.subr.mxu0 0.0
    %4944 = vmatpush1.msra.mxu0 0.0
    %4945 = vmatprep.subr.mxu0 0.0
    %4946 = vmatpush1.msra.mxu0 0.0
    %4947 = vmatprep.subr.mxu0 0.0
    %4948 = vmatpush1.msra.mxu0 0.0
    %4949 = vmatprep.subr.mxu0 0.0
    %4950 = vmatpush1.msra.mxu0 0.0
    %4951 = vmatprep.subr.mxu0 0.0
    %4952 = vmatpush1.msra.mxu0 0.0
    %4953 = vmatprep.subr.mxu0 0.0
    %4954 = vmatpush1.msra.mxu0 0.0
    %4955 = vmatprep.subr.mxu0 0.0
    %4956 = vmatpush1.msra.mxu0 0.0
    %4957 = vmatprep.subr.mxu0 0.0
    %4958 = vmatpush1.msra.mxu0 0.0
    %4959 = vmatprep.subr.mxu0 0.0
    %4960 = vmatpush1.msra.mxu0 0.0
    %4961 = vmatprep.subr.mxu0 0.0
    %4962 = vmatpush1.msra.mxu0 0.0
    %4963 = vmatprep.subr.mxu0 0.0
    %4964 = vmatpush1.msra.mxu0 0.0
    %4965 = vmatprep.subr.mxu0 0.0
    %4966 = vmatpush1.msra.mxu0 0.0
    %4967 = vmatprep.subr.mxu0 0.0
    %4968 = vmatpush1.msra.mxu0 0.0
    %4969 = vmatprep.subr.mxu0 0.0
    %4970 = vmatpush1.msra.mxu0 %v4180
    %4971 = vmatprep.subr.mxu0 0.0
    %4972 = vmatpush2.msra.mxu0 0.0
    %4973 = vmatprep.subr.mxu0 0.0
    %4974 = vmatpush2.msra.mxu0 0.0
    %4975 = vmatprep.subr.mxu0 0.0
    %4976 = vmatpush2.msra.mxu0 0.0
    %4977 = vmatprep.subr.mxu0 0.0
    %4978 = vmatpush2.msra.mxu0 0.0
    %4979 = vmatprep.subr.mxu0 0.0
    %4980 = vmatpush2.msra.mxu0 0.0
    %4981 = vmatprep.subr.mxu0 0.0
    %4982 = vmatpush2.msra.mxu0 0.0
    %4983 = vmatprep.subr.mxu0 0.0
    %4984 = vmatpush2.msra.mxu0 0.0
    %4985 = vmatprep.subr.mxu0 0.0
    %4986 = vmatpush2.msra.mxu0 0.0
    %4987 = vmatprep.subr.mxu0 0.0
    %4988 = vmatpush2.msra.mxu0 0.0
    %4989 = vmatprep.subr.mxu0 0.0
    %4990 = vmatpush2.msra.mxu0 0.0
    %4991 = vmatprep.subr.mxu0 0.0
    %4992 = vmatpush2.msra.mxu0 0.0
    %4993 = vmatprep.subr.mxu0 0.0
    %4994 = vmatpush2.msra.mxu0 0.0
    %4995 = vmatprep.subr.mxu0 0.0
    %4996 = vmatpush2.msra.mxu0 0.0
    %4997 = vmatprep.subr.mxu0 0.0
    %4998 = vmatpush2.msra.mxu0 0.0
    %4999 = vmatprep.subr.mxu0 0.0
    %5000 = vmatpush2.msra.mxu0 0.0
    %5001 = vmatprep.subr.mxu0 0.0
    %5002 = vmatpush2.msra.mxu0 0.0
    %5003 = vmatprep.mubr.f32.mxu0 0.0
    %5004 = vmatmul.mubr.f32.gmra.mxu0 %v4934
    %v5005 = vpop.f32.mrf.mxu0
    %v5006 = vadd.f32 0.0, %v5005
    %v5007 = vpop.f32.mrf.mxu0
    %5008 = vmatprep.mubr.f32.mxu0 0.0
    %5009 = vmatmul.mubr.f32.gmra.mxu0 %v4937
    %v5010 = vpop.f32.mrf.mxu0
    %v5011 = vadd.f32 0.0, %v5010
    %v5012 = vpop.f32.mrf.mxu0
    %5013 = vdwg.mxu0
    %v5014 = vadd.f32 %v4599, %v5006
    %v5015 = vadd.f32 %v4600, %v5011
    %5016 = vrot.lane.b32.xlu0 %v4171, 112
    %v5017 = vpop.permute.xlu0 %5016
    %5018 = vrot.lane.b32.xlu0 %v4171, 80
    %v5019 = vpop.permute.xlu0 %5018
    %v5020 = vsel %vm217, %v5017, 0
    %v5022 = vsel %vm217, %v5019, 0
    %5024 = vmatprep.subr.mxu0 0.0
    %5025 = vmatpush1.xpose.msra.mxu0 0.0
    %5026 = vmatprep.subr.mxu0 0.0
    %5027 = vmatpush1.xpose.msra.mxu0 0.0
    %5028 = vmatprep.subr.mxu0 0.0
    %5029 = vmatpush1.xpose.msra.mxu0 0.0
    %5030 = vmatprep.subr.mxu0 0.0
    %5031 = vmatpush1.xpose.msra.mxu0 0.0
    %5032 = vmatprep.subr.mxu0 0.0
    %5033 = vmatpush1.xpose.msra.mxu0 0.0
    %5034 = vmatprep.subr.mxu0 0.0
    %5035 = vmatpush1.xpose.msra.mxu0 0.0
    %5036 = vmatprep.subr.mxu0 0.0
    %5037 = vmatpush1.xpose.msra.mxu0 0.0
    %5038 = vmatprep.subr.mxu0 0.0
    %5039 = vmatpush1.xpose.msra.mxu0 0.0
    %5040 = vmatprep.subr.mxu0 0.0
    %5041 = vmatpush1.xpose.msra.mxu0 0.0
    %5042 = vmatprep.subr.mxu0 0.0
    %5043 = vmatpush1.xpose.msra.mxu0 0.0
    %5044 = vmatprep.subr.mxu0 0.0
    %5045 = vmatpush1.xpose.msra.mxu0 0.0
    %5046 = vmatprep.subr.mxu0 0.0
    %5047 = vmatpush1.xpose.msra.mxu0 0.0
    %5048 = vmatprep.subr.mxu0 0.0
    %5049 = vmatpush1.xpose.msra.mxu0 0.0
    %5050 = vmatprep.subr.mxu0 0.0
    %5051 = vmatpush1.xpose.msra.mxu0 0.0
    %5052 = vmatprep.subr.mxu0 0.0
    %5053 = vmatpush1.xpose.msra.mxu0 0.0
    %5054 = vmatprep.subr.mxu0 0.0
    %5055 = vmatpush1.xpose.msra.mxu0 %v5022
    %5056 = vmatprep.subr.mxu0 0.0
    %5057 = vmatpush2.xpose.msra.mxu0 0.0
    %5058 = vmatprep.subr.mxu0 0.0
    %5059 = vmatpush2.xpose.msra.mxu0 0.0
    %5060 = vmatprep.subr.mxu0 0.0
    %5061 = vmatpush2.xpose.msra.mxu0 0.0
    %5062 = vmatprep.subr.mxu0 0.0
    %5063 = vmatpush2.xpose.msra.mxu0 0.0
    %5064 = vmatprep.subr.mxu0 0.0
    %5065 = vmatpush2.xpose.msra.mxu0 0.0
    %5066 = vmatprep.subr.mxu0 0.0
    %5067 = vmatpush2.xpose.msra.mxu0 0.0
    %5068 = vmatprep.subr.mxu0 0.0
    %5069 = vmatpush2.xpose.msra.mxu0 0.0
    %5070 = vmatprep.subr.mxu0 0.0
    %5071 = vmatpush2.xpose.msra.mxu0 0.0
    %5072 = vmatprep.subr.mxu0 0.0
    %5073 = vmatpush2.xpose.msra.mxu0 0.0
    %5074 = vmatprep.subr.mxu0 0.0
    %5075 = vmatpush2.xpose.msra.mxu0 0.0
    %5076 = vmatprep.subr.mxu0 0.0
    %5077 = vmatpush2.xpose.msra.mxu0 0.0
    %5078 = vmatprep.subr.mxu0 0.0
    %5079 = vmatpush2.xpose.msra.mxu0 0.0
    %5080 = vmatprep.subr.mxu0 0.0
    %5081 = vmatpush2.xpose.msra.mxu0 0.0
    %5082 = vmatprep.subr.mxu0 0.0
    %5083 = vmatpush2.xpose.msra.mxu0 0.0
    %5084 = vmatprep.subr.mxu0 0.0
    %5085 = vmatpush2.xpose.msra.mxu0 0.0
    %5086 = vmatprep.subr.mxu0 0.0
    %5087 = vmatpush2.xpose.msra.mxu0 0.0
    %5088 = vmatprep.mubr.f32.mxu0 0.0
    %5089 = vmatmul.mubr.f32.gmra.mxu0 %v5020
    %v5090 = vpop.f32.mrf.mxu0
    %v5091 = vadd.f32 %v60, %v5090
    %v5092 = vpop.f32.mrf.mxu0
    %5093 = vdwg.mxu0
    %5094 = vrot.lane.b32.xlu0 %v4176, 112
    %v5095 = vpop.permute.xlu0 %5094
    %5096 = vrot.lane.b32.xlu0 %v4176, 80
    %v5097 = vpop.permute.xlu0 %5096
    %v5098 = vsel %vm217, %v5095, 0
    %v5100 = vsel %vm217, %v5097, 0
    %5102 = vmatprep.subr.mxu0 0.0
    %5103 = vmatpush1.xpose.msra.mxu0 0.0
    %5104 = vmatprep.subr.mxu0 0.0
    %5105 = vmatpush1.xpose.msra.mxu0 0.0
    %5106 = vmatprep.subr.mxu0 0.0
    %5107 = vmatpush1.xpose.msra.mxu0 0.0
    %5108 = vmatprep.subr.mxu0 0.0
    %5109 = vmatpush1.xpose.msra.mxu0 0.0
    %5110 = vmatprep.subr.mxu0 0.0
    %5111 = vmatpush1.xpose.msra.mxu0 0.0
    %5112 = vmatprep.subr.mxu0 0.0
    %5113 = vmatpush1.xpose.msra.mxu0 0.0
    %5114 = vmatprep.subr.mxu0 0.0
    %5115 = vmatpush1.xpose.msra.mxu0 0.0
    %5116 = vmatprep.subr.mxu0 0.0
    %5117 = vmatpush1.xpose.msra.mxu0 0.0
    %5118 = vmatprep.subr.mxu0 0.0
    %5119 = vmatpush1.xpose.msra.mxu0 0.0
    %5120 = vmatprep.subr.mxu0 0.0
    %5121 = vmatpush1.xpose.msra.mxu0 0.0
    %5122 = vmatprep.subr.mxu0 0.0
    %5123 = vmatpush1.xpose.msra.mxu0 0.0
    %5124 = vmatprep.subr.mxu0 0.0
    %5125 = vmatpush1.xpose.msra.mxu0 0.0
    %5126 = vmatprep.subr.mxu0 0.0
    %5127 = vmatpush1.xpose.msra.mxu0 0.0
    %5128 = vmatprep.subr.mxu0 0.0
    %5129 = vmatpush1.xpose.msra.mxu0 0.0
    %5130 = vmatprep.subr.mxu0 0.0
    %5131 = vmatpush1.xpose.msra.mxu0 0.0
    %5132 = vmatprep.subr.mxu0 0.0
    %5133 = vmatpush1.xpose.msra.mxu0 %v5100
    %5134 = vmatprep.subr.mxu0 0.0
    %5135 = vmatpush2.xpose.msra.mxu0 0.0
    %5136 = vmatprep.subr.mxu0 0.0
    %5137 = vmatpush2.xpose.msra.mxu0 0.0
    %5138 = vmatprep.subr.mxu0 0.0
    %5139 = vmatpush2.xpose.msra.mxu0 0.0
    %5140 = vmatprep.subr.mxu0 0.0
    %5141 = vmatpush2.xpose.msra.mxu0 0.0
    %5142 = vmatprep.subr.mxu0 0.0
    %5143 = vmatpush2.xpose.msra.mxu0 0.0
    %5144 = vmatprep.subr.mxu0 0.0
    %5145 = vmatpush2.xpose.msra.mxu0 0.0
    %5146 = vmatprep.subr.mxu0 0.0
    %5147 = vmatpush2.xpose.msra.mxu0 0.0
    %5148 = vmatprep.subr.mxu0 0.0
    %5149 = vmatpush2.xpose.msra.mxu0 0.0
    %5150 = vmatprep.subr.mxu0 0.0
    %5151 = vmatpush2.xpose.msra.mxu0 0.0
    %5152 = vmatprep.subr.mxu0 0.0
    %5153 = vmatpush2.xpose.msra.mxu0 0.0
    %5154 = vmatprep.subr.mxu0 0.0
    %5155 = vmatpush2.xpose.msra.mxu0 0.0
    %5156 = vmatprep.subr.mxu0 0.0
    %5157 = vmatpush2.xpose.msra.mxu0 0.0
    %5158 = vmatprep.subr.mxu0 0.0
    %5159 = vmatpush2.xpose.msra.mxu0 0.0
    %5160 = vmatprep.subr.mxu0 0.0
    %5161 = vmatpush2.xpose.msra.mxu0 0.0
    %5162 = vmatprep.subr.mxu0 0.0
    %5163 = vmatpush2.xpose.msra.mxu0 0.0
    %5164 = vmatprep.subr.mxu0 0.0
    %5165 = vmatpush2.xpose.msra.mxu0 0.0
    %5166 = vmatprep.mubr.f32.mxu0 0.0
    %5167 = vmatmul.mubr.f32.gmra.mxu0 %v5098
    %v5168 = vpop.f32.mrf.mxu0
    %v5169 = vadd.f32 %v61, %v5168
    %v5170 = vpop.f32.mrf.mxu0
    %5171 = vdwg.mxu0
    %v5172 = vsel %vm217, %v5091, -inf
    %5173 = vmax.xlane.f32.xlu0 %v5172
    %v5174 = vpop.xlane.xlu0 %5173
    %v5175 = vsel %vm217, %v5169, -inf
    %5176 = vmax.xlane.f32.xlu0 %v5175
    %v5177 = vpop.xlane.xlu0 %5176
    %v5178 = vsub.f32 %v5091, %v5174
    %v5179 = vsub.f32 %v5169, %v5177
    %v5180 = vmul.f32 %v5178, 1.442695
    %v5181 = vpow.pop %v5180
    %v5182 = vmul.f32 %v5179, 1.442695
    %v5183 = vpow.pop %v5182
    %v5184 = vsel %vm217, %v5181, 0.0
    %5185 = vadd.xlane.f32.xlu0 %v5184
    %v5186 = vpop.xlane.xlu0 %5185
    %v5187 = vsel %vm217, %v5183, 0.0
    %5188 = vadd.xlane.f32.xlu0 %v5187
    %v5189 = vpop.xlane.xlu0 %5188
    %v5190 = vrcp.pop %v5186
    %v5191 = vmul.f32 1.0, %v5190
    %v5192 = vrcp.pop %v5189
    %v5193 = vmul.f32 1.0, %v5192
    %v5194 = vmul.f32 %v5181, %v5191
    %v5195 = vmul.f32 %v5183, %v5193
    %5196 = vrot.lane.b32.xlu0 %v4171, 48
    %v5197 = vpop.permute.xlu0 %5196
    %v5200 = vsel %vm217, %v5194, 0
    %5202 = vmatprep.subr.mxu0 0.0
    %5203 = vmatpush1.msra.mxu0 0.0
    %5204 = vmatprep.subr.mxu0 0.0
    %5205 = vmatpush1.msra.mxu0 0.0
    %5206 = vmatprep.subr.mxu0 0.0
    %5207 = vmatpush1.msra.mxu0 0.0
    %5208 = vmatprep.subr.mxu0 0.0
    %5209 = vmatpush1.msra.mxu0 0.0
    %5210 = vmatprep.subr.mxu0 0.0
    %5211 = vmatpush1.msra.mxu0 0.0
    %5212 = vmatprep.subr.mxu0 0.0
    %5213 = vmatpush1.msra.mxu0 0.0
    %5214 = vmatprep.subr.mxu0 0.0
    %5215 = vmatpush1.msra.mxu0 0.0
    %5216 = vmatprep.subr.mxu0 0.0
    %5217 = vmatpush1.msra.mxu0 0.0
    %5218 = vmatprep.subr.mxu0 0.0
    %5219 = vmatpush1.msra.mxu0 0.0
    %5220 = vmatprep.subr.mxu0 0.0
    %5221 = vmatpush1.msra.mxu0 0.0
    %5222 = vmatprep.subr.mxu0 0.0
    %5223 = vmatpush1.msra.mxu0 0.0
    %5224 = vmatprep.subr.mxu0 0.0
    %5225 = vmatpush1.msra.mxu0 0.0
    %5226 = vmatprep.subr.mxu0 0.0
    %5227 = vmatpush1.msra.mxu0 0.0
    %5228 = vmatprep.subr.mxu0 0.0
    %5229 = vmatpush1.msra.mxu0 0.0
    %5230 = vmatprep.subr.mxu0 0.0
    %5231 = vmatpush1.msra.mxu0 0.0
    %5232 = vmatprep.subr.mxu0 0.0
    %5233 = vmatpush1.msra.mxu0 %v5197
    %5234 = vmatprep.subr.mxu0 0.0
    %5235 = vmatpush2.msra.mxu0 0.0
    %5236 = vmatprep.subr.mxu0 0.0
    %5237 = vmatpush2.msra.mxu0 0.0
    %5238 = vmatprep.subr.mxu0 0.0
    %5239 = vmatpush2.msra.mxu0 0.0
    %5240 = vmatprep.subr.mxu0 0.0
    %5241 = vmatpush2.msra.mxu0 0.0
    %5242 = vmatprep.subr.mxu0 0.0
    %5243 = vmatpush2.msra.mxu0 0.0
    %5244 = vmatprep.subr.mxu0 0.0
    %5245 = vmatpush2.msra.mxu0 0.0
    %5246 = vmatprep.subr.mxu0 0.0
    %5247 = vmatpush2.msra.mxu0 0.0
    %5248 = vmatprep.subr.mxu0 0.0
    %5249 = vmatpush2.msra.mxu0 0.0
    %5250 = vmatprep.subr.mxu0 0.0
    %5251 = vmatpush2.msra.mxu0 0.0
    %5252 = vmatprep.subr.mxu0 0.0
    %5253 = vmatpush2.msra.mxu0 0.0
    %5254 = vmatprep.subr.mxu0 0.0
    %5255 = vmatpush2.msra.mxu0 0.0
    %5256 = vmatprep.subr.mxu0 0.0
    %5257 = vmatpush2.msra.mxu0 0.0
    %5258 = vmatprep.subr.mxu0 0.0
    %5259 = vmatpush2.msra.mxu0 0.0
    %5260 = vmatprep.subr.mxu0 0.0
    %5261 = vmatpush2.msra.mxu0 0.0
    %5262 = vmatprep.subr.mxu0 0.0
    %5263 = vmatpush2.msra.mxu0 0.0
    %5264 = vmatprep.subr.mxu0 0.0
    %5265 = vmatpush2.msra.mxu0 0.0
    %5266 = vmatprep.mubr.f32.mxu0 0.0
    %5267 = vmatmul.mubr.f32.gmra.mxu0 %v5200
    %v5268 = vpop.f32.mrf.mxu0
    %v5269 = vadd.f32 0.0, %v5268
    %v5270 = vpop.f32.mrf.mxu0
    %5271 = vdwg.mxu0
    %5272 = vrot.lane.b32.xlu0 %v4176, 48
    %v5273 = vpop.permute.xlu0 %5272
    %v5276 = vsel %vm217, %v5195, 0
    %5278 = vmatprep.subr.mxu0 0.0
    %5279 = vmatpush1.msra.mxu0 0.0
    %5280 = vmatprep.subr.mxu0 0.0
    %5281 = vmatpush1.msra.mxu0 0.0
    %5282 = vmatprep.subr.mxu0 0.0
    %5283 = vmatpush1.msra.mxu0 0.0
    %5284 = vmatprep.subr.mxu0 0.0
    %5285 = vmatpush1.msra.mxu0 0.0
    %5286 = vmatprep.subr.mxu0 0.0
    %5287 = vmatpush1.msra.mxu0 0.0
    %5288 = vmatprep.subr.mxu0 0.0
    %5289 = vmatpush1.msra.mxu0 0.0
    %5290 = vmatprep.subr.mxu0 0.0
    %5291 = vmatpush1.msra.mxu0 0.0
    %5292 = vmatprep.subr.mxu0 0.0
    %5293 = vmatpush1.msra.mxu0 0.0
    %5294 = vmatprep.subr.mxu0 0.0
    %5295 = vmatpush1.msra.mxu0 0.0
    %5296 = vmatprep.subr.mxu0 0.0
    %5297 = vmatpush1.msra.mxu0 0.0
    %5298 = vmatprep.subr.mxu0 0.0
    %5299 = vmatpush1.msra.mxu0 0.0
    %5300 = vmatprep.subr.mxu0 0.0
    %5301 = vmatpush1.msra.mxu0 0.0
    %5302 = vmatprep.subr.mxu0 0.0
    %5303 = vmatpush1.msra.mxu0 0.0
    %5304 = vmatprep.subr.mxu0 0.0
    %5305 = vmatpush1.msra.mxu0 0.0
    %5306 = vmatprep.subr.mxu0 0.0
    %5307 = vmatpush1.msra.mxu0 0.0
    %5308 = vmatprep.subr.mxu0 0.0
    %5309 = vmatpush1.msra.mxu0 %v5273
    %5310 = vmatprep.subr.mxu0 0.0
    %5311 = vmatpush2.msra.mxu0 0.0
    %5312 = vmatprep.subr.mxu0 0.0
    %5313 = vmatpush2.msra.mxu0 0.0
    %5314 = vmatprep.subr.mxu0 0.0
    %5315 = vmatpush2.msra.mxu0 0.0
    %5316 = vmatprep.subr.mxu0 0.0
    %5317 = vmatpush2.msra.mxu0 0.0
    %5318 = vmatprep.subr.mxu0 0.0
    %5319 = vmatpush2.msra.mxu0 0.0
    %5320 = vmatprep.subr.mxu0 0.0
    %5321 = vmatpush2.msra.mxu0 0.0
    %5322 = vmatprep.subr.mxu0 0.0
    %5323 = vmatpush2.msra.mxu0 0.0
    %5324 = vmatprep.subr.mxu0 0.0
    %5325 = vmatpush2.msra.mxu0 0.0
    %5326 = vmatprep.subr.mxu0 0.0
    %5327 = vmatpush2.msra.mxu0 0.0
    %5328 = vmatprep.subr.mxu0 0.0
    %5329 = vmatpush2.msra.mxu0 0.0
    %5330 = vmatprep.subr.mxu0 0.0
    %5331 = vmatpush2.msra.mxu0 0.0
    %5332 = vmatprep.subr.mxu0 0.0
    %5333 = vmatpush2.msra.mxu0 0.0
    %5334 = vmatprep.subr.mxu0 0.0
    %5335 = vmatpush2.msra.mxu0 0.0
    %5336 = vmatprep.subr.mxu0 0.0
    %5337 = vmatpush2.msra.mxu0 0.0
    %5338 = vmatprep.subr.mxu0 0.0
    %5339 = vmatpush2.msra.mxu0 0.0
    %5340 = vmatprep.subr.mxu0 0.0
    %5341 = vmatpush2.msra.mxu0 0.0
    %5342 = vmatprep.mubr.f32.mxu0 0.0
    %5343 = vmatmul.mubr.f32.gmra.mxu0 %v5276
    %v5344 = vpop.f32.mrf.mxu0
    %v5345 = vadd.f32 0.0, %v5344
    %v5346 = vpop.f32.mrf.mxu0
    %5347 = vdwg.mxu0
    %v5349 = vsel %vm217, %v5269, 0
    %v5352 = vsel %vm217, %v5345, 0
    %5354 = vmatprep.subr.mxu0 0.0
    %5355 = vmatpush1.msra.mxu0 0.0
    %5356 = vmatprep.subr.mxu0 0.0
    %5357 = vmatpush1.msra.mxu0 0.0
    %5358 = vmatprep.subr.mxu0 0.0
    %5359 = vmatpush1.msra.mxu0 0.0
    %5360 = vmatprep.subr.mxu0 0.0
    %5361 = vmatpush1.msra.mxu0 0.0
    %5362 = vmatprep.subr.mxu0 0.0
    %5363 = vmatpush1.msra.mxu0 0.0
    %5364 = vmatprep.subr.mxu0 0.0
    %5365 = vmatpush1.msra.mxu0 0.0
    %5366 = vmatprep.subr.mxu0 0.0
    %5367 = vmatpush1.msra.mxu0 0.0
    %5368 = vmatprep.subr.mxu0 0.0
    %5369 = vmatpush1.msra.mxu0 0.0
    %5370 = vmatprep.subr.mxu0 0.0
    %5371 = vmatpush1.msra.mxu0 0.0
    %5372 = vmatprep.subr.mxu0 0.0
    %5373 = vmatpush1.msra.mxu0 0.0
    %5374 = vmatprep.subr.mxu0 0.0
    %5375 = vmatpush1.msra.mxu0 0.0
    %5376 = vmatprep.subr.mxu0 0.0
    %5377 = vmatpush1.msra.mxu0 0.0
    %5378 = vmatprep.subr.mxu0 0.0
    %5379 = vmatpush1.msra.mxu0 0.0
    %5380 = vmatprep.subr.mxu0 0.0
    %5381 = vmatpush1.msra.mxu0 0.0
    %5382 = vmatprep.subr.mxu0 0.0
    %5383 = vmatpush1.msra.mxu0 0.0
    %5384 = vmatprep.subr.mxu0 0.0
    %5385 = vmatpush1.msra.mxu0 %v4181
    %5386 = vmatprep.subr.mxu0 0.0
    %5387 = vmatpush2.msra.mxu0 0.0
    %5388 = vmatprep.subr.mxu0 0.0
    %5389 = vmatpush2.msra.mxu0 0.0
    %5390 = vmatprep.subr.mxu0 0.0
    %5391 = vmatpush2.msra.mxu0 0.0
    %5392 = vmatprep.subr.mxu0 0.0
    %5393 = vmatpush2.msra.mxu0 0.0
    %5394 = vmatprep.subr.mxu0 0.0
    %5395 = vmatpush2.msra.mxu0 0.0
    %5396 = vmatprep.subr.mxu0 0.0
    %5397 = vmatpush2.msra.mxu0 0.0
    %5398 = vmatprep.subr.mxu0 0.0
    %5399 = vmatpush2.msra.mxu0 0.0
    %5400 = vmatprep.subr.mxu0 0.0
    %5401 = vmatpush2.msra.mxu0 0.0
    %5402 = vmatprep.subr.mxu0 0.0
    %5403 = vmatpush2.msra.mxu0 0.0
    %5404 = vmatprep.subr.mxu0 0.0
    %5405 = vmatpush2.msra.mxu0 0.0
    %5406 = vmatprep.subr.mxu0 0.0
    %5407 = vmatpush2.msra.mxu0 0.0
    %5408 = vmatprep.subr.mxu0 0.0
    %5409 = vmatpush2.msra.mxu0 0.0
    %5410 = vmatprep.subr.mxu0 0.0
    %5411 = vmatpush2.msra.mxu0 0.0
    %5412 = vmatprep.subr.mxu0 0.0
    %5413 = vmatpush2.msra.mxu0 0.0
    %5414 = vmatprep.subr.mxu0 0.0
    %5415 = vmatpush2.msra.mxu0 0.0
    %5416 = vmatprep.subr.mxu0 0.0
    %5417 = vmatpush2.msra.mxu0 0.0
    %5418 = vmatprep.mubr.f32.mxu0 0.0
    %5419 = vmatmul.mubr.f32.gmra.mxu0 %v5349
    %v5420 = vpop.f32.mrf.mxu0
    %v5421 = vadd.f32 0.0, %v5420
    %v5422 = vpop.f32.mrf.mxu0
    %5423 = vmatprep.mubr.f32.mxu0 0.0
    %5424 = vmatmul.mubr.f32.gmra.mxu0 %v5352
    %v5425 = vpop.f32.mrf.mxu0
    %v5426 = vadd.f32 0.0, %v5425
    %v5427 = vpop.f32.mrf.mxu0
    %5428 = vdwg.mxu0
    %v5429 = vadd.f32 %v5014, %v5421
    %v5430 = vadd.f32 %v5015, %v5426
    %5431 = vrot.lane.b32.xlu0 %v4171, 104
    %v5432 = vpop.permute.xlu0 %5431
    %5433 = vrot.lane.b32.xlu0 %v4171, 72
    %v5434 = vpop.permute.xlu0 %5433
    %v5435 = vsel %vm217, %v5432, 0
    %v5437 = vsel %vm217, %v5434, 0
    %5439 = vmatprep.subr.mxu0 0.0
    %5440 = vmatpush1.xpose.msra.mxu0 0.0
    %5441 = vmatprep.subr.mxu0 0.0
    %5442 = vmatpush1.xpose.msra.mxu0 0.0
    %5443 = vmatprep.subr.mxu0 0.0
    %5444 = vmatpush1.xpose.msra.mxu0 0.0
    %5445 = vmatprep.subr.mxu0 0.0
    %5446 = vmatpush1.xpose.msra.mxu0 0.0
    %5447 = vmatprep.subr.mxu0 0.0
    %5448 = vmatpush1.xpose.msra.mxu0 0.0
    %5449 = vmatprep.subr.mxu0 0.0
    %5450 = vmatpush1.xpose.msra.mxu0 0.0
    %5451 = vmatprep.subr.mxu0 0.0
    %5452 = vmatpush1.xpose.msra.mxu0 0.0
    %5453 = vmatprep.subr.mxu0 0.0
    %5454 = vmatpush1.xpose.msra.mxu0 0.0
    %5455 = vmatprep.subr.mxu0 0.0
    %5456 = vmatpush1.xpose.msra.mxu0 0.0
    %5457 = vmatprep.subr.mxu0 0.0
    %5458 = vmatpush1.xpose.msra.mxu0 0.0
    %5459 = vmatprep.subr.mxu0 0.0
    %5460 = vmatpush1.xpose.msra.mxu0 0.0
    %5461 = vmatprep.subr.mxu0 0.0
    %5462 = vmatpush1.xpose.msra.mxu0 0.0
    %5463 = vmatprep.subr.mxu0 0.0
    %5464 = vmatpush1.xpose.msra.mxu0 0.0
    %5465 = vmatprep.subr.mxu0 0.0
    %5466 = vmatpush1.xpose.msra.mxu0 0.0
    %5467 = vmatprep.subr.mxu0 0.0
    %5468 = vmatpush1.xpose.msra.mxu0 0.0
    %5469 = vmatprep.subr.mxu0 0.0
    %5470 = vmatpush1.xpose.msra.mxu0 %v5437
    %5471 = vmatprep.subr.mxu0 0.0
    %5472 = vmatpush2.xpose.msra.mxu0 0.0
    %5473 = vmatprep.subr.mxu0 0.0
    %5474 = vmatpush2.xpose.msra.mxu0 0.0
    %5475 = vmatprep.subr.mxu0 0.0
    %5476 = vmatpush2.xpose.msra.mxu0 0.0
    %5477 = vmatprep.subr.mxu0 0.0
    %5478 = vmatpush2.xpose.msra.mxu0 0.0
    %5479 = vmatprep.subr.mxu0 0.0
    %5480 = vmatpush2.xpose.msra.mxu0 0.0
    %5481 = vmatprep.subr.mxu0 0.0
    %5482 = vmatpush2.xpose.msra.mxu0 0.0
    %5483 = vmatprep.subr.mxu0 0.0
    %5484 = vmatpush2.xpose.msra.mxu0 0.0
    %5485 = vmatprep.subr.mxu0 0.0
    %5486 = vmatpush2.xpose.msra.mxu0 0.0
    %5487 = vmatprep.subr.mxu0 0.0
    %5488 = vmatpush2.xpose.msra.mxu0 0.0
    %5489 = vmatprep.subr.mxu0 0.0
    %5490 = vmatpush2.xpose.msra.mxu0 0.0
    %5491 = vmatprep.subr.mxu0 0.0
    %5492 = vmatpush2.xpose.msra.mxu0 0.0
    %5493 = vmatprep.subr.mxu0 0.0
    %5494 = vmatpush2.xpose.msra.mxu0 0.0
    %5495 = vmatprep.subr.mxu0 0.0
    %5496 = vmatpush2.xpose.msra.mxu0 0.0
    %5497 = vmatprep.subr.mxu0 0.0
    %5498 = vmatpush2.xpose.msra.mxu0 0.0
    %5499 = vmatprep.subr.mxu0 0.0
    %5500 = vmatpush2.xpose.msra.mxu0 0.0
    %5501 = vmatprep.subr.mxu0 0.0
    %5502 = vmatpush2.xpose.msra.mxu0 0.0
    %5503 = vmatprep.mubr.f32.mxu0 0.0
    %5504 = vmatmul.mubr.f32.gmra.mxu0 %v5435
    %v5505 = vpop.f32.mrf.mxu0
    %v5506 = vadd.f32 %v60, %v5505
    %v5507 = vpop.f32.mrf.mxu0
    %5508 = vdwg.mxu0
    %5509 = vrot.lane.b32.xlu0 %v4176, 104
    %v5510 = vpop.permute.xlu0 %5509
    %5511 = vrot.lane.b32.xlu0 %v4176, 72
    %v5512 = vpop.permute.xlu0 %5511
    %v5513 = vsel %vm217, %v5510, 0
    %v5515 = vsel %vm217, %v5512, 0
    %5517 = vmatprep.subr.mxu0 0.0
    %5518 = vmatpush1.xpose.msra.mxu0 0.0
    %5519 = vmatprep.subr.mxu0 0.0
    %5520 = vmatpush1.xpose.msra.mxu0 0.0
    %5521 = vmatprep.subr.mxu0 0.0
    %5522 = vmatpush1.xpose.msra.mxu0 0.0
    %5523 = vmatprep.subr.mxu0 0.0
    %5524 = vmatpush1.xpose.msra.mxu0 0.0
    %5525 = vmatprep.subr.mxu0 0.0
    %5526 = vmatpush1.xpose.msra.mxu0 0.0
    %5527 = vmatprep.subr.mxu0 0.0
    %5528 = vmatpush1.xpose.msra.mxu0 0.0
    %5529 = vmatprep.subr.mxu0 0.0
    %5530 = vmatpush1.xpose.msra.mxu0 0.0
    %5531 = vmatprep.subr.mxu0 0.0
    %5532 = vmatpush1.xpose.msra.mxu0 0.0
    %5533 = vmatprep.subr.mxu0 0.0
    %5534 = vmatpush1.xpose.msra.mxu0 0.0
    %5535 = vmatprep.subr.mxu0 0.0
    %5536 = vmatpush1.xpose.msra.mxu0 0.0
    %5537 = vmatprep.subr.mxu0 0.0
    %5538 = vmatpush1.xpose.msra.mxu0 0.0
    %5539 = vmatprep.subr.mxu0 0.0
    %5540 = vmatpush1.xpose.msra.mxu0 0.0
    %5541 = vmatprep.subr.mxu0 0.0
    %5542 = vmatpush1.xpose.msra.mxu0 0.0
    %5543 = vmatprep.subr.mxu0 0.0
    %5544 = vmatpush1.xpose.msra.mxu0 0.0
    %5545 = vmatprep.subr.mxu0 0.0
    %5546 = vmatpush1.xpose.msra.mxu0 0.0
    %5547 = vmatprep.subr.mxu0 0.0
    %5548 = vmatpush1.xpose.msra.mxu0 %v5515
    %5549 = vmatprep.subr.mxu0 0.0
    %5550 = vmatpush2.xpose.msra.mxu0 0.0
    %5551 = vmatprep.subr.mxu0 0.0
    %5552 = vmatpush2.xpose.msra.mxu0 0.0
    %5553 = vmatprep.subr.mxu0 0.0
    %5554 = vmatpush2.xpose.msra.mxu0 0.0
    %5555 = vmatprep.subr.mxu0 0.0
    %5556 = vmatpush2.xpose.msra.mxu0 0.0
    %5557 = vmatprep.subr.mxu0 0.0
    %5558 = vmatpush2.xpose.msra.mxu0 0.0
    %5559 = vmatprep.subr.mxu0 0.0
    %5560 = vmatpush2.xpose.msra.mxu0 0.0
    %5561 = vmatprep.subr.mxu0 0.0
    %5562 = vmatpush2.xpose.msra.mxu0 0.0
    %5563 = vmatprep.subr.mxu0 0.0
    %5564 = vmatpush2.xpose.msra.mxu0 0.0
    %5565 = vmatprep.subr.mxu0 0.0
    %5566 = vmatpush2.xpose.msra.mxu0 0.0
    %5567 = vmatprep.subr.mxu0 0.0
    %5568 = vmatpush2.xpose.msra.mxu0 0.0
    %5569 = vmatprep.subr.mxu0 0.0
    %5570 = vmatpush2.xpose.msra.mxu0 0.0
    %5571 = vmatprep.subr.mxu0 0.0
    %5572 = vmatpush2.xpose.msra.mxu0 0.0
    %5573 = vmatprep.subr.mxu0 0.0
    %5574 = vmatpush2.xpose.msra.mxu0 0.0
    %5575 = vmatprep.subr.mxu0 0.0
    %5576 = vmatpush2.xpose.msra.mxu0 0.0
    %5577 = vmatprep.subr.mxu0 0.0
    %5578 = vmatpush2.xpose.msra.mxu0 0.0
    %5579 = vmatprep.subr.mxu0 0.0
    %5580 = vmatpush2.xpose.msra.mxu0 0.0
    %5581 = vmatprep.mubr.f32.mxu0 0.0
    %5582 = vmatmul.mubr.f32.gmra.mxu0 %v5513
    %v5583 = vpop.f32.mrf.mxu0
    %v5584 = vadd.f32 %v61, %v5583
    %v5585 = vpop.f32.mrf.mxu0
    %5586 = vdwg.mxu0
    %v5587 = vsel %vm217, %v5506, -inf
    %5588 = vmax.xlane.f32.xlu0 %v5587
    %v5589 = vpop.xlane.xlu0 %5588
    %v5590 = vsel %vm217, %v5584, -inf
    %5591 = vmax.xlane.f32.xlu0 %v5590
    %v5592 = vpop.xlane.xlu0 %5591
    %v5593 = vsub.f32 %v5506, %v5589
    %v5594 = vsub.f32 %v5584, %v5592
    %v5595 = vmul.f32 %v5593, 1.442695
    %v5596 = vpow.pop %v5595
    %v5597 = vmul.f32 %v5594, 1.442695
    %v5598 = vpow.pop %v5597
    %v5599 = vsel %vm217, %v5596, 0.0
    %5600 = vadd.xlane.f32.xlu0 %v5599
    %v5601 = vpop.xlane.xlu0 %5600
    %v5602 = vsel %vm217, %v5598, 0.0
    %5603 = vadd.xlane.f32.xlu0 %v5602
    %v5604 = vpop.xlane.xlu0 %5603
    %v5605 = vrcp.pop %v5601
    %v5606 = vmul.f32 1.0, %v5605
    %v5607 = vrcp.pop %v5604
    %v5608 = vmul.f32 1.0, %v5607
    %v5609 = vmul.f32 %v5596, %v5606
    %v5610 = vmul.f32 %v5598, %v5608
    %5611 = vrot.lane.b32.xlu0 %v4171, 40
    %v5612 = vpop.permute.xlu0 %5611
    %v5615 = vsel %vm217, %v5609, 0
    %5617 = vmatprep.subr.mxu0 0.0
    %5618 = vmatpush1.msra.mxu0 0.0
    %5619 = vmatprep.subr.mxu0 0.0
    %5620 = vmatpush1.msra.mxu0 0.0
    %5621 = vmatprep.subr.mxu0 0.0
    %5622 = vmatpush1.msra.mxu0 0.0
    %5623 = vmatprep.subr.mxu0 0.0
    %5624 = vmatpush1.msra.mxu0 0.0
    %5625 = vmatprep.subr.mxu0 0.0
    %5626 = vmatpush1.msra.mxu0 0.0
    %5627 = vmatprep.subr.mxu0 0.0
    %5628 = vmatpush1.msra.mxu0 0.0
    %5629 = vmatprep.subr.mxu0 0.0
    %5630 = vmatpush1.msra.mxu0 0.0
    %5631 = vmatprep.subr.mxu0 0.0
    %5632 = vmatpush1.msra.mxu0 0.0
    %5633 = vmatprep.subr.mxu0 0.0
    %5634 = vmatpush1.msra.mxu0 0.0
    %5635 = vmatprep.subr.mxu0 0.0
    %5636 = vmatpush1.msra.mxu0 0.0
    %5637 = vmatprep.subr.mxu0 0.0
    %5638 = vmatpush1.msra.mxu0 0.0
    %5639 = vmatprep.subr.mxu0 0.0
    %5640 = vmatpush1.msra.mxu0 0.0
    %5641 = vmatprep.subr.mxu0 0.0
    %5642 = vmatpush1.msra.mxu0 0.0
    %5643 = vmatprep.subr.mxu0 0.0
    %5644 = vmatpush1.msra.mxu0 0.0
    %5645 = vmatprep.subr.mxu0 0.0
    %5646 = vmatpush1.msra.mxu0 0.0
    %5647 = vmatprep.subr.mxu0 0.0
    %5648 = vmatpush1.msra.mxu0 %v5612
    %5649 = vmatprep.subr.mxu0 0.0
    %5650 = vmatpush2.msra.mxu0 0.0
    %5651 = vmatprep.subr.mxu0 0.0
    %5652 = vmatpush2.msra.mxu0 0.0
    %5653 = vmatprep.subr.mxu0 0.0
    %5654 = vmatpush2.msra.mxu0 0.0
    %5655 = vmatprep.subr.mxu0 0.0
    %5656 = vmatpush2.msra.mxu0 0.0
    %5657 = vmatprep.subr.mxu0 0.0
    %5658 = vmatpush2.msra.mxu0 0.0
    %5659 = vmatprep.subr.mxu0 0.0
    %5660 = vmatpush2.msra.mxu0 0.0
    %5661 = vmatprep.subr.mxu0 0.0
    %5662 = vmatpush2.msra.mxu0 0.0
    %5663 = vmatprep.subr.mxu0 0.0
    %5664 = vmatpush2.msra.mxu0 0.0
    %5665 = vmatprep.subr.mxu0 0.0
    %5666 = vmatpush2.msra.mxu0 0.0
    %5667 = vmatprep.subr.mxu0 0.0
    %5668 = vmatpush2.msra.mxu0 0.0
    %5669 = vmatprep.subr.mxu0 0.0
    %5670 = vmatpush2.msra.mxu0 0.0
    %5671 = vmatprep.subr.mxu0 0.0
    %5672 = vmatpush2.msra.mxu0 0.0
    %5673 = vmatprep.subr.mxu0 0.0
    %5674 = vmatpush2.msra.mxu0 0.0
    %5675 = vmatprep.subr.mxu0 0.0
    %5676 = vmatpush2.msra.mxu0 0.0
    %5677 = vmatprep.subr.mxu0 0.0
    %5678 = vmatpush2.msra.mxu0 0.0
    %5679 = vmatprep.subr.mxu0 0.0
    %5680 = vmatpush2.msra.mxu0 0.0
    %5681 = vmatprep.mubr.f32.mxu0 0.0
    %5682 = vmatmul.mubr.f32.gmra.mxu0 %v5615
    %v5683 = vpop.f32.mrf.mxu0
    %v5684 = vadd.f32 0.0, %v5683
    %v5685 = vpop.f32.mrf.mxu0
    %5686 = vdwg.mxu0
    %5687 = vrot.lane.b32.xlu0 %v4176, 40
    %v5688 = vpop.permute.xlu0 %5687
    %v5691 = vsel %vm217, %v5610, 0
    %5693 = vmatprep.subr.mxu0 0.0
    %5694 = vmatpush1.msra.mxu0 0.0
    %5695 = vmatprep.subr.mxu0 0.0
    %5696 = vmatpush1.msra.mxu0 0.0
    %5697 = vmatprep.subr.mxu0 0.0
    %5698 = vmatpush1.msra.mxu0 0.0
    %5699 = vmatprep.subr.mxu0 0.0
    %5700 = vmatpush1.msra.mxu0 0.0
    %5701 = vmatprep.subr.mxu0 0.0
    %5702 = vmatpush1.msra.mxu0 0.0
    %5703 = vmatprep.subr.mxu0 0.0
    %5704 = vmatpush1.msra.mxu0 0.0
    %5705 = vmatprep.subr.mxu0 0.0
    %5706 = vmatpush1.msra.mxu0 0.0
    %5707 = vmatprep.subr.mxu0 0.0
    %5708 = vmatpush1.msra.mxu0 0.0
    %5709 = vmatprep.subr.mxu0 0.0
    %5710 = vmatpush1.msra.mxu0 0.0
    %5711 = vmatprep.subr.mxu0 0.0
    %5712 = vmatpush1.msra.mxu0 0.0
    %5713 = vmatprep.subr.mxu0 0.0
    %5714 = vmatpush1.msra.mxu0 0.0
    %5715 = vmatprep.subr.mxu0 0.0
    %5716 = vmatpush1.msra.mxu0 0.0
    %5717 = vmatprep.subr.mxu0 0.0
    %5718 = vmatpush1.msra.mxu0 0.0
    %5719 = vmatprep.subr.mxu0 0.0
    %5720 = vmatpush1.msra.mxu0 0.0
    %5721 = vmatprep.subr.mxu0 0.0
    %5722 = vmatpush1.msra.mxu0 0.0
    %5723 = vmatprep.subr.mxu0 0.0
    %5724 = vmatpush1.msra.mxu0 %v5688
    %5725 = vmatprep.subr.mxu0 0.0
    %5726 = vmatpush2.msra.mxu0 0.0
    %5727 = vmatprep.subr.mxu0 0.0
    %5728 = vmatpush2.msra.mxu0 0.0
    %5729 = vmatprep.subr.mxu0 0.0
    %5730 = vmatpush2.msra.mxu0 0.0
    %5731 = vmatprep.subr.mxu0 0.0
    %5732 = vmatpush2.msra.mxu0 0.0
    %5733 = vmatprep.subr.mxu0 0.0
    %5734 = vmatpush2.msra.mxu0 0.0
    %5735 = vmatprep.subr.mxu0 0.0
    %5736 = vmatpush2.msra.mxu0 0.0
    %5737 = vmatprep.subr.mxu0 0.0
    %5738 = vmatpush2.msra.mxu0 0.0
    %5739 = vmatprep.subr.mxu0 0.0
    %5740 = vmatpush2.msra.mxu0 0.0
    %5741 = vmatprep.subr.mxu0 0.0
    %5742 = vmatpush2.msra.mxu0 0.0
    %5743 = vmatprep.subr.mxu0 0.0
    %5744 = vmatpush2.msra.mxu0 0.0
    %5745 = vmatprep.subr.mxu0 0.0
    %5746 = vmatpush2.msra.mxu0 0.0
    %5747 = vmatprep.subr.mxu0 0.0
    %5748 = vmatpush2.msra.mxu0 0.0
    %5749 = vmatprep.subr.mxu0 0.0
    %5750 = vmatpush2.msra.mxu0 0.0
    %5751 = vmatprep.subr.mxu0 0.0
    %5752 = vmatpush2.msra.mxu0 0.0
    %5753 = vmatprep.subr.mxu0 0.0
    %5754 = vmatpush2.msra.mxu0 0.0
    %5755 = vmatprep.subr.mxu0 0.0
    %5756 = vmatpush2.msra.mxu0 0.0
    %5757 = vmatprep.mubr.f32.mxu0 0.0
    %5758 = vmatmul.mubr.f32.gmra.mxu0 %v5691
    %v5759 = vpop.f32.mrf.mxu0
    %v5760 = vadd.f32 0.0, %v5759
    %v5761 = vpop.f32.mrf.mxu0
    %5762 = vdwg.mxu0
    %v5764 = vsel %vm217, %v5684, 0
    %v5767 = vsel %vm217, %v5760, 0
    %5769 = vmatprep.subr.mxu0 0.0
    %5770 = vmatpush1.msra.mxu0 0.0
    %5771 = vmatprep.subr.mxu0 0.0
    %5772 = vmatpush1.msra.mxu0 0.0
    %5773 = vmatprep.subr.mxu0 0.0
    %5774 = vmatpush1.msra.mxu0 0.0
    %5775 = vmatprep.subr.mxu0 0.0
    %5776 = vmatpush1.msra.mxu0 0.0
    %5777 = vmatprep.subr.mxu0 0.0
    %5778 = vmatpush1.msra.mxu0 0.0
    %5779 = vmatprep.subr.mxu0 0.0
    %5780 = vmatpush1.msra.mxu0 0.0
    %5781 = vmatprep.subr.mxu0 0.0
    %5782 = vmatpush1.msra.mxu0 0.0
    %5783 = vmatprep.subr.mxu0 0.0
    %5784 = vmatpush1.msra.mxu0 0.0
    %5785 = vmatprep.subr.mxu0 0.0
    %5786 = vmatpush1.msra.mxu0 0.0
    %5787 = vmatprep.subr.mxu0 0.0
    %5788 = vmatpush1.msra.mxu0 0.0
    %5789 = vmatprep.subr.mxu0 0.0
    %5790 = vmatpush1.msra.mxu0 0.0
    %5791 = vmatprep.subr.mxu0 0.0
    %5792 = vmatpush1.msra.mxu0 0.0
    %5793 = vmatprep.subr.mxu0 0.0
    %5794 = vmatpush1.msra.mxu0 0.0
    %5795 = vmatprep.subr.mxu0 0.0
    %5796 = vmatpush1.msra.mxu0 0.0
    %5797 = vmatprep.subr.mxu0 0.0
    %5798 = vmatpush1.msra.mxu0 0.0
    %5799 = vmatprep.subr.mxu0 0.0
    %5800 = vmatpush1.msra.mxu0 %v4182
    %5801 = vmatprep.subr.mxu0 0.0
    %5802 = vmatpush2.msra.mxu0 0.0
    %5803 = vmatprep.subr.mxu0 0.0
    %5804 = vmatpush2.msra.mxu0 0.0
    %5805 = vmatprep.subr.mxu0 0.0
    %5806 = vmatpush2.msra.mxu0 0.0
    %5807 = vmatprep.subr.mxu0 0.0
    %5808 = vmatpush2.msra.mxu0 0.0
    %5809 = vmatprep.subr.mxu0 0.0
    %5810 = vmatpush2.msra.mxu0 0.0
    %5811 = vmatprep.subr.mxu0 0.0
    %5812 = vmatpush2.msra.mxu0 0.0
    %5813 = vmatprep.subr.mxu0 0.0
    %5814 = vmatpush2.msra.mxu0 0.0
    %5815 = vmatprep.subr.mxu0 0.0
    %5816 = vmatpush2.msra.mxu0 0.0
    %5817 = vmatprep.subr.mxu0 0.0
    %5818 = vmatpush2.msra.mxu0 0.0
    %5819 = vmatprep.subr.mxu0 0.0
    %5820 = vmatpush2.msra.mxu0 0.0
    %5821 = vmatprep.subr.mxu0 0.0
    %5822 = vmatpush2.msra.mxu0 0.0
    %5823 = vmatprep.subr.mxu0 0.0
    %5824 = vmatpush2.msra.mxu0 0.0
    %5825 = vmatprep.subr.mxu0 0.0
    %5826 = vmatpush2.msra.mxu0 0.0
    %5827 = vmatprep.subr.mxu0 0.0
    %5828 = vmatpush2.msra.mxu0 0.0
    %5829 = vmatprep.subr.mxu0 0.0
    %5830 = vmatpush2.msra.mxu0 0.0
    %5831 = vmatprep.subr.mxu0 0.0
    %5832 = vmatpush2.msra.mxu0 0.0
    %5833 = vmatprep.mubr.f32.mxu0 0.0
    %5834 = vmatmul.mubr.f32.gmra.mxu0 %v5764
    %v5835 = vpop.f32.mrf.mxu0
    %v5836 = vadd.f32 0.0, %v5835
    %v5837 = vpop.f32.mrf.mxu0
    %5838 = vmatprep.mubr.f32.mxu0 0.0
    %5839 = vmatmul.mubr.f32.gmra.mxu0 %v5767
    %v5840 = vpop.f32.mrf.mxu0
    %v5841 = vadd.f32 0.0, %v5840
    %v5842 = vpop.f32.mrf.mxu0
    %5843 = vdwg.mxu0
    %v5844 = vadd.f32 %v5429, %v5836
    %v5845 = vadd.f32 %v5430, %v5841
    %v5846 = vadd.f32 %v4031, %v5844
    %v5847 = vadd.f32 %v4032, %v5845
    %v5848 = vsel %vm64, %v5846, 0.0
    %5849 = vadd.xlane.f32.xlu0 %v5848
    %v5850 = vpop.xlane.xlu0 %5849
    %v5851 = vsel %vm64, %v5847, 0.0
    %5852 = vadd.xlane.f32.xlu0 %v5851
    %v5853 = vpop.xlane.xlu0 %5852
    %v5854 = vmul.f32 %v5850, 0.03125
    %v5855 = vmul.f32 %v5853, 0.03125
    %v5856 = vsub.f32 %v5846, %v5854
    %v5857 = vsub.f32 %v5847, %v5855
    %v5858 = vmul.f32 %v5856, %v5856
    %v5859 = vmul.f32 %v5857, %v5857
    %v5860 = vsel %vm64, %v5858, 0.0
    %5861 = vadd.xlane.f32.xlu0 %v5860
    %v5862 = vpop.xlane.xlu0 %5861
    %v5863 = vsel %vm64, %v5859, 0.0
    %5864 = vadd.xlane.f32.xlu0 %v5863
    %v5865 = vpop.xlane.xlu0 %5864
    %v5866 = vmul.f32 %v5862, 0.032258064
    %v5867 = vmul.f32 %v5865, 0.032258064
    %v5868 = vrsqrt.pop %v5866
    %v5869 = vmul.f32 %v5866, %v5868
    %vm5870 = vcmp.eq.f32.partialorder %v5866, inf
    %v5871 = vsel %vm5870, %v5866, %v5869
    %vm5872 = vcmp.eq.f32.partialorder %v5866, 0.0
    %v5873 = vand.u32 %v5866, 2147483648
    %v5874 = vsel %vm5872, %v5873, %v5871
    %v5875 = vrsqrt.pop %v5867
    %v5876 = vmul.f32 %v5867, %v5875
    %vm5877 = vcmp.eq.f32.partialorder %v5867, inf
    %v5878 = vsel %vm5877, %v5867, %v5876
    %vm5879 = vcmp.eq.f32.partialorder %v5867, 0.0
    %v5880 = vand.u32 %v5867, 2147483648
    %v5881 = vsel %vm5879, %v5880, %v5878
    %v5882 = vadd.f32 %v5874, 1e-16
    %v5883 = vadd.f32 %v5881, 1e-16
    %v5884 = vrcp.pop %v5882
    %v5885 = vmul.f32 1.0, %v5884
    %v5886 = vrcp.pop %v5883
    %v5887 = vmul.f32 1.0, %v5886
    %v5888 = vmul.f32 %v5856, %v5885
    %v5889 = vmul.f32 %v5857, %v5887
    %v5890 = vlaneseq
    %v5891 = vshrl.u32 %v5890, 7
    %v5892 = vsub.s32 1, %v5891
    %v5893 = vrot.slane %v4033, %v5892
    %v5894 = vmul.f32 %v5893, %v5888
    %v5895 = vmul.f32 %v5893, %v5889
    %v5896 = vlaneseq
    %v5897 = vshrl.u32 %v5896, 7
    %v5898 = vsub.s32 1, %v5897
    %v5899 = vrot.slane %v4034, %v5898
    %v5900 = vadd.f32 %v5894, %v5899
    %v5901 = vadd.f32 %v5895, %v5899
    %v5902 = vld [vmem:[#allocation7 + $0x1a8] sm:$0xff]
    %v5903 = vld [vmem:[#allocation7 + $0x1b0] sm:$0xff]
    %v5904 = vld [vmem:[#allocation7 + $0x1b8] sm:$0xff]
    %v5905 = vld [vmem:[#allocation7 + $0x1c0] sm:$0xff]
    %v5906 = vld [vmem:[#allocation7 + $0x1c8] sm:$0x1]
    %v5907 = vlaneseq
    %v5908 = vshrl.u32 %v5907, 7
    %v5909 = vsub.s32 0, %v5908
    %v5910 = vrot.slane %v5906, %v5909
    %v5912 = vsel %vm64, %v5900, 0
    %v5915 = vsel %vm64, %v5901, 0
    %5917 = vmatprep.subr.mxu0 0.0
    %5918 = vmatpush1.msra.mxu0 0.0
    %5919 = vmatprep.subr.mxu0 0.0
    %5920 = vmatpush1.msra.mxu0 0.0
    %5921 = vmatprep.subr.mxu0 0.0
    %5922 = vmatpush1.msra.mxu0 0.0
    %5923 = vmatprep.subr.mxu0 0.0
    %5924 = vmatpush1.msra.mxu0 0.0
    %5925 = vmatprep.subr.mxu0 0.0
    %5926 = vmatpush1.msra.mxu0 0.0
    %5927 = vmatprep.subr.mxu0 0.0
    %5928 = vmatpush1.msra.mxu0 0.0
    %5929 = vmatprep.subr.mxu0 0.0
    %5930 = vmatpush1.msra.mxu0 0.0
    %5931 = vmatprep.subr.mxu0 0.0
    %5932 = vmatpush1.msra.mxu0 0.0
    %5933 = vmatprep.subr.mxu0 0.0
    %5934 = vmatpush1.msra.mxu0 0.0
    %5935 = vmatprep.subr.mxu0 0.0
    %5936 = vmatpush1.msra.mxu0 0.0
    %5937 = vmatprep.subr.mxu0 0.0
    %5938 = vmatpush1.msra.mxu0 0.0
    %5939 = vmatprep.subr.mxu0 0.0
    %5940 = vmatpush1.msra.mxu0 0.0
    %5941 = vmatprep.subr.mxu0 0.0
    %5942 = vmatpush1.msra.mxu0 %v5905
    %5943 = vmatprep.subr.mxu0 0.0
    %5944 = vmatpush1.msra.mxu0 %v5904
    %5945 = vmatprep.subr.mxu0 0.0
    %5946 = vmatpush1.msra.mxu0 %v5903
    %5947 = vmatprep.subr.mxu0 0.0
    %5948 = vmatpush1.msra.mxu0 %v5902
    %5949 = vmatprep.subr.mxu0 0.0
    %5950 = vmatpush2.msra.mxu0 0.0
    %5951 = vmatprep.subr.mxu0 0.0
    %5952 = vmatpush2.msra.mxu0 0.0
    %5953 = vmatprep.subr.mxu0 0.0
    %5954 = vmatpush2.msra.mxu0 0.0
    %5955 = vmatprep.subr.mxu0 0.0
    %5956 = vmatpush2.msra.mxu0 0.0
    %5957 = vmatprep.subr.mxu0 0.0
    %5958 = vmatpush2.msra.mxu0 0.0
    %5959 = vmatprep.subr.mxu0 0.0
    %5960 = vmatpush2.msra.mxu0 0.0
    %5961 = vmatprep.subr.mxu0 0.0
    %5962 = vmatpush2.msra.mxu0 0.0
    %5963 = vmatprep.subr.mxu0 0.0
    %5964 = vmatpush2.msra.mxu0 0.0
    %5965 = vmatprep.subr.mxu0 0.0
    %5966 = vmatpush2.msra.mxu0 0.0
    %5967 = vmatprep.subr.mxu0 0.0
    %5968 = vmatpush2.msra.mxu0 0.0
    %5969 = vmatprep.subr.mxu0 0.0
    %5970 = vmatpush2.msra.mxu0 0.0
    %5971 = vmatprep.subr.mxu0 0.0
    %5972 = vmatpush2.msra.mxu0 0.0
    %5973 = vmatprep.subr.mxu0 0.0
    %5974 = vmatpush2.msra.mxu0 0.0
    %5975 = vmatprep.subr.mxu0 0.0
    %5976 = vmatpush2.msra.mxu0 0.0
    %5977 = vmatprep.subr.mxu0 0.0
    %5978 = vmatpush2.msra.mxu0 0.0
    %5979 = vmatprep.subr.mxu0 0.0
    %5980 = vmatpush2.msra.mxu0 0.0
    %5981 = vmatprep.mubr.f32.mxu0 0.0
    %5982 = vmatmul.mubr.f32.gmra.mxu0 %v5912
    %v5983 = vpop.f32.mrf.mxu0
    %v5984 = vadd.f32 %v5910, %v5983
    %v5985 = vpop.f32.mrf.mxu0
    %5986 = vmatprep.mubr.f32.mxu0 0.0
    %5987 = vmatmul.mubr.f32.gmra.mxu0 %v5915
    %v5988 = vpop.f32.mrf.mxu0
    %v5989 = vadd.f32 %v5910, %v5988
    %v5990 = vpop.f32.mrf.mxu0
    %5991 = vdwg.mxu0
    %v5992 = vld [vmem:[#allocation7 + $0x1d0] sm:$0xff]
    %v5993 = vld [vmem:[#allocation7 + $0x1d8] sm:$0xff]
    %v5994 = vld [vmem:[#allocation7 + $0x1e0] sm:$0xff]
    %v5995 = vld [vmem:[#allocation7 + $0x1e8] sm:$0xff]
    %v5996 = vld [vmem:[#allocation7 + $0x1f0] sm:$0x1]
    %v5997 = vlaneseq
    %v5998 = vshrl.u32 %v5997, 7
    %v5999 = vsub.s32 0, %v5998
    %v6000 = vrot.slane %v5996, %v5999
    %6001 = vmatprep.subr.mxu0 0.0
    %6002 = vmatpush1.msra.mxu0 0.0
    %6003 = vmatprep.subr.mxu0 0.0
    %6004 = vmatpush1.msra.mxu0 0.0
    %6005 = vmatprep.subr.mxu0 0.0
    %6006 = vmatpush1.msra.mxu0 0.0
    %6007 = vmatprep.subr.mxu0 0.0
    %6008 = vmatpush1.msra.mxu0 0.0
    %6009 = vmatprep.subr.mxu0 0.0
    %6010 = vmatpush1.msra.mxu0 0.0
    %6011 = vmatprep.subr.mxu0 0.0
    %6012 = vmatpush1.msra.mxu0 0.0
    %6013 = vmatprep.subr.mxu0 0.0
    %6014 = vmatpush1.msra.mxu0 0.0
    %6015 = vmatprep.subr.mxu0 0.0
    %6016 = vmatpush1.msra.mxu0 0.0
    %6017 = vmatprep.subr.mxu0 0.0
    %6018 = vmatpush1.msra.mxu0 0.0
    %6019 = vmatprep.subr.mxu0 0.0
    %6020 = vmatpush1.msra.mxu0 0.0
    %6021 = vmatprep.subr.mxu0 0.0
    %6022 = vmatpush1.msra.mxu0 0.0
    %6023 = vmatprep.subr.mxu0 0.0
    %6024 = vmatpush1.msra.mxu0 0.0
    %6025 = vmatprep.subr.mxu0 0.0
    %6026 = vmatpush1.msra.mxu0 %v5995
    %6027 = vmatprep.subr.mxu0 0.0
    %6028 = vmatpush1.msra.mxu0 %v5994
    %6029 = vmatprep.subr.mxu0 0.0
    %6030 = vmatpush1.msra.mxu0 %v5993
    %6031 = vmatprep.subr.mxu0 0.0
    %6032 = vmatpush1.msra.mxu0 %v5992
    %6033 = vmatprep.subr.mxu0 0.0
    %6034 = vmatpush2.msra.mxu0 0.0
    %6035 = vmatprep.subr.mxu0 0.0
    %6036 = vmatpush2.msra.mxu0 0.0
    %6037 = vmatprep.subr.mxu0 0.0
    %6038 = vmatpush2.msra.mxu0 0.0
    %6039 = vmatprep.subr.mxu0 0.0
    %6040 = vmatpush2.msra.mxu0 0.0
    %6041 = vmatprep.subr.mxu0 0.0
    %6042 = vmatpush2.msra.mxu0 0.0
    %6043 = vmatprep.subr.mxu0 0.0
    %6044 = vmatpush2.msra.mxu0 0.0
    %6045 = vmatprep.subr.mxu0 0.0
    %6046 = vmatpush2.msra.mxu0 0.0
    %6047 = vmatprep.subr.mxu0 0.0
    %6048 = vmatpush2.msra.mxu0 0.0
    %6049 = vmatprep.subr.mxu0 0.0
    %6050 = vmatpush2.msra.mxu0 0.0
    %6051 = vmatprep.subr.mxu0 0.0
    %6052 = vmatpush2.msra.mxu0 0.0
    %6053 = vmatprep.subr.mxu0 0.0
    %6054 = vmatpush2.msra.mxu0 0.0
    %6055 = vmatprep.subr.mxu0 0.0
    %6056 = vmatpush2.msra.mxu0 0.0
    %6057 = vmatprep.subr.mxu0 0.0
    %6058 = vmatpush2.msra.mxu0 0.0
    %6059 = vmatprep.subr.mxu0 0.0
    %6060 = vmatpush2.msra.mxu0 0.0
    %6061 = vmatprep.subr.mxu0 0.0
    %6062 = vmatpush2.msra.mxu0 0.0
    %6063 = vmatprep.subr.mxu0 0.0
    %6064 = vmatpush2.msra.mxu0 0.0
    %6065 = vmatprep.mubr.f32.mxu0 0.0
    %6066 = vmatmul.mubr.f32.gmra.mxu0 %v2033
    %v6067 = vpop.f32.mrf.mxu0
    %v6068 = vadd.f32 %v6000, %v6067
    %v6069 = vpop.f32.mrf.mxu0
    %6070 = vmatprep.mubr.f32.mxu0 0.0
    %6071 = vmatmul.mubr.f32.gmra.mxu0 %v2036
    %v6072 = vpop.f32.mrf.mxu0
    %v6073 = vadd.f32 %v6000, %v6072
    %v6074 = vpop.f32.mrf.mxu0
    %6075 = vdwg.mxu0
    %v6076 = vld [vmem:[#allocation7 + $0x1f8] sm:$0xff]
    %v6077 = vld [vmem:[#allocation7 + $0x200] sm:$0xff]
    %v6078 = vld [vmem:[#allocation7 + $0x208] sm:$0xff]
    %v6079 = vld [vmem:[#allocation7 + $0x210] sm:$0xff]
    %v6080 = vld [vmem:[#allocation7 + $0x218] sm:$0x1]
    %v6082 = vsel %vm217, %v5984, 0
    %v6085 = vsel %vm217, %v6068, 0
    %6087 = vmatprep.subr.mxu0 0.0
    %6088 = vmatpush1.xpose.msra.mxu0 0.0
    %6089 = vmatprep.subr.mxu0 0.0
    %6090 = vmatpush1.xpose.msra.mxu0 0.0
    %6091 = vmatprep.subr.mxu0 0.0
    %6092 = vmatpush1.xpose.msra.mxu0 0.0
    %6093 = vmatprep.subr.mxu0 0.0
    %6094 = vmatpush1.xpose.msra.mxu0 0.0
    %6095 = vmatprep.subr.mxu0 0.0
    %6096 = vmatpush1.xpose.msra.mxu0 0.0
    %6097 = vmatprep.subr.mxu0 0.0
    %6098 = vmatpush1.xpose.msra.mxu0 0.0
    %6099 = vmatprep.subr.mxu0 0.0
    %6100 = vmatpush1.xpose.msra.mxu0 0.0
    %6101 = vmatprep.subr.mxu0 0.0
    %6102 = vmatpush1.xpose.msra.mxu0 0.0
    %6103 = vmatprep.subr.mxu0 0.0
    %6104 = vmatpush1.xpose.msra.mxu0 0.0
    %6105 = vmatprep.subr.mxu0 0.0
    %6106 = vmatpush1.xpose.msra.mxu0 0.0
    %6107 = vmatprep.subr.mxu0 0.0
    %6108 = vmatpush1.xpose.msra.mxu0 0.0
    %6109 = vmatprep.subr.mxu0 0.0
    %6110 = vmatpush1.xpose.msra.mxu0 0.0
    %6111 = vmatprep.subr.mxu0 0.0
    %6112 = vmatpush1.xpose.msra.mxu0 0.0
    %6113 = vmatprep.subr.mxu0 0.0
    %6114 = vmatpush1.xpose.msra.mxu0 0.0
    %6115 = vmatprep.subr.mxu0 0.0
    %6116 = vmatpush1.xpose.msra.mxu0 0.0
    %6117 = vmatprep.subr.mxu0 0.0
    %6118 = vmatpush1.xpose.msra.mxu0 %v6085
    %6119 = vmatprep.subr.mxu0 0.0
    %6120 = vmatpush2.xpose.msra.mxu0 0.0
    %6121 = vmatprep.subr.mxu0 0.0
    %6122 = vmatpush2.xpose.msra.mxu0 0.0
    %6123 = vmatprep.subr.mxu0 0.0
    %6124 = vmatpush2.xpose.msra.mxu0 0.0
    %6125 = vmatprep.subr.mxu0 0.0
    %6126 = vmatpush2.xpose.msra.mxu0 0.0
    %6127 = vmatprep.subr.mxu0 0.0
    %6128 = vmatpush2.xpose.msra.mxu0 0.0
    %6129 = vmatprep.subr.mxu0 0.0
    %6130 = vmatpush2.xpose.msra.mxu0 0.0
    %6131 = vmatprep.subr.mxu0 0.0
    %6132 = vmatpush2.xpose.msra.mxu0 0.0
    %6133 = vmatprep.subr.mxu0 0.0
    %6134 = vmatpush2.xpose.msra.mxu0 0.0
    %6135 = vmatprep.subr.mxu0 0.0
    %6136 = vmatpush2.xpose.msra.mxu0 0.0
    %6137 = vmatprep.subr.mxu0 0.0
    %6138 = vmatpush2.xpose.msra.mxu0 0.0
    %6139 = vmatprep.subr.mxu0 0.0
    %6140 = vmatpush2.xpose.msra.mxu0 0.0
    %6141 = vmatprep.subr.mxu0 0.0
    %6142 = vmatpush2.xpose.msra.mxu0 0.0
    %6143 = vmatprep.subr.mxu0 0.0
    %6144 = vmatpush2.xpose.msra.mxu0 0.0
    %6145 = vmatprep.subr.mxu0 0.0
    %6146 = vmatpush2.xpose.msra.mxu0 0.0
    %6147 = vmatprep.subr.mxu0 0.0
    %6148 = vmatpush2.xpose.msra.mxu0 0.0
    %6149 = vmatprep.subr.mxu0 0.0
    %6150 = vmatpush2.xpose.msra.mxu0 0.0
    %6151 = vmatprep.mubr.f32.mxu0 0.0
    %6152 = vmatmul.mubr.f32.gmra.mxu0 %v6082
    %v6153 = vpop.f32.mrf.mxu0
    %v6154 = vadd.f32 %v2120, %v6153
    %v6155 = vpop.f32.mrf.mxu0
    %6156 = vdwg.mxu0
    %v6158 = vsel %vm217, %v5989, 0
    %v6161 = vsel %vm217, %v6073, 0
    %6163 = vmatprep.subr.mxu0 0.0
    %6164 = vmatpush1.xpose.msra.mxu0 0.0
    %6165 = vmatprep.subr.mxu0 0.0
    %6166 = vmatpush1.xpose.msra.mxu0 0.0
    %6167 = vmatprep.subr.mxu0 0.0
    %6168 = vmatpush1.xpose.msra.mxu0 0.0
    %6169 = vmatprep.subr.mxu0 0.0
    %6170 = vmatpush1.xpose.msra.mxu0 0.0
    %6171 = vmatprep.subr.mxu0 0.0
    %6172 = vmatpush1.xpose.msra.mxu0 0.0
    %6173 = vmatprep.subr.mxu0 0.0
    %6174 = vmatpush1.xpose.msra.mxu0 0.0
    %6175 = vmatprep.subr.mxu0 0.0
    %6176 = vmatpush1.xpose.msra.mxu0 0.0
    %6177 = vmatprep.subr.mxu0 0.0
    %6178 = vmatpush1.xpose.msra.mxu0 0.0
    %6179 = vmatprep.subr.mxu0 0.0
    %6180 = vmatpush1.xpose.msra.mxu0 0.0
    %6181 = vmatprep.subr.mxu0 0.0
    %6182 = vmatpush1.xpose.msra.mxu0 0.0
    %6183 = vmatprep.subr.mxu0 0.0
    %6184 = vmatpush1.xpose.msra.mxu0 0.0
    %6185 = vmatprep.subr.mxu0 0.0
    %6186 = vmatpush1.xpose.msra.mxu0 0.0
    %6187 = vmatprep.subr.mxu0 0.0
    %6188 = vmatpush1.xpose.msra.mxu0 0.0
    %6189 = vmatprep.subr.mxu0 0.0
    %6190 = vmatpush1.xpose.msra.mxu0 0.0
    %6191 = vmatprep.subr.mxu0 0.0
    %6192 = vmatpush1.xpose.msra.mxu0 0.0
    %6193 = vmatprep.subr.mxu0 0.0
    %6194 = vmatpush1.xpose.msra.mxu0 %v6161
    %6195 = vmatprep.subr.mxu0 0.0
    %6196 = vmatpush2.xpose.msra.mxu0 0.0
    %6197 = vmatprep.subr.mxu0 0.0
    %6198 = vmatpush2.xpose.msra.mxu0 0.0
    %6199 = vmatprep.subr.mxu0 0.0
    %6200 = vmatpush2.xpose.msra.mxu0 0.0
    %6201 = vmatprep.subr.mxu0 0.0
    %6202 = vmatpush2.xpose.msra.mxu0 0.0
    %6203 = vmatprep.subr.mxu0 0.0
    %6204 = vmatpush2.xpose.msra.mxu0 0.0
    %6205 = vmatprep.subr.mxu0 0.0
    %6206 = vmatpush2.xpose.msra.mxu0 0.0
    %6207 = vmatprep.subr.mxu0 0.0
    %6208 = vmatpush2.xpose.msra.mxu0 0.0
    %6209 = vmatprep.subr.mxu0 0.0
    %6210 = vmatpush2.xpose.msra.mxu0 0.0
    %6211 = vmatprep.subr.mxu0 0.0
    %6212 = vmatpush2.xpose.msra.mxu0 0.0
    %6213 = vmatprep.subr.mxu0 0.0
    %6214 = vmatpush2.xpose.msra.mxu0 0.0
    %6215 = vmatprep.subr.mxu0 0.0
    %6216 = vmatpush2.xpose.msra.mxu0 0.0
    %6217 = vmatprep.subr.mxu0 0.0
    %6218 = vmatpush2.xpose.msra.mxu0 0.0
    %6219 = vmatprep.subr.mxu0 0.0
    %6220 = vmatpush2.xpose.msra.mxu0 0.0
    %6221 = vmatprep.subr.mxu0 0.0
    %6222 = vmatpush2.xpose.msra.mxu0 0.0
    %6223 = vmatprep.subr.mxu0 0.0
    %6224 = vmatpush2.xpose.msra.mxu0 0.0
    %6225 = vmatprep.subr.mxu0 0.0
    %6226 = vmatpush2.xpose.msra.mxu0 0.0
    %6227 = vmatprep.mubr.f32.mxu0 0.0
    %6228 = vmatmul.mubr.f32.gmra.mxu0 %v6158
    %v6229 = vpop.f32.mrf.mxu0
    %v6230 = vadd.f32 %v2200, %v6229
    %v6231 = vpop.f32.mrf.mxu0
    %6232 = vdwg.mxu0
    %v6233 = vsel %vm217, %v6154, -inf
    %6234 = vmax.xlane.f32.xlu0 %v6233
    %v6235 = vpop.xlane.xlu0 %6234
    %v6236 = vsel %vm217, %v6230, -inf
    %6237 = vmax.xlane.f32.xlu0 %v6236
    %v6238 = vpop.xlane.xlu0 %6237
    %v6239 = vsub.f32 %v6154, %v6235
    %v6240 = vsub.f32 %v6230, %v6238
    %v6241 = vmul.f32 %v6239, 1.442695
    %v6242 = vpow.pop %v6241
    %v6243 = vmul.f32 %v6240, 1.442695
    %v6244 = vpow.pop %v6243
    %v6245 = vsel %vm217, %v6242, 0.0
    %6246 = vadd.xlane.f32.xlu0 %v6245
    %v6247 = vpop.xlane.xlu0 %6246
    %v6248 = vsel %vm217, %v6244, 0.0
    %6249 = vadd.xlane.f32.xlu0 %v6248
    %v6250 = vpop.xlane.xlu0 %6249
    %v6251 = vrcp.pop %v6247
    %v6252 = vmul.f32 1.0, %v6251
    %v6253 = vrcp.pop %v6250
    %v6254 = vmul.f32 1.0, %v6253
    %v6255 = vmul.f32 %v6242, %v6252
    %v6256 = vmul.f32 %v6244, %v6254
    %6257 = vrot.lane.b32.xlu0 %v6068, 96
    %v6258 = vpop.permute.xlu0 %6257
    %v6261 = vsel %vm217, %v6255, 0
    %6263 = vmatprep.subr.mxu0 0.0
    %6264 = vmatpush1.msra.mxu0 0.0
    %6265 = vmatprep.subr.mxu0 0.0
    %6266 = vmatpush1.msra.mxu0 0.0
    %6267 = vmatprep.subr.mxu0 0.0
    %6268 = vmatpush1.msra.mxu0 0.0
    %6269 = vmatprep.subr.mxu0 0.0
    %6270 = vmatpush1.msra.mxu0 0.0
    %6271 = vmatprep.subr.mxu0 0.0
    %6272 = vmatpush1.msra.mxu0 0.0
    %6273 = vmatprep.subr.mxu0 0.0
    %6274 = vmatpush1.msra.mxu0 0.0
    %6275 = vmatprep.subr.mxu0 0.0
    %6276 = vmatpush1.msra.mxu0 0.0
    %6277 = vmatprep.subr.mxu0 0.0
    %6278 = vmatpush1.msra.mxu0 0.0
    %6279 = vmatprep.subr.mxu0 0.0
    %6280 = vmatpush1.msra.mxu0 0.0
    %6281 = vmatprep.subr.mxu0 0.0
    %6282 = vmatpush1.msra.mxu0 0.0
    %6283 = vmatprep.subr.mxu0 0.0
    %6284 = vmatpush1.msra.mxu0 0.0
    %6285 = vmatprep.subr.mxu0 0.0
    %6286 = vmatpush1.msra.mxu0 0.0
    %6287 = vmatprep.subr.mxu0 0.0
    %6288 = vmatpush1.msra.mxu0 0.0
    %6289 = vmatprep.subr.mxu0 0.0
    %6290 = vmatpush1.msra.mxu0 0.0
    %6291 = vmatprep.subr.mxu0 0.0
    %6292 = vmatpush1.msra.mxu0 0.0
    %6293 = vmatprep.subr.mxu0 0.0
    %6294 = vmatpush1.msra.mxu0 %v6258
    %6295 = vmatprep.subr.mxu0 0.0
    %6296 = vmatpush2.msra.mxu0 0.0
    %6297 = vmatprep.subr.mxu0 0.0
    %6298 = vmatpush2.msra.mxu0 0.0
    %6299 = vmatprep.subr.mxu0 0.0
    %6300 = vmatpush2.msra.mxu0 0.0
    %6301 = vmatprep.subr.mxu0 0.0
    %6302 = vmatpush2.msra.mxu0 0.0
    %6303 = vmatprep.subr.mxu0 0.0
    %6304 = vmatpush2.msra.mxu0 0.0
    %6305 = vmatprep.subr.mxu0 0.0
    %6306 = vmatpush2.msra.mxu0 0.0
    %6307 = vmatprep.subr.mxu0 0.0
    %6308 = vmatpush2.msra.mxu0 0.0
    %6309 = vmatprep.subr.mxu0 0.0
    %6310 = vmatpush2.msra.mxu0 0.0
    %6311 = vmatprep.subr.mxu0 0.0
    %6312 = vmatpush2.msra.mxu0 0.0
    %6313 = vmatprep.subr.mxu0 0.0
    %6314 = vmatpush2.msra.mxu0 0.0
    %6315 = vmatprep.subr.mxu0 0.0
    %6316 = vmatpush2.msra.mxu0 0.0
    %6317 = vmatprep.subr.mxu0 0.0
    %6318 = vmatpush2.msra.mxu0 0.0
    %6319 = vmatprep.subr.mxu0 0.0
    %6320 = vmatpush2.msra.mxu0 0.0
    %6321 = vmatprep.subr.mxu0 0.0
    %6322 = vmatpush2.msra.mxu0 0.0
    %6323 = vmatprep.subr.mxu0 0.0
    %6324 = vmatpush2.msra.mxu0 0.0
    %6325 = vmatprep.subr.mxu0 0.0
    %6326 = vmatpush2.msra.mxu0 0.0
    %6327 = vmatprep.mubr.f32.mxu0 0.0
    %6328 = vmatmul.mubr.f32.gmra.mxu0 %v6261
    %v6329 = vpop.f32.mrf.mxu0
    %v6330 = vadd.f32 0.0, %v6329
    %v6331 = vpop.f32.mrf.mxu0
    %6332 = vdwg.mxu0
    %6333 = vrot.lane.b32.xlu0 %v6073, 96
    %v6334 = vpop.permute.xlu0 %6333
    %v6337 = vsel %vm217, %v6256, 0
    %6339 = vmatprep.subr.mxu0 0.0
    %6340 = vmatpush1.msra.mxu0 0.0
    %6341 = vmatprep.subr.mxu0 0.0
    %6342 = vmatpush1.msra.mxu0 0.0
    %6343 = vmatprep.subr.mxu0 0.0
    %6344 = vmatpush1.msra.mxu0 0.0
    %6345 = vmatprep.subr.mxu0 0.0
    %6346 = vmatpush1.msra.mxu0 0.0
    %6347 = vmatprep.subr.mxu0 0.0
    %6348 = vmatpush1.msra.mxu0 0.0
    %6349 = vmatprep.subr.mxu0 0.0
    %6350 = vmatpush1.msra.mxu0 0.0
    %6351 = vmatprep.subr.mxu0 0.0
    %6352 = vmatpush1.msra.mxu0 0.0
    %6353 = vmatprep.subr.mxu0 0.0
    %6354 = vmatpush1.msra.mxu0 0.0
    %6355 = vmatprep.subr.mxu0 0.0
    %6356 = vmatpush1.msra.mxu0 0.0
    %6357 = vmatprep.subr.mxu0 0.0
    %6358 = vmatpush1.msra.mxu0 0.0
    %6359 = vmatprep.subr.mxu0 0.0
    %6360 = vmatpush1.msra.mxu0 0.0
    %6361 = vmatprep.subr.mxu0 0.0
    %6362 = vmatpush1.msra.mxu0 0.0
    %6363 = vmatprep.subr.mxu0 0.0
    %6364 = vmatpush1.msra.mxu0 0.0
    %6365 = vmatprep.subr.mxu0 0.0
    %6366 = vmatpush1.msra.mxu0 0.0
    %6367 = vmatprep.subr.mxu0 0.0
    %6368 = vmatpush1.msra.mxu0 0.0
    %6369 = vmatprep.subr.mxu0 0.0
    %6370 = vmatpush1.msra.mxu0 %v6334
    %6371 = vmatprep.subr.mxu0 0.0
    %6372 = vmatpush2.msra.mxu0 0.0
    %6373 = vmatprep.subr.mxu0 0.0
    %6374 = vmatpush2.msra.mxu0 0.0
    %6375 = vmatprep.subr.mxu0 0.0
    %6376 = vmatpush2.msra.mxu0 0.0
    %6377 = vmatprep.subr.mxu0 0.0
    %6378 = vmatpush2.msra.mxu0 0.0
    %6379 = vmatprep.subr.mxu0 0.0
    %6380 = vmatpush2.msra.mxu0 0.0
    %6381 = vmatprep.subr.mxu0 0.0
    %6382 = vmatpush2.msra.mxu0 0.0
    %6383 = vmatprep.subr.mxu0 0.0
    %6384 = vmatpush2.msra.mxu0 0.0
    %6385 = vmatprep.subr.mxu0 0.0
    %6386 = vmatpush2.msra.mxu0 0.0
    %6387 = vmatprep.subr.mxu0 0.0
    %6388 = vmatpush2.msra.mxu0 0.0
    %6389 = vmatprep.subr.mxu0 0.0
    %6390 = vmatpush2.msra.mxu0 0.0
    %6391 = vmatprep.subr.mxu0 0.0
    %6392 = vmatpush2.msra.mxu0 0.0
    %6393 = vmatprep.subr.mxu0 0.0
    %6394 = vmatpush2.msra.mxu0 0.0
    %6395 = vmatprep.subr.mxu0 0.0
    %6396 = vmatpush2.msra.mxu0 0.0
    %6397 = vmatprep.subr.mxu0 0.0
    %6398 = vmatpush2.msra.mxu0 0.0
    %6399 = vmatprep.subr.mxu0 0.0
    %6400 = vmatpush2.msra.mxu0 0.0
    %6401 = vmatprep.subr.mxu0 0.0
    %6402 = vmatpush2.msra.mxu0 0.0
    %6403 = vmatprep.mubr.f32.mxu0 0.0
    %6404 = vmatmul.mubr.f32.gmra.mxu0 %v6337
    %v6405 = vpop.f32.mrf.mxu0
    %v6406 = vadd.f32 0.0, %v6405
    %v6407 = vpop.f32.mrf.mxu0
    %6408 = vdwg.mxu0
    %v6410 = vsel %vm217, %v6330, 0
    %v6413 = vsel %vm217, %v6406, 0
    %6415 = vmatprep.subr.mxu0 0.0
    %6416 = vmatpush1.msra.mxu0 0.0
    %6417 = vmatprep.subr.mxu0 0.0
    %6418 = vmatpush1.msra.mxu0 0.0
    %6419 = vmatprep.subr.mxu0 0.0
    %6420 = vmatpush1.msra.mxu0 0.0
    %6421 = vmatprep.subr.mxu0 0.0
    %6422 = vmatpush1.msra.mxu0 0.0
    %6423 = vmatprep.subr.mxu0 0.0
    %6424 = vmatpush1.msra.mxu0 0.0
    %6425 = vmatprep.subr.mxu0 0.0
    %6426 = vmatpush1.msra.mxu0 0.0
    %6427 = vmatprep.subr.mxu0 0.0
    %6428 = vmatpush1.msra.mxu0 0.0
    %6429 = vmatprep.subr.mxu0 0.0
    %6430 = vmatpush1.msra.mxu0 0.0
    %6431 = vmatprep.subr.mxu0 0.0
    %6432 = vmatpush1.msra.mxu0 0.0
    %6433 = vmatprep.subr.mxu0 0.0
    %6434 = vmatpush1.msra.mxu0 0.0
    %6435 = vmatprep.subr.mxu0 0.0
    %6436 = vmatpush1.msra.mxu0 0.0
    %6437 = vmatprep.subr.mxu0 0.0
    %6438 = vmatpush1.msra.mxu0 0.0
    %6439 = vmatprep.subr.mxu0 0.0
    %6440 = vmatpush1.msra.mxu0 0.0
    %6441 = vmatprep.subr.mxu0 0.0
    %6442 = vmatpush1.msra.mxu0 0.0
    %6443 = vmatprep.subr.mxu0 0.0
    %6444 = vmatpush1.msra.mxu0 0.0
    %6445 = vmatprep.subr.mxu0 0.0
    %6446 = vmatpush1.msra.mxu0 %v6076
    %6447 = vmatprep.subr.mxu0 0.0
    %6448 = vmatpush2.msra.mxu0 0.0
    %6449 = vmatprep.subr.mxu0 0.0
    %6450 = vmatpush2.msra.mxu0 0.0
    %6451 = vmatprep.subr.mxu0 0.0
    %6452 = vmatpush2.msra.mxu0 0.0
    %6453 = vmatprep.subr.mxu0 0.0
    %6454 = vmatpush2.msra.mxu0 0.0
    %6455 = vmatprep.subr.mxu0 0.0
    %6456 = vmatpush2.msra.mxu0 0.0
    %6457 = vmatprep.subr.mxu0 0.0
    %6458 = vmatpush2.msra.mxu0 0.0
    %6459 = vmatprep.subr.mxu0 0.0
    %6460 = vmatpush2.msra.mxu0 0.0
    %6461 = vmatprep.subr.mxu0 0.0
    %6462 = vmatpush2.msra.mxu0 0.0
    %6463 = vmatprep.subr.mxu0 0.0
    %6464 = vmatpush2.msra.mxu0 0.0
    %6465 = vmatprep.subr.mxu0 0.0
    %6466 = vmatpush2.msra.mxu0 0.0
    %6467 = vmatprep.subr.mxu0 0.0
    %6468 = vmatpush2.msra.mxu0 0.0
    %6469 = vmatprep.subr.mxu0 0.0
    %6470 = vmatpush2.msra.mxu0 0.0
    %6471 = vmatprep.subr.mxu0 0.0
    %6472 = vmatpush2.msra.mxu0 0.0
    %6473 = vmatprep.subr.mxu0 0.0
    %6474 = vmatpush2.msra.mxu0 0.0
    %6475 = vmatprep.subr.mxu0 0.0
    %6476 = vmatpush2.msra.mxu0 0.0
    %6477 = vmatprep.subr.mxu0 0.0
    %6478 = vmatpush2.msra.mxu0 0.0
    %6479 = vmatprep.mubr.f32.mxu0 0.0
    %6480 = vmatmul.mubr.f32.gmra.mxu0 %v6410
    %v6481 = vpop.f32.mrf.mxu0
    %v6482 = vadd.f32 0.0, %v6481
    %v6483 = vpop.f32.mrf.mxu0
    %6484 = vmatprep.mubr.f32.mxu0 0.0
    %6485 = vmatmul.mubr.f32.gmra.mxu0 %v6413
    %v6486 = vpop.f32.mrf.mxu0
    %v6487 = vadd.f32 0.0, %v6486
    %v6488 = vpop.f32.mrf.mxu0
    %6489 = vdwg.mxu0
    %v6490 = vlaneseq
    %v6491 = vshrl.u32 %v6490, 7
    %v6492 = vsub.s32 0, %v6491
    %v6493 = vrot.slane %v6080, %v6492
    %v6494 = vadd.f32 %v6493, %v6482
    %v6495 = vadd.f32 %v6493, %v6487
    %6496 = vrot.lane.b32.xlu0 %v5984, 120
    %v6497 = vpop.permute.xlu0 %6496
    %6498 = vrot.lane.b32.xlu0 %v6068, 120
    %v6499 = vpop.permute.xlu0 %6498
    %v6500 = vsel %vm217, %v6497, 0
    %v6502 = vsel %vm217, %v6499, 0
    %6504 = vmatprep.subr.mxu0 0.0
    %6505 = vmatpush1.xpose.msra.mxu0 0.0
    %6506 = vmatprep.subr.mxu0 0.0
    %6507 = vmatpush1.xpose.msra.mxu0 0.0
    %6508 = vmatprep.subr.mxu0 0.0
    %6509 = vmatpush1.xpose.msra.mxu0 0.0
    %6510 = vmatprep.subr.mxu0 0.0
    %6511 = vmatpush1.xpose.msra.mxu0 0.0
    %6512 = vmatprep.subr.mxu0 0.0
    %6513 = vmatpush1.xpose.msra.mxu0 0.0
    %6514 = vmatprep.subr.mxu0 0.0
    %6515 = vmatpush1.xpose.msra.mxu0 0.0
    %6516 = vmatprep.subr.mxu0 0.0
    %6517 = vmatpush1.xpose.msra.mxu0 0.0
    %6518 = vmatprep.subr.mxu0 0.0
    %6519 = vmatpush1.xpose.msra.mxu0 0.0
    %6520 = vmatprep.subr.mxu0 0.0
    %6521 = vmatpush1.xpose.msra.mxu0 0.0
    %6522 = vmatprep.subr.mxu0 0.0
    %6523 = vmatpush1.xpose.msra.mxu0 0.0
    %6524 = vmatprep.subr.mxu0 0.0
    %6525 = vmatpush1.xpose.msra.mxu0 0.0
    %6526 = vmatprep.subr.mxu0 0.0
    %6527 = vmatpush1.xpose.msra.mxu0 0.0
    %6528 = vmatprep.subr.mxu0 0.0
    %6529 = vmatpush1.xpose.msra.mxu0 0.0
    %6530 = vmatprep.subr.mxu0 0.0
    %6531 = vmatpush1.xpose.msra.mxu0 0.0
    %6532 = vmatprep.subr.mxu0 0.0
    %6533 = vmatpush1.xpose.msra.mxu0 0.0
    %6534 = vmatprep.subr.mxu0 0.0
    %6535 = vmatpush1.xpose.msra.mxu0 %v6502
    %6536 = vmatprep.subr.mxu0 0.0
    %6537 = vmatpush2.xpose.msra.mxu0 0.0
    %6538 = vmatprep.subr.mxu0 0.0
    %6539 = vmatpush2.xpose.msra.mxu0 0.0
    %6540 = vmatprep.subr.mxu0 0.0
    %6541 = vmatpush2.xpose.msra.mxu0 0.0
    %6542 = vmatprep.subr.mxu0 0.0
    %6543 = vmatpush2.xpose.msra.mxu0 0.0
    %6544 = vmatprep.subr.mxu0 0.0
    %6545 = vmatpush2.xpose.msra.mxu0 0.0
    %6546 = vmatprep.subr.mxu0 0.0
    %6547 = vmatpush2.xpose.msra.mxu0 0.0
    %6548 = vmatprep.subr.mxu0 0.0
    %6549 = vmatpush2.xpose.msra.mxu0 0.0
    %6550 = vmatprep.subr.mxu0 0.0
    %6551 = vmatpush2.xpose.msra.mxu0 0.0
    %6552 = vmatprep.subr.mxu0 0.0
    %6553 = vmatpush2.xpose.msra.mxu0 0.0
    %6554 = vmatprep.subr.mxu0 0.0
    %6555 = vmatpush2.xpose.msra.mxu0 0.0
    %6556 = vmatprep.subr.mxu0 0.0
    %6557 = vmatpush2.xpose.msra.mxu0 0.0
    %6558 = vmatprep.subr.mxu0 0.0
    %6559 = vmatpush2.xpose.msra.mxu0 0.0
    %6560 = vmatprep.subr.mxu0 0.0
    %6561 = vmatpush2.xpose.msra.mxu0 0.0
    %6562 = vmatprep.subr.mxu0 0.0
    %6563 = vmatpush2.xpose.msra.mxu0 0.0
    %6564 = vmatprep.subr.mxu0 0.0
    %6565 = vmatpush2.xpose.msra.mxu0 0.0
    %6566 = vmatprep.subr.mxu0 0.0
    %6567 = vmatpush2.xpose.msra.mxu0 0.0
    %6568 = vmatprep.mubr.f32.mxu0 0.0
    %6569 = vmatmul.mubr.f32.gmra.mxu0 %v6500
    %v6570 = vpop.f32.mrf.mxu0
    %v6571 = vadd.f32 %v2120, %v6570
    %v6572 = vpop.f32.mrf.mxu0
    %6573 = vdwg.mxu0
    %6574 = vrot.lane.b32.xlu0 %v5989, 120
    %v6575 = vpop.permute.xlu0 %6574
    %6576 = vrot.lane.b32.xlu0 %v6073, 120
    %v6577 = vpop.permute.xlu0 %6576
    %v6578 = vsel %vm217, %v6575, 0
    %v6580 = vsel %vm217, %v6577, 0
    %6582 = vmatprep.subr.mxu0 0.0
    %6583 = vmatpush1.xpose.msra.mxu0 0.0
    %6584 = vmatprep.subr.mxu0 0.0
    %6585 = vmatpush1.xpose.msra.mxu0 0.0
    %6586 = vmatprep.subr.mxu0 0.0
    %6587 = vmatpush1.xpose.msra.mxu0 0.0
    %6588 = vmatprep.subr.mxu0 0.0
    %6589 = vmatpush1.xpose.msra.mxu0 0.0
    %6590 = vmatprep.subr.mxu0 0.0
    %6591 = vmatpush1.xpose.msra.mxu0 0.0
    %6592 = vmatprep.subr.mxu0 0.0
    %6593 = vmatpush1.xpose.msra.mxu0 0.0
    %6594 = vmatprep.subr.mxu0 0.0
    %6595 = vmatpush1.xpose.msra.mxu0 0.0
    %6596 = vmatprep.subr.mxu0 0.0
    %6597 = vmatpush1.xpose.msra.mxu0 0.0
    %6598 = vmatprep.subr.mxu0 0.0
    %6599 = vmatpush1.xpose.msra.mxu0 0.0
    %6600 = vmatprep.subr.mxu0 0.0
    %6601 = vmatpush1.xpose.msra.mxu0 0.0
    %6602 = vmatprep.subr.mxu0 0.0
    %6603 = vmatpush1.xpose.msra.mxu0 0.0
    %6604 = vmatprep.subr.mxu0 0.0
    %6605 = vmatpush1.xpose.msra.mxu0 0.0
    %6606 = vmatprep.subr.mxu0 0.0
    %6607 = vmatpush1.xpose.msra.mxu0 0.0
    %6608 = vmatprep.subr.mxu0 0.0
    %6609 = vmatpush1.xpose.msra.mxu0 0.0
    %6610 = vmatprep.subr.mxu0 0.0
    %6611 = vmatpush1.xpose.msra.mxu0 0.0
    %6612 = vmatprep.subr.mxu0 0.0
    %6613 = vmatpush1.xpose.msra.mxu0 %v6580
    %6614 = vmatprep.subr.mxu0 0.0
    %6615 = vmatpush2.xpose.msra.mxu0 0.0
    %6616 = vmatprep.subr.mxu0 0.0
    %6617 = vmatpush2.xpose.msra.mxu0 0.0
    %6618 = vmatprep.subr.mxu0 0.0
    %6619 = vmatpush2.xpose.msra.mxu0 0.0
    %6620 = vmatprep.subr.mxu0 0.0
    %6621 = vmatpush2.xpose.msra.mxu0 0.0
    %6622 = vmatprep.subr.mxu0 0.0
    %6623 = vmatpush2.xpose.msra.mxu0 0.0
    %6624 = vmatprep.subr.mxu0 0.0
    %6625 = vmatpush2.xpose.msra.mxu0 0.0
    %6626 = vmatprep.subr.mxu0 0.0
    %6627 = vmatpush2.xpose.msra.mxu0 0.0
    %6628 = vmatprep.subr.mxu0 0.0
    %6629 = vmatpush2.xpose.msra.mxu0 0.0
    %6630 = vmatprep.subr.mxu0 0.0
    %6631 = vmatpush2.xpose.msra.mxu0 0.0
    %6632 = vmatprep.subr.mxu0 0.0
    %6633 = vmatpush2.xpose.msra.mxu0 0.0
    %6634 = vmatprep.subr.mxu0 0.0
    %6635 = vmatpush2.xpose.msra.mxu0 0.0
    %6636 = vmatprep.subr.mxu0 0.0
    %6637 = vmatpush2.xpose.msra.mxu0 0.0
    %6638 = vmatprep.subr.mxu0 0.0
    %6639 = vmatpush2.xpose.msra.mxu0 0.0
    %6640 = vmatprep.subr.mxu0 0.0
    %6641 = vmatpush2.xpose.msra.mxu0 0.0
    %6642 = vmatprep.subr.mxu0 0.0
    %6643 = vmatpush2.xpose.msra.mxu0 0.0
    %6644 = vmatprep.subr.mxu0 0.0
    %6645 = vmatpush2.xpose.msra.mxu0 0.0
    %6646 = vmatprep.mubr.f32.mxu0 0.0
    %6647 = vmatmul.mubr.f32.gmra.mxu0 %v6578
    %v6648 = vpop.f32.mrf.mxu0
    %v6649 = vadd.f32 %v2200, %v6648
    %v6650 = vpop.f32.mrf.mxu0
    %6651 = vdwg.mxu0
    %v6652 = vsel %vm217, %v6571, -inf
    %6653 = vmax.xlane.f32.xlu0 %v6652
    %v6654 = vpop.xlane.xlu0 %6653
    %v6655 = vsel %vm217, %v6649, -inf
    %6656 = vmax.xlane.f32.xlu0 %v6655
    %v6657 = vpop.xlane.xlu0 %6656
    %v6658 = vsub.f32 %v6571, %v6654
    %v6659 = vsub.f32 %v6649, %v6657
    %v6660 = vmul.f32 %v6658, 1.442695
    %v6661 = vpow.pop %v6660
    %v6662 = vmul.f32 %v6659, 1.442695
    %v6663 = vpow.pop %v6662
    %v6664 = vsel %vm217, %v6661, 0.0
    %6665 = vadd.xlane.f32.xlu0 %v6664
    %v6666 = vpop.xlane.xlu0 %6665
    %v6667 = vsel %vm217, %v6663, 0.0
    %6668 = vadd.xlane.f32.xlu0 %v6667
    %v6669 = vpop.xlane.xlu0 %6668
    %v6670 = vrcp.pop %v6666
    %v6671 = vmul.f32 1.0, %v6670
    %v6672 = vrcp.pop %v6669
    %v6673 = vmul.f32 1.0, %v6672
    %v6674 = vmul.f32 %v6661, %v6671
    %v6675 = vmul.f32 %v6663, %v6673
    %6676 = vrot.lane.b32.xlu0 %v6068, 88
    %v6677 = vpop.permute.xlu0 %6676
    %v6680 = vsel %vm217, %v6674, 0
    %6682 = vmatprep.subr.mxu0 0.0
    %6683 = vmatpush1.msra.mxu0 0.0
    %6684 = vmatprep.subr.mxu0 0.0
    %6685 = vmatpush1.msra.mxu0 0.0
    %6686 = vmatprep.subr.mxu0 0.0
    %6687 = vmatpush1.msra.mxu0 0.0
    %6688 = vmatprep.subr.mxu0 0.0
    %6689 = vmatpush1.msra.mxu0 0.0
    %6690 = vmatprep.subr.mxu0 0.0
    %6691 = vmatpush1.msra.mxu0 0.0
    %6692 = vmatprep.subr.mxu0 0.0
    %6693 = vmatpush1.msra.mxu0 0.0
    %6694 = vmatprep.subr.mxu0 0.0
    %6695 = vmatpush1.msra.mxu0 0.0
    %6696 = vmatprep.subr.mxu0 0.0
    %6697 = vmatpush1.msra.mxu0 0.0
    %6698 = vmatprep.subr.mxu0 0.0
    %6699 = vmatpush1.msra.mxu0 0.0
    %6700 = vmatprep.subr.mxu0 0.0
    %6701 = vmatpush1.msra.mxu0 0.0
    %6702 = vmatprep.subr.mxu0 0.0
    %6703 = vmatpush1.msra.mxu0 0.0
    %6704 = vmatprep.subr.mxu0 0.0
    %6705 = vmatpush1.msra.mxu0 0.0
    %6706 = vmatprep.subr.mxu0 0.0
    %6707 = vmatpush1.msra.mxu0 0.0
    %6708 = vmatprep.subr.mxu0 0.0
    %6709 = vmatpush1.msra.mxu0 0.0
    %6710 = vmatprep.subr.mxu0 0.0
    %6711 = vmatpush1.msra.mxu0 0.0
    %6712 = vmatprep.subr.mxu0 0.0
    %6713 = vmatpush1.msra.mxu0 %v6677
    %6714 = vmatprep.subr.mxu0 0.0
    %6715 = vmatpush2.msra.mxu0 0.0
    %6716 = vmatprep.subr.mxu0 0.0
    %6717 = vmatpush2.msra.mxu0 0.0
    %6718 = vmatprep.subr.mxu0 0.0
    %6719 = vmatpush2.msra.mxu0 0.0
    %6720 = vmatprep.subr.mxu0 0.0
    %6721 = vmatpush2.msra.mxu0 0.0
    %6722 = vmatprep.subr.mxu0 0.0
    %6723 = vmatpush2.msra.mxu0 0.0
    %6724 = vmatprep.subr.mxu0 0.0
    %6725 = vmatpush2.msra.mxu0 0.0
    %6726 = vmatprep.subr.mxu0 0.0
    %6727 = vmatpush2.msra.mxu0 0.0
    %6728 = vmatprep.subr.mxu0 0.0
    %6729 = vmatpush2.msra.mxu0 0.0
    %6730 = vmatprep.subr.mxu0 0.0
    %6731 = vmatpush2.msra.mxu0 0.0
    %6732 = vmatprep.subr.mxu0 0.0
    %6733 = vmatpush2.msra.mxu0 0.0
    %6734 = vmatprep.subr.mxu0 0.0
    %6735 = vmatpush2.msra.mxu0 0.0
    %6736 = vmatprep.subr.mxu0 0.0
    %6737 = vmatpush2.msra.mxu0 0.0
    %6738 = vmatprep.subr.mxu0 0.0
    %6739 = vmatpush2.msra.mxu0 0.0
    %6740 = vmatprep.subr.mxu0 0.0
    %6741 = vmatpush2.msra.mxu0 0.0
    %6742 = vmatprep.subr.mxu0 0.0
    %6743 = vmatpush2.msra.mxu0 0.0
    %6744 = vmatprep.subr.mxu0 0.0
    %6745 = vmatpush2.msra.mxu0 0.0
    %6746 = vmatprep.mubr.f32.mxu0 0.0
    %6747 = vmatmul.mubr.f32.gmra.mxu0 %v6680
    %v6748 = vpop.f32.mrf.mxu0
    %v6749 = vadd.f32 0.0, %v6748
    %v6750 = vpop.f32.mrf.mxu0
    %6751 = vdwg.mxu0
    %6752 = vrot.lane.b32.xlu0 %v6073, 88
    %v6753 = vpop.permute.xlu0 %6752
    %v6756 = vsel %vm217, %v6675, 0
    %6758 = vmatprep.subr.mxu0 0.0
    %6759 = vmatpush1.msra.mxu0 0.0
    %6760 = vmatprep.subr.mxu0 0.0
    %6761 = vmatpush1.msra.mxu0 0.0
    %6762 = vmatprep.subr.mxu0 0.0
    %6763 = vmatpush1.msra.mxu0 0.0
    %6764 = vmatprep.subr.mxu0 0.0
    %6765 = vmatpush1.msra.mxu0 0.0
    %6766 = vmatprep.subr.mxu0 0.0
    %6767 = vmatpush1.msra.mxu0 0.0
    %6768 = vmatprep.subr.mxu0 0.0
    %6769 = vmatpush1.msra.mxu0 0.0
    %6770 = vmatprep.subr.mxu0 0.0
    %6771 = vmatpush1.msra.mxu0 0.0
    %6772 = vmatprep.subr.mxu0 0.0
    %6773 = vmatpush1.msra.mxu0 0.0
    %6774 = vmatprep.subr.mxu0 0.0
    %6775 = vmatpush1.msra.mxu0 0.0
    %6776 = vmatprep.subr.mxu0 0.0
    %6777 = vmatpush1.msra.mxu0 0.0
    %6778 = vmatprep.subr.mxu0 0.0
    %6779 = vmatpush1.msra.mxu0 0.0
    %6780 = vmatprep.subr.mxu0 0.0
    %6781 = vmatpush1.msra.mxu0 0.0
    %6782 = vmatprep.subr.mxu0 0.0
    %6783 = vmatpush1.msra.mxu0 0.0
    %6784 = vmatprep.subr.mxu0 0.0
    %6785 = vmatpush1.msra.mxu0 0.0
    %6786 = vmatprep.subr.mxu0 0.0
    %6787 = vmatpush1.msra.mxu0 0.0
    %6788 = vmatprep.subr.mxu0 0.0
    %6789 = vmatpush1.msra.mxu0 %v6753
    %6790 = vmatprep.subr.mxu0 0.0
    %6791 = vmatpush2.msra.mxu0 0.0
    %6792 = vmatprep.subr.mxu0 0.0
    %6793 = vmatpush2.msra.mxu0 0.0
    %6794 = vmatprep.subr.mxu0 0.0
    %6795 = vmatpush2.msra.mxu0 0.0
    %6796 = vmatprep.subr.mxu0 0.0
    %6797 = vmatpush2.msra.mxu0 0.0
    %6798 = vmatprep.subr.mxu0 0.0
    %6799 = vmatpush2.msra.mxu0 0.0
    %6800 = vmatprep.subr.mxu0 0.0
    %6801 = vmatpush2.msra.mxu0 0.0
    %6802 = vmatprep.subr.mxu0 0.0
    %6803 = vmatpush2.msra.mxu0 0.0
    %6804 = vmatprep.subr.mxu0 0.0
    %6805 = vmatpush2.msra.mxu0 0.0
    %6806 = vmatprep.subr.mxu0 0.0
    %6807 = vmatpush2.msra.mxu0 0.0
    %6808 = vmatprep.subr.mxu0 0.0
    %6809 = vmatpush2.msra.mxu0 0.0
    %6810 = vmatprep.subr.mxu0 0.0
    %6811 = vmatpush2.msra.mxu0 0.0
    %6812 = vmatprep.subr.mxu0 0.0
    %6813 = vmatpush2.msra.mxu0 0.0
    %6814 = vmatprep.subr.mxu0 0.0
    %6815 = vmatpush2.msra.mxu0 0.0
    %6816 = vmatprep.subr.mxu0 0.0
    %6817 = vmatpush2.msra.mxu0 0.0
    %6818 = vmatprep.subr.mxu0 0.0
    %6819 = vmatpush2.msra.mxu0 0.0
    %6820 = vmatprep.subr.mxu0 0.0
    %6821 = vmatpush2.msra.mxu0 0.0
    %6822 = vmatprep.mubr.f32.mxu0 0.0
    %6823 = vmatmul.mubr.f32.gmra.mxu0 %v6756
    %v6824 = vpop.f32.mrf.mxu0
    %v6825 = vadd.f32 0.0, %v6824
    %v6826 = vpop.f32.mrf.mxu0
    %6827 = vdwg.mxu0
    %v6829 = vsel %vm217, %v6749, 0
    %v6832 = vsel %vm217, %v6825, 0
    %6834 = vmatprep.subr.mxu0 0.0
    %6835 = vmatpush1.msra.mxu0 0.0
    %6836 = vmatprep.subr.mxu0 0.0
    %6837 = vmatpush1.msra.mxu0 0.0
    %6838 = vmatprep.subr.mxu0 0.0
    %6839 = vmatpush1.msra.mxu0 0.0
    %6840 = vmatprep.subr.mxu0 0.0
    %6841 = vmatpush1.msra.mxu0 0.0
    %6842 = vmatprep.subr.mxu0 0.0
    %6843 = vmatpush1.msra.mxu0 0.0
    %6844 = vmatprep.subr.mxu0 0.0
    %6845 = vmatpush1.msra.mxu0 0.0
    %6846 = vmatprep.subr.mxu0 0.0
    %6847 = vmatpush1.msra.mxu0 0.0
    %6848 = vmatprep.subr.mxu0 0.0
    %6849 = vmatpush1.msra.mxu0 0.0
    %6850 = vmatprep.subr.mxu0 0.0
    %6851 = vmatpush1.msra.mxu0 0.0
    %6852 = vmatprep.subr.mxu0 0.0
    %6853 = vmatpush1.msra.mxu0 0.0
    %6854 = vmatprep.subr.mxu0 0.0
    %6855 = vmatpush1.msra.mxu0 0.0
    %6856 = vmatprep.subr.mxu0 0.0
    %6857 = vmatpush1.msra.mxu0 0.0
    %6858 = vmatprep.subr.mxu0 0.0
    %6859 = vmatpush1.msra.mxu0 0.0
    %6860 = vmatprep.subr.mxu0 0.0
    %6861 = vmatpush1.msra.mxu0 0.0
    %6862 = vmatprep.subr.mxu0 0.0
    %6863 = vmatpush1.msra.mxu0 0.0
    %6864 = vmatprep.subr.mxu0 0.0
    %6865 = vmatpush1.msra.mxu0 %v6077
    %6866 = vmatprep.subr.mxu0 0.0
    %6867 = vmatpush2.msra.mxu0 0.0
    %6868 = vmatprep.subr.mxu0 0.0
    %6869 = vmatpush2.msra.mxu0 0.0
    %6870 = vmatprep.subr.mxu0 0.0
    %6871 = vmatpush2.msra.mxu0 0.0
    %6872 = vmatprep.subr.mxu0 0.0
    %6873 = vmatpush2.msra.mxu0 0.0
    %6874 = vmatprep.subr.mxu0 0.0
    %6875 = vmatpush2.msra.mxu0 0.0
    %6876 = vmatprep.subr.mxu0 0.0
    %6877 = vmatpush2.msra.mxu0 0.0
    %6878 = vmatprep.subr.mxu0 0.0
    %6879 = vmatpush2.msra.mxu0 0.0
    %6880 = vmatprep.subr.mxu0 0.0
    %6881 = vmatpush2.msra.mxu0 0.0
    %6882 = vmatprep.subr.mxu0 0.0
    %6883 = vmatpush2.msra.mxu0 0.0
    %6884 = vmatprep.subr.mxu0 0.0
    %6885 = vmatpush2.msra.mxu0 0.0
    %6886 = vmatprep.subr.mxu0 0.0
    %6887 = vmatpush2.msra.mxu0 0.0
    %6888 = vmatprep.subr.mxu0 0.0
    %6889 = vmatpush2.msra.mxu0 0.0
    %6890 = vmatprep.subr.mxu0 0.0
    %6891 = vmatpush2.msra.mxu0 0.0
    %6892 = vmatprep.subr.mxu0 0.0
    %6893 = vmatpush2.msra.mxu0 0.0
    %6894 = vmatprep.subr.mxu0 0.0
    %6895 = vmatpush2.msra.mxu0 0.0
    %6896 = vmatprep.subr.mxu0 0.0
    %6897 = vmatpush2.msra.mxu0 0.0
    %6898 = vmatprep.mubr.f32.mxu0 0.0
    %6899 = vmatmul.mubr.f32.gmra.mxu0 %v6829
    %v6900 = vpop.f32.mrf.mxu0
    %v6901 = vadd.f32 0.0, %v6900
    %v6902 = vpop.f32.mrf.mxu0
    %6903 = vmatprep.mubr.f32.mxu0 0.0
    %6904 = vmatmul.mubr.f32.gmra.mxu0 %v6832
    %v6905 = vpop.f32.mrf.mxu0
    %v6906 = vadd.f32 0.0, %v6905
    %v6907 = vpop.f32.mrf.mxu0
    %6908 = vdwg.mxu0
    %v6909 = vadd.f32 %v6494, %v6901
    %v6910 = vadd.f32 %v6495, %v6906
    %6911 = vrot.lane.b32.xlu0 %v5984, 112
    %v6912 = vpop.permute.xlu0 %6911
    %6913 = vrot.lane.b32.xlu0 %v6068, 112
    %v6914 = vpop.permute.xlu0 %6913
    %v6915 = vsel %vm217, %v6912, 0
    %v6917 = vsel %vm217, %v6914, 0
    %6919 = vmatprep.subr.mxu0 0.0
    %6920 = vmatpush1.xpose.msra.mxu0 0.0
    %6921 = vmatprep.subr.mxu0 0.0
    %6922 = vmatpush1.xpose.msra.mxu0 0.0
    %6923 = vmatprep.subr.mxu0 0.0
    %6924 = vmatpush1.xpose.msra.mxu0 0.0
    %6925 = vmatprep.subr.mxu0 0.0
    %6926 = vmatpush1.xpose.msra.mxu0 0.0
    %6927 = vmatprep.subr.mxu0 0.0
    %6928 = vmatpush1.xpose.msra.mxu0 0.0
    %6929 = vmatprep.subr.mxu0 0.0
    %6930 = vmatpush1.xpose.msra.mxu0 0.0
    %6931 = vmatprep.subr.mxu0 0.0
    %6932 = vmatpush1.xpose.msra.mxu0 0.0
    %6933 = vmatprep.subr.mxu0 0.0
    %6934 = vmatpush1.xpose.msra.mxu0 0.0
    %6935 = vmatprep.subr.mxu0 0.0
    %6936 = vmatpush1.xpose.msra.mxu0 0.0
    %6937 = vmatprep.subr.mxu0 0.0
    %6938 = vmatpush1.xpose.msra.mxu0 0.0
    %6939 = vmatprep.subr.mxu0 0.0
    %6940 = vmatpush1.xpose.msra.mxu0 0.0
    %6941 = vmatprep.subr.mxu0 0.0
    %6942 = vmatpush1.xpose.msra.mxu0 0.0
    %6943 = vmatprep.subr.mxu0 0.0
    %6944 = vmatpush1.xpose.msra.mxu0 0.0
    %6945 = vmatprep.subr.mxu0 0.0
    %6946 = vmatpush1.xpose.msra.mxu0 0.0
    %6947 = vmatprep.subr.mxu0 0.0
    %6948 = vmatpush1.xpose.msra.mxu0 0.0
    %6949 = vmatprep.subr.mxu0 0.0
    %6950 = vmatpush1.xpose.msra.mxu0 %v6917
    %6951 = vmatprep.subr.mxu0 0.0
    %6952 = vmatpush2.xpose.msra.mxu0 0.0
    %6953 = vmatprep.subr.mxu0 0.0
    %6954 = vmatpush2.xpose.msra.mxu0 0.0
    %6955 = vmatprep.subr.mxu0 0.0
    %6956 = vmatpush2.xpose.msra.mxu0 0.0
    %6957 = vmatprep.subr.mxu0 0.0
    %6958 = vmatpush2.xpose.msra.mxu0 0.0
    %6959 = vmatprep.subr.mxu0 0.0
    %6960 = vmatpush2.xpose.msra.mxu0 0.0
    %6961 = vmatprep.subr.mxu0 0.0
    %6962 = vmatpush2.xpose.msra.mxu0 0.0
    %6963 = vmatprep.subr.mxu0 0.0
    %6964 = vmatpush2.xpose.msra.mxu0 0.0
    %6965 = vmatprep.subr.mxu0 0.0
    %6966 = vmatpush2.xpose.msra.mxu0 0.0
    %6967 = vmatprep.subr.mxu0 0.0
    %6968 = vmatpush2.xpose.msra.mxu0 0.0
    %6969 = vmatprep.subr.mxu0 0.0
    %6970 = vmatpush2.xpose.msra.mxu0 0.0
    %6971 = vmatprep.subr.mxu0 0.0
    %6972 = vmatpush2.xpose.msra.mxu0 0.0
    %6973 = vmatprep.subr.mxu0 0.0
    %6974 = vmatpush2.xpose.msra.mxu0 0.0
    %6975 = vmatprep.subr.mxu0 0.0
    %6976 = vmatpush2.xpose.msra.mxu0 0.0
    %6977 = vmatprep.subr.mxu0 0.0
    %6978 = vmatpush2.xpose.msra.mxu0 0.0
    %6979 = vmatprep.subr.mxu0 0.0
    %6980 = vmatpush2.xpose.msra.mxu0 0.0
    %6981 = vmatprep.subr.mxu0 0.0
    %6982 = vmatpush2.xpose.msra.mxu0 0.0
    %6983 = vmatprep.mubr.f32.mxu0 0.0
    %6984 = vmatmul.mubr.f32.gmra.mxu0 %v6915
    %v6985 = vpop.f32.mrf.mxu0
    %v6986 = vadd.f32 %v2120, %v6985
    %v6987 = vpop.f32.mrf.mxu0
    %6988 = vdwg.mxu0
    %6989 = vrot.lane.b32.xlu0 %v5989, 112
    %v6990 = vpop.permute.xlu0 %6989
    %6991 = vrot.lane.b32.xlu0 %v6073, 112
    %v6992 = vpop.permute.xlu0 %6991
    %v6993 = vsel %vm217, %v6990, 0
    %v6995 = vsel %vm217, %v6992, 0
    %6997 = vmatprep.subr.mxu0 0.0
    %6998 = vmatpush1.xpose.msra.mxu0 0.0
    %6999 = vmatprep.subr.mxu0 0.0
    %7000 = vmatpush1.xpose.msra.mxu0 0.0
    %7001 = vmatprep.subr.mxu0 0.0
    %7002 = vmatpush1.xpose.msra.mxu0 0.0
    %7003 = vmatprep.subr.mxu0 0.0
    %7004 = vmatpush1.xpose.msra.mxu0 0.0
    %7005 = vmatprep.subr.mxu0 0.0
    %7006 = vmatpush1.xpose.msra.mxu0 0.0
    %7007 = vmatprep.subr.mxu0 0.0
    %7008 = vmatpush1.xpose.msra.mxu0 0.0
    %7009 = vmatprep.subr.mxu0 0.0
    %7010 = vmatpush1.xpose.msra.mxu0 0.0
    %7011 = vmatprep.subr.mxu0 0.0
    %7012 = vmatpush1.xpose.msra.mxu0 0.0
    %7013 = vmatprep.subr.mxu0 0.0
    %7014 = vmatpush1.xpose.msra.mxu0 0.0
    %7015 = vmatprep.subr.mxu0 0.0
    %7016 = vmatpush1.xpose.msra.mxu0 0.0
    %7017 = vmatprep.subr.mxu0 0.0
    %7018 = vmatpush1.xpose.msra.mxu0 0.0
    %7019 = vmatprep.subr.mxu0 0.0
    %7020 = vmatpush1.xpose.msra.mxu0 0.0
    %7021 = vmatprep.subr.mxu0 0.0
    %7022 = vmatpush1.xpose.msra.mxu0 0.0
    %7023 = vmatprep.subr.mxu0 0.0
    %7024 = vmatpush1.xpose.msra.mxu0 0.0
    %7025 = vmatprep.subr.mxu0 0.0
    %7026 = vmatpush1.xpose.msra.mxu0 0.0
    %7027 = vmatprep.subr.mxu0 0.0
    %7028 = vmatpush1.xpose.msra.mxu0 %v6995
    %7029 = vmatprep.subr.mxu0 0.0
    %7030 = vmatpush2.xpose.msra.mxu0 0.0
    %7031 = vmatprep.subr.mxu0 0.0
    %7032 = vmatpush2.xpose.msra.mxu0 0.0
    %7033 = vmatprep.subr.mxu0 0.0
    %7034 = vmatpush2.xpose.msra.mxu0 0.0
    %7035 = vmatprep.subr.mxu0 0.0
    %7036 = vmatpush2.xpose.msra.mxu0 0.0
    %7037 = vmatprep.subr.mxu0 0.0
    %7038 = vmatpush2.xpose.msra.mxu0 0.0
    %7039 = vmatprep.subr.mxu0 0.0
    %7040 = vmatpush2.xpose.msra.mxu0 0.0
    %7041 = vmatprep.subr.mxu0 0.0
    %7042 = vmatpush2.xpose.msra.mxu0 0.0
    %7043 = vmatprep.subr.mxu0 0.0
    %7044 = vmatpush2.xpose.msra.mxu0 0.0
    %7045 = vmatprep.subr.mxu0 0.0
    %7046 = vmatpush2.xpose.msra.mxu0 0.0
    %7047 = vmatprep.subr.mxu0 0.0
    %7048 = vmatpush2.xpose.msra.mxu0 0.0
    %7049 = vmatprep.subr.mxu0 0.0
    %7050 = vmatpush2.xpose.msra.mxu0 0.0
    %7051 = vmatprep.subr.mxu0 0.0
    %7052 = vmatpush2.xpose.msra.mxu0 0.0
    %7053 = vmatprep.subr.mxu0 0.0
    %7054 = vmatpush2.xpose.msra.mxu0 0.0
    %7055 = vmatprep.subr.mxu0 0.0
    %7056 = vmatpush2.xpose.msra.mxu0 0.0
    %7057 = vmatprep.subr.mxu0 0.0
    %7058 = vmatpush2.xpose.msra.mxu0 0.0
    %7059 = vmatprep.subr.mxu0 0.0
    %7060 = vmatpush2.xpose.msra.mxu0 0.0
    %7061 = vmatprep.mubr.f32.mxu0 0.0
    %7062 = vmatmul.mubr.f32.gmra.mxu0 %v6993
    %v7063 = vpop.f32.mrf.mxu0
    %v7064 = vadd.f32 %v2200, %v7063
    %v7065 = vpop.f32.mrf.mxu0
    %7066 = vdwg.mxu0
    %v7067 = vsel %vm217, %v6986, -inf
    %7068 = vmax.xlane.f32.xlu0 %v7067
    %v7069 = vpop.xlane.xlu0 %7068
    %v7070 = vsel %vm217, %v7064, -inf
    %7071 = vmax.xlane.f32.xlu0 %v7070
    %v7072 = vpop.xlane.xlu0 %7071
    %v7073 = vsub.f32 %v6986, %v7069
    %v7074 = vsub.f32 %v7064, %v7072
    %v7075 = vmul.f32 %v7073, 1.442695
    %v7076 = vpow.pop %v7075
    %v7077 = vmul.f32 %v7074, 1.442695
    %v7078 = vpow.pop %v7077
    %v7079 = vsel %vm217, %v7076, 0.0
    %7080 = vadd.xlane.f32.xlu0 %v7079
    %v7081 = vpop.xlane.xlu0 %7080
    %v7082 = vsel %vm217, %v7078, 0.0
    %7083 = vadd.xlane.f32.xlu0 %v7082
    %v7084 = vpop.xlane.xlu0 %7083
    %v7085 = vrcp.pop %v7081
    %v7086 = vmul.f32 1.0, %v7085
    %v7087 = vrcp.pop %v7084
    %v7088 = vmul.f32 1.0, %v7087
    %v7089 = vmul.f32 %v7076, %v7086
    %v7090 = vmul.f32 %v7078, %v7088
    %7091 = vrot.lane.b32.xlu0 %v6068, 80
    %v7092 = vpop.permute.xlu0 %7091
    %v7095 = vsel %vm217, %v7089, 0
    %7097 = vmatprep.subr.mxu0 0.0
    %7098 = vmatpush1.msra.mxu0 0.0
    %7099 = vmatprep.subr.mxu0 0.0
    %7100 = vmatpush1.msra.mxu0 0.0
    %7101 = vmatprep.subr.mxu0 0.0
    %7102 = vmatpush1.msra.mxu0 0.0
    %7103 = vmatprep.subr.mxu0 0.0
    %7104 = vmatpush1.msra.mxu0 0.0
    %7105 = vmatprep.subr.mxu0 0.0
    %7106 = vmatpush1.msra.mxu0 0.0
    %7107 = vmatprep.subr.mxu0 0.0
    %7108 = vmatpush1.msra.mxu0 0.0
    %7109 = vmatprep.subr.mxu0 0.0
    %7110 = vmatpush1.msra.mxu0 0.0
    %7111 = vmatprep.subr.mxu0 0.0
    %7112 = vmatpush1.msra.mxu0 0.0
    %7113 = vmatprep.subr.mxu0 0.0
    %7114 = vmatpush1.msra.mxu0 0.0
    %7115 = vmatprep.subr.mxu0 0.0
    %7116 = vmatpush1.msra.mxu0 0.0
    %7117 = vmatprep.subr.mxu0 0.0
    %7118 = vmatpush1.msra.mxu0 0.0
    %7119 = vmatprep.subr.mxu0 0.0
    %7120 = vmatpush1.msra.mxu0 0.0
    %7121 = vmatprep.subr.mxu0 0.0
    %7122 = vmatpush1.msra.mxu0 0.0
    %7123 = vmatprep.subr.mxu0 0.0
    %7124 = vmatpush1.msra.mxu0 0.0
    %7125 = vmatprep.subr.mxu0 0.0
    %7126 = vmatpush1.msra.mxu0 0.0
    %7127 = vmatprep.subr.mxu0 0.0
    %7128 = vmatpush1.msra.mxu0 %v7092
    %7129 = vmatprep.subr.mxu0 0.0
    %7130 = vmatpush2.msra.mxu0 0.0
    %7131 = vmatprep.subr.mxu0 0.0
    %7132 = vmatpush2.msra.mxu0 0.0
    %7133 = vmatprep.subr.mxu0 0.0
    %7134 = vmatpush2.msra.mxu0 0.0
    %7135 = vmatprep.subr.mxu0 0.0
    %7136 = vmatpush2.msra.mxu0 0.0
    %7137 = vmatprep.subr.mxu0 0.0
    %7138 = vmatpush2.msra.mxu0 0.0
    %7139 = vmatprep.subr.mxu0 0.0
    %7140 = vmatpush2.msra.mxu0 0.0
    %7141 = vmatprep.subr.mxu0 0.0
    %7142 = vmatpush2.msra.mxu0 0.0
    %7143 = vmatprep.subr.mxu0 0.0
    %7144 = vmatpush2.msra.mxu0 0.0
    %7145 = vmatprep.subr.mxu0 0.0
    %7146 = vmatpush2.msra.mxu0 0.0
    %7147 = vmatprep.subr.mxu0 0.0
    %7148 = vmatpush2.msra.mxu0 0.0
    %7149 = vmatprep.subr.mxu0 0.0
    %7150 = vmatpush2.msra.mxu0 0.0
    %7151 = vmatprep.subr.mxu0 0.0
    %7152 = vmatpush2.msra.mxu0 0.0
    %7153 = vmatprep.subr.mxu0 0.0
    %7154 = vmatpush2.msra.mxu0 0.0
    %7155 = vmatprep.subr.mxu0 0.0
    %7156 = vmatpush2.msra.mxu0 0.0
    %7157 = vmatprep.subr.mxu0 0.0
    %7158 = vmatpush2.msra.mxu0 0.0
    %7159 = vmatprep.subr.mxu0 0.0
    %7160 = vmatpush2.msra.mxu0 0.0
    %7161 = vmatprep.mubr.f32.mxu0 0.0
    %7162 = vmatmul.mubr.f32.gmra.mxu0 %v7095
    %v7163 = vpop.f32.mrf.mxu0
    %v7164 = vadd.f32 0.0, %v7163
    %v7165 = vpop.f32.mrf.mxu0
    %7166 = vdwg.mxu0
    %7167 = vrot.lane.b32.xlu0 %v6073, 80
    %v7168 = vpop.permute.xlu0 %7167
    %v7171 = vsel %vm217, %v7090, 0
    %7173 = vmatprep.subr.mxu0 0.0
    %7174 = vmatpush1.msra.mxu0 0.0
    %7175 = vmatprep.subr.mxu0 0.0
    %7176 = vmatpush1.msra.mxu0 0.0
    %7177 = vmatprep.subr.mxu0 0.0
    %7178 = vmatpush1.msra.mxu0 0.0
    %7179 = vmatprep.subr.mxu0 0.0
    %7180 = vmatpush1.msra.mxu0 0.0
    %7181 = vmatprep.subr.mxu0 0.0
    %7182 = vmatpush1.msra.mxu0 0.0
    %7183 = vmatprep.subr.mxu0 0.0
    %7184 = vmatpush1.msra.mxu0 0.0
    %7185 = vmatprep.subr.mxu0 0.0
    %7186 = vmatpush1.msra.mxu0 0.0
    %7187 = vmatprep.subr.mxu0 0.0
    %7188 = vmatpush1.msra.mxu0 0.0
    %7189 = vmatprep.subr.mxu0 0.0
    %7190 = vmatpush1.msra.mxu0 0.0
    %7191 = vmatprep.subr.mxu0 0.0
    %7192 = vmatpush1.msra.mxu0 0.0
    %7193 = vmatprep.subr.mxu0 0.0
    %7194 = vmatpush1.msra.mxu0 0.0
    %7195 = vmatprep.subr.mxu0 0.0
    %7196 = vmatpush1.msra.mxu0 0.0
    %7197 = vmatprep.subr.mxu0 0.0
    %7198 = vmatpush1.msra.mxu0 0.0
    %7199 = vmatprep.subr.mxu0 0.0
    %7200 = vmatpush1.msra.mxu0 0.0
    %7201 = vmatprep.subr.mxu0 0.0
    %7202 = vmatpush1.msra.mxu0 0.0
    %7203 = vmatprep.subr.mxu0 0.0
    %7204 = vmatpush1.msra.mxu0 %v7168
    %7205 = vmatprep.subr.mxu0 0.0
    %7206 = vmatpush2.msra.mxu0 0.0
    %7207 = vmatprep.subr.mxu0 0.0
    %7208 = vmatpush2.msra.mxu0 0.0
    %7209 = vmatprep.subr.mxu0 0.0
    %7210 = vmatpush2.msra.mxu0 0.0
    %7211 = vmatprep.subr.mxu0 0.0
    %7212 = vmatpush2.msra.mxu0 0.0
    %7213 = vmatprep.subr.mxu0 0.0
    %7214 = vmatpush2.msra.mxu0 0.0
    %7215 = vmatprep.subr.mxu0 0.0
    %7216 = vmatpush2.msra.mxu0 0.0
    %7217 = vmatprep.subr.mxu0 0.0
    %7218 = vmatpush2.msra.mxu0 0.0
    %7219 = vmatprep.subr.mxu0 0.0
    %7220 = vmatpush2.msra.mxu0 0.0
    %7221 = vmatprep.subr.mxu0 0.0
    %7222 = vmatpush2.msra.mxu0 0.0
    %7223 = vmatprep.subr.mxu0 0.0
    %7224 = vmatpush2.msra.mxu0 0.0
    %7225 = vmatprep.subr.mxu0 0.0
    %7226 = vmatpush2.msra.mxu0 0.0
    %7227 = vmatprep.subr.mxu0 0.0
    %7228 = vmatpush2.msra.mxu0 0.0
    %7229 = vmatprep.subr.mxu0 0.0
    %7230 = vmatpush2.msra.mxu0 0.0
    %7231 = vmatprep.subr.mxu0 0.0
    %7232 = vmatpush2.msra.mxu0 0.0
    %7233 = vmatprep.subr.mxu0 0.0
    %7234 = vmatpush2.msra.mxu0 0.0
    %7235 = vmatprep.subr.mxu0 0.0
    %7236 = vmatpush2.msra.mxu0 0.0
    %7237 = vmatprep.mubr.f32.mxu0 0.0
    %7238 = vmatmul.mubr.f32.gmra.mxu0 %v7171
    %v7239 = vpop.f32.mrf.mxu0
    %v7240 = vadd.f32 0.0, %v7239
    %v7241 = vpop.f32.mrf.mxu0
    %7242 = vdwg.mxu0
    %v7244 = vsel %vm217, %v7164, 0
    %v7247 = vsel %vm217, %v7240, 0
    %7249 = vmatprep.subr.mxu0 0.0
    %7250 = vmatpush1.msra.mxu0 0.0
    %7251 = vmatprep.subr.mxu0 0.0
    %7252 = vmatpush1.msra.mxu0 0.0
    %7253 = vmatprep.subr.mxu0 0.0
    %7254 = vmatpush1.msra.mxu0 0.0
    %7255 = vmatprep.subr.mxu0 0.0
    %7256 = vmatpush1.msra.mxu0 0.0
    %7257 = vmatprep.subr.mxu0 0.0
    %7258 = vmatpush1.msra.mxu0 0.0
    %7259 = vmatprep.subr.mxu0 0.0
    %7260 = vmatpush1.msra.mxu0 0.0
    %7261 = vmatprep.subr.mxu0 0.0
    %7262 = vmatpush1.msra.mxu0 0.0
    %7263 = vmatprep.subr.mxu0 0.0
    %7264 = vmatpush1.msra.mxu0 0.0
    %7265 = vmatprep.subr.mxu0 0.0
    %7266 = vmatpush1.msra.mxu0 0.0
    %7267 = vmatprep.subr.mxu0 0.0
    %7268 = vmatpush1.msra.mxu0 0.0
    %7269 = vmatprep.subr.mxu0 0.0
    %7270 = vmatpush1.msra.mxu0 0.0
    %7271 = vmatprep.subr.mxu0 0.0
    %7272 = vmatpush1.msra.mxu0 0.0
    %7273 = vmatprep.subr.mxu0 0.0
    %7274 = vmatpush1.msra.mxu0 0.0
    %7275 = vmatprep.subr.mxu0 0.0
    %7276 = vmatpush1.msra.mxu0 0.0
    %7277 = vmatprep.subr.mxu0 0.0
    %7278 = vmatpush1.msra.mxu0 0.0
    %7279 = vmatprep.subr.mxu0 0.0
    %7280 = vmatpush1.msra.mxu0 %v6078
    %7281 = vmatprep.subr.mxu0 0.0
    %7282 = vmatpush2.msra.mxu0 0.0
    %7283 = vmatprep.subr.mxu0 0.0
    %7284 = vmatpush2.msra.mxu0 0.0
    %7285 = vmatprep.subr.mxu0 0.0
    %7286 = vmatpush2.msra.mxu0 0.0
    %7287 = vmatprep.subr.mxu0 0.0
    %7288 = vmatpush2.msra.mxu0 0.0
    %7289 = vmatprep.subr.mxu0 0.0
    %7290 = vmatpush2.msra.mxu0 0.0
    %7291 = vmatprep.subr.mxu0 0.0
    %7292 = vmatpush2.msra.mxu0 0.0
    %7293 = vmatprep.subr.mxu0 0.0
    %7294 = vmatpush2.msra.mxu0 0.0
    %7295 = vmatprep.subr.mxu0 0.0
    %7296 = vmatpush2.msra.mxu0 0.0
    %7297 = vmatprep.subr.mxu0 0.0
    %7298 = vmatpush2.msra.mxu0 0.0
    %7299 = vmatprep.subr.mxu0 0.0
    %7300 = vmatpush2.msra.mxu0 0.0
    %7301 = vmatprep.subr.mxu0 0.0
    %7302 = vmatpush2.msra.mxu0 0.0
    %7303 = vmatprep.subr.mxu0 0.0
    %7304 = vmatpush2.msra.mxu0 0.0
    %7305 = vmatprep.subr.mxu0 0.0
    %7306 = vmatpush2.msra.mxu0 0.0
    %7307 = vmatprep.subr.mxu0 0.0
    %7308 = vmatpush2.msra.mxu0 0.0
    %7309 = vmatprep.subr.mxu0 0.0
    %7310 = vmatpush2.msra.mxu0 0.0
    %7311 = vmatprep.subr.mxu0 0.0
    %7312 = vmatpush2.msra.mxu0 0.0
    %7313 = vmatprep.mubr.f32.mxu0 0.0
    %7314 = vmatmul.mubr.f32.gmra.mxu0 %v7244
    %v7315 = vpop.f32.mrf.mxu0
    %v7316 = vadd.f32 0.0, %v7315
    %v7317 = vpop.f32.mrf.mxu0
    %7318 = vmatprep.mubr.f32.mxu0 0.0
    %7319 = vmatmul.mubr.f32.gmra.mxu0 %v7247
    %v7320 = vpop.f32.mrf.mxu0
    %v7321 = vadd.f32 0.0, %v7320
    %v7322 = vpop.f32.mrf.mxu0
    %7323 = vdwg.mxu0
    %v7324 = vadd.f32 %v6909, %v7316
    %v7325 = vadd.f32 %v6910, %v7321
    %7326 = vrot.lane.b32.xlu0 %v5984, 104
    %v7327 = vpop.permute.xlu0 %7326
    %7328 = vrot.lane.b32.xlu0 %v6068, 104
    %v7329 = vpop.permute.xlu0 %7328
    %v7330 = vsel %vm217, %v7327, 0
    %v7332 = vsel %vm217, %v7329, 0
    %7334 = vmatprep.subr.mxu0 0.0
    %7335 = vmatpush1.xpose.msra.mxu0 0.0
    %7336 = vmatprep.subr.mxu0 0.0
    %7337 = vmatpush1.xpose.msra.mxu0 0.0
    %7338 = vmatprep.subr.mxu0 0.0
    %7339 = vmatpush1.xpose.msra.mxu0 0.0
    %7340 = vmatprep.subr.mxu0 0.0
    %7341 = vmatpush1.xpose.msra.mxu0 0.0
    %7342 = vmatprep.subr.mxu0 0.0
    %7343 = vmatpush1.xpose.msra.mxu0 0.0
    %7344 = vmatprep.subr.mxu0 0.0
    %7345 = vmatpush1.xpose.msra.mxu0 0.0
    %7346 = vmatprep.subr.mxu0 0.0
    %7347 = vmatpush1.xpose.msra.mxu0 0.0
    %7348 = vmatprep.subr.mxu0 0.0
    %7349 = vmatpush1.xpose.msra.mxu0 0.0
    %7350 = vmatprep.subr.mxu0 0.0
    %7351 = vmatpush1.xpose.msra.mxu0 0.0
    %7352 = vmatprep.subr.mxu0 0.0
    %7353 = vmatpush1.xpose.msra.mxu0 0.0
    %7354 = vmatprep.subr.mxu0 0.0
    %7355 = vmatpush1.xpose.msra.mxu0 0.0
    %7356 = vmatprep.subr.mxu0 0.0
    %7357 = vmatpush1.xpose.msra.mxu0 0.0
    %7358 = vmatprep.subr.mxu0 0.0
    %7359 = vmatpush1.xpose.msra.mxu0 0.0
    %7360 = vmatprep.subr.mxu0 0.0
    %7361 = vmatpush1.xpose.msra.mxu0 0.0
    %7362 = vmatprep.subr.mxu0 0.0
    %7363 = vmatpush1.xpose.msra.mxu0 0.0
    %7364 = vmatprep.subr.mxu0 0.0
    %7365 = vmatpush1.xpose.msra.mxu0 %v7332
    %7366 = vmatprep.subr.mxu0 0.0
    %7367 = vmatpush2.xpose.msra.mxu0 0.0
    %7368 = vmatprep.subr.mxu0 0.0
    %7369 = vmatpush2.xpose.msra.mxu0 0.0
    %7370 = vmatprep.subr.mxu0 0.0
    %7371 = vmatpush2.xpose.msra.mxu0 0.0
    %7372 = vmatprep.subr.mxu0 0.0
    %7373 = vmatpush2.xpose.msra.mxu0 0.0
    %7374 = vmatprep.subr.mxu0 0.0
    %7375 = vmatpush2.xpose.msra.mxu0 0.0
    %7376 = vmatprep.subr.mxu0 0.0
    %7377 = vmatpush2.xpose.msra.mxu0 0.0
    %7378 = vmatprep.subr.mxu0 0.0
    %7379 = vmatpush2.xpose.msra.mxu0 0.0
    %7380 = vmatprep.subr.mxu0 0.0
    %7381 = vmatpush2.xpose.msra.mxu0 0.0
    %7382 = vmatprep.subr.mxu0 0.0
    %7383 = vmatpush2.xpose.msra.mxu0 0.0
    %7384 = vmatprep.subr.mxu0 0.0
    %7385 = vmatpush2.xpose.msra.mxu0 0.0
    %7386 = vmatprep.subr.mxu0 0.0
    %7387 = vmatpush2.xpose.msra.mxu0 0.0
    %7388 = vmatprep.subr.mxu0 0.0
    %7389 = vmatpush2.xpose.msra.mxu0 0.0
    %7390 = vmatprep.subr.mxu0 0.0
    %7391 = vmatpush2.xpose.msra.mxu0 0.0
    %7392 = vmatprep.subr.mxu0 0.0
    %7393 = vmatpush2.xpose.msra.mxu0 0.0
    %7394 = vmatprep.subr.mxu0 0.0
    %7395 = vmatpush2.xpose.msra.mxu0 0.0
    %7396 = vmatprep.subr.mxu0 0.0
    %7397 = vmatpush2.xpose.msra.mxu0 0.0
    %7398 = vmatprep.mubr.f32.mxu0 0.0
    %7399 = vmatmul.mubr.f32.gmra.mxu0 %v7330
    %v7400 = vpop.f32.mrf.mxu0
    %v7401 = vadd.f32 %v2120, %v7400
    %v7402 = vpop.f32.mrf.mxu0
    %7403 = vdwg.mxu0
    %7404 = vrot.lane.b32.xlu0 %v5989, 104
    %v7405 = vpop.permute.xlu0 %7404
    %7406 = vrot.lane.b32.xlu0 %v6073, 104
    %v7407 = vpop.permute.xlu0 %7406
    %v7408 = vsel %vm217, %v7405, 0
    %v7410 = vsel %vm217, %v7407, 0
    %7412 = vmatprep.subr.mxu0 0.0
    %7413 = vmatpush1.xpose.msra.mxu0 0.0
    %7414 = vmatprep.subr.mxu0 0.0
    %7415 = vmatpush1.xpose.msra.mxu0 0.0
    %7416 = vmatprep.subr.mxu0 0.0
    %7417 = vmatpush1.xpose.msra.mxu0 0.0
    %7418 = vmatprep.subr.mxu0 0.0
    %7419 = vmatpush1.xpose.msra.mxu0 0.0
    %7420 = vmatprep.subr.mxu0 0.0
    %7421 = vmatpush1.xpose.msra.mxu0 0.0
    %7422 = vmatprep.subr.mxu0 0.0
    %7423 = vmatpush1.xpose.msra.mxu0 0.0
    %7424 = vmatprep.subr.mxu0 0.0
    %7425 = vmatpush1.xpose.msra.mxu0 0.0
    %7426 = vmatprep.subr.mxu0 0.0
    %7427 = vmatpush1.xpose.msra.mxu0 0.0
    %7428 = vmatprep.subr.mxu0 0.0
    %7429 = vmatpush1.xpose.msra.mxu0 0.0
    %7430 = vmatprep.subr.mxu0 0.0
    %7431 = vmatpush1.xpose.msra.mxu0 0.0
    %7432 = vmatprep.subr.mxu0 0.0
    %7433 = vmatpush1.xpose.msra.mxu0 0.0
    %7434 = vmatprep.subr.mxu0 0.0
    %7435 = vmatpush1.xpose.msra.mxu0 0.0
    %7436 = vmatprep.subr.mxu0 0.0
    %7437 = vmatpush1.xpose.msra.mxu0 0.0
    %7438 = vmatprep.subr.mxu0 0.0
    %7439 = vmatpush1.xpose.msra.mxu0 0.0
    %7440 = vmatprep.subr.mxu0 0.0
    %7441 = vmatpush1.xpose.msra.mxu0 0.0
    %7442 = vmatprep.subr.mxu0 0.0
    %7443 = vmatpush1.xpose.msra.mxu0 %v7410
    %7444 = vmatprep.subr.mxu0 0.0
    %7445 = vmatpush2.xpose.msra.mxu0 0.0
    %7446 = vmatprep.subr.mxu0 0.0
    %7447 = vmatpush2.xpose.msra.mxu0 0.0
    %7448 = vmatprep.subr.mxu0 0.0
    %7449 = vmatpush2.xpose.msra.mxu0 0.0
    %7450 = vmatprep.subr.mxu0 0.0
    %7451 = vmatpush2.xpose.msra.mxu0 0.0
    %7452 = vmatprep.subr.mxu0 0.0
    %7453 = vmatpush2.xpose.msra.mxu0 0.0
    %7454 = vmatprep.subr.mxu0 0.0
    %7455 = vmatpush2.xpose.msra.mxu0 0.0
    %7456 = vmatprep.subr.mxu0 0.0
    %7457 = vmatpush2.xpose.msra.mxu0 0.0
    %7458 = vmatprep.subr.mxu0 0.0
    %7459 = vmatpush2.xpose.msra.mxu0 0.0
    %7460 = vmatprep.subr.mxu0 0.0
    %7461 = vmatpush2.xpose.msra.mxu0 0.0
    %7462 = vmatprep.subr.mxu0 0.0
    %7463 = vmatpush2.xpose.msra.mxu0 0.0
    %7464 = vmatprep.subr.mxu0 0.0
    %7465 = vmatpush2.xpose.msra.mxu0 0.0
    %7466 = vmatprep.subr.mxu0 0.0
    %7467 = vmatpush2.xpose.msra.mxu0 0.0
    %7468 = vmatprep.subr.mxu0 0.0
    %7469 = vmatpush2.xpose.msra.mxu0 0.0
    %7470 = vmatprep.subr.mxu0 0.0
    %7471 = vmatpush2.xpose.msra.mxu0 0.0
    %7472 = vmatprep.subr.mxu0 0.0
    %7473 = vmatpush2.xpose.msra.mxu0 0.0
    %7474 = vmatprep.subr.mxu0 0.0
    %7475 = vmatpush2.xpose.msra.mxu0 0.0
    %7476 = vmatprep.mubr.f32.mxu0 0.0
    %7477 = vmatmul.mubr.f32.gmra.mxu0 %v7408
    %v7478 = vpop.f32.mrf.mxu0
    %v7479 = vadd.f32 %v2200, %v7478
    %v7480 = vpop.f32.mrf.mxu0
    %7481 = vdwg.mxu0
    %v7482 = vsel %vm217, %v7401, -inf
    %7483 = vmax.xlane.f32.xlu0 %v7482
    %v7484 = vpop.xlane.xlu0 %7483
    %v7485 = vsel %vm217, %v7479, -inf
    %7486 = vmax.xlane.f32.xlu0 %v7485
    %v7487 = vpop.xlane.xlu0 %7486
    %v7488 = vsub.f32 %v7401, %v7484
    %v7489 = vsub.f32 %v7479, %v7487
    %v7490 = vmul.f32 %v7488, 1.442695
    %v7491 = vpow.pop %v7490
    %v7492 = vmul.f32 %v7489, 1.442695
    %v7493 = vpow.pop %v7492
    %v7494 = vsel %vm217, %v7491, 0.0
    %7495 = vadd.xlane.f32.xlu0 %v7494
    %v7496 = vpop.xlane.xlu0 %7495
    %v7497 = vsel %vm217, %v7493, 0.0
    %7498 = vadd.xlane.f32.xlu0 %v7497
    %v7499 = vpop.xlane.xlu0 %7498
    %v7500 = vrcp.pop %v7496
    %v7501 = vmul.f32 1.0, %v7500
    %v7502 = vrcp.pop %v7499
    %v7503 = vmul.f32 1.0, %v7502
    %v7504 = vmul.f32 %v7491, %v7501
    %v7505 = vmul.f32 %v7493, %v7503
    %7506 = vrot.lane.b32.xlu0 %v6068, 72
    %v7507 = vpop.permute.xlu0 %7506
    %v7510 = vsel %vm217, %v7504, 0
    %7512 = vmatprep.subr.mxu0 0.0
    %7513 = vmatpush1.msra.mxu0 0.0
    %7514 = vmatprep.subr.mxu0 0.0
    %7515 = vmatpush1.msra.mxu0 0.0
    %7516 = vmatprep.subr.mxu0 0.0
    %7517 = vmatpush1.msra.mxu0 0.0
    %7518 = vmatprep.subr.mxu0 0.0
    %7519 = vmatpush1.msra.mxu0 0.0
    %7520 = vmatprep.subr.mxu0 0.0
    %7521 = vmatpush1.msra.mxu0 0.0
    %7522 = vmatprep.subr.mxu0 0.0
    %7523 = vmatpush1.msra.mxu0 0.0
    %7524 = vmatprep.subr.mxu0 0.0
    %7525 = vmatpush1.msra.mxu0 0.0
    %7526 = vmatprep.subr.mxu0 0.0
    %7527 = vmatpush1.msra.mxu0 0.0
    %7528 = vmatprep.subr.mxu0 0.0
    %7529 = vmatpush1.msra.mxu0 0.0
    %7530 = vmatprep.subr.mxu0 0.0
    %7531 = vmatpush1.msra.mxu0 0.0
    %7532 = vmatprep.subr.mxu0 0.0
    %7533 = vmatpush1.msra.mxu0 0.0
    %7534 = vmatprep.subr.mxu0 0.0
    %7535 = vmatpush1.msra.mxu0 0.0
    %7536 = vmatprep.subr.mxu0 0.0
    %7537 = vmatpush1.msra.mxu0 0.0
    %7538 = vmatprep.subr.mxu0 0.0
    %7539 = vmatpush1.msra.mxu0 0.0
    %7540 = vmatprep.subr.mxu0 0.0
    %7541 = vmatpush1.msra.mxu0 0.0
    %7542 = vmatprep.subr.mxu0 0.0
    %7543 = vmatpush1.msra.mxu0 %v7507
    %7544 = vmatprep.subr.mxu0 0.0
    %7545 = vmatpush2.msra.mxu0 0.0
    %7546 = vmatprep.subr.mxu0 0.0
    %7547 = vmatpush2.msra.mxu0 0.0
    %7548 = vmatprep.subr.mxu0 0.0
    %7549 = vmatpush2.msra.mxu0 0.0
    %7550 = vmatprep.subr.mxu0 0.0
    %7551 = vmatpush2.msra.mxu0 0.0
    %7552 = vmatprep.subr.mxu0 0.0
    %7553 = vmatpush2.msra.mxu0 0.0
    %7554 = vmatprep.subr.mxu0 0.0
    %7555 = vmatpush2.msra.mxu0 0.0
    %7556 = vmatprep.subr.mxu0 0.0
    %7557 = vmatpush2.msra.mxu0 0.0
    %7558 = vmatprep.subr.mxu0 0.0
    %7559 = vmatpush2.msra.mxu0 0.0
    %7560 = vmatprep.subr.mxu0 0.0
    %7561 = vmatpush2.msra.mxu0 0.0
    %7562 = vmatprep.subr.mxu0 0.0
    %7563 = vmatpush2.msra.mxu0 0.0
    %7564 = vmatprep.subr.mxu0 0.0
    %7565 = vmatpush2.msra.mxu0 0.0
    %7566 = vmatprep.subr.mxu0 0.0
    %7567 = vmatpush2.msra.mxu0 0.0
    %7568 = vmatprep.subr.mxu0 0.0
    %7569 = vmatpush2.msra.mxu0 0.0
    %7570 = vmatprep.subr.mxu0 0.0
    %7571 = vmatpush2.msra.mxu0 0.0
    %7572 = vmatprep.subr.mxu0 0.0
    %7573 = vmatpush2.msra.mxu0 0.0
    %7574 = vmatprep.subr.mxu0 0.0
    %7575 = vmatpush2.msra.mxu0 0.0
    %7576 = vmatprep.mubr.f32.mxu0 0.0
    %7577 = vmatmul.mubr.f32.gmra.mxu0 %v7510
    %v7578 = vpop.f32.mrf.mxu0
    %v7579 = vadd.f32 0.0, %v7578
    %v7580 = vpop.f32.mrf.mxu0
    %7581 = vdwg.mxu0
    %7582 = vrot.lane.b32.xlu0 %v6073, 72
    %v7583 = vpop.permute.xlu0 %7582
    %v7586 = vsel %vm217, %v7505, 0
    %7588 = vmatprep.subr.mxu0 0.0
    %7589 = vmatpush1.msra.mxu0 0.0
    %7590 = vmatprep.subr.mxu0 0.0
    %7591 = vmatpush1.msra.mxu0 0.0
    %7592 = vmatprep.subr.mxu0 0.0
    %7593 = vmatpush1.msra.mxu0 0.0
    %7594 = vmatprep.subr.mxu0 0.0
    %7595 = vmatpush1.msra.mxu0 0.0
    %7596 = vmatprep.subr.mxu0 0.0
    %7597 = vmatpush1.msra.mxu0 0.0
    %7598 = vmatprep.subr.mxu0 0.0
    %7599 = vmatpush1.msra.mxu0 0.0
    %7600 = vmatprep.subr.mxu0 0.0
    %7601 = vmatpush1.msra.mxu0 0.0
    %7602 = vmatprep.subr.mxu0 0.0
    %7603 = vmatpush1.msra.mxu0 0.0
    %7604 = vmatprep.subr.mxu0 0.0
    %7605 = vmatpush1.msra.mxu0 0.0
    %7606 = vmatprep.subr.mxu0 0.0
    %7607 = vmatpush1.msra.mxu0 0.0
    %7608 = vmatprep.subr.mxu0 0.0
    %7609 = vmatpush1.msra.mxu0 0.0
    %7610 = vmatprep.subr.mxu0 0.0
    %7611 = vmatpush1.msra.mxu0 0.0
    %7612 = vmatprep.subr.mxu0 0.0
    %7613 = vmatpush1.msra.mxu0 0.0
    %7614 = vmatprep.subr.mxu0 0.0
    %7615 = vmatpush1.msra.mxu0 0.0
    %7616 = vmatprep.subr.mxu0 0.0
    %7617 = vmatpush1.msra.mxu0 0.0
    %7618 = vmatprep.subr.mxu0 0.0
    %7619 = vmatpush1.msra.mxu0 %v7583
    %7620 = vmatprep.subr.mxu0 0.0
    %7621 = vmatpush2.msra.mxu0 0.0
    %7622 = vmatprep.subr.mxu0 0.0
    %7623 = vmatpush2.msra.mxu0 0.0
    %7624 = vmatprep.subr.mxu0 0.0
    %7625 = vmatpush2.msra.mxu0 0.0
    %7626 = vmatprep.subr.mxu0 0.0
    %7627 = vmatpush2.msra.mxu0 0.0
    %7628 = vmatprep.subr.mxu0 0.0
    %7629 = vmatpush2.msra.mxu0 0.0
    %7630 = vmatprep.subr.mxu0 0.0
    %7631 = vmatpush2.msra.mxu0 0.0
    %7632 = vmatprep.subr.mxu0 0.0
    %7633 = vmatpush2.msra.mxu0 0.0
    %7634 = vmatprep.subr.mxu0 0.0
    %7635 = vmatpush2.msra.mxu0 0.0
    %7636 = vmatprep.subr.mxu0 0.0
    %7637 = vmatpush2.msra.mxu0 0.0
    %7638 = vmatprep.subr.mxu0 0.0
    %7639 = vmatpush2.msra.mxu0 0.0
    %7640 = vmatprep.subr.mxu0 0.0
    %7641 = vmatpush2.msra.mxu0 0.0
    %7642 = vmatprep.subr.mxu0 0.0
    %7643 = vmatpush2.msra.mxu0 0.0
    %7644 = vmatprep.subr.mxu0 0.0
    %7645 = vmatpush2.msra.mxu0 0.0
    %7646 = vmatprep.subr.mxu0 0.0
    %7647 = vmatpush2.msra.mxu0 0.0
    %7648 = vmatprep.subr.mxu0 0.0
    %7649 = vmatpush2.msra.mxu0 0.0
    %7650 = vmatprep.subr.mxu0 0.0
    %7651 = vmatpush2.msra.mxu0 0.0
    %7652 = vmatprep.mubr.f32.mxu0 0.0
    %7653 = vmatmul.mubr.f32.gmra.mxu0 %v7586
    %v7654 = vpop.f32.mrf.mxu0
    %v7655 = vadd.f32 0.0, %v7654
    %v7656 = vpop.f32.mrf.mxu0
    %7657 = vdwg.mxu0
    %v7659 = vsel %vm217, %v7579, 0
    %v7662 = vsel %vm217, %v7655, 0
    %7664 = vmatprep.subr.mxu0 0.0
    %7665 = vmatpush1.msra.mxu0 0.0
    %7666 = vmatprep.subr.mxu0 0.0
    %7667 = vmatpush1.msra.mxu0 0.0
    %7668 = vmatprep.subr.mxu0 0.0
    %7669 = vmatpush1.msra.mxu0 0.0
    %7670 = vmatprep.subr.mxu0 0.0
    %7671 = vmatpush1.msra.mxu0 0.0
    %7672 = vmatprep.subr.mxu0 0.0
    %7673 = vmatpush1.msra.mxu0 0.0
    %7674 = vmatprep.subr.mxu0 0.0
    %7675 = vmatpush1.msra.mxu0 0.0
    %7676 = vmatprep.subr.mxu0 0.0
    %7677 = vmatpush1.msra.mxu0 0.0
    %7678 = vmatprep.subr.mxu0 0.0
    %7679 = vmatpush1.msra.mxu0 0.0
    %7680 = vmatprep.subr.mxu0 0.0
    %7681 = vmatpush1.msra.mxu0 0.0
    %7682 = vmatprep.subr.mxu0 0.0
    %7683 = vmatpush1.msra.mxu0 0.0
    %7684 = vmatprep.subr.mxu0 0.0
    %7685 = vmatpush1.msra.mxu0 0.0
    %7686 = vmatprep.subr.mxu0 0.0
    %7687 = vmatpush1.msra.mxu0 0.0
    %7688 = vmatprep.subr.mxu0 0.0
    %7689 = vmatpush1.msra.mxu0 0.0
    %7690 = vmatprep.subr.mxu0 0.0
    %7691 = vmatpush1.msra.mxu0 0.0
    %7692 = vmatprep.subr.mxu0 0.0
    %7693 = vmatpush1.msra.mxu0 0.0
    %7694 = vmatprep.subr.mxu0 0.0
    %7695 = vmatpush1.msra.mxu0 %v6079
    %7696 = vmatprep.subr.mxu0 0.0
    %7697 = vmatpush2.msra.mxu0 0.0
    %7698 = vmatprep.subr.mxu0 0.0
    %7699 = vmatpush2.msra.mxu0 0.0
    %7700 = vmatprep.subr.mxu0 0.0
    %7701 = vmatpush2.msra.mxu0 0.0
    %7702 = vmatprep.subr.mxu0 0.0
    %7703 = vmatpush2.msra.mxu0 0.0
    %7704 = vmatprep.subr.mxu0 0.0
    %7705 = vmatpush2.msra.mxu0 0.0
    %7706 = vmatprep.subr.mxu0 0.0
    %7707 = vmatpush2.msra.mxu0 0.0
    %7708 = vmatprep.subr.mxu0 0.0
    %7709 = vmatpush2.msra.mxu0 0.0
    %7710 = vmatprep.subr.mxu0 0.0
    %7711 = vmatpush2.msra.mxu0 0.0
    %7712 = vmatprep.subr.mxu0 0.0
    %7713 = vmatpush2.msra.mxu0 0.0
    %7714 = vmatprep.subr.mxu0 0.0
    %7715 = vmatpush2.msra.mxu0 0.0
    %7716 = vmatprep.subr.mxu0 0.0
    %7717 = vmatpush2.msra.mxu0 0.0
    %7718 = vmatprep.subr.mxu0 0.0
    %7719 = vmatpush2.msra.mxu0 0.0
    %7720 = vmatprep.subr.mxu0 0.0
    %7721 = vmatpush2.msra.mxu0 0.0
    %7722 = vmatprep.subr.mxu0 0.0
    %7723 = vmatpush2.msra.mxu0 0.0
    %7724 = vmatprep.subr.mxu0 0.0
    %7725 = vmatpush2.msra.mxu0 0.0
    %7726 = vmatprep.subr.mxu0 0.0
    %7727 = vmatpush2.msra.mxu0 0.0
    %7728 = vmatprep.mubr.f32.mxu0 0.0
    %7729 = vmatmul.mubr.f32.gmra.mxu0 %v7659
    %v7730 = vpop.f32.mrf.mxu0
    %v7731 = vadd.f32 0.0, %v7730
    %v7732 = vpop.f32.mrf.mxu0
    %7733 = vmatprep.mubr.f32.mxu0 0.0
    %7734 = vmatmul.mubr.f32.gmra.mxu0 %v7662
    %v7735 = vpop.f32.mrf.mxu0
    %v7736 = vadd.f32 0.0, %v7735
    %v7737 = vpop.f32.mrf.mxu0
    %7738 = vdwg.mxu0
    %v7739 = vadd.f32 %v7324, %v7731
    %v7740 = vadd.f32 %v7325, %v7736
    %v7741 = vadd.f32 %v5846, %v7739
    %v7742 = vadd.f32 %v5847, %v7740
    %v7743 = vsel %vm64, %v7741, 0.0
    %7744 = vadd.xlane.f32.xlu0 %v7743
    %v7745 = vpop.xlane.xlu0 %7744
    %v7746 = vsel %vm64, %v7742, 0.0
    %7747 = vadd.xlane.f32.xlu0 %v7746
    %v7748 = vpop.xlane.xlu0 %7747
    %v7749 = vmul.f32 %v7745, 0.03125
    %v7750 = vmul.f32 %v7748, 0.03125
    %v7751 = vsub.f32 %v7741, %v7749
    %v7752 = vsub.f32 %v7742, %v7750
    %v7753 = vmul.f32 %v7751, %v7751
    %v7754 = vmul.f32 %v7752, %v7752
    %v7755 = vsel %vm64, %v7753, 0.0
    %7756 = vadd.xlane.f32.xlu0 %v7755
    %v7757 = vpop.xlane.xlu0 %7756
    %v7758 = vsel %vm64, %v7754, 0.0
    %7759 = vadd.xlane.f32.xlu0 %v7758
    %v7760 = vpop.xlane.xlu0 %7759
    %v7761 = vmul.f32 %v7757, 0.032258064
    %v7762 = vmul.f32 %v7760, 0.032258064
    %v7763 = vrsqrt.pop %v7761
    %v7764 = vmul.f32 %v7761, %v7763
    %vm7765 = vcmp.eq.f32.partialorder %v7761, inf
    %v7766 = vsel %vm7765, %v7761, %v7764
    %vm7767 = vcmp.eq.f32.partialorder %v7761, 0.0
    %v7768 = vand.u32 %v7761, 2147483648
    %v7769 = vsel %vm7767, %v7768, %v7766
    %v7770 = vrsqrt.pop %v7762
    %v7771 = vmul.f32 %v7762, %v7770
    %vm7772 = vcmp.eq.f32.partialorder %v7762, inf
    %v7773 = vsel %vm7772, %v7762, %v7771
    %vm7774 = vcmp.eq.f32.partialorder %v7762, 0.0
    %v7775 = vand.u32 %v7762, 2147483648
    %v7776 = vsel %vm7774, %v7775, %v7773
    %v7777 = vadd.f32 %v7769, 1e-16
    %v7778 = vadd.f32 %v7776, 1e-16
    %v7779 = vrcp.pop %v7777
    %v7780 = vmul.f32 1.0, %v7779
    %v7781 = vrcp.pop %v7778
    %v7782 = vmul.f32 1.0, %v7781
    %v7783 = vmul.f32 %v7751, %v7780
    %v7784 = vmul.f32 %v7752, %v7782
    %v7785 = vlaneseq
    %v7786 = vshrl.u32 %v7785, 7
    %v7787 = vsub.s32 2, %v7786
    %v7788 = vrot.slane %v4033, %v7787
    %v7789 = vmul.f32 %v7788, %v7783
    %v7790 = vmul.f32 %v7788, %v7784
    %v7791 = vlaneseq
    %v7792 = vshrl.u32 %v7791, 7
    %v7793 = vsub.s32 2, %v7792
    %v7794 = vrot.slane %v4034, %v7793
    %v7795 = vadd.f32 %v7789, %v7794
    %v7796 = vadd.f32 %v7790, %v7794
    %v7797 = vld [vmem:[#allocation7 + $0x220] sm:$0xff]
    %v7798 = vld [vmem:[#allocation7 + $0x228] sm:$0xff]
    %v7799 = vld [vmem:[#allocation7 + $0x230] sm:$0xff]
    %v7800 = vld [vmem:[#allocation7 + $0x238] sm:$0xff]
    %v7801 = vld [vmem:[#allocation7 + $0x240] sm:$0x1]
    %v7802 = vlaneseq
    %v7803 = vshrl.u32 %v7802, 7
    %v7804 = vsub.s32 0, %v7803
    %v7805 = vrot.slane %v7801, %v7804
    %v7807 = vsel %vm64, %v7795, 0
    %v7810 = vsel %vm64, %v7796, 0
    %7812 = vmatprep.subr.mxu0 0.0
    %7813 = vmatpush1.msra.mxu0 0.0
    %7814 = vmatprep.subr.mxu0 0.0
    %7815 = vmatpush1.msra.mxu0 0.0
    %7816 = vmatprep.subr.mxu0 0.0
    %7817 = vmatpush1.msra.mxu0 0.0
    %7818 = vmatprep.subr.mxu0 0.0
    %7819 = vmatpush1.msra.mxu0 0.0
    %7820 = vmatprep.subr.mxu0 0.0
    %7821 = vmatpush1.msra.mxu0 0.0
    %7822 = vmatprep.subr.mxu0 0.0
    %7823 = vmatpush1.msra.mxu0 0.0
    %7824 = vmatprep.subr.mxu0 0.0
    %7825 = vmatpush1.msra.mxu0 0.0
    %7826 = vmatprep.subr.mxu0 0.0
    %7827 = vmatpush1.msra.mxu0 0.0
    %7828 = vmatprep.subr.mxu0 0.0
    %7829 = vmatpush1.msra.mxu0 0.0
    %7830 = vmatprep.subr.mxu0 0.0
    %7831 = vmatpush1.msra.mxu0 0.0
    %7832 = vmatprep.subr.mxu0 0.0
    %7833 = vmatpush1.msra.mxu0 0.0
    %7834 = vmatprep.subr.mxu0 0.0
    %7835 = vmatpush1.msra.mxu0 0.0
    %7836 = vmatprep.subr.mxu0 0.0
    %7837 = vmatpush1.msra.mxu0 %v7800
    %7838 = vmatprep.subr.mxu0 0.0
    %7839 = vmatpush1.msra.mxu0 %v7799
    %7840 = vmatprep.subr.mxu0 0.0
    %7841 = vmatpush1.msra.mxu0 %v7798
    %7842 = vmatprep.subr.mxu0 0.0
    %7843 = vmatpush1.msra.mxu0 %v7797
    %7844 = vmatprep.subr.mxu0 0.0
    %7845 = vmatpush2.msra.mxu0 0.0
    %7846 = vmatprep.subr.mxu0 0.0
    %7847 = vmatpush2.msra.mxu0 0.0
    %7848 = vmatprep.subr.mxu0 0.0
    %7849 = vmatpush2.msra.mxu0 0.0
    %7850 = vmatprep.subr.mxu0 0.0
    %7851 = vmatpush2.msra.mxu0 0.0
    %7852 = vmatprep.subr.mxu0 0.0
    %7853 = vmatpush2.msra.mxu0 0.0
    %7854 = vmatprep.subr.mxu0 0.0
    %7855 = vmatpush2.msra.mxu0 0.0
    %7856 = vmatprep.subr.mxu0 0.0
    %7857 = vmatpush2.msra.mxu0 0.0
    %7858 = vmatprep.subr.mxu0 0.0
    %7859 = vmatpush2.msra.mxu0 0.0
    %7860 = vmatprep.subr.mxu0 0.0
    %7861 = vmatpush2.msra.mxu0 0.0
    %7862 = vmatprep.subr.mxu0 0.0
    %7863 = vmatpush2.msra.mxu0 0.0
    %7864 = vmatprep.subr.mxu0 0.0
    %7865 = vmatpush2.msra.mxu0 0.0
    %7866 = vmatprep.subr.mxu0 0.0
    %7867 = vmatpush2.msra.mxu0 0.0
    %7868 = vmatprep.subr.mxu0 0.0
    %7869 = vmatpush2.msra.mxu0 0.0
    %7870 = vmatprep.subr.mxu0 0.0
    %7871 = vmatpush2.msra.mxu0 0.0
    %7872 = vmatprep.subr.mxu0 0.0
    %7873 = vmatpush2.msra.mxu0 0.0
    %7874 = vmatprep.subr.mxu0 0.0
    %7875 = vmatpush2.msra.mxu0 0.0
    %7876 = vmatprep.mubr.f32.mxu0 0.0
    %7877 = vmatmul.mubr.f32.gmra.mxu0 %v7807
    %v7878 = vpop.f32.mrf.mxu0
    %v7879 = vadd.f32 %v7805, %v7878
    %v7880 = vpop.f32.mrf.mxu0
    %7881 = vmatprep.mubr.f32.mxu0 0.0
    %7882 = vmatmul.mubr.f32.gmra.mxu0 %v7810
    %v7883 = vpop.f32.mrf.mxu0
    %v7884 = vadd.f32 %v7805, %v7883
    %v7885 = vpop.f32.mrf.mxu0
    %7886 = vdwg.mxu0
    %v7887 = vmax.f32 %v7879, 0.0
    %v7888 = vmax.f32 %v7884, 0.0
    %v7889 = vld [vmem:[#allocation7 + $0x248] sm:$0xff]
    %v7890 = vld [vmem:[#allocation7 + $0x250] sm:$0xff]
    %v7891 = vld [vmem:[#allocation7 + $0x258] sm:$0xff]
    %v7892 = vld [vmem:[#allocation7 + $0x260] sm:$0xff]
    %v7893 = vld [vmem:[#allocation7 + $0x268] sm:$0xff]
    %v7894 = vld [vmem:[#allocation7 + $0x270] sm:$0xff]
    %v7895 = vld [vmem:[#allocation7 + $0x278] sm:$0xff]
    %v7896 = vld [vmem:[#allocation7 + $0x280] sm:$0xff]
    %v7898 = vsel %vm3942, %v7887, 0
    %v7901 = vsel %vm3942, %v7888, 0
    %7903 = vmatprep.subr.mxu0 0.0
    %7904 = vmatpush1.msra.mxu0 0.0
    %7905 = vmatprep.subr.mxu0 0.0
    %7906 = vmatpush1.msra.mxu0 0.0
    %7907 = vmatprep.subr.mxu0 0.0
    %7908 = vmatpush1.msra.mxu0 0.0
    %7909 = vmatprep.subr.mxu0 0.0
    %7910 = vmatpush1.msra.mxu0 0.0
    %7911 = vmatprep.subr.mxu0 0.0
    %7912 = vmatpush1.msra.mxu0 0.0
    %7913 = vmatprep.subr.mxu0 0.0
    %7914 = vmatpush1.msra.mxu0 0.0
    %7915 = vmatprep.subr.mxu0 0.0
    %7916 = vmatpush1.msra.mxu0 0.0
    %7917 = vmatprep.subr.mxu0 0.0
    %7918 = vmatpush1.msra.mxu0 0.0
    %7919 = vmatprep.subr.mxu0 0.0
    %7920 = vmatpush1.msra.mxu0 %v7896
    %7921 = vmatprep.subr.mxu0 0.0
    %7922 = vmatpush1.msra.mxu0 %v7895
    %7923 = vmatprep.subr.mxu0 0.0
    %7924 = vmatpush1.msra.mxu0 %v7894
    %7925 = vmatprep.subr.mxu0 0.0
    %7926 = vmatpush1.msra.mxu0 %v7893
    %7927 = vmatprep.subr.mxu0 0.0
    %7928 = vmatpush1.msra.mxu0 %v7892
    %7929 = vmatprep.subr.mxu0 0.0
    %7930 = vmatpush1.msra.mxu0 %v7891
    %7931 = vmatprep.subr.mxu0 0.0
    %7932 = vmatpush1.msra.mxu0 %v7890
    %7933 = vmatprep.subr.mxu0 0.0
    %7934 = vmatpush1.msra.mxu0 %v7889
    %7935 = vmatprep.subr.mxu0 0.0
    %7936 = vmatpush2.msra.mxu0 0.0
    %7937 = vmatprep.subr.mxu0 0.0
    %7938 = vmatpush2.msra.mxu0 0.0
    %7939 = vmatprep.subr.mxu0 0.0
    %7940 = vmatpush2.msra.mxu0 0.0
    %7941 = vmatprep.subr.mxu0 0.0
    %7942 = vmatpush2.msra.mxu0 0.0
    %7943 = vmatprep.subr.mxu0 0.0
    %7944 = vmatpush2.msra.mxu0 0.0
    %7945 = vmatprep.subr.mxu0 0.0
    %7946 = vmatpush2.msra.mxu0 0.0
    %7947 = vmatprep.subr.mxu0 0.0
    %7948 = vmatpush2.msra.mxu0 0.0
    %7949 = vmatprep.subr.mxu0 0.0
    %7950 = vmatpush2.msra.mxu0 0.0
    %7951 = vmatprep.subr.mxu0 0.0
    %7952 = vmatpush2.msra.mxu0 0.0
    %7953 = vmatprep.subr.mxu0 0.0
    %7954 = vmatpush2.msra.mxu0 0.0
    %7955 = vmatprep.subr.mxu0 0.0
    %7956 = vmatpush2.msra.mxu0 0.0
    %7957 = vmatprep.subr.mxu0 0.0
    %7958 = vmatpush2.msra.mxu0 0.0
    %7959 = vmatprep.subr.mxu0 0.0
    %7960 = vmatpush2.msra.mxu0 0.0
    %7961 = vmatprep.subr.mxu0 0.0
    %7962 = vmatpush2.msra.mxu0 0.0
    %7963 = vmatprep.subr.mxu0 0.0
    %7964 = vmatpush2.msra.mxu0 0.0
    %7965 = vmatprep.subr.mxu0 0.0
    %7966 = vmatpush2.msra.mxu0 0.0
    %7967 = vmatprep.mubr.f32.mxu0 0.0
    %7968 = vmatmul.mubr.f32.gmra.mxu0 %v7898
    %v7969 = vpop.f32.mrf.mxu0
    %v7970 = vadd.f32 0.0, %v7969
    %v7971 = vpop.f32.mrf.mxu0
    %7972 = vmatprep.mubr.f32.mxu0 0.0
    %7973 = vmatmul.mubr.f32.gmra.mxu0 %v7901
    %v7974 = vpop.f32.mrf.mxu0
    %v7975 = vadd.f32 0.0, %v7974
    %v7976 = vpop.f32.mrf.mxu0
    %7977 = vdwg.mxu0
    %v7978 = vadd.f32 %v7741, %v7970
    %v7979 = vadd.f32 %v7742, %v7975
    %v7980 = vld [vmem:[#allocation7 + $0x288] sm:$0x1]
    %v7981 = vlaneseq
    %v7982 = vshrl.u32 %v7981, 7
    %v7983 = vsub.s32 0, %v7982
    %v7984 = vrot.slane %v7980, %v7983
    %v7985 = vadd.f32 %v7978, %v7984
    %v7986 = vadd.f32 %v7979, %v7984
    %v7987 = vld [vmem:[#allocation7 + $0x290] sm:$0x1]
    %v7988 = vld [vmem:[#allocation7 + $0x298] sm:$0x1]
    %v7989 = vsel %vm64, %v7985, 0.0
    %7990 = vadd.xlane.f32.xlu0 %v7989
    %v7991 = vpop.xlane.xlu0 %7990
    %v7992 = vsel %vm64, %v7986, 0.0
    %7993 = vadd.xlane.f32.xlu0 %v7992
    %v7994 = vpop.xlane.xlu0 %7993
    %v7995 = vmul.f32 %v7991, 0.03125
    %v7996 = vmul.f32 %v7994, 0.03125
    %v7997 = vsub.f32 %v7985, %v7995
    %v7998 = vsub.f32 %v7986, %v7996
    %v7999 = vmul.f32 %v7997, %v7997
    %v8000 = vmul.f32 %v7998, %v7998
    %v8001 = vsel %vm64, %v7999, 0.0
    %8002 = vadd.xlane.f32.xlu0 %v8001
    %v8003 = vpop.xlane.xlu0 %8002
    %v8004 = vsel %vm64, %v8000, 0.0
    %8005 = vadd.xlane.f32.xlu0 %v8004
    %v8006 = vpop.xlane.xlu0 %8005
    %v8007 = vmul.f32 %v8003, 0.032258064
    %v8008 = vmul.f32 %v8006, 0.032258064
    %v8009 = vrsqrt.pop %v8007
    %v8010 = vmul.f32 %v8007, %v8009
    %vm8011 = vcmp.eq.f32.partialorder %v8007, inf
    %v8012 = vsel %vm8011, %v8007, %v8010
    %vm8013 = vcmp.eq.f32.partialorder %v8007, 0.0
    %v8014 = vand.u32 %v8007, 2147483648
    %v8015 = vsel %vm8013, %v8014, %v8012
    %v8016 = vrsqrt.pop %v8008
    %v8017 = vmul.f32 %v8008, %v8016
    %vm8018 = vcmp.eq.f32.partialorder %v8008, inf
    %v8019 = vsel %vm8018, %v8008, %v8017
    %vm8020 = vcmp.eq.f32.partialorder %v8008, 0.0
    %v8021 = vand.u32 %v8008, 2147483648
    %v8022 = vsel %vm8020, %v8021, %v8019
    %v8023 = vadd.f32 %v8015, 1e-16
    %v8024 = vadd.f32 %v8022, 1e-16
    %v8025 = vrcp.pop %v8023
    %v8026 = vmul.f32 1.0, %v8025
    %v8027 = vrcp.pop %v8024
    %v8028 = vmul.f32 1.0, %v8027
    %v8029 = vmul.f32 %v7997, %v8026
    %v8030 = vmul.f32 %v7998, %v8028
    %v8031 = vlaneseq
    %v8032 = vshrl.u32 %v8031, 7
    %v8033 = vsub.s32 0, %v8032
    %v8034 = vrot.slane %v7987, %v8033
    %v8035 = vmul.f32 %v8034, %v8029
    %v8036 = vmul.f32 %v8034, %v8030
    %v8037 = vlaneseq
    %v8038 = vshrl.u32 %v8037, 7
    %v8039 = vsub.s32 0, %v8038
    %v8040 = vrot.slane %v7988, %v8039
    %v8041 = vadd.f32 %v8035, %v8040
    %v8042 = vadd.f32 %v8036, %v8040
    %8043 = vst.msk [vmem:[#allocation8] sm:$0xff] %vm64, %v8041
    %8044 = vst.msk [vmem:[#allocation8 + $0x8] sm:$0xff] %vm64, %v8042
    // Predicated region
    $region26: #{fwd.1} parent=1 // pred_check
      _
    $region27: #{fwd.1} parent=1 // pred_check_branch
      %8046 = sbr.rel (0) target = $region29
    $region28: #{fwd.1} parent=1 // pred_region
      %s8048 = ssub.s32 256, 256
      %8049 = vsyncadd [#allocation4], %s8048
      %s8050 = sshll.u32 [#allocation8], 4
      %s8051 = int_to_ptr.vmem [resolvable:$true] %s8050
      %8056 = dma.vmem_to_hbm [thread:$0]  %s8051, 256, %s3, [#allocation4], 128, 128, 8
    $region29: #{fwd.1} parent=1 // pred_fallthru
      _
    // Predicated region
    $region30: #{fwd.1} parent=1 // pred_check
      _
    $region31: #{fwd.1} parent=1 // pred_check_branch
      %8058 = sbr.rel (0) target = $region33
    $region32: #{fwd.1} parent=1 // pred_region
      %8059 = dma.done [#allocation4], 256
    $region33: #{fwd.1} parent=1 // pred_fallthru
      _
    %8060 = vsyncpa [#allocation3], 1
    %8061 = vsyncpa [#allocation6], 1
    %8062 = vsyncpa [#allocation4], 1

</llo_original>
